<compile_context>
chip_gen: v6e
topology: v6e:2x2x1
jax: 0.10.0
libtpu: 0.0.40
codegen_flags: <defaults>
</compile_context>

<pallas_src>
import functools

import jax
import jax.numpy as jnp
from jax.experimental import pallas as pl
from jax.experimental.pallas import tpu as pltpu


# ----------------------------------------------------------------------------
# Fused kernel: runs the whole CRM_TCN forward for one batch element.
# ----------------------------------------------------------------------------
def _crm_tcn_fused_kernel(alphas_ref, x_ref, *refs, stages, n_params, pad, eps):
    """alphas_ref : SMEM (n_alphas,) f32 -- PReLU slopes (scalar prefetch).
    x_ref      : VMEM (1, T, C_in)    -- input slab for this batch element.
    refs       : (*param_refs, o_ref, scratch_ref)
    scratch    : VMEM (pad + T, C_max) -- left-zero-padded staging buffer that
                 realizes the causal time shift as a shifted window read."""
    p = refs[:n_params]
    o_ref = refs[n_params]
    scratch = refs[n_params + 1]

    T = x_ref.shape[1]

    # Rows [0, pad) stay zero for the whole kernel: they supply the causal
    # left padding (Conv1d padding + Chomp1d) for every dilated conv.
    scratch[...] = jnp.zeros(scratch.shape, jnp.float32)

    def prelu(v, a_idx):
        a = alphas_ref[a_idx]                          # SMEM scalar
        return jnp.where(v >= 0.0, v, v * a)

    def causal_conv(v, w_idx, b_idx, K, dilation):
        """Conv1d(pad=(K-1)*d, dilation=d) + causal Chomp1d, channel-last."""
        c_in = v.shape[1]
        w_ref = p[w_idx]                               # (K, c_in, c_out)
        c_out = w_ref.shape[-1]
        # Stage the conv input below the zero pad; each tap is then a
        # statically shifted sublane window -- no TxT shift matrices.
        scratch[pad:pad + T, :c_in] = v
        acc = jnp.zeros((T, c_out), jnp.float32) + p[b_idx][...]
        for j in range(K):                             # K is small & static
            shift = (K - 1 - j) * dilation             # static python int
            xs = scratch[pad - shift:pad - shift + T, :c_in]
            acc = acc + jnp.dot(xs, w_ref[j],
                                preferred_element_type=jnp.float32)
        return acc

    h = x_ref[0].astype(jnp.float32)                   # (T, C_in)

    for st in stages:                                  # static python plan
        kind = st[0]
        if kind == "block":                            # TemporalBlock
            (_, dil, K, i_w1, i_b1, i_w2, i_b2, i_wd, i_bd, a1, a2, a3) = st
            inp = h
            z = prelu(causal_conv(inp, i_w1, i_b1, K, dil), a1)
            z = prelu(causal_conv(z, i_w2, i_b2, K, dil), a2)
            if i_wd >= 0:                              # 1x1 downsample residual
                res = (jnp.dot(inp, p[i_wd][...],
                               preferred_element_type=jnp.float32)
                       + p[i_bd][...])
            else:
                res = inp
            h = prelu(z + res, a3)
        elif kind == "gnorm":                          # GroupNorm(C, C)
            (_, i_g, i_b) = st
            mean = jnp.mean(h, axis=0, keepdims=True)  # per-channel over time
            var = jnp.mean((h - mean) ** 2, axis=0, keepdims=True)
            h = (h - mean) * jax.lax.rsqrt(var + eps)
            h = h * p[i_g][...] + p[i_b][...]
        else:                                          # Linear + Sigmoid head
            (_, i_w, i_b) = st
            y = (jnp.dot(h, p[i_w][...], preferred_element_type=jnp.float32)
                 + p[i_b][...])
            h = 1.0 / (1.0 + jnp.exp(-y))              # exp on EUP

    # Final store is narrow (output_size lanes) by module contract.
    o_ref[0] = h.astype(o_ref.dtype)


# ----------------------------------------------------------------------------
# Static plan: flatten params into (VMEM arrays, SMEM alphas, stage tuples)
# ----------------------------------------------------------------------------
def _build_plan(params, kernel_size):
    arrays, alphas, stages = [], [], []
    max_shift = 1

    def add_arr(a):
        arrays.append(a)
        return len(arrays) - 1

    def add_alpha(a):
        alphas.append(float(a))
        return len(alphas) - 1

    def add_tcn(tcn):
        nonlocal max_shift
        for blk, dilation in tcn:
            max_shift = max(max_shift, (kernel_size - 1) * dilation)
            i_wd = add_arr(blk["wd"]) if blk["wd"] is not None else -1
            i_bd = add_arr(blk["bd"]) if blk["bd"] is not None else -1
            stages.append((
                "block", dilation, kernel_size,
                add_arr(blk["w1"]), add_arr(blk["b1"]),
                add_arr(blk["w2"]), add_arr(blk["b2"]),
                i_wd, i_bd,
                add_alpha(blk["a1"]), add_alpha(blk["a2"]), add_alpha(blk["a3"]),
            ))

    add_tcn(params["tcn1"])
    stages.append(("gnorm", add_arr(params["norm1_gamma"]),
                   add_arr(params["norm1_beta"])))
    add_tcn(params["tcn2"])
    stages.append(("gnorm", add_arr(params["norm2_gamma"]),
                   add_arr(params["norm2_beta"])))
    add_tcn(params["tcn3"])
    stages.append(("linear_sigmoid", add_arr(params["line3_w"]),
                   add_arr(params["line3_b"])))

    pad = max(8, -(-max_shift // 8) * 8)               # sublane-aligned pad
    c_max = max(a.shape[-1] for a in arrays)           # widest channel count
    return tuple(stages), arrays, jnp.asarray(alphas, jnp.float32), pad, c_max


def _estimate_cost(B, T, input_size, output_size, stages, arrays):
    flops = 0
    for st in stages:
        if st[0] == "block":
            K, cin, cout = arrays[st[3]].shape
            flops += 2 * T * K * cin * cout            # conv1
            flops += 2 * T * K * cout * cout           # conv2
            if st[7] >= 0:
                flops += 2 * T * cin * cout            # 1x1 downsample
            flops += 8 * T * cout                      # PReLUs + residual add
        elif st[0] == "gnorm":
            flops += 8 * T * arrays[st[1]].shape[-1]
        else:                                          # linear + sigmoid
            cin, cout = arrays[st[1]].shape
            flops += 2 * T * cin * cout + 4 * T * cout
    transcendentals = T * output_size                  # sigmoid exp
    param_bytes = sum(int(a.size) * 4 for a in arrays)
    io_bytes = 4 * B * T * (input_size + output_size)
    return B * flops, B * transcendentals, param_bytes + io_bytes


# ----------------------------------------------------------------------------
# Fused forward (single pallas_call)
# ----------------------------------------------------------------------------
def crm_tcn_forward(x, params, kernel_size):
    B, T, c_in = x.shape
    stages, arrays, alphas, pad, c_max = _build_plan(params, kernel_size)
    output_size = params["line3_w"].shape[1]
    n_params = len(arrays)

    def rep_spec(a):                                   # weights: whole array,
        nd = a.ndim                                    # resident across grid
        return pl.BlockSpec(a.shape, lambda b, _alphas, _nd=nd: (0,) * _nd)

    grid_spec = pltpu.PrefetchScalarGridSpec(
        num_scalar_prefetch=1,                         # PReLU slopes -> SMEM
        grid=(B,),
        in_specs=[pl.BlockSpec((1, T, c_in), lambda b, _alphas: (b, 0, 0))]
                 + [rep_spec(a) for a in arrays],
        out_specs=pl.BlockSpec((1, T, output_size), lambda b, _alphas: (b, 0, 0)),
        scratch_shapes=[pltpu.VMEM((pad + T, c_max), jnp.float32)],
    )

    flops, transcendentals, bytes_accessed = _estimate_cost(
        B, T, c_in, output_size, stages, arrays)

    kernel = functools.partial(
        _crm_tcn_fused_kernel,
        stages=stages, n_params=n_params, pad=pad, eps=1e-5)

    return pl.pallas_call(
        kernel,
        out_shape=jax.ShapeDtypeStruct((B, T, output_size), jnp.float32),
        grid_spec=grid_spec,
        compiler_params=pltpu.CompilerParams(
            dimension_semantics=("parallel",)),        # v7x: 2 TCs split batch
        cost_estimate=pl.CostEstimate(
            flops=int(flops),
            transcendentals=int(transcendentals),
            bytes_accessed=int(bytes_accessed)),
    )(alphas, x, *arrays)


# ----------------------------------------------------------------------------
# Deterministic parameter construction (synthetic; mirrors module __init__)
# ----------------------------------------------------------------------------
def init_temporal_block(key, c_in, c_out, k):
    ks = jax.random.split(key, 6)
    # Conv weights stored channel-last as (K, Cin, Cout); weight_norm folded.
    blk = dict(
        w1=0.01 * jax.random.normal(ks[0], (k, c_in, c_out), jnp.float32),
        b1=0.01 * jax.random.normal(ks[1], (1, c_out), jnp.float32),
        w2=0.01 * jax.random.normal(ks[2], (k, c_out, c_out), jnp.float32),
        b2=0.01 * jax.random.normal(ks[3], (1, c_out), jnp.float32),
        a1=0.25, a2=0.25, a3=0.25,                     # PReLU default slopes
    )
    if c_in != c_out:
        blk["wd"] = 0.01 * jax.random.normal(ks[4], (c_in, c_out), jnp.float32)
        blk["bd"] = 0.01 * jax.random.normal(ks[5], (1, c_out), jnp.float32)
    else:
        blk["wd"], blk["bd"] = None, None
    return blk


def init_tcn(key, num_inputs, num_channels, k):
    blocks = []
    for i, c_out in enumerate(num_channels):
        c_in = num_inputs if i == 0 else num_channels[i - 1]
        key, sub = jax.random.split(key)
        blocks.append((init_temporal_block(sub, c_in, c_out, k), 2 ** i))
    return blocks


def init_crm_tcn(key, input_size, output_size, num_channels, kernel_size):
    k1, k2, k3, k4 = jax.random.split(key, 4)
    return {
        "tcn1": init_tcn(k1, input_size, num_channels, kernel_size),
        "norm1_gamma": jnp.ones((1, input_size), jnp.float32),
        "norm1_beta": jnp.zeros((1, input_size), jnp.float32),
        "tcn2": init_tcn(k2, input_size, num_channels, kernel_size),
        "norm2_gamma": jnp.ones((1, input_size), jnp.float32),
        "norm2_beta": jnp.zeros((1, input_size), jnp.float32),
        "tcn3": init_tcn(k3, input_size, num_channels, kernel_size),
        "line3_w": 0.1 * jax.random.normal(k4, (input_size, output_size), jnp.float32),
        "line3_b": jnp.zeros((1, output_size), jnp.float32),
    }


# ----------------------------------------------------------------------------
if __name__ == "__main__":
    # GroupNorm(input_size, input_size) after tcn1/tcn2 requires
    # num_channels[-1] == input_size (same implicit constraint as PyTorch).
    input_size = 8
    output_size = 4
    num_channels = (16, 8)
    kernel_size = 3
    B, T = 2, 16

    key = jax.random.PRNGKey(0)
    k_x, k_p = jax.random.split(key)
    # x is channel-last (B, T, input_size) == the PyTorch input before
    # x.transpose(1, 2); the transposes in CRM_TCN.forward are implicit here.
    x = jax.random.normal(k_x, (B, T, input_size), jnp.float32)
    params = init_crm_tcn(k_p, input_size, output_size, num_channels, kernel_size)

    y = crm_tcn_forward(x, params, kernel_size)
    y = jax.block_until_ready(y)

    assert y.shape == (B, T, output_size), y.shape
    assert bool(jnp.all(jnp.isfinite(y)))
    assert bool(jnp.all((y >= 0.0) & (y <= 1.0)))      # sigmoid range
    print("KERNEL_OK")
</pallas_src>

<mosaic_0001>
module attributes {stable_mosaic.version = 11 : i64} {
  func.func @_crm_tcn_fused_kernel(%arg0: i32, %arg1: memref<18xf32, #tpu.memory_space<smem>>, %arg2: memref<1x16x8xf32, #tpu.memory_space<vmem>>, %arg3: memref<8x16xf32, #tpu.memory_space<vmem>>, %arg4: memref<1x16xf32, #tpu.memory_space<vmem>>, %arg5: memref<3x8x16xf32, #tpu.memory_space<vmem>>, %arg6: memref<1x16xf32, #tpu.memory_space<vmem>>, %arg7: memref<3x16x16xf32, #tpu.memory_space<vmem>>, %arg8: memref<1x16xf32, #tpu.memory_space<vmem>>, %arg9: memref<16x8xf32, #tpu.memory_space<vmem>>, %arg10: memref<1x8xf32, #tpu.memory_space<vmem>>, %arg11: memref<3x16x8xf32, #tpu.memory_space<vmem>>, %arg12: memref<1x8xf32, #tpu.memory_space<vmem>>, %arg13: memref<3x8x8xf32, #tpu.memory_space<vmem>>, %arg14: memref<1x8xf32, #tpu.memory_space<vmem>>, %arg15: memref<1x8xf32, #tpu.memory_space<vmem>>, %arg16: memref<1x8xf32, #tpu.memory_space<vmem>>, %arg17: memref<8x16xf32, #tpu.memory_space<vmem>>, %arg18: memref<1x16xf32, #tpu.memory_space<vmem>>, %arg19: memref<3x8x16xf32, #tpu.memory_space<vmem>>, %arg20: memref<1x16xf32, #tpu.memory_space<vmem>>, %arg21: memref<3x16x16xf32, #tpu.memory_space<vmem>>, %arg22: memref<1x16xf32, #tpu.memory_space<vmem>>, %arg23: memref<16x8xf32, #tpu.memory_space<vmem>>, %arg24: memref<1x8xf32, #tpu.memory_space<vmem>>, %arg25: memref<3x16x8xf32, #tpu.memory_space<vmem>>, %arg26: memref<1x8xf32, #tpu.memory_space<vmem>>, %arg27: memref<3x8x8xf32, #tpu.memory_space<vmem>>, %arg28: memref<1x8xf32, #tpu.memory_space<vmem>>, %arg29: memref<1x8xf32, #tpu.memory_space<vmem>>, %arg30: memref<1x8xf32, #tpu.memory_space<vmem>>, %arg31: memref<8x16xf32, #tpu.memory_space<vmem>>, %arg32: memref<1x16xf32, #tpu.memory_space<vmem>>, %arg33: memref<3x8x16xf32, #tpu.memory_space<vmem>>, %arg34: memref<1x16xf32, #tpu.memory_space<vmem>>, %arg35: memref<3x16x16xf32, #tpu.memory_space<vmem>>, %arg36: memref<1x16xf32, #tpu.memory_space<vmem>>, %arg37: memref<16x8xf32, #tpu.memory_space<vmem>>, %arg38: memref<1x8xf32, #tpu.memory_space<vmem>>, %arg39: memref<3x16x8xf32, #tpu.memory_space<vmem>>, %arg40: memref<1x8xf32, #tpu.memory_space<vmem>>, %arg41: memref<3x8x8xf32, #tpu.memory_space<vmem>>, %arg42: memref<1x8xf32, #tpu.memory_space<vmem>>, %arg43: memref<8x4xf32, #tpu.memory_space<vmem>>, %arg44: memref<1x4xf32, #tpu.memory_space<vmem>>, %arg45: memref<1x16x4xf32, #tpu.memory_space<vmem>>, %arg46: memref<24x16xf32, #tpu.memory_space<vmem>>) attributes {dimension_semantics = [#tpu.dimension_semantics<parallel>], iteration_bounds = array<i64: 2>, scalar_prefetch = 1 : i64, scratch_operands = 1 : i64, tpu.core_type = #tpu.core_type<tc>, window_params = [{transform_indices = @transform_0, window_bounds = array<i64: 1, 16, 8>}, {pipeline_mode = #tpu.pipeline_mode<synchronous>, transform_indices = @transform_1, window_bounds = array<i64: 8, 16>}, {pipeline_mode = #tpu.pipeline_mode<synchronous>, transform_indices = @transform_2, window_bounds = array<i64: 1, 16>}, {pipeline_mode = #tpu.pipeline_mode<synchronous>, transform_indices = @transform_3, window_bounds = array<i64: 3, 8, 16>}, {pipeline_mode = #tpu.pipeline_mode<synchronous>, transform_indices = @transform_4, window_bounds = array<i64: 1, 16>}, {pipeline_mode = #tpu.pipeline_mode<synchronous>, transform_indices = @transform_5, window_bounds = array<i64: 3, 16, 16>}, {pipeline_mode = #tpu.pipeline_mode<synchronous>, transform_indices = @transform_6, window_bounds = array<i64: 1, 16>}, {pipeline_mode = #tpu.pipeline_mode<synchronous>, transform_indices = @transform_7, window_bounds = array<i64: 16, 8>}, {pipeline_mode = #tpu.pipeline_mode<synchronous>, transform_indices = @transform_8, window_bounds = array<i64: 1, 8>}, {pipeline_mode = #tpu.pipeline_mode<synchronous>, transform_indices = @transform_9, window_bounds = array<i64: 3, 16, 8>}, {pipeline_mode = #tpu.pipeline_mode<synchronous>, transform_indices = @transform_10, window_bounds = array<i64: 1, 8>}, {pipeline_mode = #tpu.pipeline_mode<synchronous>, transform_indices = @transform_11, window_bounds = array<i64: 3, 8, 8>}, {pipeline_mode = #tpu.pipeline_mode<synchronous>, transform_indices = @transform_12, window_bounds = array<i64: 1, 8>}, {pipeline_mode = #tpu.pipeline_mode<synchronous>, transform_indices = @transform_13, window_bounds = array<i64: 1, 8>}, {pipeline_mode = #tpu.pipeline_mode<synchronous>, transform_indices = @transform_14, window_bounds = array<i64: 1, 8>}, {pipeline_mode = #tpu.pipeline_mode<synchronous>, transform_indices = @transform_15, window_bounds = array<i64: 8, 16>}, {pipeline_mode = #tpu.pipeline_mode<synchronous>, transform_indices = @transform_16, window_bounds = array<i64: 1, 16>}, {pipeline_mode = #tpu.pipeline_mode<synchronous>, transform_indices = @transform_17, window_bounds = array<i64: 3, 8, 16>}, {pipeline_mode = #tpu.pipeline_mode<synchronous>, transform_indices = @transform_18, window_bounds = array<i64: 1, 16>}, {pipeline_mode = #tpu.pipeline_mode<synchronous>, transform_indices = @transform_19, window_bounds = array<i64: 3, 16, 16>}, {pipeline_mode = #tpu.pipeline_mode<synchronous>, transform_indices = @transform_20, window_bounds = array<i64: 1, 16>}, {pipeline_mode = #tpu.pipeline_mode<synchronous>, transform_indices = @transform_21, window_bounds = array<i64: 16, 8>}, {pipeline_mode = #tpu.pipeline_mode<synchronous>, transform_indices = @transform_22, window_bounds = array<i64: 1, 8>}, {pipeline_mode = #tpu.pipeline_mode<synchronous>, transform_indices = @transform_23, window_bounds = array<i64: 3, 16, 8>}, {pipeline_mode = #tpu.pipeline_mode<synchronous>, transform_indices = @transform_24, window_bounds = array<i64: 1, 8>}, {pipeline_mode = #tpu.pipeline_mode<synchronous>, transform_indices = @transform_25, window_bounds = array<i64: 3, 8, 8>}, {pipeline_mode = #tpu.pipeline_mode<synchronous>, transform_indices = @transform_26, window_bounds = array<i64: 1, 8>}, {pipeline_mode = #tpu.pipeline_mode<synchronous>, transform_indices = @transform_27, window_bounds = array<i64: 1, 8>}, {pipeline_mode = #tpu.pipeline_mode<synchronous>, transform_indices = @transform_28, window_bounds = array<i64: 1, 8>}, {pipeline_mode = #tpu.pipeline_mode<synchronous>, transform_indices = @transform_29, window_bounds = array<i64: 8, 16>}, {pipeline_mode = #tpu.pipeline_mode<synchronous>, transform_indices = @transform_30, window_bounds = array<i64: 1, 16>}, {pipeline_mode = #tpu.pipeline_mode<synchronous>, transform_indices = @transform_31, window_bounds = array<i64: 3, 8, 16>}, {pipeline_mode = #tpu.pipeline_mode<synchronous>, transform_indices = @transform_32, window_bounds = array<i64: 1, 16>}, {pipeline_mode = #tpu.pipeline_mode<synchronous>, transform_indices = @transform_33, window_bounds = array<i64: 3, 16, 16>}, {pipeline_mode = #tpu.pipeline_mode<synchronous>, transform_indices = @transform_34, window_bounds = array<i64: 1, 16>}, {pipeline_mode = #tpu.pipeline_mode<synchronous>, transform_indices = @transform_35, window_bounds = array<i64: 16, 8>}, {pipeline_mode = #tpu.pipeline_mode<synchronous>, transform_indices = @transform_36, window_bounds = array<i64: 1, 8>}, {pipeline_mode = #tpu.pipeline_mode<synchronous>, transform_indices = @transform_37, window_bounds = array<i64: 3, 16, 8>}, {pipeline_mode = #tpu.pipeline_mode<synchronous>, transform_indices = @transform_38, window_bounds = array<i64: 1, 8>}, {pipeline_mode = #tpu.pipeline_mode<synchronous>, transform_indices = @transform_39, window_bounds = array<i64: 3, 8, 8>}, {pipeline_mode = #tpu.pipeline_mode<synchronous>, transform_indices = @transform_40, window_bounds = array<i64: 1, 8>}, {pipeline_mode = #tpu.pipeline_mode<synchronous>, transform_indices = @transform_41, window_bounds = array<i64: 8, 4>}, {pipeline_mode = #tpu.pipeline_mode<synchronous>, transform_indices = @transform_42, window_bounds = array<i64: 1, 4>}, {transform_indices = @transform_43, window_bounds = array<i64: 1, 16, 4>}]} {
    %cst = arith.constant 0.000000e+00 : f32
    %0 = vector.broadcast %cst : f32 to vector<24x16xf32>
    %c0 = arith.constant 0 : index
    %c0_0 = arith.constant 0 : index
    %1 = vector.load %arg46[%c0, %c0_0] : memref<24x16xf32, #tpu.memory_space<vmem>>, vector<24x16xf32>
    tpu.vector_store %arg46[%c0, %c0_0], %0 {strides = array<i32>} : memref<24x16xf32, #tpu.memory_space<vmem>>, vector<24x16xf32>,
    %c0_1 = arith.constant 0 : index
    %c0_2 = arith.constant 0 : index
    %c0_3 = arith.constant 0 : index
    %2 = vector.load %arg2[%c0_1, %c0_2, %c0_3] : memref<1x16x8xf32, #tpu.memory_space<vmem>>, vector<1x16x8xf32>
    %3 = vector.shape_cast %2 : vector<1x16x8xf32> to vector<16x8xf32>
    %c8 = arith.constant 8 : index
    %c0_4 = arith.constant 0 : index
    %4 = vector.load %arg46[%c8, %c0_4] : memref<24x16xf32, #tpu.memory_space<vmem>>, vector<16x8xf32>
    tpu.vector_store %arg46[%c8, %c0_4], %3 {strides = array<i32>} : memref<24x16xf32, #tpu.memory_space<vmem>>, vector<16x8xf32>,
    %cst_5 = arith.constant 0.000000e+00 : f32
    %5 = vector.broadcast %cst_5 : f32 to vector<16x16xf32>
    %c0_6 = arith.constant 0 : index
    %c0_7 = arith.constant 0 : index
    %6 = vector.load %arg6[%c0_6, %c0_7] : memref<1x16xf32, #tpu.memory_space<vmem>>, vector<1x16xf32>
    %7 = vector.broadcast %6 : vector<1x16xf32> to vector<16x16xf32>
    %8 = arith.addf %5, %7 : vector<16x16xf32>
    %c6 = arith.constant 6 : index
    %c0_8 = arith.constant 0 : index
    %9 = vector.load %arg46[%c6, %c0_8] : memref<24x16xf32, #tpu.memory_space<vmem>>, vector<16x8xf32>
    %c0_9 = arith.constant 0 : index
    %c0_10 = arith.constant 0 : index
    %c0_11 = arith.constant 0 : index
    %10 = vector.load %arg5[%c0_9, %c0_10, %c0_11] : memref<3x8x16xf32, #tpu.memory_space<vmem>>, vector<1x8x16xf32>
    %11 = vector.shape_cast %10 : vector<1x8x16xf32> to vector<8x16xf32>
    %cst_12 = arith.constant dense<0.000000e+00> : vector<16x16xf32>
    %12 = tpu.matmul %9, %11, %cst_12 {dimension_numbers = #tpu.dot_dimension_numbers<[1], [0], [0], [1], [0, 0, 1, 1], [], []>} : vector<16x8xf32>, vector<8x16xf32>, vector<16x16xf32> -> vector<16x16xf32>
    %13 = arith.addf %8, %12 : vector<16x16xf32>
    %c7 = arith.constant 7 : index
    %c0_13 = arith.constant 0 : index
    %14 = vector.load %arg46[%c7, %c0_13] : memref<24x16xf32, #tpu.memory_space<vmem>>, vector<16x8xf32>
    %c1 = arith.constant 1 : index
    %c0_14 = arith.constant 0 : index
    %c0_15 = arith.constant 0 : index
    %15 = vector.load %arg5[%c1, %c0_14, %c0_15] : memref<3x8x16xf32, #tpu.memory_space<vmem>>, vector<1x8x16xf32>
    %16 = vector.shape_cast %15 : vector<1x8x16xf32> to vector<8x16xf32>
    %cst_16 = arith.constant dense<0.000000e+00> : vector<16x16xf32>
    %17 = tpu.matmul %14, %16, %cst_16 {dimension_numbers = #tpu.dot_dimension_numbers<[1], [0], [0], [1], [0, 0, 1, 1], [], []>} : vector<16x8xf32>, vector<8x16xf32>, vector<16x16xf32> -> vector<16x16xf32>
    %18 = arith.addf %13, %17 : vector<16x16xf32>
    %c8_17 = arith.constant 8 : index
    %c0_18 = arith.constant 0 : index
    %19 = vector.load %arg46[%c8_17, %c0_18] : memref<24x16xf32, #tpu.memory_space<vmem>>, vector<16x8xf32>
    %c2 = arith.constant 2 : index
    %c0_19 = arith.constant 0 : index
    %c0_20 = arith.constant 0 : index
    %20 = vector.load %arg5[%c2, %c0_19, %c0_20] : memref<3x8x16xf32, #tpu.memory_space<vmem>>, vector<1x8x16xf32>
    %21 = vector.shape_cast %20 : vector<1x8x16xf32> to vector<8x16xf32>
    %cst_21 = arith.constant dense<0.000000e+00> : vector<16x16xf32>
    %22 = tpu.matmul %19, %21, %cst_21 {dimension_numbers = #tpu.dot_dimension_numbers<[1], [0], [0], [1], [0, 0, 1, 1], [], []>} : vector<16x8xf32>, vector<8x16xf32>, vector<16x16xf32> -> vector<16x16xf32>
    %23 = arith.addf %18, %22 : vector<16x16xf32>
    %c0_22 = arith.constant 0 : index
    %24 = memref.load %arg1[%c0_22] : memref<18xf32, #tpu.memory_space<smem>>
    %cst_23 = arith.constant 0.000000e+00 : f32
    %25 = vector.broadcast %cst_23 : f32 to vector<16x16xf32>
    %26 = arith.cmpf oge, %23, %25 : vector<16x16xf32>
    %27 = vector.broadcast %24 : f32 to vector<16x16xf32>
    %28 = arith.mulf %23, %27 : vector<16x16xf32>
    %29 = arith.select %26, %23, %28 : vector<16x16xi1>, vector<16x16xf32>
    %c8_24 = arith.constant 8 : index
    %c0_25 = arith.constant 0 : index
    %30 = vector.load %arg46[%c8_24, %c0_25] : memref<24x16xf32, #tpu.memory_space<vmem>>, vector<16x16xf32>
    tpu.vector_store %arg46[%c8_24, %c0_25], %29 {strides = array<i32>} : memref<24x16xf32, #tpu.memory_space<vmem>>, vector<16x16xf32>,
    %cst_26 = arith.constant 0.000000e+00 : f32
    %31 = vector.broadcast %cst_26 : f32 to vector<16x16xf32>
    %c0_27 = arith.constant 0 : index
    %c0_28 = arith.constant 0 : index
    %32 = vector.load %arg8[%c0_27, %c0_28] : memref<1x16xf32, #tpu.memory_space<vmem>>, vector<1x16xf32>
    %33 = vector.broadcast %32 : vector<1x16xf32> to vector<16x16xf32>
    %34 = arith.addf %31, %33 : vector<16x16xf32>
    %c6_29 = arith.constant 6 : index
    %c0_30 = arith.constant 0 : index
    %35 = vector.load %arg46[%c6_29, %c0_30] : memref<24x16xf32, #tpu.memory_space<vmem>>, vector<16x16xf32>
    %c0_31 = arith.constant 0 : index
    %c0_32 = arith.constant 0 : index
    %c0_33 = arith.constant 0 : index
    %36 = vector.load %arg7[%c0_31, %c0_32, %c0_33] : memref<3x16x16xf32, #tpu.memory_space<vmem>>, vector<1x16x16xf32>
    %37 = vector.shape_cast %36 : vector<1x16x16xf32> to vector<16x16xf32>
    %cst_34 = arith.constant dense<0.000000e+00> : vector<16x16xf32>
    %38 = tpu.matmul %35, %37, %cst_34 {dimension_numbers = #tpu.dot_dimension_numbers<[1], [0], [0], [1], [0, 0, 1, 1], [], []>} : vector<16x16xf32>, vector<16x16xf32>, vector<16x16xf32> -> vector<16x16xf32>
    %39 = arith.addf %34, %38 : vector<16x16xf32>
    %c7_35 = arith.constant 7 : index
    %c0_36 = arith.constant 0 : index
    %40 = vector.load %arg46[%c7_35, %c0_36] : memref<24x16xf32, #tpu.memory_space<vmem>>, vector<16x16xf32>
    %c1_37 = arith.constant 1 : index
    %c0_38 = arith.constant 0 : index
    %c0_39 = arith.constant 0 : index
    %41 = vector.load %arg7[%c1_37, %c0_38, %c0_39] : memref<3x16x16xf32, #tpu.memory_space<vmem>>, vector<1x16x16xf32>
    %42 = vector.shape_cast %41 : vector<1x16x16xf32> to vector<16x16xf32>
    %cst_40 = arith.constant dense<0.000000e+00> : vector<16x16xf32>
    %43 = tpu.matmul %40, %42, %cst_40 {dimension_numbers = #tpu.dot_dimension_numbers<[1], [0], [0], [1], [0, 0, 1, 1], [], []>} : vector<16x16xf32>, vector<16x16xf32>, vector<16x16xf32> -> vector<16x16xf32>
    %44 = arith.addf %39, %43 : vector<16x16xf32>
    %c8_41 = arith.constant 8 : index
    %c0_42 = arith.constant 0 : index
    %45 = vector.load %arg46[%c8_41, %c0_42] : memref<24x16xf32, #tpu.memory_space<vmem>>, vector<16x16xf32>
    %c2_43 = arith.constant 2 : index
    %c0_44 = arith.constant 0 : index
    %c0_45 = arith.constant 0 : index
    %46 = vector.load %arg7[%c2_43, %c0_44, %c0_45] : memref<3x16x16xf32, #tpu.memory_space<vmem>>, vector<1x16x16xf32>
    %47 = vector.shape_cast %46 : vector<1x16x16xf32> to vector<16x16xf32>
    %cst_46 = arith.constant dense<0.000000e+00> : vector<16x16xf32>
    %48 = tpu.matmul %45, %47, %cst_46 {dimension_numbers = #tpu.dot_dimension_numbers<[1], [0], [0], [1], [0, 0, 1, 1], [], []>} : vector<16x16xf32>, vector<16x16xf32>, vector<16x16xf32> -> vector<16x16xf32>
    %49 = arith.addf %44, %48 : vector<16x16xf32>
    %c1_47 = arith.constant 1 : index
    %50 = memref.load %arg1[%c1_47] : memref<18xf32, #tpu.memory_space<smem>>
    %cst_48 = arith.constant 0.000000e+00 : f32
    %51 = vector.broadcast %cst_48 : f32 to vector<16x16xf32>
    %52 = arith.cmpf oge, %49, %51 : vector<16x16xf32>
    %53 = vector.broadcast %50 : f32 to vector<16x16xf32>
    %54 = arith.mulf %49, %53 : vector<16x16xf32>
    %55 = arith.select %52, %49, %54 : vector<16x16xi1>, vector<16x16xf32>
    %c0_49 = arith.constant 0 : index
    %c0_50 = arith.constant 0 : index
    %56 = vector.load %arg3[%c0_49, %c0_50] : memref<8x16xf32, #tpu.memory_space<vmem>>, vector<8x16xf32>
    %cst_51 = arith.constant dense<0.000000e+00> : vector<16x16xf32>
    %57 = tpu.matmul %3, %56, %cst_51 {dimension_numbers = #tpu.dot_dimension_numbers<[1], [0], [0], [1], [0, 0, 1, 1], [], []>} : vector<16x8xf32>, vector<8x16xf32>, vector<16x16xf32> -> vector<16x16xf32>
    %c0_52 = arith.constant 0 : index
    %c0_53 = arith.constant 0 : index
    %58 = vector.load %arg4[%c0_52, %c0_53] : memref<1x16xf32, #tpu.memory_space<vmem>>, vector<1x16xf32>
    %59 = vector.broadcast %58 : vector<1x16xf32> to vector<16x16xf32>
    %60 = arith.addf %57, %59 : vector<16x16xf32>
    %61 = arith.addf %55, %60 : vector<16x16xf32>
    %c2_54 = arith.constant 2 : index
    %62 = memref.load %arg1[%c2_54] : memref<18xf32, #tpu.memory_space<smem>>
    %cst_55 = arith.constant 0.000000e+00 : f32
    %63 = vector.broadcast %cst_55 : f32 to vector<16x16xf32>
    %64 = arith.cmpf oge, %61, %63 : vector<16x16xf32>
    %65 = vector.broadcast %62 : f32 to vector<16x16xf32>
    %66 = arith.mulf %61, %65 : vector<16x16xf32>
    %67 = arith.select %64, %61, %66 : vector<16x16xi1>, vector<16x16xf32>
    %c8_56 = arith.constant 8 : index
    %c0_57 = arith.constant 0 : index
    %68 = vector.load %arg46[%c8_56, %c0_57] : memref<24x16xf32, #tpu.memory_space<vmem>>, vector<16x16xf32>
    tpu.vector_store %arg46[%c8_56, %c0_57], %67 {strides = array<i32>} : memref<24x16xf32, #tpu.memory_space<vmem>>, vector<16x16xf32>,
    %cst_58 = arith.constant 0.000000e+00 : f32
    %69 = vector.broadcast %cst_58 : f32 to vector<16x8xf32>
    %c0_59 = arith.constant 0 : index
    %c0_60 = arith.constant 0 : index
    %70 = vector.load %arg12[%c0_59, %c0_60] : memref<1x8xf32, #tpu.memory_space<vmem>>, vector<1x8xf32>
    %71 = vector.broadcast %70 : vector<1x8xf32> to vector<16x8xf32>
    %72 = arith.addf %69, %71 : vector<16x8xf32>
    %c4 = arith.constant 4 : index
    %c0_61 = arith.constant 0 : index
    %73 = vector.load %arg46[%c4, %c0_61] : memref<24x16xf32, #tpu.memory_space<vmem>>, vector<16x16xf32>
    %c0_62 = arith.constant 0 : index
    %c0_63 = arith.constant 0 : index
    %c0_64 = arith.constant 0 : index
    %74 = vector.load %arg11[%c0_62, %c0_63, %c0_64] : memref<3x16x8xf32, #tpu.memory_space<vmem>>, vector<1x16x8xf32>
    %75 = vector.shape_cast %74 : vector<1x16x8xf32> to vector<16x8xf32>
    %cst_65 = arith.constant dense<0.000000e+00> : vector<16x8xf32>
    %76 = tpu.matmul %73, %75, %cst_65 {dimension_numbers = #tpu.dot_dimension_numbers<[1], [0], [0], [1], [0, 0, 1, 1], [], []>} : vector<16x16xf32>, vector<16x8xf32>, vector<16x8xf32> -> vector<16x8xf32>
    %77 = arith.addf %72, %76 : vector<16x8xf32>
    %c6_66 = arith.constant 6 : index
    %c0_67 = arith.constant 0 : index
    %78 = vector.load %arg46[%c6_66, %c0_67] : memref<24x16xf32, #tpu.memory_space<vmem>>, vector<16x16xf32>
    %c1_68 = arith.constant 1 : index
    %c0_69 = arith.constant 0 : index
    %c0_70 = arith.constant 0 : index
    %79 = vector.load %arg11[%c1_68, %c0_69, %c0_70] : memref<3x16x8xf32, #tpu.memory_space<vmem>>, vector<1x16x8xf32>
    %80 = vector.shape_cast %79 : vector<1x16x8xf32> to vector<16x8xf32>
    %cst_71 = arith.constant dense<0.000000e+00> : vector<16x8xf32>
    %81 = tpu.matmul %78, %80, %cst_71 {dimension_numbers = #tpu.dot_dimension_numbers<[1], [0], [0], [1], [0, 0, 1, 1], [], []>} : vector<16x16xf32>, vector<16x8xf32>, vector<16x8xf32> -> vector<16x8xf32>
    %82 = arith.addf %77, %81 : vector<16x8xf32>
    %c8_72 = arith.constant 8 : index
    %c0_73 = arith.constant 0 : index
    %83 = vector.load %arg46[%c8_72, %c0_73] : memref<24x16xf32, #tpu.memory_space<vmem>>, vector<16x16xf32>
    %c2_74 = arith.constant 2 : index
    %c0_75 = arith.constant 0 : index
    %c0_76 = arith.constant 0 : index
    %84 = vector.load %arg11[%c2_74, %c0_75, %c0_76] : memref<3x16x8xf32, #tpu.memory_space<vmem>>, vector<1x16x8xf32>
    %85 = vector.shape_cast %84 : vector<1x16x8xf32> to vector<16x8xf32>
    %cst_77 = arith.constant dense<0.000000e+00> : vector<16x8xf32>
    %86 = tpu.matmul %83, %85, %cst_77 {dimension_numbers = #tpu.dot_dimension_numbers<[1], [0], [0], [1], [0, 0, 1, 1], [], []>} : vector<16x16xf32>, vector<16x8xf32>, vector<16x8xf32> -> vector<16x8xf32>
    %87 = arith.addf %82, %86 : vector<16x8xf32>
    %c3 = arith.constant 3 : index
    %88 = memref.load %arg1[%c3] : memref<18xf32, #tpu.memory_space<smem>>
    %cst_78 = arith.constant 0.000000e+00 : f32
    %89 = vector.broadcast %cst_78 : f32 to vector<16x8xf32>
    %90 = arith.cmpf oge, %87, %89 : vector<16x8xf32>
    %91 = vector.broadcast %88 : f32 to vector<16x8xf32>
    %92 = arith.mulf %87, %91 : vector<16x8xf32>
    %93 = arith.select %90, %87, %92 : vector<16x8xi1>, vector<16x8xf32>
    %c8_79 = arith.constant 8 : index
    %c0_80 = arith.constant 0 : index
    %94 = vector.load %arg46[%c8_79, %c0_80] : memref<24x16xf32, #tpu.memory_space<vmem>>, vector<16x8xf32>
    tpu.vector_store %arg46[%c8_79, %c0_80], %93 {strides = array<i32>} : memref<24x16xf32, #tpu.memory_space<vmem>>, vector<16x8xf32>,
    %cst_81 = arith.constant 0.000000e+00 : f32
    %95 = vector.broadcast %cst_81 : f32 to vector<16x8xf32>
    %c0_82 = arith.constant 0 : index
    %c0_83 = arith.constant 0 : index
    %96 = vector.load %arg14[%c0_82, %c0_83] : memref<1x8xf32, #tpu.memory_space<vmem>>, vector<1x8xf32>
    %97 = vector.broadcast %96 : vector<1x8xf32> to vector<16x8xf32>
    %98 = arith.addf %95, %97 : vector<16x8xf32>
    %c4_84 = arith.constant 4 : index
    %c0_85 = arith.constant 0 : index
    %99 = vector.load %arg46[%c4_84, %c0_85] : memref<24x16xf32, #tpu.memory_space<vmem>>, vector<16x8xf32>
    %c0_86 = arith.constant 0 : index
    %c0_87 = arith.constant 0 : index
    %c0_88 = arith.constant 0 : index
    %100 = vector.load %arg13[%c0_86, %c0_87, %c0_88] : memref<3x8x8xf32, #tpu.memory_space<vmem>>, vector<1x8x8xf32>
    %101 = vector.shape_cast %100 : vector<1x8x8xf32> to vector<8x8xf32>
    %cst_89 = arith.constant dense<0.000000e+00> : vector<16x8xf32>
    %102 = tpu.matmul %99, %101, %cst_89 {dimension_numbers = #tpu.dot_dimension_numbers<[1], [0], [0], [1], [0, 0, 1, 1], [], []>} : vector<16x8xf32>, vector<8x8xf32>, vector<16x8xf32> -> vector<16x8xf32>
    %103 = arith.addf %98, %102 : vector<16x8xf32>
    %c6_90 = arith.constant 6 : index
    %c0_91 = arith.constant 0 : index
    %104 = vector.load %arg46[%c6_90, %c0_91] : memref<24x16xf32, #tpu.memory_space<vmem>>, vector<16x8xf32>
    %c1_92 = arith.constant 1 : index
    %c0_93 = arith.constant 0 : index
    %c0_94 = arith.constant 0 : index
    %105 = vector.load %arg13[%c1_92, %c0_93, %c0_94] : memref<3x8x8xf32, #tpu.memory_space<vmem>>, vector<1x8x8xf32>
    %106 = vector.shape_cast %105 : vector<1x8x8xf32> to vector<8x8xf32>
    %cst_95 = arith.constant dense<0.000000e+00> : vector<16x8xf32>
    %107 = tpu.matmul %104, %106, %cst_95 {dimension_numbers = #tpu.dot_dimension_numbers<[1], [0], [0], [1], [0, 0, 1, 1], [], []>} : vector<16x8xf32>, vector<8x8xf32>, vector<16x8xf32> -> vector<16x8xf32>
    %108 = arith.addf %103, %107 : vector<16x8xf32>
    %c8_96 = arith.constant 8 : index
    %c0_97 = arith.constant 0 : index
    %109 = vector.load %arg46[%c8_96, %c0_97] : memref<24x16xf32, #tpu.memory_space<vmem>>, vector<16x8xf32>
    %c2_98 = arith.constant 2 : index
    %c0_99 = arith.constant 0 : index
    %c0_100 = arith.constant 0 : index
    %110 = vector.load %arg13[%c2_98, %c0_99, %c0_100] : memref<3x8x8xf32, #tpu.memory_space<vmem>>, vector<1x8x8xf32>
    %111 = vector.shape_cast %110 : vector<1x8x8xf32> to vector<8x8xf32>
    %cst_101 = arith.constant dense<0.000000e+00> : vector<16x8xf32>
    %112 = tpu.matmul %109, %111, %cst_101 {dimension_numbers = #tpu.dot_dimension_numbers<[1], [0], [0], [1], [0, 0, 1, 1], [], []>} : vector<16x8xf32>, vector<8x8xf32>, vector<16x8xf32> -> vector<16x8xf32>
    %113 = arith.addf %108, %112 : vector<16x8xf32>
    %c4_102 = arith.constant 4 : index
    %114 = memref.load %arg1[%c4_102] : memref<18xf32, #tpu.memory_space<smem>>
    %cst_103 = arith.constant 0.000000e+00 : f32
    %115 = vector.broadcast %cst_103 : f32 to vector<16x8xf32>
    %116 = arith.cmpf oge, %113, %115 : vector<16x8xf32>
    %117 = vector.broadcast %114 : f32 to vector<16x8xf32>
    %118 = arith.mulf %113, %117 : vector<16x8xf32>
    %119 = arith.select %116, %113, %118 : vector<16x8xi1>, vector<16x8xf32>
    %c0_104 = arith.constant 0 : index
    %c0_105 = arith.constant 0 : index
    %120 = vector.load %arg9[%c0_104, %c0_105] : memref<16x8xf32, #tpu.memory_space<vmem>>, vector<16x8xf32>
    %cst_106 = arith.constant dense<0.000000e+00> : vector<16x8xf32>
    %121 = tpu.matmul %67, %120, %cst_106 {dimension_numbers = #tpu.dot_dimension_numbers<[1], [0], [0], [1], [0, 0, 1, 1], [], []>} : vector<16x16xf32>, vector<16x8xf32>, vector<16x8xf32> -> vector<16x8xf32>
    %c0_107 = arith.constant 0 : index
    %c0_108 = arith.constant 0 : index
    %122 = vector.load %arg10[%c0_107, %c0_108] : memref<1x8xf32, #tpu.memory_space<vmem>>, vector<1x8xf32>
    %123 = vector.broadcast %122 : vector<1x8xf32> to vector<16x8xf32>
    %124 = arith.addf %121, %123 : vector<16x8xf32>
    %125 = arith.addf %119, %124 : vector<16x8xf32>
    %c5 = arith.constant 5 : index
    %126 = memref.load %arg1[%c5] : memref<18xf32, #tpu.memory_space<smem>>
    %cst_109 = arith.constant 0.000000e+00 : f32
    %127 = vector.broadcast %cst_109 : f32 to vector<16x8xf32>
    %128 = arith.cmpf oge, %125, %127 : vector<16x8xf32>
    %129 = vector.broadcast %126 : f32 to vector<16x8xf32>
    %130 = arith.mulf %125, %129 : vector<16x8xf32>
    %131 = arith.select %128, %125, %130 : vector<16x8xi1>, vector<16x8xf32>
    %cst_110 = arith.constant dense<0.000000e+00> : vector<8xf32>
    %132 = vector.multi_reduction <add>, %131, %cst_110 [0] : vector<16x8xf32> to vector<8xf32>
    %133 = vector.shape_cast %132 : vector<8xf32> to vector<1x8xf32>
    %cst_111 = arith.constant 1.600000e+01 : f32
    %134 = vector.broadcast %cst_111 : f32 to vector<1x8xf32>
    %135 = arith.divf %133, %134 : vector<1x8xf32>
    %136 = vector.broadcast %135 : vector<1x8xf32> to vector<16x8xf32>
    %137 = arith.subf %131, %136 : vector<16x8xf32>
    %138 = arith.mulf %137, %137 : vector<16x8xf32>
    %cst_112 = arith.constant dense<0.000000e+00> : vector<8xf32>
    %139 = vector.multi_reduction <add>, %138, %cst_112 [0] : vector<16x8xf32> to vector<8xf32>
    %140 = vector.shape_cast %139 : vector<8xf32> to vector<1x8xf32>
    %cst_113 = arith.constant 1.600000e+01 : f32
    %141 = vector.broadcast %cst_113 : f32 to vector<1x8xf32>
    %142 = arith.divf %140, %141 : vector<1x8xf32>
    %143 = vector.broadcast %135 : vector<1x8xf32> to vector<16x8xf32>
    %144 = arith.subf %131, %143 : vector<16x8xf32>
    %cst_114 = arith.constant 9.99999974E-6 : f32
    %145 = vector.broadcast %cst_114 : f32 to vector<1x8xf32>
    %146 = arith.addf %142, %145 : vector<1x8xf32>
    %147 = math.rsqrt %146 : vector<1x8xf32>
    %148 = vector.broadcast %147 : vector<1x8xf32> to vector<16x8xf32>
    %149 = arith.mulf %144, %148 : vector<16x8xf32>
    %c0_115 = arith.constant 0 : index
    %c0_116 = arith.constant 0 : index
    %150 = vector.load %arg15[%c0_115, %c0_116] : memref<1x8xf32, #tpu.memory_space<vmem>>, vector<1x8xf32>
    %151 = vector.broadcast %150 : vector<1x8xf32> to vector<16x8xf32>
    %152 = arith.mulf %149, %151 : vector<16x8xf32>
    %c0_117 = arith.constant 0 : index
    %c0_118 = arith.constant 0 : index
    %153 = vector.load %arg16[%c0_117, %c0_118] : memref<1x8xf32, #tpu.memory_space<vmem>>, vector<1x8xf32>
    %154 = vector.broadcast %153 : vector<1x8xf32> to vector<16x8xf32>
    %155 = arith.addf %152, %154 : vector<16x8xf32>
    %c8_119 = arith.constant 8 : index
    %c0_120 = arith.constant 0 : index
    %156 = vector.load %arg46[%c8_119, %c0_120] : memref<24x16xf32, #tpu.memory_space<vmem>>, vector<16x8xf32>
    tpu.vector_store %arg46[%c8_119, %c0_120], %155 {strides = array<i32>} : memref<24x16xf32, #tpu.memory_space<vmem>>, vector<16x8xf32>,
    %cst_121 = arith.constant 0.000000e+00 : f32
    %157 = vector.broadcast %cst_121 : f32 to vector<16x16xf32>
    %c0_122 = arith.constant 0 : index
    %c0_123 = arith.constant 0 : index
    %158 = vector.load %arg20[%c0_122, %c0_123] : memref<1x16xf32, #tpu.memory_space<vmem>>, vector<1x16xf32>
    %159 = vector.broadcast %158 : vector<1x16xf32> to vector<16x16xf32>
    %160 = arith.addf %157, %159 : vector<16x16xf32>
    %c6_124 = arith.constant 6 : index
    %c0_125 = arith.constant 0 : index
    %161 = vector.load %arg46[%c6_124, %c0_125] : memref<24x16xf32, #tpu.memory_space<vmem>>, vector<16x8xf32>
    %c0_126 = arith.constant 0 : index
    %c0_127 = arith.constant 0 : index
    %c0_128 = arith.constant 0 : index
    %162 = vector.load %arg19[%c0_126, %c0_127, %c0_128] : memref<3x8x16xf32, #tpu.memory_space<vmem>>, vector<1x8x16xf32>
    %163 = vector.shape_cast %162 : vector<1x8x16xf32> to vector<8x16xf32>
    %cst_129 = arith.constant dense<0.000000e+00> : vector<16x16xf32>
    %164 = tpu.matmul %161, %163, %cst_129 {dimension_numbers = #tpu.dot_dimension_numbers<[1], [0], [0], [1], [0, 0, 1, 1], [], []>} : vector<16x8xf32>, vector<8x16xf32>, vector<16x16xf32> -> vector<16x16xf32>
    %165 = arith.addf %160, %164 : vector<16x16xf32>
    %c7_130 = arith.constant 7 : index
    %c0_131 = arith.constant 0 : index
    %166 = vector.load %arg46[%c7_130, %c0_131] : memref<24x16xf32, #tpu.memory_space<vmem>>, vector<16x8xf32>
    %c1_132 = arith.constant 1 : index
    %c0_133 = arith.constant 0 : index
    %c0_134 = arith.constant 0 : index
    %167 = vector.load %arg19[%c1_132, %c0_133, %c0_134] : memref<3x8x16xf32, #tpu.memory_space<vmem>>, vector<1x8x16xf32>
    %168 = vector.shape_cast %167 : vector<1x8x16xf32> to vector<8x16xf32>
    %cst_135 = arith.constant dense<0.000000e+00> : vector<16x16xf32>
    %169 = tpu.matmul %166, %168, %cst_135 {dimension_numbers = #tpu.dot_dimension_numbers<[1], [0], [0], [1], [0, 0, 1, 1], [], []>} : vector<16x8xf32>, vector<8x16xf32>, vector<16x16xf32> -> vector<16x16xf32>
    %170 = arith.addf %165, %169 : vector<16x16xf32>
    %c8_136 = arith.constant 8 : index
    %c0_137 = arith.constant 0 : index
    %171 = vector.load %arg46[%c8_136, %c0_137] : memref<24x16xf32, #tpu.memory_space<vmem>>, vector<16x8xf32>
    %c2_138 = arith.constant 2 : index
    %c0_139 = arith.constant 0 : index
    %c0_140 = arith.constant 0 : index
    %172 = vector.load %arg19[%c2_138, %c0_139, %c0_140] : memref<3x8x16xf32, #tpu.memory_space<vmem>>, vector<1x8x16xf32>
    %173 = vector.shape_cast %172 : vector<1x8x16xf32> to vector<8x16xf32>
    %cst_141 = arith.constant dense<0.000000e+00> : vector<16x16xf32>
    %174 = tpu.matmul %171, %173, %cst_141 {dimension_numbers = #tpu.dot_dimension_numbers<[1], [0], [0], [1], [0, 0, 1, 1], [], []>} : vector<16x8xf32>, vector<8x16xf32>, vector<16x16xf32> -> vector<16x16xf32>
    %175 = arith.addf %170, %174 : vector<16x16xf32>
    %c6_142 = arith.constant 6 : index
    %176 = memref.load %arg1[%c6_142] : memref<18xf32, #tpu.memory_space<smem>>
    %cst_143 = arith.constant 0.000000e+00 : f32
    %177 = vector.broadcast %cst_143 : f32 to vector<16x16xf32>
    %178 = arith.cmpf oge, %175, %177 : vector<16x16xf32>
    %179 = vector.broadcast %176 : f32 to vector<16x16xf32>
    %180 = arith.mulf %175, %179 : vector<16x16xf32>
    %181 = arith.select %178, %175, %180 : vector<16x16xi1>, vector<16x16xf32>
    %c8_144 = arith.constant 8 : index
    %c0_145 = arith.constant 0 : index
    %182 = vector.load %arg46[%c8_144, %c0_145] : memref<24x16xf32, #tpu.memory_space<vmem>>, vector<16x16xf32>
    tpu.vector_store %arg46[%c8_144, %c0_145], %181 {strides = array<i32>} : memref<24x16xf32, #tpu.memory_space<vmem>>, vector<16x16xf32>,
    %cst_146 = arith.constant 0.000000e+00 : f32
    %183 = vector.broadcast %cst_146 : f32 to vector<16x16xf32>
    %c0_147 = arith.constant 0 : index
    %c0_148 = arith.constant 0 : index
    %184 = vector.load %arg22[%c0_147, %c0_148] : memref<1x16xf32, #tpu.memory_space<vmem>>, vector<1x16xf32>
    %185 = vector.broadcast %184 : vector<1x16xf32> to vector<16x16xf32>
    %186 = arith.addf %183, %185 : vector<16x16xf32>
    %c6_149 = arith.constant 6 : index
    %c0_150 = arith.constant 0 : index
    %187 = vector.load %arg46[%c6_149, %c0_150] : memref<24x16xf32, #tpu.memory_space<vmem>>, vector<16x16xf32>
    %c0_151 = arith.constant 0 : index
    %c0_152 = arith.constant 0 : index
    %c0_153 = arith.constant 0 : index
    %188 = vector.load %arg21[%c0_151, %c0_152, %c0_153] : memref<3x16x16xf32, #tpu.memory_space<vmem>>, vector<1x16x16xf32>
    %189 = vector.shape_cast %188 : vector<1x16x16xf32> to vector<16x16xf32>
    %cst_154 = arith.constant dense<0.000000e+00> : vector<16x16xf32>
    %190 = tpu.matmul %187, %189, %cst_154 {dimension_numbers = #tpu.dot_dimension_numbers<[1], [0], [0], [1], [0, 0, 1, 1], [], []>} : vector<16x16xf32>, vector<16x16xf32>, vector<16x16xf32> -> vector<16x16xf32>
    %191 = arith.addf %186, %190 : vector<16x16xf32>
    %c7_155 = arith.constant 7 : index
    %c0_156 = arith.constant 0 : index
    %192 = vector.load %arg46[%c7_155, %c0_156] : memref<24x16xf32, #tpu.memory_space<vmem>>, vector<16x16xf32>
    %c1_157 = arith.constant 1 : index
    %c0_158 = arith.constant 0 : index
    %c0_159 = arith.constant 0 : index
    %193 = vector.load %arg21[%c1_157, %c0_158, %c0_159] : memref<3x16x16xf32, #tpu.memory_space<vmem>>, vector<1x16x16xf32>
    %194 = vector.shape_cast %193 : vector<1x16x16xf32> to vector<16x16xf32>
    %cst_160 = arith.constant dense<0.000000e+00> : vector<16x16xf32>
    %195 = tpu.matmul %192, %194, %cst_160 {dimension_numbers = #tpu.dot_dimension_numbers<[1], [0], [0], [1], [0, 0, 1, 1], [], []>} : vector<16x16xf32>, vector<16x16xf32>, vector<16x16xf32> -> vector<16x16xf32>
    %196 = arith.addf %191, %195 : vector<16x16xf32>
    %c8_161 = arith.constant 8 : index
    %c0_162 = arith.constant 0 : index
    %197 = vector.load %arg46[%c8_161, %c0_162] : memref<24x16xf32, #tpu.memory_space<vmem>>, vector<16x16xf32>
    %c2_163 = arith.constant 2 : index
    %c0_164 = arith.constant 0 : index
    %c0_165 = arith.constant 0 : index
    %198 = vector.load %arg21[%c2_163, %c0_164, %c0_165] : memref<3x16x16xf32, #tpu.memory_space<vmem>>, vector<1x16x16xf32>
    %199 = vector.shape_cast %198 : vector<1x16x16xf32> to vector<16x16xf32>
    %cst_166 = arith.constant dense<0.000000e+00> : vector<16x16xf32>
    %200 = tpu.matmul %197, %199, %cst_166 {dimension_numbers = #tpu.dot_dimension_numbers<[1], [0], [0], [1], [0, 0, 1, 1], [], []>} : vector<16x16xf32>, vector<16x16xf32>, vector<16x16xf32> -> vector<16x16xf32>
    %201 = arith.addf %196, %200 : vector<16x16xf32>
    %c7_167 = arith.constant 7 : index
    %202 = memref.load %arg1[%c7_167] : memref<18xf32, #tpu.memory_space<smem>>
    %cst_168 = arith.constant 0.000000e+00 : f32
    %203 = vector.broadcast %cst_168 : f32 to vector<16x16xf32>
    %204 = arith.cmpf oge, %201, %203 : vector<16x16xf32>
    %205 = vector.broadcast %202 : f32 to vector<16x16xf32>
    %206 = arith.mulf %201, %205 : vector<16x16xf32>
    %207 = arith.select %204, %201, %206 : vector<16x16xi1>, vector<16x16xf32>
    %c0_169 = arith.constant 0 : index
    %c0_170 = arith.constant 0 : index
    %208 = vector.load %arg17[%c0_169, %c0_170] : memref<8x16xf32, #tpu.memory_space<vmem>>, vector<8x16xf32>
    %cst_171 = arith.constant dense<0.000000e+00> : vector<16x16xf32>
    %209 = tpu.matmul %155, %208, %cst_171 {dimension_numbers = #tpu.dot_dimension_numbers<[1], [0], [0], [1], [0, 0, 1, 1], [], []>} : vector<16x8xf32>, vector<8x16xf32>, vector<16x16xf32> -> vector<16x16xf32>
    %c0_172 = arith.constant 0 : index
    %c0_173 = arith.constant 0 : index
    %210 = vector.load %arg18[%c0_172, %c0_173] : memref<1x16xf32, #tpu.memory_space<vmem>>, vector<1x16xf32>
    %211 = vector.broadcast %210 : vector<1x16xf32> to vector<16x16xf32>
    %212 = arith.addf %209, %211 : vector<16x16xf32>
    %213 = arith.addf %207, %212 : vector<16x16xf32>
    %c8_174 = arith.constant 8 : index
    %214 = memref.load %arg1[%c8_174] : memref<18xf32, #tpu.memory_space<smem>>
    %cst_175 = arith.constant 0.000000e+00 : f32
    %215 = vector.broadcast %cst_175 : f32 to vector<16x16xf32>
    %216 = arith.cmpf oge, %213, %215 : vector<16x16xf32>
    %217 = vector.broadcast %214 : f32 to vector<16x16xf32>
    %218 = arith.mulf %213, %217 : vector<16x16xf32>
    %219 = arith.select %216, %213, %218 : vector<16x16xi1>, vector<16x16xf32>
    %c8_176 = arith.constant 8 : index
    %c0_177 = arith.constant 0 : index
    %220 = vector.load %arg46[%c8_176, %c0_177] : memref<24x16xf32, #tpu.memory_space<vmem>>, vector<16x16xf32>
    tpu.vector_store %arg46[%c8_176, %c0_177], %219 {strides = array<i32>} : memref<24x16xf32, #tpu.memory_space<vmem>>, vector<16x16xf32>,
    %cst_178 = arith.constant 0.000000e+00 : f32
    %221 = vector.broadcast %cst_178 : f32 to vector<16x8xf32>
    %c0_179 = arith.constant 0 : index
    %c0_180 = arith.constant 0 : index
    %222 = vector.load %arg26[%c0_179, %c0_180] : memref<1x8xf32, #tpu.memory_space<vmem>>, vector<1x8xf32>
    %223 = vector.broadcast %222 : vector<1x8xf32> to vector<16x8xf32>
    %224 = arith.addf %221, %223 : vector<16x8xf32>
    %c4_181 = arith.constant 4 : index
    %c0_182 = arith.constant 0 : index
    %225 = vector.load %arg46[%c4_181, %c0_182] : memref<24x16xf32, #tpu.memory_space<vmem>>, vector<16x16xf32>
    %c0_183 = arith.constant 0 : index
    %c0_184 = arith.constant 0 : index
    %c0_185 = arith.constant 0 : index
    %226 = vector.load %arg25[%c0_183, %c0_184, %c0_185] : memref<3x16x8xf32, #tpu.memory_space<vmem>>, vector<1x16x8xf32>
    %227 = vector.shape_cast %226 : vector<1x16x8xf32> to vector<16x8xf32>
    %cst_186 = arith.constant dense<0.000000e+00> : vector<16x8xf32>
    %228 = tpu.matmul %225, %227, %cst_186 {dimension_numbers = #tpu.dot_dimension_numbers<[1], [0], [0], [1], [0, 0, 1, 1], [], []>} : vector<16x16xf32>, vector<16x8xf32>, vector<16x8xf32> -> vector<16x8xf32>
    %229 = arith.addf %224, %228 : vector<16x8xf32>
    %c6_187 = arith.constant 6 : index
    %c0_188 = arith.constant 0 : index
    %230 = vector.load %arg46[%c6_187, %c0_188] : memref<24x16xf32, #tpu.memory_space<vmem>>, vector<16x16xf32>
    %c1_189 = arith.constant 1 : index
    %c0_190 = arith.constant 0 : index
    %c0_191 = arith.constant 0 : index
    %231 = vector.load %arg25[%c1_189, %c0_190, %c0_191] : memref<3x16x8xf32, #tpu.memory_space<vmem>>, vector<1x16x8xf32>
    %232 = vector.shape_cast %231 : vector<1x16x8xf32> to vector<16x8xf32>
    %cst_192 = arith.constant dense<0.000000e+00> : vector<16x8xf32>
    %233 = tpu.matmul %230, %232, %cst_192 {dimension_numbers = #tpu.dot_dimension_numbers<[1], [0], [0], [1], [0, 0, 1, 1], [], []>} : vector<16x16xf32>, vector<16x8xf32>, vector<16x8xf32> -> vector<16x8xf32>
    %234 = arith.addf %229, %233 : vector<16x8xf32>
    %c8_193 = arith.constant 8 : index
    %c0_194 = arith.constant 0 : index
    %235 = vector.load %arg46[%c8_193, %c0_194] : memref<24x16xf32, #tpu.memory_space<vmem>>, vector<16x16xf32>
    %c2_195 = arith.constant 2 : index
    %c0_196 = arith.constant 0 : index
    %c0_197 = arith.constant 0 : index
    %236 = vector.load %arg25[%c2_195, %c0_196, %c0_197] : memref<3x16x8xf32, #tpu.memory_space<vmem>>, vector<1x16x8xf32>
    %237 = vector.shape_cast %236 : vector<1x16x8xf32> to vector<16x8xf32>
    %cst_198 = arith.constant dense<0.000000e+00> : vector<16x8xf32>
    %238 = tpu.matmul %235, %237, %cst_198 {dimension_numbers = #tpu.dot_dimension_numbers<[1], [0], [0], [1], [0, 0, 1, 1], [], []>} : vector<16x16xf32>, vector<16x8xf32>, vector<16x8xf32> -> vector<16x8xf32>
    %239 = arith.addf %234, %238 : vector<16x8xf32>
    %c9 = arith.constant 9 : index
    %240 = memref.load %arg1[%c9] : memref<18xf32, #tpu.memory_space<smem>>
    %cst_199 = arith.constant 0.000000e+00 : f32
    %241 = vector.broadcast %cst_199 : f32 to vector<16x8xf32>
    %242 = arith.cmpf oge, %239, %241 : vector<16x8xf32>
    %243 = vector.broadcast %240 : f32 to vector<16x8xf32>
    %244 = arith.mulf %239, %243 : vector<16x8xf32>
    %245 = arith.select %242, %239, %244 : vector<16x8xi1>, vector<16x8xf32>
    %c8_200 = arith.constant 8 : index
    %c0_201 = arith.constant 0 : index
    %246 = vector.load %arg46[%c8_200, %c0_201] : memref<24x16xf32, #tpu.memory_space<vmem>>, vector<16x8xf32>
    tpu.vector_store %arg46[%c8_200, %c0_201], %245 {strides = array<i32>} : memref<24x16xf32, #tpu.memory_space<vmem>>, vector<16x8xf32>,
    %cst_202 = arith.constant 0.000000e+00 : f32
    %247 = vector.broadcast %cst_202 : f32 to vector<16x8xf32>
    %c0_203 = arith.constant 0 : index
    %c0_204 = arith.constant 0 : index
    %248 = vector.load %arg28[%c0_203, %c0_204] : memref<1x8xf32, #tpu.memory_space<vmem>>, vector<1x8xf32>
    %249 = vector.broadcast %248 : vector<1x8xf32> to vector<16x8xf32>
    %250 = arith.addf %247, %249 : vector<16x8xf32>
    %c4_205 = arith.constant 4 : index
    %c0_206 = arith.constant 0 : index
    %251 = vector.load %arg46[%c4_205, %c0_206] : memref<24x16xf32, #tpu.memory_space<vmem>>, vector<16x8xf32>
    %c0_207 = arith.constant 0 : index
    %c0_208 = arith.constant 0 : index
    %c0_209 = arith.constant 0 : index
    %252 = vector.load %arg27[%c0_207, %c0_208, %c0_209] : memref<3x8x8xf32, #tpu.memory_space<vmem>>, vector<1x8x8xf32>
    %253 = vector.shape_cast %252 : vector<1x8x8xf32> to vector<8x8xf32>
    %cst_210 = arith.constant dense<0.000000e+00> : vector<16x8xf32>
    %254 = tpu.matmul %251, %253, %cst_210 {dimension_numbers = #tpu.dot_dimension_numbers<[1], [0], [0], [1], [0, 0, 1, 1], [], []>} : vector<16x8xf32>, vector<8x8xf32>, vector<16x8xf32> -> vector<16x8xf32>
    %255 = arith.addf %250, %254 : vector<16x8xf32>
    %c6_211 = arith.constant 6 : index
    %c0_212 = arith.constant 0 : index
    %256 = vector.load %arg46[%c6_211, %c0_212] : memref<24x16xf32, #tpu.memory_space<vmem>>, vector<16x8xf32>
    %c1_213 = arith.constant 1 : index
    %c0_214 = arith.constant 0 : index
    %c0_215 = arith.constant 0 : index
    %257 = vector.load %arg27[%c1_213, %c0_214, %c0_215] : memref<3x8x8xf32, #tpu.memory_space<vmem>>, vector<1x8x8xf32>
    %258 = vector.shape_cast %257 : vector<1x8x8xf32> to vector<8x8xf32>
    %cst_216 = arith.constant dense<0.000000e+00> : vector<16x8xf32>
    %259 = tpu.matmul %256, %258, %cst_216 {dimension_numbers = #tpu.dot_dimension_numbers<[1], [0], [0], [1], [0, 0, 1, 1], [], []>} : vector<16x8xf32>, vector<8x8xf32>, vector<16x8xf32> -> vector<16x8xf32>
    %260 = arith.addf %255, %259 : vector<16x8xf32>
    %c8_217 = arith.constant 8 : index
    %c0_218 = arith.constant 0 : index
    %261 = vector.load %arg46[%c8_217, %c0_218] : memref<24x16xf32, #tpu.memory_space<vmem>>, vector<16x8xf32>
    %c2_219 = arith.constant 2 : index
    %c0_220 = arith.constant 0 : index
    %c0_221 = arith.constant 0 : index
    %262 = vector.load %arg27[%c2_219, %c0_220, %c0_221] : memref<3x8x8xf32, #tpu.memory_space<vmem>>, vector<1x8x8xf32>
    %263 = vector.shape_cast %262 : vector<1x8x8xf32> to vector<8x8xf32>
    %cst_222 = arith.constant dense<0.000000e+00> : vector<16x8xf32>
    %264 = tpu.matmul %261, %263, %cst_222 {dimension_numbers = #tpu.dot_dimension_numbers<[1], [0], [0], [1], [0, 0, 1, 1], [], []>} : vector<16x8xf32>, vector<8x8xf32>, vector<16x8xf32> -> vector<16x8xf32>
    %265 = arith.addf %260, %264 : vector<16x8xf32>
    %c10 = arith.constant 10 : index
    %266 = memref.load %arg1[%c10] : memref<18xf32, #tpu.memory_space<smem>>
    %cst_223 = arith.constant 0.000000e+00 : f32
    %267 = vector.broadcast %cst_223 : f32 to vector<16x8xf32>
    %268 = arith.cmpf oge, %265, %267 : vector<16x8xf32>
    %269 = vector.broadcast %266 : f32 to vector<16x8xf32>
    %270 = arith.mulf %265, %269 : vector<16x8xf32>
    %271 = arith.select %268, %265, %270 : vector<16x8xi1>, vector<16x8xf32>
    %c0_224 = arith.constant 0 : index
    %c0_225 = arith.constant 0 : index
    %272 = vector.load %arg23[%c0_224, %c0_225] : memref<16x8xf32, #tpu.memory_space<vmem>>, vector<16x8xf32>
    %cst_226 = arith.constant dense<0.000000e+00> : vector<16x8xf32>
    %273 = tpu.matmul %219, %272, %cst_226 {dimension_numbers = #tpu.dot_dimension_numbers<[1], [0], [0], [1], [0, 0, 1, 1], [], []>} : vector<16x16xf32>, vector<16x8xf32>, vector<16x8xf32> -> vector<16x8xf32>
    %c0_227 = arith.constant 0 : index
    %c0_228 = arith.constant 0 : index
    %274 = vector.load %arg24[%c0_227, %c0_228] : memref<1x8xf32, #tpu.memory_space<vmem>>, vector<1x8xf32>
    %275 = vector.broadcast %274 : vector<1x8xf32> to vector<16x8xf32>
    %276 = arith.addf %273, %275 : vector<16x8xf32>
    %277 = arith.addf %271, %276 : vector<16x8xf32>
    %c11 = arith.constant 11 : index
    %278 = memref.load %arg1[%c11] : memref<18xf32, #tpu.memory_space<smem>>
    %cst_229 = arith.constant 0.000000e+00 : f32
    %279 = vector.broadcast %cst_229 : f32 to vector<16x8xf32>
    %280 = arith.cmpf oge, %277, %279 : vector<16x8xf32>
    %281 = vector.broadcast %278 : f32 to vector<16x8xf32>
    %282 = arith.mulf %277, %281 : vector<16x8xf32>
    %283 = arith.select %280, %277, %282 : vector<16x8xi1>, vector<16x8xf32>
    %cst_230 = arith.constant dense<0.000000e+00> : vector<8xf32>
    %284 = vector.multi_reduction <add>, %283, %cst_230 [0] : vector<16x8xf32> to vector<8xf32>
    %285 = vector.shape_cast %284 : vector<8xf32> to vector<1x8xf32>
    %cst_231 = arith.constant 1.600000e+01 : f32
    %286 = vector.broadcast %cst_231 : f32 to vector<1x8xf32>
    %287 = arith.divf %285, %286 : vector<1x8xf32>
    %288 = vector.broadcast %287 : vector<1x8xf32> to vector<16x8xf32>
    %289 = arith.subf %283, %288 : vector<16x8xf32>
    %290 = arith.mulf %289, %289 : vector<16x8xf32>
    %cst_232 = arith.constant dense<0.000000e+00> : vector<8xf32>
    %291 = vector.multi_reduction <add>, %290, %cst_232 [0] : vector<16x8xf32> to vector<8xf32>
    %292 = vector.shape_cast %291 : vector<8xf32> to vector<1x8xf32>
    %cst_233 = arith.constant 1.600000e+01 : f32
    %293 = vector.broadcast %cst_233 : f32 to vector<1x8xf32>
    %294 = arith.divf %292, %293 : vector<1x8xf32>
    %295 = vector.broadcast %287 : vector<1x8xf32> to vector<16x8xf32>
    %296 = arith.subf %283, %295 : vector<16x8xf32>
    %cst_234 = arith.constant 9.99999974E-6 : f32
    %297 = vector.broadcast %cst_234 : f32 to vector<1x8xf32>
    %298 = arith.addf %294, %297 : vector<1x8xf32>
    %299 = math.rsqrt %298 : vector<1x8xf32>
    %300 = vector.broadcast %299 : vector<1x8xf32> to vector<16x8xf32>
    %301 = arith.mulf %296, %300 : vector<16x8xf32>
    %c0_235 = arith.constant 0 : index
    %c0_236 = arith.constant 0 : index
    %302 = vector.load %arg29[%c0_235, %c0_236] : memref<1x8xf32, #tpu.memory_space<vmem>>, vector<1x8xf32>
    %303 = vector.broadcast %302 : vector<1x8xf32> to vector<16x8xf32>
    %304 = arith.mulf %301, %303 : vector<16x8xf32>
    %c0_237 = arith.constant 0 : index
    %c0_238 = arith.constant 0 : index
    %305 = vector.load %arg30[%c0_237, %c0_238] : memref<1x8xf32, #tpu.memory_space<vmem>>, vector<1x8xf32>
    %306 = vector.broadcast %305 : vector<1x8xf32> to vector<16x8xf32>
    %307 = arith.addf %304, %306 : vector<16x8xf32>
    %c8_239 = arith.constant 8 : index
    %c0_240 = arith.constant 0 : index
    %308 = vector.load %arg46[%c8_239, %c0_240] : memref<24x16xf32, #tpu.memory_space<vmem>>, vector<16x8xf32>
    tpu.vector_store %arg46[%c8_239, %c0_240], %307 {strides = array<i32>} : memref<24x16xf32, #tpu.memory_space<vmem>>, vector<16x8xf32>,
    %cst_241 = arith.constant 0.000000e+00 : f32
    %309 = vector.broadcast %cst_241 : f32 to vector<16x16xf32>
    %c0_242 = arith.constant 0 : index
    %c0_243 = arith.constant 0 : index
    %310 = vector.load %arg34[%c0_242, %c0_243] : memref<1x16xf32, #tpu.memory_space<vmem>>, vector<1x16xf32>
    %311 = vector.broadcast %310 : vector<1x16xf32> to vector<16x16xf32>
    %312 = arith.addf %309, %311 : vector<16x16xf32>
    %c6_244 = arith.constant 6 : index
    %c0_245 = arith.constant 0 : index
    %313 = vector.load %arg46[%c6_244, %c0_245] : memref<24x16xf32, #tpu.memory_space<vmem>>, vector<16x8xf32>
    %c0_246 = arith.constant 0 : index
    %c0_247 = arith.constant 0 : index
    %c0_248 = arith.constant 0 : index
    %314 = vector.load %arg33[%c0_246, %c0_247, %c0_248] : memref<3x8x16xf32, #tpu.memory_space<vmem>>, vector<1x8x16xf32>
    %315 = vector.shape_cast %314 : vector<1x8x16xf32> to vector<8x16xf32>
    %cst_249 = arith.constant dense<0.000000e+00> : vector<16x16xf32>
    %316 = tpu.matmul %313, %315, %cst_249 {dimension_numbers = #tpu.dot_dimension_numbers<[1], [0], [0], [1], [0, 0, 1, 1], [], []>} : vector<16x8xf32>, vector<8x16xf32>, vector<16x16xf32> -> vector<16x16xf32>
    %317 = arith.addf %312, %316 : vector<16x16xf32>
    %c7_250 = arith.constant 7 : index
    %c0_251 = arith.constant 0 : index
    %318 = vector.load %arg46[%c7_250, %c0_251] : memref<24x16xf32, #tpu.memory_space<vmem>>, vector<16x8xf32>
    %c1_252 = arith.constant 1 : index
    %c0_253 = arith.constant 0 : index
    %c0_254 = arith.constant 0 : index
    %319 = vector.load %arg33[%c1_252, %c0_253, %c0_254] : memref<3x8x16xf32, #tpu.memory_space<vmem>>, vector<1x8x16xf32>
    %320 = vector.shape_cast %319 : vector<1x8x16xf32> to vector<8x16xf32>
    %cst_255 = arith.constant dense<0.000000e+00> : vector<16x16xf32>
    %321 = tpu.matmul %318, %320, %cst_255 {dimension_numbers = #tpu.dot_dimension_numbers<[1], [0], [0], [1], [0, 0, 1, 1], [], []>} : vector<16x8xf32>, vector<8x16xf32>, vector<16x16xf32> -> vector<16x16xf32>
    %322 = arith.addf %317, %321 : vector<16x16xf32>
    %c8_256 = arith.constant 8 : index
    %c0_257 = arith.constant 0 : index
    %323 = vector.load %arg46[%c8_256, %c0_257] : memref<24x16xf32, #tpu.memory_space<vmem>>, vector<16x8xf32>
    %c2_258 = arith.constant 2 : index
    %c0_259 = arith.constant 0 : index
    %c0_260 = arith.constant 0 : index
    %324 = vector.load %arg33[%c2_258, %c0_259, %c0_260] : memref<3x8x16xf32, #tpu.memory_space<vmem>>, vector<1x8x16xf32>
    %325 = vector.shape_cast %324 : vector<1x8x16xf32> to vector<8x16xf32>
    %cst_261 = arith.constant dense<0.000000e+00> : vector<16x16xf32>
    %326 = tpu.matmul %323, %325, %cst_261 {dimension_numbers = #tpu.dot_dimension_numbers<[1], [0], [0], [1], [0, 0, 1, 1], [], []>} : vector<16x8xf32>, vector<8x16xf32>, vector<16x16xf32> -> vector<16x16xf32>
    %327 = arith.addf %322, %326 : vector<16x16xf32>
    %c12 = arith.constant 12 : index
    %328 = memref.load %arg1[%c12] : memref<18xf32, #tpu.memory_space<smem>>
    %cst_262 = arith.constant 0.000000e+00 : f32
    %329 = vector.broadcast %cst_262 : f32 to vector<16x16xf32>
    %330 = arith.cmpf oge, %327, %329 : vector<16x16xf32>
    %331 = vector.broadcast %328 : f32 to vector<16x16xf32>
    %332 = arith.mulf %327, %331 : vector<16x16xf32>
    %333 = arith.select %330, %327, %332 : vector<16x16xi1>, vector<16x16xf32>
    %c8_263 = arith.constant 8 : index
    %c0_264 = arith.constant 0 : index
    %334 = vector.load %arg46[%c8_263, %c0_264] : memref<24x16xf32, #tpu.memory_space<vmem>>, vector<16x16xf32>
    tpu.vector_store %arg46[%c8_263, %c0_264], %333 {strides = array<i32>} : memref<24x16xf32, #tpu.memory_space<vmem>>, vector<16x16xf32>,
    %cst_265 = arith.constant 0.000000e+00 : f32
    %335 = vector.broadcast %cst_265 : f32 to vector<16x16xf32>
    %c0_266 = arith.constant 0 : index
    %c0_267 = arith.constant 0 : index
    %336 = vector.load %arg36[%c0_266, %c0_267] : memref<1x16xf32, #tpu.memory_space<vmem>>, vector<1x16xf32>
    %337 = vector.broadcast %336 : vector<1x16xf32> to vector<16x16xf32>
    %338 = arith.addf %335, %337 : vector<16x16xf32>
    %c6_268 = arith.constant 6 : index
    %c0_269 = arith.constant 0 : index
    %339 = vector.load %arg46[%c6_268, %c0_269] : memref<24x16xf32, #tpu.memory_space<vmem>>, vector<16x16xf32>
    %c0_270 = arith.constant 0 : index
    %c0_271 = arith.constant 0 : index
    %c0_272 = arith.constant 0 : index
    %340 = vector.load %arg35[%c0_270, %c0_271, %c0_272] : memref<3x16x16xf32, #tpu.memory_space<vmem>>, vector<1x16x16xf32>
    %341 = vector.shape_cast %340 : vector<1x16x16xf32> to vector<16x16xf32>
    %cst_273 = arith.constant dense<0.000000e+00> : vector<16x16xf32>
    %342 = tpu.matmul %339, %341, %cst_273 {dimension_numbers = #tpu.dot_dimension_numbers<[1], [0], [0], [1], [0, 0, 1, 1], [], []>} : vector<16x16xf32>, vector<16x16xf32>, vector<16x16xf32> -> vector<16x16xf32>
    %343 = arith.addf %338, %342 : vector<16x16xf32>
    %c7_274 = arith.constant 7 : index
    %c0_275 = arith.constant 0 : index
    %344 = vector.load %arg46[%c7_274, %c0_275] : memref<24x16xf32, #tpu.memory_space<vmem>>, vector<16x16xf32>
    %c1_276 = arith.constant 1 : index
    %c0_277 = arith.constant 0 : index
    %c0_278 = arith.constant 0 : index
    %345 = vector.load %arg35[%c1_276, %c0_277, %c0_278] : memref<3x16x16xf32, #tpu.memory_space<vmem>>, vector<1x16x16xf32>
    %346 = vector.shape_cast %345 : vector<1x16x16xf32> to vector<16x16xf32>
    %cst_279 = arith.constant dense<0.000000e+00> : vector<16x16xf32>
    %347 = tpu.matmul %344, %346, %cst_279 {dimension_numbers = #tpu.dot_dimension_numbers<[1], [0], [0], [1], [0, 0, 1, 1], [], []>} : vector<16x16xf32>, vector<16x16xf32>, vector<16x16xf32> -> vector<16x16xf32>
    %348 = arith.addf %343, %347 : vector<16x16xf32>
    %c8_280 = arith.constant 8 : index
    %c0_281 = arith.constant 0 : index
    %349 = vector.load %arg46[%c8_280, %c0_281] : memref<24x16xf32, #tpu.memory_space<vmem>>, vector<16x16xf32>
    %c2_282 = arith.constant 2 : index
    %c0_283 = arith.constant 0 : index
    %c0_284 = arith.constant 0 : index
    %350 = vector.load %arg35[%c2_282, %c0_283, %c0_284] : memref<3x16x16xf32, #tpu.memory_space<vmem>>, vector<1x16x16xf32>
    %351 = vector.shape_cast %350 : vector<1x16x16xf32> to vector<16x16xf32>
    %cst_285 = arith.constant dense<0.000000e+00> : vector<16x16xf32>
    %352 = tpu.matmul %349, %351, %cst_285 {dimension_numbers = #tpu.dot_dimension_numbers<[1], [0], [0], [1], [0, 0, 1, 1], [], []>} : vector<16x16xf32>, vector<16x16xf32>, vector<16x16xf32> -> vector<16x16xf32>
    %353 = arith.addf %348, %352 : vector<16x16xf32>
    %c13 = arith.constant 13 : index
    %354 = memref.load %arg1[%c13] : memref<18xf32, #tpu.memory_space<smem>>
    %cst_286 = arith.constant 0.000000e+00 : f32
    %355 = vector.broadcast %cst_286 : f32 to vector<16x16xf32>
    %356 = arith.cmpf oge, %353, %355 : vector<16x16xf32>
    %357 = vector.broadcast %354 : f32 to vector<16x16xf32>
    %358 = arith.mulf %353, %357 : vector<16x16xf32>
    %359 = arith.select %356, %353, %358 : vector<16x16xi1>, vector<16x16xf32>
    %c0_287 = arith.constant 0 : index
    %c0_288 = arith.constant 0 : index
    %360 = vector.load %arg31[%c0_287, %c0_288] : memref<8x16xf32, #tpu.memory_space<vmem>>, vector<8x16xf32>
    %cst_289 = arith.constant dense<0.000000e+00> : vector<16x16xf32>
    %361 = tpu.matmul %307, %360, %cst_289 {dimension_numbers = #tpu.dot_dimension_numbers<[1], [0], [0], [1], [0, 0, 1, 1], [], []>} : vector<16x8xf32>, vector<8x16xf32>, vector<16x16xf32> -> vector<16x16xf32>
    %c0_290 = arith.constant 0 : index
    %c0_291 = arith.constant 0 : index
    %362 = vector.load %arg32[%c0_290, %c0_291] : memref<1x16xf32, #tpu.memory_space<vmem>>, vector<1x16xf32>
    %363 = vector.broadcast %362 : vector<1x16xf32> to vector<16x16xf32>
    %364 = arith.addf %361, %363 : vector<16x16xf32>
    %365 = arith.addf %359, %364 : vector<16x16xf32>
    %c14 = arith.constant 14 : index
    %366 = memref.load %arg1[%c14] : memref<18xf32, #tpu.memory_space<smem>>
    %cst_292 = arith.constant 0.000000e+00 : f32
    %367 = vector.broadcast %cst_292 : f32 to vector<16x16xf32>
    %368 = arith.cmpf oge, %365, %367 : vector<16x16xf32>
    %369 = vector.broadcast %366 : f32 to vector<16x16xf32>
    %370 = arith.mulf %365, %369 : vector<16x16xf32>
    %371 = arith.select %368, %365, %370 : vector<16x16xi1>, vector<16x16xf32>
    %c8_293 = arith.constant 8 : index
    %c0_294 = arith.constant 0 : index
    %372 = vector.load %arg46[%c8_293, %c0_294] : memref<24x16xf32, #tpu.memory_space<vmem>>, vector<16x16xf32>
    tpu.vector_store %arg46[%c8_293, %c0_294], %371 {strides = array<i32>} : memref<24x16xf32, #tpu.memory_space<vmem>>, vector<16x16xf32>,
    %cst_295 = arith.constant 0.000000e+00 : f32
    %373 = vector.broadcast %cst_295 : f32 to vector<16x8xf32>
    %c0_296 = arith.constant 0 : index
    %c0_297 = arith.constant 0 : index
    %374 = vector.load %arg40[%c0_296, %c0_297] : memref<1x8xf32, #tpu.memory_space<vmem>>, vector<1x8xf32>
    %375 = vector.broadcast %374 : vector<1x8xf32> to vector<16x8xf32>
    %376 = arith.addf %373, %375 : vector<16x8xf32>
    %c4_298 = arith.constant 4 : index
    %c0_299 = arith.constant 0 : index
    %377 = vector.load %arg46[%c4_298, %c0_299] : memref<24x16xf32, #tpu.memory_space<vmem>>, vector<16x16xf32>
    %c0_300 = arith.constant 0 : index
    %c0_301 = arith.constant 0 : index
    %c0_302 = arith.constant 0 : index
    %378 = vector.load %arg39[%c0_300, %c0_301, %c0_302] : memref<3x16x8xf32, #tpu.memory_space<vmem>>, vector<1x16x8xf32>
    %379 = vector.shape_cast %378 : vector<1x16x8xf32> to vector<16x8xf32>
    %cst_303 = arith.constant dense<0.000000e+00> : vector<16x8xf32>
    %380 = tpu.matmul %377, %379, %cst_303 {dimension_numbers = #tpu.dot_dimension_numbers<[1], [0], [0], [1], [0, 0, 1, 1], [], []>} : vector<16x16xf32>, vector<16x8xf32>, vector<16x8xf32> -> vector<16x8xf32>
    %381 = arith.addf %376, %380 : vector<16x8xf32>
    %c6_304 = arith.constant 6 : index
    %c0_305 = arith.constant 0 : index
    %382 = vector.load %arg46[%c6_304, %c0_305] : memref<24x16xf32, #tpu.memory_space<vmem>>, vector<16x16xf32>
    %c1_306 = arith.constant 1 : index
    %c0_307 = arith.constant 0 : index
    %c0_308 = arith.constant 0 : index
    %383 = vector.load %arg39[%c1_306, %c0_307, %c0_308] : memref<3x16x8xf32, #tpu.memory_space<vmem>>, vector<1x16x8xf32>
    %384 = vector.shape_cast %383 : vector<1x16x8xf32> to vector<16x8xf32>
    %cst_309 = arith.constant dense<0.000000e+00> : vector<16x8xf32>
    %385 = tpu.matmul %382, %384, %cst_309 {dimension_numbers = #tpu.dot_dimension_numbers<[1], [0], [0], [1], [0, 0, 1, 1], [], []>} : vector<16x16xf32>, vector<16x8xf32>, vector<16x8xf32> -> vector<16x8xf32>
    %386 = arith.addf %381, %385 : vector<16x8xf32>
    %c8_310 = arith.constant 8 : index
    %c0_311 = arith.constant 0 : index
    %387 = vector.load %arg46[%c8_310, %c0_311] : memref<24x16xf32, #tpu.memory_space<vmem>>, vector<16x16xf32>
    %c2_312 = arith.constant 2 : index
    %c0_313 = arith.constant 0 : index
    %c0_314 = arith.constant 0 : index
    %388 = vector.load %arg39[%c2_312, %c0_313, %c0_314] : memref<3x16x8xf32, #tpu.memory_space<vmem>>, vector<1x16x8xf32>
    %389 = vector.shape_cast %388 : vector<1x16x8xf32> to vector<16x8xf32>
    %cst_315 = arith.constant dense<0.000000e+00> : vector<16x8xf32>
    %390 = tpu.matmul %387, %389, %cst_315 {dimension_numbers = #tpu.dot_dimension_numbers<[1], [0], [0], [1], [0, 0, 1, 1], [], []>} : vector<16x16xf32>, vector<16x8xf32>, vector<16x8xf32> -> vector<16x8xf32>
    %391 = arith.addf %386, %390 : vector<16x8xf32>
    %c15 = arith.constant 15 : index
    %392 = memref.load %arg1[%c15] : memref<18xf32, #tpu.memory_space<smem>>
    %cst_316 = arith.constant 0.000000e+00 : f32
    %393 = vector.broadcast %cst_316 : f32 to vector<16x8xf32>
    %394 = arith.cmpf oge, %391, %393 : vector<16x8xf32>
    %395 = vector.broadcast %392 : f32 to vector<16x8xf32>
    %396 = arith.mulf %391, %395 : vector<16x8xf32>
    %397 = arith.select %394, %391, %396 : vector<16x8xi1>, vector<16x8xf32>
    %c8_317 = arith.constant 8 : index
    %c0_318 = arith.constant 0 : index
    %398 = vector.load %arg46[%c8_317, %c0_318] : memref<24x16xf32, #tpu.memory_space<vmem>>, vector<16x8xf32>
    tpu.vector_store %arg46[%c8_317, %c0_318], %397 {strides = array<i32>} : memref<24x16xf32, #tpu.memory_space<vmem>>, vector<16x8xf32>,
    %cst_319 = arith.constant 0.000000e+00 : f32
    %399 = vector.broadcast %cst_319 : f32 to vector<16x8xf32>
    %c0_320 = arith.constant 0 : index
    %c0_321 = arith.constant 0 : index
    %400 = vector.load %arg42[%c0_320, %c0_321] : memref<1x8xf32, #tpu.memory_space<vmem>>, vector<1x8xf32>
    %401 = vector.broadcast %400 : vector<1x8xf32> to vector<16x8xf32>
    %402 = arith.addf %399, %401 : vector<16x8xf32>
    %c4_322 = arith.constant 4 : index
    %c0_323 = arith.constant 0 : index
    %403 = vector.load %arg46[%c4_322, %c0_323] : memref<24x16xf32, #tpu.memory_space<vmem>>, vector<16x8xf32>
    %c0_324 = arith.constant 0 : index
    %c0_325 = arith.constant 0 : index
    %c0_326 = arith.constant 0 : index
    %404 = vector.load %arg41[%c0_324, %c0_325, %c0_326] : memref<3x8x8xf32, #tpu.memory_space<vmem>>, vector<1x8x8xf32>
    %405 = vector.shape_cast %404 : vector<1x8x8xf32> to vector<8x8xf32>
    %cst_327 = arith.constant dense<0.000000e+00> : vector<16x8xf32>
    %406 = tpu.matmul %403, %405, %cst_327 {dimension_numbers = #tpu.dot_dimension_numbers<[1], [0], [0], [1], [0, 0, 1, 1], [], []>} : vector<16x8xf32>, vector<8x8xf32>, vector<16x8xf32> -> vector<16x8xf32>
    %407 = arith.addf %402, %406 : vector<16x8xf32>
    %c6_328 = arith.constant 6 : index
    %c0_329 = arith.constant 0 : index
    %408 = vector.load %arg46[%c6_328, %c0_329] : memref<24x16xf32, #tpu.memory_space<vmem>>, vector<16x8xf32>
    %c1_330 = arith.constant 1 : index
    %c0_331 = arith.constant 0 : index
    %c0_332 = arith.constant 0 : index
    %409 = vector.load %arg41[%c1_330, %c0_331, %c0_332] : memref<3x8x8xf32, #tpu.memory_space<vmem>>, vector<1x8x8xf32>
    %410 = vector.shape_cast %409 : vector<1x8x8xf32> to vector<8x8xf32>
    %cst_333 = arith.constant dense<0.000000e+00> : vector<16x8xf32>
    %411 = tpu.matmul %408, %410, %cst_333 {dimension_numbers = #tpu.dot_dimension_numbers<[1], [0], [0], [1], [0, 0, 1, 1], [], []>} : vector<16x8xf32>, vector<8x8xf32>, vector<16x8xf32> -> vector<16x8xf32>
    %412 = arith.addf %407, %411 : vector<16x8xf32>
    %c8_334 = arith.constant 8 : index
    %c0_335 = arith.constant 0 : index
    %413 = vector.load %arg46[%c8_334, %c0_335] : memref<24x16xf32, #tpu.memory_space<vmem>>, vector<16x8xf32>
    %c2_336 = arith.constant 2 : index
    %c0_337 = arith.constant 0 : index
    %c0_338 = arith.constant 0 : index
    %414 = vector.load %arg41[%c2_336, %c0_337, %c0_338] : memref<3x8x8xf32, #tpu.memory_space<vmem>>, vector<1x8x8xf32>
    %415 = vector.shape_cast %414 : vector<1x8x8xf32> to vector<8x8xf32>
    %cst_339 = arith.constant dense<0.000000e+00> : vector<16x8xf32>
    %416 = tpu.matmul %413, %415, %cst_339 {dimension_numbers = #tpu.dot_dimension_numbers<[1], [0], [0], [1], [0, 0, 1, 1], [], []>} : vector<16x8xf32>, vector<8x8xf32>, vector<16x8xf32> -> vector<16x8xf32>
    %417 = arith.addf %412, %416 : vector<16x8xf32>
    %c16 = arith.constant 16 : index
    %418 = memref.load %arg1[%c16] : memref<18xf32, #tpu.memory_space<smem>>
    %cst_340 = arith.constant 0.000000e+00 : f32
    %419 = vector.broadcast %cst_340 : f32 to vector<16x8xf32>
    %420 = arith.cmpf oge, %417, %419 : vector<16x8xf32>
    %421 = vector.broadcast %418 : f32 to vector<16x8xf32>
    %422 = arith.mulf %417, %421 : vector<16x8xf32>
    %423 = arith.select %420, %417, %422 : vector<16x8xi1>, vector<16x8xf32>
    %c0_341 = arith.constant 0 : index
    %c0_342 = arith.constant 0 : index
    %424 = vector.load %arg37[%c0_341, %c0_342] : memref<16x8xf32, #tpu.memory_space<vmem>>, vector<16x8xf32>
    %cst_343 = arith.constant dense<0.000000e+00> : vector<16x8xf32>
    %425 = tpu.matmul %371, %424, %cst_343 {dimension_numbers = #tpu.dot_dimension_numbers<[1], [0], [0], [1], [0, 0, 1, 1], [], []>} : vector<16x16xf32>, vector<16x8xf32>, vector<16x8xf32> -> vector<16x8xf32>
    %c0_344 = arith.constant 0 : index
    %c0_345 = arith.constant 0 : index
    %426 = vector.load %arg38[%c0_344, %c0_345] : memref<1x8xf32, #tpu.memory_space<vmem>>, vector<1x8xf32>
    %427 = vector.broadcast %426 : vector<1x8xf32> to vector<16x8xf32>
    %428 = arith.addf %425, %427 : vector<16x8xf32>
    %429 = arith.addf %423, %428 : vector<16x8xf32>
    %c17 = arith.constant 17 : index
    %430 = memref.load %arg1[%c17] : memref<18xf32, #tpu.memory_space<smem>>
    %cst_346 = arith.constant 0.000000e+00 : f32
    %431 = vector.broadcast %cst_346 : f32 to vector<16x8xf32>
    %432 = arith.cmpf oge, %429, %431 : vector<16x8xf32>
    %433 = vector.broadcast %430 : f32 to vector<16x8xf32>
    %434 = arith.mulf %429, %433 : vector<16x8xf32>
    %435 = arith.select %432, %429, %434 : vector<16x8xi1>, vector<16x8xf32>
    %c0_347 = arith.constant 0 : index
    %c0_348 = arith.constant 0 : index
    %436 = vector.load %arg43[%c0_347, %c0_348] : memref<8x4xf32, #tpu.memory_space<vmem>>, vector<8x4xf32>
    %cst_349 = arith.constant dense<0.000000e+00> : vector<16x4xf32>
    %437 = tpu.matmul %435, %436, %cst_349 {dimension_numbers = #tpu.dot_dimension_numbers<[1], [0], [0], [1], [0, 0, 1, 1], [], []>} : vector<16x8xf32>, vector<8x4xf32>, vector<16x4xf32> -> vector<16x4xf32>
    %c0_350 = arith.constant 0 : index
    %c0_351 = arith.constant 0 : index
    %438 = vector.load %arg44[%c0_350, %c0_351] : memref<1x4xf32, #tpu.memory_space<vmem>>, vector<1x4xf32>
    %439 = vector.broadcast %438 : vector<1x4xf32> to vector<16x4xf32>
    %440 = arith.addf %437, %439 : vector<16x4xf32>
    %cst_352 = arith.constant 0.000000e+00 : f32
    %441 = vector.broadcast %cst_352 : f32 to vector<16x4xf32>
    %442 = arith.subf %441, %440 : vector<16x4xf32>
    %443 = math.exp %442 : vector<16x4xf32>
    %cst_353 = arith.constant 1.000000e+00 : f32
    %444 = vector.broadcast %cst_353 : f32 to vector<16x4xf32>
    %445 = arith.addf %444, %443 : vector<16x4xf32>
    %cst_354 = arith.constant 1.000000e+00 : f32
    %446 = vector.broadcast %cst_354 : f32 to vector<16x4xf32>
    %447 = arith.divf %446, %445 : vector<16x4xf32>
    %c0_355 = arith.constant 0 : index
    %c0_356 = arith.constant 0 : index
    %c0_357 = arith.constant 0 : index
    %448 = vector.load %arg45[%c0_355, %c0_356, %c0_357] : memref<1x16x4xf32, #tpu.memory_space<vmem>>, vector<1x16x4xf32>
    %449 = vector.shape_cast %448 : vector<1x16x4xf32> to vector<16x4xf32>
    %450 = vector.shape_cast %447 : vector<16x4xf32> to vector<1x16x4xf32>
    tpu.vector_store %arg45[%c0_355, %c0_356, %c0_357], %450 {strides = array<i32>} : memref<1x16x4xf32, #tpu.memory_space<vmem>>, vector<1x16x4xf32>,
    return
  }
  func.func @transform_0(%arg0: i32, %arg1: memref<18xf32, #tpu.memory_space<smem>>) -> (i32, i32, i32) {
    %c0_i32 = arith.constant 0 : i32
    %c0_i32_0 = arith.constant 0 : i32
    %c0_i32_1 = arith.constant 0 : i32
    return %arg0, %c0_i32, %c0_i32_0 : i32, i32, i32
  }
  func.func @transform_1(%arg0: i32, %arg1: memref<18xf32, #tpu.memory_space<smem>>) -> (i32, i32) {
    %c0_i32 = arith.constant 0 : i32
    %c0_i32_0 = arith.constant 0 : i32
    %c0_i32_1 = arith.constant 0 : i32
    return %c0_i32, %c0_i32_0 : i32, i32
  }
  func.func @transform_2(%arg0: i32, %arg1: memref<18xf32, #tpu.memory_space<smem>>) -> (i32, i32) {
    %c0_i32 = arith.constant 0 : i32
    %c0_i32_0 = arith.constant 0 : i32
    %c0_i32_1 = arith.constant 0 : i32
    return %c0_i32, %c0_i32_0 : i32, i32
  }
  func.func @transform_3(%arg0: i32, %arg1: memref<18xf32, #tpu.memory_space<smem>>) -> (i32, i32, i32) {
    %c0_i32 = arith.constant 0 : i32
    %c0_i32_0 = arith.constant 0 : i32
    %c0_i32_1 = arith.constant 0 : i32
    %c0_i32_2 = arith.constant 0 : i32
    return %c0_i32, %c0_i32_0, %c0_i32_1 : i32, i32, i32
  }
  func.func @transform_4(%arg0: i32, %arg1: memref<18xf32, #tpu.memory_space<smem>>) -> (i32, i32) {
    %c0_i32 = arith.constant 0 : i32
    %c0_i32_0 = arith.constant 0 : i32
    %c0_i32_1 = arith.constant 0 : i32
    return %c0_i32, %c0_i32_0 : i32, i32
  }
  func.func @transform_5(%arg0: i32, %arg1: memref<18xf32, #tpu.memory_space<smem>>) -> (i32, i32, i32) {
    %c0_i32 = arith.constant 0 : i32
    %c0_i32_0 = arith.constant 0 : i32
    %c0_i32_1 = arith.constant 0 : i32
    %c0_i32_2 = arith.constant 0 : i32
    return %c0_i32, %c0_i32_0, %c0_i32_1 : i32, i32, i32
  }
  func.func @transform_6(%arg0: i32, %arg1: memref<18xf32, #tpu.memory_space<smem>>) -> (i32, i32) {
    %c0_i32 = arith.constant 0 : i32
    %c0_i32_0 = arith.constant 0 : i32
    %c0_i32_1 = arith.constant 0 : i32
    return %c0_i32, %c0_i32_0 : i32, i32
  }
  func.func @transform_7(%arg0: i32, %arg1: memref<18xf32, #tpu.memory_space<smem>>) -> (i32, i32) {
    %c0_i32 = arith.constant 0 : i32
    %c0_i32_0 = arith.constant 0 : i32
    %c0_i32_1 = arith.constant 0 : i32
    return %c0_i32, %c0_i32_0 : i32, i32
  }
  func.func @transform_8(%arg0: i32, %arg1: memref<18xf32, #tpu.memory_space<smem>>) -> (i32, i32) {
    %c0_i32 = arith.constant 0 : i32
    %c0_i32_0 = arith.constant 0 : i32
    %c0_i32_1 = arith.constant 0 : i32
    return %c0_i32, %c0_i32_0 : i32, i32
  }
  func.func @transform_9(%arg0: i32, %arg1: memref<18xf32, #tpu.memory_space<smem>>) -> (i32, i32, i32) {
    %c0_i32 = arith.constant 0 : i32
    %c0_i32_0 = arith.constant 0 : i32
    %c0_i32_1 = arith.constant 0 : i32
    %c0_i32_2 = arith.constant 0 : i32
    return %c0_i32, %c0_i32_0, %c0_i32_1 : i32, i32, i32
  }
  func.func @transform_10(%arg0: i32, %arg1: memref<18xf32, #tpu.memory_space<smem>>) -> (i32, i32) {
    %c0_i32 = arith.constant 0 : i32
    %c0_i32_0 = arith.constant 0 : i32
    %c0_i32_1 = arith.constant 0 : i32
    return %c0_i32, %c0_i32_0 : i32, i32
  }
  func.func @transform_11(%arg0: i32, %arg1: memref<18xf32, #tpu.memory_space<smem>>) -> (i32, i32, i32) {
    %c0_i32 = arith.constant 0 : i32
    %c0_i32_0 = arith.constant 0 : i32
    %c0_i32_1 = arith.constant 0 : i32
    %c0_i32_2 = arith.constant 0 : i32
    return %c0_i32, %c0_i32_0, %c0_i32_1 : i32, i32, i32
  }
  func.func @transform_12(%arg0: i32, %arg1: memref<18xf32, #tpu.memory_space<smem>>) -> (i32, i32) {
    %c0_i32 = arith.constant 0 : i32
    %c0_i32_0 = arith.constant 0 : i32
    %c0_i32_1 = arith.constant 0 : i32
    return %c0_i32, %c0_i32_0 : i32, i32
  }
  func.func @transform_13(%arg0: i32, %arg1: memref<18xf32, #tpu.memory_space<smem>>) -> (i32, i32) {
    %c0_i32 = arith.constant 0 : i32
    %c0_i32_0 = arith.constant 0 : i32
    %c0_i32_1 = arith.constant 0 : i32
    return %c0_i32, %c0_i32_0 : i32, i32
  }
  func.func @transform_14(%arg0: i32, %arg1: memref<18xf32, #tpu.memory_space<smem>>) -> (i32, i32) {
    %c0_i32 = arith.constant 0 : i32
    %c0_i32_0 = arith.constant 0 : i32
    %c0_i32_1 = arith.constant 0 : i32
    return %c0_i32, %c0_i32_0 : i32, i32
  }
  func.func @transform_15(%arg0: i32, %arg1: memref<18xf32, #tpu.memory_space<smem>>) -> (i32, i32) {
    %c0_i32 = arith.constant 0 : i32
    %c0_i32_0 = arith.constant 0 : i32
    %c0_i32_1 = arith.constant 0 : i32
    return %c0_i32, %c0_i32_0 : i32, i32
  }
  func.func @transform_16(%arg0: i32, %arg1: memref<18xf32, #tpu.memory_space<smem>>) -> (i32, i32) {
    %c0_i32 = arith.constant 0 : i32
    %c0_i32_0 = arith.constant 0 : i32
    %c0_i32_1 = arith.constant 0 : i32
    return %c0_i32, %c0_i32_0 : i32, i32
  }
  func.func @transform_17(%arg0: i32, %arg1: memref<18xf32, #tpu.memory_space<smem>>) -> (i32, i32, i32) {
    %c0_i32 = arith.constant 0 : i32
    %c0_i32_0 = arith.constant 0 : i32
    %c0_i32_1 = arith.constant 0 : i32
    %c0_i32_2 = arith.constant 0 : i32
    return %c0_i32, %c0_i32_0, %c0_i32_1 : i32, i32, i32
  }
  func.func @transform_18(%arg0: i32, %arg1: memref<18xf32, #tpu.memory_space<smem>>) -> (i32, i32) {
    %c0_i32 = arith.constant 0 : i32
    %c0_i32_0 = arith.constant 0 : i32
    %c0_i32_1 = arith.constant 0 : i32
    return %c0_i32, %c0_i32_0 : i32, i32
  }
  func.func @transform_19(%arg0: i32, %arg1: memref<18xf32, #tpu.memory_space<smem>>) -> (i32, i32, i32) {
    %c0_i32 = arith.constant 0 : i32
    %c0_i32_0 = arith.constant 0 : i32
    %c0_i32_1 = arith.constant 0 : i32
    %c0_i32_2 = arith.constant 0 : i32
    return %c0_i32, %c0_i32_0, %c0_i32_1 : i32, i32, i32
  }
  func.func @transform_20(%arg0: i32, %arg1: memref<18xf32, #tpu.memory_space<smem>>) -> (i32, i32) {
    %c0_i32 = arith.constant 0 : i32
    %c0_i32_0 = arith.constant 0 : i32
    %c0_i32_1 = arith.constant 0 : i32
    return %c0_i32, %c0_i32_0 : i32, i32
  }
  func.func @transform_21(%arg0: i32, %arg1: memref<18xf32, #tpu.memory_space<smem>>) -> (i32, i32) {
    %c0_i32 = arith.constant 0 : i32
    %c0_i32_0 = arith.constant 0 : i32
    %c0_i32_1 = arith.constant 0 : i32
    return %c0_i32, %c0_i32_0 : i32, i32
  }
  func.func @transform_22(%arg0: i32, %arg1: memref<18xf32, #tpu.memory_space<smem>>) -> (i32, i32) {
    %c0_i32 = arith.constant 0 : i32
    %c0_i32_0 = arith.constant 0 : i32
    %c0_i32_1 = arith.constant 0 : i32
    return %c0_i32, %c0_i32_0 : i32, i32
  }
  func.func @transform_23(%arg0: i32, %arg1: memref<18xf32, #tpu.memory_space<smem>>) -> (i32, i32, i32) {
    %c0_i32 = arith.constant 0 : i32
    %c0_i32_0 = arith.constant 0 : i32
    %c0_i32_1 = arith.constant 0 : i32
    %c0_i32_2 = arith.constant 0 : i32
    return %c0_i32, %c0_i32_0, %c0_i32_1 : i32, i32, i32
  }
  func.func @transform_24(%arg0: i32, %arg1: memref<18xf32, #tpu.memory_space<smem>>) -> (i32, i32) {
    %c0_i32 = arith.constant 0 : i32
    %c0_i32_0 = arith.constant 0 : i32
    %c0_i32_1 = arith.constant 0 : i32
    return %c0_i32, %c0_i32_0 : i32, i32
  }
  func.func @transform_25(%arg0: i32, %arg1: memref<18xf32, #tpu.memory_space<smem>>) -> (i32, i32, i32) {
    %c0_i32 = arith.constant 0 : i32
    %c0_i32_0 = arith.constant 0 : i32
    %c0_i32_1 = arith.constant 0 : i32
    %c0_i32_2 = arith.constant 0 : i32
    return %c0_i32, %c0_i32_0, %c0_i32_1 : i32, i32, i32
  }
  func.func @transform_26(%arg0: i32, %arg1: memref<18xf32, #tpu.memory_space<smem>>) -> (i32, i32) {
    %c0_i32 = arith.constant 0 : i32
    %c0_i32_0 = arith.constant 0 : i32
    %c0_i32_1 = arith.constant 0 : i32
    return %c0_i32, %c0_i32_0 : i32, i32
  }
  func.func @transform_27(%arg0: i32, %arg1: memref<18xf32, #tpu.memory_space<smem>>) -> (i32, i32) {
    %c0_i32 = arith.constant 0 : i32
    %c0_i32_0 = arith.constant 0 : i32
    %c0_i32_1 = arith.constant 0 : i32
    return %c0_i32, %c0_i32_0 : i32, i32
  }
  func.func @transform_28(%arg0: i32, %arg1: memref<18xf32, #tpu.memory_space<smem>>) -> (i32, i32) {
    %c0_i32 = arith.constant 0 : i32
    %c0_i32_0 = arith.constant 0 : i32
    %c0_i32_1 = arith.constant 0 : i32
    return %c0_i32, %c0_i32_0 : i32, i32
  }
  func.func @transform_29(%arg0: i32, %arg1: memref<18xf32, #tpu.memory_space<smem>>) -> (i32, i32) {
    %c0_i32 = arith.constant 0 : i32
    %c0_i32_0 = arith.constant 0 : i32
    %c0_i32_1 = arith.constant 0 : i32
    return %c0_i32, %c0_i32_0 : i32, i32
  }
  func.func @transform_30(%arg0: i32, %arg1: memref<18xf32, #tpu.memory_space<smem>>) -> (i32, i32) {
    %c0_i32 = arith.constant 0 : i32
    %c0_i32_0 = arith.constant 0 : i32
    %c0_i32_1 = arith.constant 0 : i32
    return %c0_i32, %c0_i32_0 : i32, i32
  }
  func.func @transform_31(%arg0: i32, %arg1: memref<18xf32, #tpu.memory_space<smem>>) -> (i32, i32, i32) {
    %c0_i32 = arith.constant 0 : i32
    %c0_i32_0 = arith.constant 0 : i32
    %c0_i32_1 = arith.constant 0 : i32
    %c0_i32_2 = arith.constant 0 : i32
    return %c0_i32, %c0_i32_0, %c0_i32_1 : i32, i32, i32
  }
  func.func @transform_32(%arg0: i32, %arg1: memref<18xf32, #tpu.memory_space<smem>>) -> (i32, i32) {
    %c0_i32 = arith.constant 0 : i32
    %c0_i32_0 = arith.constant 0 : i32
    %c0_i32_1 = arith.constant 0 : i32
    return %c0_i32, %c0_i32_0 : i32, i32
  }
  func.func @transform_33(%arg0: i32, %arg1: memref<18xf32, #tpu.memory_space<smem>>) -> (i32, i32, i32) {
    %c0_i32 = arith.constant 0 : i32
    %c0_i32_0 = arith.constant 0 : i32
    %c0_i32_1 = arith.constant 0 : i32
    %c0_i32_2 = arith.constant 0 : i32
    return %c0_i32, %c0_i32_0, %c0_i32_1 : i32, i32, i32
  }
  func.func @transform_34(%arg0: i32, %arg1: memref<18xf32, #tpu.memory_space<smem>>) -> (i32, i32) {
    %c0_i32 = arith.constant 0 : i32
    %c0_i32_0 = arith.constant 0 : i32
    %c0_i32_1 = arith.constant 0 : i32
    return %c0_i32, %c0_i32_0 : i32, i32
  }
  func.func @transform_35(%arg0: i32, %arg1: memref<18xf32, #tpu.memory_space<smem>>) -> (i32, i32) {
    %c0_i32 = arith.constant 0 : i32
    %c0_i32_0 = arith.constant 0 : i32
    %c0_i32_1 = arith.constant 0 : i32
    return %c0_i32, %c0_i32_0 : i32, i32
  }
  func.func @transform_36(%arg0: i32, %arg1: memref<18xf32, #tpu.memory_space<smem>>) -> (i32, i32) {
    %c0_i32 = arith.constant 0 : i32
    %c0_i32_0 = arith.constant 0 : i32
    %c0_i32_1 = arith.constant 0 : i32
    return %c0_i32, %c0_i32_0 : i32, i32
  }
  func.func @transform_37(%arg0: i32, %arg1: memref<18xf32, #tpu.memory_space<smem>>) -> (i32, i32, i32) {
    %c0_i32 = arith.constant 0 : i32
    %c0_i32_0 = arith.constant 0 : i32
    %c0_i32_1 = arith.constant 0 : i32
    %c0_i32_2 = arith.constant 0 : i32
    return %c0_i32, %c0_i32_0, %c0_i32_1 : i32, i32, i32
  }
  func.func @transform_38(%arg0: i32, %arg1: memref<18xf32, #tpu.memory_space<smem>>) -> (i32, i32) {
    %c0_i32 = arith.constant 0 : i32
    %c0_i32_0 = arith.constant 0 : i32
    %c0_i32_1 = arith.constant 0 : i32
    return %c0_i32, %c0_i32_0 : i32, i32
  }
  func.func @transform_39(%arg0: i32, %arg1: memref<18xf32, #tpu.memory_space<smem>>) -> (i32, i32, i32) {
    %c0_i32 = arith.constant 0 : i32
    %c0_i32_0 = arith.constant 0 : i32
    %c0_i32_1 = arith.constant 0 : i32
    %c0_i32_2 = arith.constant 0 : i32
    return %c0_i32, %c0_i32_0, %c0_i32_1 : i32, i32, i32
  }
  func.func @transform_40(%arg0: i32, %arg1: memref<18xf32, #tpu.memory_space<smem>>) -> (i32, i32) {
    %c0_i32 = arith.constant 0 : i32
    %c0_i32_0 = arith.constant 0 : i32
    %c0_i32_1 = arith.constant 0 : i32
    return %c0_i32, %c0_i32_0 : i32, i32
  }
  func.func @transform_41(%arg0: i32, %arg1: memref<18xf32, #tpu.memory_space<smem>>) -> (i32, i32) {
    %c0_i32 = arith.constant 0 : i32
    %c0_i32_0 = arith.constant 0 : i32
    %c0_i32_1 = arith.constant 0 : i32
    return %c0_i32, %c0_i32_0 : i32, i32
  }
  func.func @transform_42(%arg0: i32, %arg1: memref<18xf32, #tpu.memory_space<smem>>) -> (i32, i32) {
    %c0_i32 = arith.constant 0 : i32
    %c0_i32_0 = arith.constant 0 : i32
    %c0_i32_1 = arith.constant 0 : i32
    return %c0_i32, %c0_i32_0 : i32, i32
  }
  func.func @transform_43(%arg0: i32, %arg1: memref<18xf32, #tpu.memory_space<smem>>) -> (i32, i32, i32) {
    %c0_i32 = arith.constant 0 : i32
    %c0_i32_0 = arith.constant 0 : i32
    %c0_i32_1 = arith.constant 0 : i32
    return %arg0, %c0_i32, %c0_i32_0 : i32, i32, i32
  }
}

</mosaic_0001>

<llo_original>
// kernel: tpu_custom_call.1
$region0: #{tpu_custom_call.1}
  #allocation0 [shape = 'u32[]', space=smem, size = 0x4, offset = 0x4, fixed_abs, tag = 'smem constant byte address 0x4 - core index']
  #allocation1 [shape = 'u32[144,128]{1,0:T(1,128)}', space=vmem, size = 0x12000, scoped, tag = 'internal scratch']
  #allocation2 [shape = 'f32[24,16]{1,0:T(8,128)}', space=vmem, size = 0x3000, scoped, tag = 'scratch operand']
  #allocation3 [shape = 's32[1]{0}', space=sflag, size = 0x4, scoped, tag = 'scoped memory for tpu_custom_call.1']
  #allocation4 [shape = 'u8[512]{0}', space=smem, size = 0x200, scoped, tag = 'prefetched SMEM operand 0']
  %s0 = inlined_call_operand.smem [shape: u32[45], index: -1, kind: input, shape index: {}]
  %s1 = sld [smem:[%s0]]
  %s2 = scalar_lea.smem %s0, 1
  %s3 = sld [smem:[%s2]]
  %s4 = scalar_lea.smem %s0, 2
  %s5 = sld [smem:[%s4]]
  %s6 = scalar_lea.smem %s0, 3
  %s7 = sld [smem:[%s6]]
  %s8 = scalar_lea.smem %s0, 4
  %s9 = sld [smem:[%s8]]
  %s10 = scalar_lea.smem %s0, 5
  %s11 = sld [smem:[%s10]]
  %s12 = scalar_lea.smem %s0, 6
  %s13 = sld [smem:[%s12]]
  %s14 = scalar_lea.smem %s0, 7
  %s15 = sld [smem:[%s14]]
  %s16 = scalar_lea.smem %s0, 8
  %s17 = sld [smem:[%s16]]
  %s18 = scalar_lea.smem %s0, 9
  %s19 = sld [smem:[%s18]]
  %s20 = scalar_lea.smem %s0, 10
  %s21 = sld [smem:[%s20]]
  %s22 = scalar_lea.smem %s0, 11
  %s23 = sld [smem:[%s22]]
  %s24 = scalar_lea.smem %s0, 12
  %s25 = sld [smem:[%s24]]
  %s26 = scalar_lea.smem %s0, 13
  %s27 = sld [smem:[%s26]]
  %s28 = scalar_lea.smem %s0, 14
  %s29 = sld [smem:[%s28]]
  %s30 = scalar_lea.smem %s0, 15
  %s31 = sld [smem:[%s30]]
  %s32 = scalar_lea.smem %s0, 16
  %s33 = sld [smem:[%s32]]
  %s34 = scalar_lea.smem %s0, 17
  %s35 = sld [smem:[%s34]]
  %s36 = scalar_lea.smem %s0, 18
  %s37 = sld [smem:[%s36]]
  %s38 = scalar_lea.smem %s0, 19
  %s39 = sld [smem:[%s38]]
  %s40 = scalar_lea.smem %s0, 20
  %s41 = sld [smem:[%s40]]
  %s42 = scalar_lea.smem %s0, 21
  %s43 = sld [smem:[%s42]]
  %s44 = scalar_lea.smem %s0, 22
  %s45 = sld [smem:[%s44]]
  %s46 = scalar_lea.smem %s0, 23
  %s47 = sld [smem:[%s46]]
  %s48 = scalar_lea.smem %s0, 24
  %s49 = sld [smem:[%s48]]
  %s50 = scalar_lea.smem %s0, 25
  %s51 = sld [smem:[%s50]]
  %s52 = scalar_lea.smem %s0, 26
  %s53 = sld [smem:[%s52]]
  %s54 = scalar_lea.smem %s0, 27
  %s55 = sld [smem:[%s54]]
  %s56 = scalar_lea.smem %s0, 28
  %s57 = sld [smem:[%s56]]
  %s58 = scalar_lea.smem %s0, 29
  %s59 = sld [smem:[%s58]]
  %s60 = scalar_lea.smem %s0, 30
  %s61 = sld [smem:[%s60]]
  %s62 = scalar_lea.smem %s0, 31
  %s63 = sld [smem:[%s62]]
  %s64 = scalar_lea.smem %s0, 32
  %s65 = sld [smem:[%s64]]
  %s66 = scalar_lea.smem %s0, 33
  %s67 = sld [smem:[%s66]]
  %s68 = scalar_lea.smem %s0, 34
  %s69 = sld [smem:[%s68]]
  %s70 = scalar_lea.smem %s0, 35
  %s71 = sld [smem:[%s70]]
  %s72 = scalar_lea.smem %s0, 36
  %s73 = sld [smem:[%s72]]
  %s74 = scalar_lea.smem %s0, 37
  %s75 = sld [smem:[%s74]]
  %s76 = scalar_lea.smem %s0, 38
  %s77 = sld [smem:[%s76]]
  %s78 = scalar_lea.smem %s0, 39
  %s79 = sld [smem:[%s78]]
  %s80 = scalar_lea.smem %s0, 40
  %s81 = sld [smem:[%s80]]
  %s82 = scalar_lea.smem %s0, 41
  %s83 = sld [smem:[%s82]]
  %s84 = scalar_lea.smem %s0, 42
  %s85 = sld [smem:[%s84]]
  %s86 = scalar_lea.smem %s0, 43
  %s87 = sld [smem:[%s86]]
  %s88 = scalar_lea.smem %s0, 44
  %s89 = sld [smem:[%s88]]
  %s90 = sld [smem:[#allocation0]]
  $region261: #{tpu_custom_call.1} parent=0
    _
  %s92 = ssub.s32 1, %s90
  %s93 = scalar_select 0, %s92, %s90
  %95 = dma.hbm_to_smem %s1, 16, [#allocation4], [#allocation3]
  %96 = dma.done [#allocation3], 16
  %97 = sfence
  $region1: #{tpu_custom_call.1} parent=0
    #allocation5 [shape = 'u8[4096]{0}', space=vmem, size = 0x1000, scoped, tag = 'input window, operand 2, single buffered']
    #allocation6 [shape = 's32[2]{0}', space=sflag, size = 0x8, scoped, tag = 'scoped memory for tpu_custom_call.1']
    #allocation7 [shape = 'u8[512]{0}', space=vmem, size = 0x400, scoped, tag = 'input window, operand 3, single buffered']
    #allocation8 [shape = 's32[1]{0}', space=sflag, size = 0x4, scoped, tag = 'scoped memory for tpu_custom_call.1']
    #allocation9 [shape = 'u8[512]{0}', space=vmem, size = 0x400, scoped, tag = 'input window, operand 5, single buffered']
    #allocation10 [shape = 'u8[512]{0}', space=vmem, size = 0x400, scoped, tag = 'input window, operand 7, single buffered']
    #allocation11 [shape = 's32[1]{0}', space=sflag, size = 0x4, scoped, tag = 'scoped memory for tpu_custom_call.1']
    #allocation12 [shape = 'u8[512]{0}', space=vmem, size = 0x400, scoped, tag = 'input window, operand 9, single buffered']
    #allocation13 [shape = 'u8[512]{0}', space=vmem, size = 0x400, scoped, tag = 'input window, operand 11, single buffered']
    #allocation14 [shape = 's32[1]{0}', space=sflag, size = 0x4, scoped, tag = 'scoped memory for tpu_custom_call.1']
    #allocation15 [shape = 'u8[512]{0}', space=vmem, size = 0x400, scoped, tag = 'input window, operand 13, single buffered']
    #allocation16 [shape = 'u8[512]{0}', space=vmem, size = 0x400, scoped, tag = 'input window, operand 14, single buffered']
    #allocation17 [shape = 's32[1]{0}', space=sflag, size = 0x4, scoped, tag = 'scoped memory for tpu_custom_call.1']
    #allocation18 [shape = 'u8[512]{0}', space=vmem, size = 0x400, scoped, tag = 'input window, operand 15, single buffered']
    #allocation19 [shape = 'u8[4096]{0}', space=vmem, size = 0x1000, scoped, tag = 'input window, operand 16, single buffered']
    #allocation20 [shape = 's32[1]{0}', space=sflag, size = 0x4, scoped, tag = 'scoped memory for tpu_custom_call.1']
    #allocation21 [shape = 'u8[512]{0}', space=vmem, size = 0x400, scoped, tag = 'input window, operand 17, single buffered']
    #allocation22 [shape = 'u8[512]{0}', space=vmem, size = 0x400, scoped, tag = 'input window, operand 19, single buffered']
    #allocation23 [shape = 's32[1]{0}', space=sflag, size = 0x4, scoped, tag = 'scoped memory for tpu_custom_call.1']
    #allocation24 [shape = 'u8[512]{0}', space=vmem, size = 0x400, scoped, tag = 'input window, operand 21, single buffered']
    #allocation25 [shape = 'u8[512]{0}', space=vmem, size = 0x400, scoped, tag = 'input window, operand 23, single buffered']
    #allocation26 [shape = 's32[1]{0}', space=sflag, size = 0x4, scoped, tag = 'scoped memory for tpu_custom_call.1']
    %98 = vsyncpa [#allocation6], 0
    %99 = vsyncpa [#allocation8], 0
    %100 = vsyncpa [#allocation11], 0
    %101 = vsyncpa [#allocation14], 0
    %102 = vsyncpa [#allocation17], 0
    %103 = vsyncpa [#allocation20], 0
    %104 = vsyncpa [#allocation23], 0
    %105 = vsyncpa [#allocation26], 0
    loop: start=0, step=1, limit=4
    $region2: #{tpu_custom_call.1} parent=1 // loop_pre_header
      _
    $region3: #{tpu_custom_call.1} parent=1 // loop_header
      %s107 = sphi 0, %s111
      %p108 = scmp.ge.s32.totalorder %s107, 4
      %s117 = sphi 0, %s119
      %s120 = sphi 0, %s117
      %s121 = sphi 0, %s120
      %s137 = sphi 0, %s121
      %s141 = sphi 0, %s141
      %s143 = sphi 0, %s141
      %s144 = sphi 0, %s143
      %s158 = sphi 0, %s144
      %s162 = sphi 0, %s162
      %s164 = sphi 0, %s162
      %s165 = sphi 0, %s164
      %s179 = sphi 0, %s165
      %s183 = sphi 0, %s183
      %s185 = sphi 0, %s183
      %s186 = sphi 0, %s185
      %s200 = sphi 0, %s186
      %s204 = sphi 0, %s204
      %s206 = sphi 0, %s204
      %s207 = sphi 0, %s206
      %s221 = sphi 0, %s207
      %s225 = sphi 0, %s225
      %s227 = sphi 0, %s225
      %s228 = sphi 0, %s227
      %s242 = sphi 0, %s228
      %s246 = sphi 0, %s246
      %s248 = sphi 0, %s246
      %s249 = sphi 0, %s248
      %s263 = sphi 0, %s249
      %s267 = sphi 0, %s267
      %s269 = sphi 0, %s267
      %s270 = sphi 0, %s269
      %s284 = sphi 0, %s270
      %s288 = sphi 0, %s288
      %s290 = sphi 0, %s288
      %s291 = sphi 0, %s290
      %s305 = sphi 0, %s291
      %s309 = sphi 0, %s309
      %s311 = sphi 0, %s309
      %s312 = sphi 0, %s311
      %s326 = sphi 0, %s312
      %s330 = sphi 0, %s330
      %s332 = sphi 0, %s330
      %s333 = sphi 0, %s332
      %s347 = sphi 0, %s333
      %s351 = sphi 0, %s351
      %s353 = sphi 0, %s351
      %s354 = sphi 0, %s353
      %s368 = sphi 0, %s354
      %s372 = sphi 0, %s372
      %s374 = sphi 0, %s372
      %s375 = sphi 0, %s374
      %s389 = sphi 0, %s375
      %s393 = sphi 0, %s393
      %s395 = sphi 0, %s393
      %s396 = sphi 0, %s395
      %s410 = sphi 0, %s396
      %s414 = sphi 0, %s414
      %s416 = sphi 0, %s414
      %s417 = sphi 0, %s416
      %s431 = sphi 0, %s417
      %s435 = sphi 0, %s435
      %s437 = sphi 0, %s435
      %s438 = sphi 0, %s437
      %s452 = sphi 0, %s438
      %s456 = sphi 0, %s456
      %s458 = sphi 0, %s456
      %s459 = sphi 0, %s458
      %s473 = sphi 0, %s459
      %s477 = sphi 0, %s477
      %s479 = sphi 0, %s477
      %s480 = sphi 0, %s479
      %s494 = sphi 0, %s480
      %s498 = sphi 0, %s498
      %s500 = sphi 0, %s498
      %s501 = sphi 0, %s500
      %s515 = sphi 0, %s501
      %s519 = sphi 0, %s519
      %s521 = sphi 0, %s519
      %s522 = sphi 0, %s521
      %s536 = sphi 0, %s522
      %s540 = sphi 0, %s540
      %s542 = sphi 0, %s540
      %s543 = sphi 0, %s542
      %s557 = sphi 0, %s543
      %s561 = sphi 0, %s561
      %s563 = sphi 0, %s561
      %s564 = sphi 0, %s563
      %s578 = sphi 0, %s564
      %s582 = sphi 0, %s582
      %s584 = sphi 0, %s582
      %s585 = sphi 0, %s584
      %s599 = sphi 0, %s585
      %s603 = sphi 0, %s603
      %s605 = sphi 0, %s603
      %s606 = sphi 0, %s605
      %s620 = sphi 0, %s606
      %s624 = sphi 0, %s624
      %s626 = sphi 0, %s624
      %s627 = sphi 0, %s626
      %s641 = sphi 0, %s627
      %s645 = sphi 0, %s645
      %s647 = sphi 0, %s645
      %s648 = sphi 0, %s647
      %s662 = sphi 0, %s648
      %s666 = sphi 0, %s666
      %s668 = sphi 0, %s666
      %s669 = sphi 0, %s668
      %s683 = sphi 0, %s669
      %s687 = sphi 0, %s687
      %s689 = sphi 0, %s687
      %s690 = sphi 0, %s689
      %s704 = sphi 0, %s690
      %s708 = sphi 0, %s708
      %s710 = sphi 0, %s708
      %s711 = sphi 0, %s710
      %s725 = sphi 0, %s711
      %s729 = sphi 0, %s729
      %s731 = sphi 0, %s729
      %s732 = sphi 0, %s731
      %s746 = sphi 0, %s732
      %s750 = sphi 0, %s750
      %s752 = sphi 0, %s750
      %s753 = sphi 0, %s752
      %s767 = sphi 0, %s753
      %s771 = sphi 0, %s771
      %s773 = sphi 0, %s771
      %s774 = sphi 0, %s773
      %s788 = sphi 0, %s774
      %s792 = sphi 0, %s792
      %s794 = sphi 0, %s792
      %s795 = sphi 0, %s794
      %s809 = sphi 0, %s795
      %s813 = sphi 0, %s813
      %s815 = sphi 0, %s813
      %s816 = sphi 0, %s815
      %s830 = sphi 0, %s816
      %s834 = sphi 0, %s834
      %s836 = sphi 0, %s834
      %s837 = sphi 0, %s836
      %s851 = sphi 0, %s837
      %s855 = sphi 0, %s855
      %s857 = sphi 0, %s855
      %s858 = sphi 0, %s857
      %s872 = sphi 0, %s858
      %s876 = sphi 0, %s876
      %s878 = sphi 0, %s876
      %s879 = sphi 0, %s878
      %s893 = sphi 0, %s879
      %s897 = sphi 0, %s897
      %s899 = sphi 0, %s897
      %s900 = sphi 0, %s899
      %s914 = sphi 0, %s900
      %s918 = sphi 0, %s918
      %s920 = sphi 0, %s918
      %s921 = sphi 0, %s920
      %s935 = sphi 0, %s921
      %s939 = sphi 0, %s939
      %s941 = sphi 0, %s939
      %s942 = sphi 0, %s941
      %s956 = sphi 0, %s942
      %s960 = sphi 0, %s960
      %s962 = sphi 0, %s960
      %s963 = sphi 0, %s962
      %s977 = sphi 0, %s963
      %s981 = sphi 0, %s981
      %s983 = sphi 0, %s981
      %s984 = sphi 0, %s983
      %s998 = sphi 0, %s984
      %s1002 = sphi 0, %s1002
      %s1004 = sphi 0, %s1002
      %s1005 = sphi 0, %s1004
      %s1019 = sphi 0, %s1005
      %s1025 = sphi 0, %s1027
      %s1028 = sphi 0, %s1025
      %s1029 = sphi 0, %s1028
      %s1045 = sphi 0, %s1029
    $region4: #{tpu_custom_call.1} parent=1 // loop_header_branch
      %110 = sbr.rel (%p108) target = $region8
    $region5: #{tpu_custom_call.1} parent=1 // loop_body
      %s112 = ssub.s32 %s107, 1
      %s113 = ssub.s32 %s107, 2
      %s114 = sadd.s32 %s107, 1
      %s115 = ssub.s32 %s107, %s114
      %p116 = scmp.eq.s32.totalorder %s115, 0
      %s118 = sadd.s32 %s117, 1
      %s119 = scalar_select %p116, %s117, %s118
      %p122 = pneg %p116
      %p123 = scmp.eq.s32.totalorder %s107, 1
      %p124 = por %p122, %p123
      %p125 = scmp.ne.s32.totalorder %s117, %s120
      %p126 = scmp.eq.s32.totalorder %s107, 0
      %p127 = por %p125, %p126
      %p128 = scmp.ne.s32.totalorder %s117, %s120
      %p129 = scmp.eq.s32.totalorder %s112, 1
      %p130 = por %p128, %p129
      %p131 = scmp.ne.s32.totalorder %s120, %s121
      %p132 = scmp.eq.s32.totalorder %s112, 0
      %p133 = por %p131, %p132
      %p134 = scmp.ne.s32.totalorder %s120, %s121
      %p135 = scmp.eq.s32.totalorder %s113, 1
      %p136 = por %p134, %p135
      %p138 = scmp.ne.s32.totalorder %s121, %s137
      %p139 = scmp.eq.s32.totalorder %s113, 0
      %p140 = por %p138, %p139
      %s142 = sadd.s32 %s141, 1
      %p145 = scmp.eq.s32.totalorder %s107, 1
      %p146 = scmp.ne.s32.totalorder %s141, %s143
      %p147 = scmp.eq.s32.totalorder %s107, 0
      %p148 = por %p146, %p147
      %p149 = scmp.ne.s32.totalorder %s141, %s143
      %p150 = scmp.eq.s32.totalorder %s112, 1
      %p151 = por %p149, %p150
      %p152 = scmp.ne.s32.totalorder %s143, %s144
      %p153 = scmp.eq.s32.totalorder %s112, 0
      %p154 = por %p152, %p153
      %p155 = scmp.ne.s32.totalorder %s143, %s144
      %p156 = scmp.eq.s32.totalorder %s113, 1
      %p157 = por %p155, %p156
      %p159 = scmp.ne.s32.totalorder %s144, %s158
      %p160 = scmp.eq.s32.totalorder %s113, 0
      %p161 = por %p159, %p160
      %s163 = sadd.s32 %s162, 1
      %p166 = scmp.eq.s32.totalorder %s107, 1
      %p167 = scmp.ne.s32.totalorder %s162, %s164
      %p168 = scmp.eq.s32.totalorder %s107, 0
      %p169 = por %p167, %p168
      %p170 = scmp.ne.s32.totalorder %s162, %s164
      %p171 = scmp.eq.s32.totalorder %s112, 1
      %p172 = por %p170, %p171
      %p173 = scmp.ne.s32.totalorder %s164, %s165
      %p174 = scmp.eq.s32.totalorder %s112, 0
      %p175 = por %p173, %p174
      %p176 = scmp.ne.s32.totalorder %s164, %s165
      %p177 = scmp.eq.s32.totalorder %s113, 1
      %p178 = por %p176, %p177
      %p180 = scmp.ne.s32.totalorder %s165, %s179
      %p181 = scmp.eq.s32.totalorder %s113, 0
      %p182 = por %p180, %p181
      %s184 = sadd.s32 %s183, 1
      %p187 = scmp.eq.s32.totalorder %s107, 1
      %p188 = scmp.ne.s32.totalorder %s183, %s185
      %p189 = scmp.eq.s32.totalorder %s107, 0
      %p190 = por %p188, %p189
      %p191 = scmp.ne.s32.totalorder %s183, %s185
      %p192 = scmp.eq.s32.totalorder %s112, 1
      %p193 = por %p191, %p192
      %p194 = scmp.ne.s32.totalorder %s185, %s186
      %p195 = scmp.eq.s32.totalorder %s112, 0
      %p196 = por %p194, %p195
      %p197 = scmp.ne.s32.totalorder %s185, %s186
      %p198 = scmp.eq.s32.totalorder %s113, 1
      %p199 = por %p197, %p198
      %p201 = scmp.ne.s32.totalorder %s186, %s200
      %p202 = scmp.eq.s32.totalorder %s113, 0
      %p203 = por %p201, %p202
      %s205 = sadd.s32 %s204, 1
      %p208 = scmp.eq.s32.totalorder %s107, 1
      %p209 = scmp.ne.s32.totalorder %s204, %s206
      %p210 = scmp.eq.s32.totalorder %s107, 0
      %p211 = por %p209, %p210
      %p212 = scmp.ne.s32.totalorder %s204, %s206
      %p213 = scmp.eq.s32.totalorder %s112, 1
      %p214 = por %p212, %p213
      %p215 = scmp.ne.s32.totalorder %s206, %s207
      %p216 = scmp.eq.s32.totalorder %s112, 0
      %p217 = por %p215, %p216
      %p218 = scmp.ne.s32.totalorder %s206, %s207
      %p219 = scmp.eq.s32.totalorder %s113, 1
      %p220 = por %p218, %p219
      %p222 = scmp.ne.s32.totalorder %s207, %s221
      %p223 = scmp.eq.s32.totalorder %s113, 0
      %p224 = por %p222, %p223
      %s226 = sadd.s32 %s225, 1
      %p229 = scmp.eq.s32.totalorder %s107, 1
      %p230 = scmp.ne.s32.totalorder %s225, %s227
      %p231 = scmp.eq.s32.totalorder %s107, 0
      %p232 = por %p230, %p231
      %p233 = scmp.ne.s32.totalorder %s225, %s227
      %p234 = scmp.eq.s32.totalorder %s112, 1
      %p235 = por %p233, %p234
      %p236 = scmp.ne.s32.totalorder %s227, %s228
      %p237 = scmp.eq.s32.totalorder %s112, 0
      %p238 = por %p236, %p237
      %p239 = scmp.ne.s32.totalorder %s227, %s228
      %p240 = scmp.eq.s32.totalorder %s113, 1
      %p241 = por %p239, %p240
      %p243 = scmp.ne.s32.totalorder %s228, %s242
      %p244 = scmp.eq.s32.totalorder %s113, 0
      %p245 = por %p243, %p244
      %s247 = sadd.s32 %s246, 1
      %p250 = scmp.eq.s32.totalorder %s107, 1
      %p251 = scmp.ne.s32.totalorder %s246, %s248
      %p252 = scmp.eq.s32.totalorder %s107, 0
      %p253 = por %p251, %p252
      %p254 = scmp.ne.s32.totalorder %s246, %s248
      %p255 = scmp.eq.s32.totalorder %s112, 1
      %p256 = por %p254, %p255
      %p257 = scmp.ne.s32.totalorder %s248, %s249
      %p258 = scmp.eq.s32.totalorder %s112, 0
      %p259 = por %p257, %p258
      %p260 = scmp.ne.s32.totalorder %s248, %s249
      %p261 = scmp.eq.s32.totalorder %s113, 1
      %p262 = por %p260, %p261
      %p264 = scmp.ne.s32.totalorder %s249, %s263
      %p265 = scmp.eq.s32.totalorder %s113, 0
      %p266 = por %p264, %p265
      %s268 = sadd.s32 %s267, 1
      %p271 = scmp.eq.s32.totalorder %s107, 1
      %p272 = scmp.ne.s32.totalorder %s267, %s269
      %p273 = scmp.eq.s32.totalorder %s107, 0
      %p274 = por %p272, %p273
      %p275 = scmp.ne.s32.totalorder %s267, %s269
      %p276 = scmp.eq.s32.totalorder %s112, 1
      %p277 = por %p275, %p276
      %p278 = scmp.ne.s32.totalorder %s269, %s270
      %p279 = scmp.eq.s32.totalorder %s112, 0
      %p280 = por %p278, %p279
      %p281 = scmp.ne.s32.totalorder %s269, %s270
      %p282 = scmp.eq.s32.totalorder %s113, 1
      %p283 = por %p281, %p282
      %p285 = scmp.ne.s32.totalorder %s270, %s284
      %p286 = scmp.eq.s32.totalorder %s113, 0
      %p287 = por %p285, %p286
      %s289 = sadd.s32 %s288, 1
      %p292 = scmp.eq.s32.totalorder %s107, 1
      %p293 = scmp.ne.s32.totalorder %s288, %s290
      %p294 = scmp.eq.s32.totalorder %s107, 0
      %p295 = por %p293, %p294
      %p296 = scmp.ne.s32.totalorder %s288, %s290
      %p297 = scmp.eq.s32.totalorder %s112, 1
      %p298 = por %p296, %p297
      %p299 = scmp.ne.s32.totalorder %s290, %s291
      %p300 = scmp.eq.s32.totalorder %s112, 0
      %p301 = por %p299, %p300
      %p302 = scmp.ne.s32.totalorder %s290, %s291
      %p303 = scmp.eq.s32.totalorder %s113, 1
      %p304 = por %p302, %p303
      %p306 = scmp.ne.s32.totalorder %s291, %s305
      %p307 = scmp.eq.s32.totalorder %s113, 0
      %p308 = por %p306, %p307
      %s310 = sadd.s32 %s309, 1
      %p313 = scmp.eq.s32.totalorder %s107, 1
      %p314 = scmp.ne.s32.totalorder %s309, %s311
      %p315 = scmp.eq.s32.totalorder %s107, 0
      %p316 = por %p314, %p315
      %p317 = scmp.ne.s32.totalorder %s309, %s311
      %p318 = scmp.eq.s32.totalorder %s112, 1
      %p319 = por %p317, %p318
      %p320 = scmp.ne.s32.totalorder %s311, %s312
      %p321 = scmp.eq.s32.totalorder %s112, 0
      %p322 = por %p320, %p321
      %p323 = scmp.ne.s32.totalorder %s311, %s312
      %p324 = scmp.eq.s32.totalorder %s113, 1
      %p325 = por %p323, %p324
      %p327 = scmp.ne.s32.totalorder %s312, %s326
      %p328 = scmp.eq.s32.totalorder %s113, 0
      %p329 = por %p327, %p328
      %s331 = sadd.s32 %s330, 1
      %p334 = scmp.eq.s32.totalorder %s107, 1
      %p335 = scmp.ne.s32.totalorder %s330, %s332
      %p336 = scmp.eq.s32.totalorder %s107, 0
      %p337 = por %p335, %p336
      %p338 = scmp.ne.s32.totalorder %s330, %s332
      %p339 = scmp.eq.s32.totalorder %s112, 1
      %p340 = por %p338, %p339
      %p341 = scmp.ne.s32.totalorder %s332, %s333
      %p342 = scmp.eq.s32.totalorder %s112, 0
      %p343 = por %p341, %p342
      %p344 = scmp.ne.s32.totalorder %s332, %s333
      %p345 = scmp.eq.s32.totalorder %s113, 1
      %p346 = por %p344, %p345
      %p348 = scmp.ne.s32.totalorder %s333, %s347
      %p349 = scmp.eq.s32.totalorder %s113, 0
      %p350 = por %p348, %p349
      %s352 = sadd.s32 %s351, 1
      %p355 = scmp.eq.s32.totalorder %s107, 1
      %p356 = scmp.ne.s32.totalorder %s351, %s353
      %p357 = scmp.eq.s32.totalorder %s107, 0
      %p358 = por %p356, %p357
      %p359 = scmp.ne.s32.totalorder %s351, %s353
      %p360 = scmp.eq.s32.totalorder %s112, 1
      %p361 = por %p359, %p360
      %p362 = scmp.ne.s32.totalorder %s353, %s354
      %p363 = scmp.eq.s32.totalorder %s112, 0
      %p364 = por %p362, %p363
      %p365 = scmp.ne.s32.totalorder %s353, %s354
      %p366 = scmp.eq.s32.totalorder %s113, 1
      %p367 = por %p365, %p366
      %p369 = scmp.ne.s32.totalorder %s354, %s368
      %p370 = scmp.eq.s32.totalorder %s113, 0
      %p371 = por %p369, %p370
      %s373 = sadd.s32 %s372, 1
      %p376 = scmp.eq.s32.totalorder %s107, 1
      %p377 = scmp.ne.s32.totalorder %s372, %s374
      %p378 = scmp.eq.s32.totalorder %s107, 0
      %p379 = por %p377, %p378
      %p380 = scmp.ne.s32.totalorder %s372, %s374
      %p381 = scmp.eq.s32.totalorder %s112, 1
      %p382 = por %p380, %p381
      %p383 = scmp.ne.s32.totalorder %s374, %s375
      %p384 = scmp.eq.s32.totalorder %s112, 0
      %p385 = por %p383, %p384
      %p386 = scmp.ne.s32.totalorder %s374, %s375
      %p387 = scmp.eq.s32.totalorder %s113, 1
      %p388 = por %p386, %p387
      %p390 = scmp.ne.s32.totalorder %s375, %s389
      %p391 = scmp.eq.s32.totalorder %s113, 0
      %p392 = por %p390, %p391
      %s394 = sadd.s32 %s393, 1
      %p397 = scmp.eq.s32.totalorder %s107, 1
      %p398 = scmp.ne.s32.totalorder %s393, %s395
      %p399 = scmp.eq.s32.totalorder %s107, 0
      %p400 = por %p398, %p399
      %p401 = scmp.ne.s32.totalorder %s393, %s395
      %p402 = scmp.eq.s32.totalorder %s112, 1
      %p403 = por %p401, %p402
      %p404 = scmp.ne.s32.totalorder %s395, %s396
      %p405 = scmp.eq.s32.totalorder %s112, 0
      %p406 = por %p404, %p405
      %p407 = scmp.ne.s32.totalorder %s395, %s396
      %p408 = scmp.eq.s32.totalorder %s113, 1
      %p409 = por %p407, %p408
      %p411 = scmp.ne.s32.totalorder %s396, %s410
      %p412 = scmp.eq.s32.totalorder %s113, 0
      %p413 = por %p411, %p412
      %s415 = sadd.s32 %s414, 1
      %p418 = scmp.eq.s32.totalorder %s107, 1
      %p419 = scmp.ne.s32.totalorder %s414, %s416
      %p420 = scmp.eq.s32.totalorder %s107, 0
      %p421 = por %p419, %p420
      %p422 = scmp.ne.s32.totalorder %s414, %s416
      %p423 = scmp.eq.s32.totalorder %s112, 1
      %p424 = por %p422, %p423
      %p425 = scmp.ne.s32.totalorder %s416, %s417
      %p426 = scmp.eq.s32.totalorder %s112, 0
      %p427 = por %p425, %p426
      %p428 = scmp.ne.s32.totalorder %s416, %s417
      %p429 = scmp.eq.s32.totalorder %s113, 1
      %p430 = por %p428, %p429
      %p432 = scmp.ne.s32.totalorder %s417, %s431
      %p433 = scmp.eq.s32.totalorder %s113, 0
      %p434 = por %p432, %p433
      %s436 = sadd.s32 %s435, 1
      %p439 = scmp.eq.s32.totalorder %s107, 1
      %p440 = scmp.ne.s32.totalorder %s435, %s437
      %p441 = scmp.eq.s32.totalorder %s107, 0
      %p442 = por %p440, %p441
      %p443 = scmp.ne.s32.totalorder %s435, %s437
      %p444 = scmp.eq.s32.totalorder %s112, 1
      %p445 = por %p443, %p444
      %p446 = scmp.ne.s32.totalorder %s437, %s438
      %p447 = scmp.eq.s32.totalorder %s112, 0
      %p448 = por %p446, %p447
      %p449 = scmp.ne.s32.totalorder %s437, %s438
      %p450 = scmp.eq.s32.totalorder %s113, 1
      %p451 = por %p449, %p450
      %p453 = scmp.ne.s32.totalorder %s438, %s452
      %p454 = scmp.eq.s32.totalorder %s113, 0
      %p455 = por %p453, %p454
      %s457 = sadd.s32 %s456, 1
      %p460 = scmp.eq.s32.totalorder %s107, 1
      %p461 = scmp.ne.s32.totalorder %s456, %s458
      %p462 = scmp.eq.s32.totalorder %s107, 0
      %p463 = por %p461, %p462
      %p464 = scmp.ne.s32.totalorder %s456, %s458
      %p465 = scmp.eq.s32.totalorder %s112, 1
      %p466 = por %p464, %p465
      %p467 = scmp.ne.s32.totalorder %s458, %s459
      %p468 = scmp.eq.s32.totalorder %s112, 0
      %p469 = por %p467, %p468
      %p470 = scmp.ne.s32.totalorder %s458, %s459
      %p471 = scmp.eq.s32.totalorder %s113, 1
      %p472 = por %p470, %p471
      %p474 = scmp.ne.s32.totalorder %s459, %s473
      %p475 = scmp.eq.s32.totalorder %s113, 0
      %p476 = por %p474, %p475
      %s478 = sadd.s32 %s477, 1
      %p481 = scmp.eq.s32.totalorder %s107, 1
      %p482 = scmp.ne.s32.totalorder %s477, %s479
      %p483 = scmp.eq.s32.totalorder %s107, 0
      %p484 = por %p482, %p483
      %p485 = scmp.ne.s32.totalorder %s477, %s479
      %p486 = scmp.eq.s32.totalorder %s112, 1
      %p487 = por %p485, %p486
      %p488 = scmp.ne.s32.totalorder %s479, %s480
      %p489 = scmp.eq.s32.totalorder %s112, 0
      %p490 = por %p488, %p489
      %p491 = scmp.ne.s32.totalorder %s479, %s480
      %p492 = scmp.eq.s32.totalorder %s113, 1
      %p493 = por %p491, %p492
      %p495 = scmp.ne.s32.totalorder %s480, %s494
      %p496 = scmp.eq.s32.totalorder %s113, 0
      %p497 = por %p495, %p496
      %s499 = sadd.s32 %s498, 1
      %p502 = scmp.eq.s32.totalorder %s107, 1
      %p503 = scmp.ne.s32.totalorder %s498, %s500
      %p504 = scmp.eq.s32.totalorder %s107, 0
      %p505 = por %p503, %p504
      %p506 = scmp.ne.s32.totalorder %s498, %s500
      %p507 = scmp.eq.s32.totalorder %s112, 1
      %p508 = por %p506, %p507
      %p509 = scmp.ne.s32.totalorder %s500, %s501
      %p510 = scmp.eq.s32.totalorder %s112, 0
      %p511 = por %p509, %p510
      %p512 = scmp.ne.s32.totalorder %s500, %s501
      %p513 = scmp.eq.s32.totalorder %s113, 1
      %p514 = por %p512, %p513
      %p516 = scmp.ne.s32.totalorder %s501, %s515
      %p517 = scmp.eq.s32.totalorder %s113, 0
      %p518 = por %p516, %p517
      %s520 = sadd.s32 %s519, 1
      %p523 = scmp.eq.s32.totalorder %s107, 1
      %p524 = scmp.ne.s32.totalorder %s519, %s521
      %p525 = scmp.eq.s32.totalorder %s107, 0
      %p526 = por %p524, %p525
      %p527 = scmp.ne.s32.totalorder %s519, %s521
      %p528 = scmp.eq.s32.totalorder %s112, 1
      %p529 = por %p527, %p528
      %p530 = scmp.ne.s32.totalorder %s521, %s522
      %p531 = scmp.eq.s32.totalorder %s112, 0
      %p532 = por %p530, %p531
      %p533 = scmp.ne.s32.totalorder %s521, %s522
      %p534 = scmp.eq.s32.totalorder %s113, 1
      %p535 = por %p533, %p534
      %p537 = scmp.ne.s32.totalorder %s522, %s536
      %p538 = scmp.eq.s32.totalorder %s113, 0
      %p539 = por %p537, %p538
      %s541 = sadd.s32 %s540, 1
      %p544 = scmp.eq.s32.totalorder %s107, 1
      %p545 = scmp.ne.s32.totalorder %s540, %s542
      %p546 = scmp.eq.s32.totalorder %s107, 0
      %p547 = por %p545, %p546
      %p548 = scmp.ne.s32.totalorder %s540, %s542
      %p549 = scmp.eq.s32.totalorder %s112, 1
      %p550 = por %p548, %p549
      %p551 = scmp.ne.s32.totalorder %s542, %s543
      %p552 = scmp.eq.s32.totalorder %s112, 0
      %p553 = por %p551, %p552
      %p554 = scmp.ne.s32.totalorder %s542, %s543
      %p555 = scmp.eq.s32.totalorder %s113, 1
      %p556 = por %p554, %p555
      %p558 = scmp.ne.s32.totalorder %s543, %s557
      %p559 = scmp.eq.s32.totalorder %s113, 0
      %p560 = por %p558, %p559
      %s562 = sadd.s32 %s561, 1
      %p565 = scmp.eq.s32.totalorder %s107, 1
      %p566 = scmp.ne.s32.totalorder %s561, %s563
      %p567 = scmp.eq.s32.totalorder %s107, 0
      %p568 = por %p566, %p567
      %p569 = scmp.ne.s32.totalorder %s561, %s563
      %p570 = scmp.eq.s32.totalorder %s112, 1
      %p571 = por %p569, %p570
      %p572 = scmp.ne.s32.totalorder %s563, %s564
      %p573 = scmp.eq.s32.totalorder %s112, 0
      %p574 = por %p572, %p573
      %p575 = scmp.ne.s32.totalorder %s563, %s564
      %p576 = scmp.eq.s32.totalorder %s113, 1
      %p577 = por %p575, %p576
      %p579 = scmp.ne.s32.totalorder %s564, %s578
      %p580 = scmp.eq.s32.totalorder %s113, 0
      %p581 = por %p579, %p580
      %s583 = sadd.s32 %s582, 1
      %p586 = scmp.eq.s32.totalorder %s107, 1
      %p587 = scmp.ne.s32.totalorder %s582, %s584
      %p588 = scmp.eq.s32.totalorder %s107, 0
      %p589 = por %p587, %p588
      %p590 = scmp.ne.s32.totalorder %s582, %s584
      %p591 = scmp.eq.s32.totalorder %s112, 1
      %p592 = por %p590, %p591
      %p593 = scmp.ne.s32.totalorder %s584, %s585
      %p594 = scmp.eq.s32.totalorder %s112, 0
      %p595 = por %p593, %p594
      %p596 = scmp.ne.s32.totalorder %s584, %s585
      %p597 = scmp.eq.s32.totalorder %s113, 1
      %p598 = por %p596, %p597
      %p600 = scmp.ne.s32.totalorder %s585, %s599
      %p601 = scmp.eq.s32.totalorder %s113, 0
      %p602 = por %p600, %p601
      %s604 = sadd.s32 %s603, 1
      %p607 = scmp.eq.s32.totalorder %s107, 1
      %p608 = scmp.ne.s32.totalorder %s603, %s605
      %p609 = scmp.eq.s32.totalorder %s107, 0
      %p610 = por %p608, %p609
      %p611 = scmp.ne.s32.totalorder %s603, %s605
      %p612 = scmp.eq.s32.totalorder %s112, 1
      %p613 = por %p611, %p612
      %p614 = scmp.ne.s32.totalorder %s605, %s606
      %p615 = scmp.eq.s32.totalorder %s112, 0
      %p616 = por %p614, %p615
      %p617 = scmp.ne.s32.totalorder %s605, %s606
      %p618 = scmp.eq.s32.totalorder %s113, 1
      %p619 = por %p617, %p618
      %p621 = scmp.ne.s32.totalorder %s606, %s620
      %p622 = scmp.eq.s32.totalorder %s113, 0
      %p623 = por %p621, %p622
      %s625 = sadd.s32 %s624, 1
      %p628 = scmp.eq.s32.totalorder %s107, 1
      %p629 = scmp.ne.s32.totalorder %s624, %s626
      %p630 = scmp.eq.s32.totalorder %s107, 0
      %p631 = por %p629, %p630
      %p632 = scmp.ne.s32.totalorder %s624, %s626
      %p633 = scmp.eq.s32.totalorder %s112, 1
      %p634 = por %p632, %p633
      %p635 = scmp.ne.s32.totalorder %s626, %s627
      %p636 = scmp.eq.s32.totalorder %s112, 0
      %p637 = por %p635, %p636
      %p638 = scmp.ne.s32.totalorder %s626, %s627
      %p639 = scmp.eq.s32.totalorder %s113, 1
      %p640 = por %p638, %p639
      %p642 = scmp.ne.s32.totalorder %s627, %s641
      %p643 = scmp.eq.s32.totalorder %s113, 0
      %p644 = por %p642, %p643
      %s646 = sadd.s32 %s645, 1
      %p649 = scmp.eq.s32.totalorder %s107, 1
      %p650 = scmp.ne.s32.totalorder %s645, %s647
      %p651 = scmp.eq.s32.totalorder %s107, 0
      %p652 = por %p650, %p651
      %p653 = scmp.ne.s32.totalorder %s645, %s647
      %p654 = scmp.eq.s32.totalorder %s112, 1
      %p655 = por %p653, %p654
      %p656 = scmp.ne.s32.totalorder %s647, %s648
      %p657 = scmp.eq.s32.totalorder %s112, 0
      %p658 = por %p656, %p657
      %p659 = scmp.ne.s32.totalorder %s647, %s648
      %p660 = scmp.eq.s32.totalorder %s113, 1
      %p661 = por %p659, %p660
      %p663 = scmp.ne.s32.totalorder %s648, %s662
      %p664 = scmp.eq.s32.totalorder %s113, 0
      %p665 = por %p663, %p664
      %s667 = sadd.s32 %s666, 1
      %p670 = scmp.eq.s32.totalorder %s107, 1
      %p671 = scmp.ne.s32.totalorder %s666, %s668
      %p672 = scmp.eq.s32.totalorder %s107, 0
      %p673 = por %p671, %p672
      %p674 = scmp.ne.s32.totalorder %s666, %s668
      %p675 = scmp.eq.s32.totalorder %s112, 1
      %p676 = por %p674, %p675
      %p677 = scmp.ne.s32.totalorder %s668, %s669
      %p678 = scmp.eq.s32.totalorder %s112, 0
      %p679 = por %p677, %p678
      %p680 = scmp.ne.s32.totalorder %s668, %s669
      %p681 = scmp.eq.s32.totalorder %s113, 1
      %p682 = por %p680, %p681
      %p684 = scmp.ne.s32.totalorder %s669, %s683
      %p685 = scmp.eq.s32.totalorder %s113, 0
      %p686 = por %p684, %p685
      %s688 = sadd.s32 %s687, 1
      %p691 = scmp.eq.s32.totalorder %s107, 1
      %p692 = scmp.ne.s32.totalorder %s687, %s689
      %p693 = scmp.eq.s32.totalorder %s107, 0
      %p694 = por %p692, %p693
      %p695 = scmp.ne.s32.totalorder %s687, %s689
      %p696 = scmp.eq.s32.totalorder %s112, 1
      %p697 = por %p695, %p696
      %p698 = scmp.ne.s32.totalorder %s689, %s690
      %p699 = scmp.eq.s32.totalorder %s112, 0
      %p700 = por %p698, %p699
      %p701 = scmp.ne.s32.totalorder %s689, %s690
      %p702 = scmp.eq.s32.totalorder %s113, 1
      %p703 = por %p701, %p702
      %p705 = scmp.ne.s32.totalorder %s690, %s704
      %p706 = scmp.eq.s32.totalorder %s113, 0
      %p707 = por %p705, %p706
      %s709 = sadd.s32 %s708, 1
      %p712 = scmp.eq.s32.totalorder %s107, 1
      %p713 = scmp.ne.s32.totalorder %s708, %s710
      %p714 = scmp.eq.s32.totalorder %s107, 0
      %p715 = por %p713, %p714
      %p716 = scmp.ne.s32.totalorder %s708, %s710
      %p717 = scmp.eq.s32.totalorder %s112, 1
      %p718 = por %p716, %p717
      %p719 = scmp.ne.s32.totalorder %s710, %s711
      %p720 = scmp.eq.s32.totalorder %s112, 0
      %p721 = por %p719, %p720
      %p722 = scmp.ne.s32.totalorder %s710, %s711
      %p723 = scmp.eq.s32.totalorder %s113, 1
      %p724 = por %p722, %p723
      %p726 = scmp.ne.s32.totalorder %s711, %s725
      %p727 = scmp.eq.s32.totalorder %s113, 0
      %p728 = por %p726, %p727
      %s730 = sadd.s32 %s729, 1
      %p733 = scmp.eq.s32.totalorder %s107, 1
      %p734 = scmp.ne.s32.totalorder %s729, %s731
      %p735 = scmp.eq.s32.totalorder %s107, 0
      %p736 = por %p734, %p735
      %p737 = scmp.ne.s32.totalorder %s729, %s731
      %p738 = scmp.eq.s32.totalorder %s112, 1
      %p739 = por %p737, %p738
      %p740 = scmp.ne.s32.totalorder %s731, %s732
      %p741 = scmp.eq.s32.totalorder %s112, 0
      %p742 = por %p740, %p741
      %p743 = scmp.ne.s32.totalorder %s731, %s732
      %p744 = scmp.eq.s32.totalorder %s113, 1
      %p745 = por %p743, %p744
      %p747 = scmp.ne.s32.totalorder %s732, %s746
      %p748 = scmp.eq.s32.totalorder %s113, 0
      %p749 = por %p747, %p748
      %s751 = sadd.s32 %s750, 1
      %p754 = scmp.eq.s32.totalorder %s107, 1
      %p755 = scmp.ne.s32.totalorder %s750, %s752
      %p756 = scmp.eq.s32.totalorder %s107, 0
      %p757 = por %p755, %p756
      %p758 = scmp.ne.s32.totalorder %s750, %s752
      %p759 = scmp.eq.s32.totalorder %s112, 1
      %p760 = por %p758, %p759
      %p761 = scmp.ne.s32.totalorder %s752, %s753
      %p762 = scmp.eq.s32.totalorder %s112, 0
      %p763 = por %p761, %p762
      %p764 = scmp.ne.s32.totalorder %s752, %s753
      %p765 = scmp.eq.s32.totalorder %s113, 1
      %p766 = por %p764, %p765
      %p768 = scmp.ne.s32.totalorder %s753, %s767
      %p769 = scmp.eq.s32.totalorder %s113, 0
      %p770 = por %p768, %p769
      %s772 = sadd.s32 %s771, 1
      %p775 = scmp.eq.s32.totalorder %s107, 1
      %p776 = scmp.ne.s32.totalorder %s771, %s773
      %p777 = scmp.eq.s32.totalorder %s107, 0
      %p778 = por %p776, %p777
      %p779 = scmp.ne.s32.totalorder %s771, %s773
      %p780 = scmp.eq.s32.totalorder %s112, 1
      %p781 = por %p779, %p780
      %p782 = scmp.ne.s32.totalorder %s773, %s774
      %p783 = scmp.eq.s32.totalorder %s112, 0
      %p784 = por %p782, %p783
      %p785 = scmp.ne.s32.totalorder %s773, %s774
      %p786 = scmp.eq.s32.totalorder %s113, 1
      %p787 = por %p785, %p786
      %p789 = scmp.ne.s32.totalorder %s774, %s788
      %p790 = scmp.eq.s32.totalorder %s113, 0
      %p791 = por %p789, %p790
      %s793 = sadd.s32 %s792, 1
      %p796 = scmp.eq.s32.totalorder %s107, 1
      %p797 = scmp.ne.s32.totalorder %s792, %s794
      %p798 = scmp.eq.s32.totalorder %s107, 0
      %p799 = por %p797, %p798
      %p800 = scmp.ne.s32.totalorder %s792, %s794
      %p801 = scmp.eq.s32.totalorder %s112, 1
      %p802 = por %p800, %p801
      %p803 = scmp.ne.s32.totalorder %s794, %s795
      %p804 = scmp.eq.s32.totalorder %s112, 0
      %p805 = por %p803, %p804
      %p806 = scmp.ne.s32.totalorder %s794, %s795
      %p807 = scmp.eq.s32.totalorder %s113, 1
      %p808 = por %p806, %p807
      %p810 = scmp.ne.s32.totalorder %s795, %s809
      %p811 = scmp.eq.s32.totalorder %s113, 0
      %p812 = por %p810, %p811
      %s814 = sadd.s32 %s813, 1
      %p817 = scmp.eq.s32.totalorder %s107, 1
      %p818 = scmp.ne.s32.totalorder %s813, %s815
      %p819 = scmp.eq.s32.totalorder %s107, 0
      %p820 = por %p818, %p819
      %p821 = scmp.ne.s32.totalorder %s813, %s815
      %p822 = scmp.eq.s32.totalorder %s112, 1
      %p823 = por %p821, %p822
      %p824 = scmp.ne.s32.totalorder %s815, %s816
      %p825 = scmp.eq.s32.totalorder %s112, 0
      %p826 = por %p824, %p825
      %p827 = scmp.ne.s32.totalorder %s815, %s816
      %p828 = scmp.eq.s32.totalorder %s113, 1
      %p829 = por %p827, %p828
      %p831 = scmp.ne.s32.totalorder %s816, %s830
      %p832 = scmp.eq.s32.totalorder %s113, 0
      %p833 = por %p831, %p832
      %s835 = sadd.s32 %s834, 1
      %p838 = scmp.eq.s32.totalorder %s107, 1
      %p839 = scmp.ne.s32.totalorder %s834, %s836
      %p840 = scmp.eq.s32.totalorder %s107, 0
      %p841 = por %p839, %p840
      %p842 = scmp.ne.s32.totalorder %s834, %s836
      %p843 = scmp.eq.s32.totalorder %s112, 1
      %p844 = por %p842, %p843
      %p845 = scmp.ne.s32.totalorder %s836, %s837
      %p846 = scmp.eq.s32.totalorder %s112, 0
      %p847 = por %p845, %p846
      %p848 = scmp.ne.s32.totalorder %s836, %s837
      %p849 = scmp.eq.s32.totalorder %s113, 1
      %p850 = por %p848, %p849
      %p852 = scmp.ne.s32.totalorder %s837, %s851
      %p853 = scmp.eq.s32.totalorder %s113, 0
      %p854 = por %p852, %p853
      %s856 = sadd.s32 %s855, 1
      %p859 = scmp.eq.s32.totalorder %s107, 1
      %p860 = scmp.ne.s32.totalorder %s855, %s857
      %p861 = scmp.eq.s32.totalorder %s107, 0
      %p862 = por %p860, %p861
      %p863 = scmp.ne.s32.totalorder %s855, %s857
      %p864 = scmp.eq.s32.totalorder %s112, 1
      %p865 = por %p863, %p864
      %p866 = scmp.ne.s32.totalorder %s857, %s858
      %p867 = scmp.eq.s32.totalorder %s112, 0
      %p868 = por %p866, %p867
      %p869 = scmp.ne.s32.totalorder %s857, %s858
      %p870 = scmp.eq.s32.totalorder %s113, 1
      %p871 = por %p869, %p870
      %p873 = scmp.ne.s32.totalorder %s858, %s872
      %p874 = scmp.eq.s32.totalorder %s113, 0
      %p875 = por %p873, %p874
      %s877 = sadd.s32 %s876, 1
      %p880 = scmp.eq.s32.totalorder %s107, 1
      %p881 = scmp.ne.s32.totalorder %s876, %s878
      %p882 = scmp.eq.s32.totalorder %s107, 0
      %p883 = por %p881, %p882
      %p884 = scmp.ne.s32.totalorder %s876, %s878
      %p885 = scmp.eq.s32.totalorder %s112, 1
      %p886 = por %p884, %p885
      %p887 = scmp.ne.s32.totalorder %s878, %s879
      %p888 = scmp.eq.s32.totalorder %s112, 0
      %p889 = por %p887, %p888
      %p890 = scmp.ne.s32.totalorder %s878, %s879
      %p891 = scmp.eq.s32.totalorder %s113, 1
      %p892 = por %p890, %p891
      %p894 = scmp.ne.s32.totalorder %s879, %s893
      %p895 = scmp.eq.s32.totalorder %s113, 0
      %p896 = por %p894, %p895
      %s898 = sadd.s32 %s897, 1
      %p901 = scmp.eq.s32.totalorder %s107, 1
      %p902 = scmp.ne.s32.totalorder %s897, %s899
      %p903 = scmp.eq.s32.totalorder %s107, 0
      %p904 = por %p902, %p903
      %p905 = scmp.ne.s32.totalorder %s897, %s899
      %p906 = scmp.eq.s32.totalorder %s112, 1
      %p907 = por %p905, %p906
      %p908 = scmp.ne.s32.totalorder %s899, %s900
      %p909 = scmp.eq.s32.totalorder %s112, 0
      %p910 = por %p908, %p909
      %p911 = scmp.ne.s32.totalorder %s899, %s900
      %p912 = scmp.eq.s32.totalorder %s113, 1
      %p913 = por %p911, %p912
      %p915 = scmp.ne.s32.totalorder %s900, %s914
      %p916 = scmp.eq.s32.totalorder %s113, 0
      %p917 = por %p915, %p916
      %s919 = sadd.s32 %s918, 1
      %p922 = scmp.eq.s32.totalorder %s107, 1
      %p923 = scmp.ne.s32.totalorder %s918, %s920
      %p924 = scmp.eq.s32.totalorder %s107, 0
      %p925 = por %p923, %p924
      %p926 = scmp.ne.s32.totalorder %s918, %s920
      %p927 = scmp.eq.s32.totalorder %s112, 1
      %p928 = por %p926, %p927
      %p929 = scmp.ne.s32.totalorder %s920, %s921
      %p930 = scmp.eq.s32.totalorder %s112, 0
      %p931 = por %p929, %p930
      %p932 = scmp.ne.s32.totalorder %s920, %s921
      %p933 = scmp.eq.s32.totalorder %s113, 1
      %p934 = por %p932, %p933
      %p936 = scmp.ne.s32.totalorder %s921, %s935
      %p937 = scmp.eq.s32.totalorder %s113, 0
      %p938 = por %p936, %p937
      %s940 = sadd.s32 %s939, 1
      %p943 = scmp.eq.s32.totalorder %s107, 1
      %p944 = scmp.ne.s32.totalorder %s939, %s941
      %p945 = scmp.eq.s32.totalorder %s107, 0
      %p946 = por %p944, %p945
      %p947 = scmp.ne.s32.totalorder %s939, %s941
      %p948 = scmp.eq.s32.totalorder %s112, 1
      %p949 = por %p947, %p948
      %p950 = scmp.ne.s32.totalorder %s941, %s942
      %p951 = scmp.eq.s32.totalorder %s112, 0
      %p952 = por %p950, %p951
      %p953 = scmp.ne.s32.totalorder %s941, %s942
      %p954 = scmp.eq.s32.totalorder %s113, 1
      %p955 = por %p953, %p954
      %p957 = scmp.ne.s32.totalorder %s942, %s956
      %p958 = scmp.eq.s32.totalorder %s113, 0
      %p959 = por %p957, %p958
      %s961 = sadd.s32 %s960, 1
      %p964 = scmp.eq.s32.totalorder %s107, 1
      %p965 = scmp.ne.s32.totalorder %s960, %s962
      %p966 = scmp.eq.s32.totalorder %s107, 0
      %p967 = por %p965, %p966
      %p968 = scmp.ne.s32.totalorder %s960, %s962
      %p969 = scmp.eq.s32.totalorder %s112, 1
      %p970 = por %p968, %p969
      %p971 = scmp.ne.s32.totalorder %s962, %s963
      %p972 = scmp.eq.s32.totalorder %s112, 0
      %p973 = por %p971, %p972
      %p974 = scmp.ne.s32.totalorder %s962, %s963
      %p975 = scmp.eq.s32.totalorder %s113, 1
      %p976 = por %p974, %p975
      %p978 = scmp.ne.s32.totalorder %s963, %s977
      %p979 = scmp.eq.s32.totalorder %s113, 0
      %p980 = por %p978, %p979
      %s982 = sadd.s32 %s981, 1
      %p985 = scmp.eq.s32.totalorder %s107, 1
      %p986 = scmp.ne.s32.totalorder %s981, %s983
      %p987 = scmp.eq.s32.totalorder %s107, 0
      %p988 = por %p986, %p987
      %p989 = scmp.ne.s32.totalorder %s981, %s983
      %p990 = scmp.eq.s32.totalorder %s112, 1
      %p991 = por %p989, %p990
      %p992 = scmp.ne.s32.totalorder %s983, %s984
      %p993 = scmp.eq.s32.totalorder %s112, 0
      %p994 = por %p992, %p993
      %p995 = scmp.ne.s32.totalorder %s983, %s984
      %p996 = scmp.eq.s32.totalorder %s113, 1
      %p997 = por %p995, %p996
      %p999 = scmp.ne.s32.totalorder %s984, %s998
      %p1000 = scmp.eq.s32.totalorder %s113, 0
      %p1001 = por %p999, %p1000
      %s1003 = sadd.s32 %s1002, 1
      %p1006 = scmp.eq.s32.totalorder %s107, 1
      %p1007 = scmp.ne.s32.totalorder %s1002, %s1004
      %p1008 = scmp.eq.s32.totalorder %s107, 0
      %p1009 = por %p1007, %p1008
      %p1010 = scmp.ne.s32.totalorder %s1002, %s1004
      %p1011 = scmp.eq.s32.totalorder %s112, 1
      %p1012 = por %p1010, %p1011
      %p1013 = scmp.ne.s32.totalorder %s1004, %s1005
      %p1014 = scmp.eq.s32.totalorder %s112, 0
      %p1015 = por %p1013, %p1014
      %p1016 = scmp.ne.s32.totalorder %s1004, %s1005
      %p1017 = scmp.eq.s32.totalorder %s113, 1
      %p1018 = por %p1016, %p1017
      %p1020 = scmp.ne.s32.totalorder %s1005, %s1019
      %p1021 = scmp.eq.s32.totalorder %s113, 0
      %p1022 = por %p1020, %p1021
      %s1023 = ssub.s32 %s107, %s114
      %p1024 = scmp.eq.s32.totalorder %s1023, 0
      %s1026 = sadd.s32 %s1025, 1
      %s1027 = scalar_select %p1024, %s1025, %s1026
      %p1030 = pneg %p1024
      %p1031 = scmp.eq.s32.totalorder %s107, 1
      %p1032 = por %p1030, %p1031
      %p1033 = scmp.ne.s32.totalorder %s1025, %s1028
      %p1034 = scmp.eq.s32.totalorder %s107, 0
      %p1035 = por %p1033, %p1034
      %p1036 = scmp.ne.s32.totalorder %s1025, %s1028
      %p1037 = scmp.eq.s32.totalorder %s112, 1
      %p1038 = por %p1036, %p1037
      %p1039 = scmp.ne.s32.totalorder %s1028, %s1029
      %p1040 = scmp.eq.s32.totalorder %s112, 0
      %p1041 = por %p1039, %p1040
      %p1042 = scmp.ne.s32.totalorder %s1028, %s1029
      %p1043 = scmp.eq.s32.totalorder %s113, 1
      %p1044 = por %p1042, %p1043
      %p1046 = scmp.ne.s32.totalorder %s1029, %s1045
      %p1047 = scmp.eq.s32.totalorder %s113, 0
      %p1048 = por %p1046, %p1047
      %p1049 = scmp.le.s32.totalorder 1, %s107
      %p1050 = scmp.lt.s32.totalorder %s107, 3
      %p1051 = pnand %p1049, %p1050
      %p1052 = pneg %p1051
      // Predicated region
      $region9: #{tpu_custom_call.1} parent=5 // pred_check
        _
      $region10: #{tpu_custom_call.1} parent=5 // pred_check_branch
        %1054 = sbr.rel (%p1051) target = $region12
      $region11: #{tpu_custom_call.1} parent=5 // pred_region
        %s1055 = ssub.s32 %s107, 1
        // Predicated region
        $region13: #{tpu_custom_call.1} parent=11 // pred_check
          %p1056 = pneg %p154
        $region14: #{tpu_custom_call.1} parent=11 // pred_check_branch
          %1058 = sbr.rel (%p1056) target = $region16
        $region15: #{tpu_custom_call.1} parent=11 // pred_region
          %s1060 = ssub.s32 128, 128
          %1061 = vsyncadd [#allocation6], %s1060
          %s1063 = sshll.u32 [#allocation5], 4
          %s1064 = int_to_ptr.vmem [resolvable:$true] %s1063
          %1066 = dma.hbm_to_vmem [thread:$0]  %s5, 128, %s1064, [#allocation6]
        $region16: #{tpu_custom_call.1} parent=11 // pred_fallthru
          _
        // Predicated region
        $region17: #{tpu_custom_call.1} parent=11 // pred_check
          %p1067 = pneg %p175
        $region18: #{tpu_custom_call.1} parent=11 // pred_check_branch
          %1069 = sbr.rel (%p1067) target = $region20
        $region19: #{tpu_custom_call.1} parent=11 // pred_region
          %s1071 = ssub.s32 16, 16
          %1072 = vsyncadd [#allocation8], %s1071
          %s1074 = sshll.u32 [#allocation7], 4
          %s1075 = int_to_ptr.vmem [resolvable:$true] %s1074
          %1077 = dma.hbm_to_vmem [thread:$0]  %s7, 16, %s1075, [#allocation8]
        $region20: #{tpu_custom_call.1} parent=11 // pred_fallthru
          _
        // Predicated region
        $region21: #{tpu_custom_call.1} parent=11 // pred_check
          %p1078 = pneg %p196
        $region22: #{tpu_custom_call.1} parent=11 // pred_check_branch
          %1080 = sbr.rel (%p1078) target = $region24
        $region23: #{tpu_custom_call.1} parent=11 // pred_region
          _
        $region24: #{tpu_custom_call.1} parent=11 // pred_fallthru
          _
        // Predicated region
        $region25: #{tpu_custom_call.1} parent=11 // pred_check
          %p1081 = pneg %p217
        $region26: #{tpu_custom_call.1} parent=11 // pred_check_branch
          %1083 = sbr.rel (%p1081) target = $region28
        $region27: #{tpu_custom_call.1} parent=11 // pred_region
          %s1085 = ssub.s32 16, 16
          %1086 = vsyncadd [#allocation8], %s1085
          %s1088 = sshll.u32 [#allocation9], 4
          %s1089 = int_to_ptr.vmem [resolvable:$true] %s1088
          %1091 = dma.hbm_to_vmem [thread:$0]  %s11, 16, %s1089, [#allocation8]
        $region28: #{tpu_custom_call.1} parent=11 // pred_fallthru
          _
        // Predicated region
        $region29: #{tpu_custom_call.1} parent=11 // pred_check
          %p1092 = pneg %p238
        $region30: #{tpu_custom_call.1} parent=11 // pred_check_branch
          %1094 = sbr.rel (%p1092) target = $region32
        $region31: #{tpu_custom_call.1} parent=11 // pred_region
          _
        $region32: #{tpu_custom_call.1} parent=11 // pred_fallthru
          _
        // Predicated region
        $region33: #{tpu_custom_call.1} parent=11 // pred_check
          %p1095 = pneg %p259
        $region34: #{tpu_custom_call.1} parent=11 // pred_check_branch
          %1097 = sbr.rel (%p1095) target = $region36
        $region35: #{tpu_custom_call.1} parent=11 // pred_region
          %s1099 = ssub.s32 16, 16
          %1100 = vsyncadd [#allocation11], %s1099
          %s1102 = sshll.u32 [#allocation10], 4
          %s1103 = int_to_ptr.vmem [resolvable:$true] %s1102
          %1105 = dma.hbm_to_vmem [thread:$0]  %s15, 16, %s1103, [#allocation11]
        $region36: #{tpu_custom_call.1} parent=11 // pred_fallthru
          _
        // Predicated region
        $region37: #{tpu_custom_call.1} parent=11 // pred_check
          %p1106 = pneg %p280
        $region38: #{tpu_custom_call.1} parent=11 // pred_check_branch
          %1108 = sbr.rel (%p1106) target = $region40
        $region39: #{tpu_custom_call.1} parent=11 // pred_region
          _
        $region40: #{tpu_custom_call.1} parent=11 // pred_fallthru
          _
        // Predicated region
        $region41: #{tpu_custom_call.1} parent=11 // pred_check
          %p1109 = pneg %p301
        $region42: #{tpu_custom_call.1} parent=11 // pred_check_branch
          %1111 = sbr.rel (%p1109) target = $region44
        $region43: #{tpu_custom_call.1} parent=11 // pred_region
          %s1113 = ssub.s32 16, 16
          %1114 = vsyncadd [#allocation11], %s1113
          %s1116 = sshll.u32 [#allocation12], 4
          %s1117 = int_to_ptr.vmem [resolvable:$true] %s1116
          %1119 = dma.hbm_to_vmem [thread:$0]  %s19, 16, %s1117, [#allocation11]
        $region44: #{tpu_custom_call.1} parent=11 // pred_fallthru
          _
        // Predicated region
        $region45: #{tpu_custom_call.1} parent=11 // pred_check
          %p1120 = pneg %p322
        $region46: #{tpu_custom_call.1} parent=11 // pred_check_branch
          %1122 = sbr.rel (%p1120) target = $region48
        $region47: #{tpu_custom_call.1} parent=11 // pred_region
          _
        $region48: #{tpu_custom_call.1} parent=11 // pred_fallthru
          _
        // Predicated region
        $region49: #{tpu_custom_call.1} parent=11 // pred_check
          %p1123 = pneg %p343
        $region50: #{tpu_custom_call.1} parent=11 // pred_check_branch
          %1125 = sbr.rel (%p1123) target = $region52
        $region51: #{tpu_custom_call.1} parent=11 // pred_region
          %s1127 = ssub.s32 16, 16
          %1128 = vsyncadd [#allocation14], %s1127
          %s1130 = sshll.u32 [#allocation13], 4
          %s1131 = int_to_ptr.vmem [resolvable:$true] %s1130
          %1133 = dma.hbm_to_vmem [thread:$0]  %s23, 16, %s1131, [#allocation14]
        $region52: #{tpu_custom_call.1} parent=11 // pred_fallthru
          _
        // Predicated region
        $region53: #{tpu_custom_call.1} parent=11 // pred_check
          %p1134 = pneg %p364
        $region54: #{tpu_custom_call.1} parent=11 // pred_check_branch
          %1136 = sbr.rel (%p1134) target = $region56
        $region55: #{tpu_custom_call.1} parent=11 // pred_region
          _
        $region56: #{tpu_custom_call.1} parent=11 // pred_fallthru
          _
        // Predicated region
        $region57: #{tpu_custom_call.1} parent=11 // pred_check
          %p1137 = pneg %p385
        $region58: #{tpu_custom_call.1} parent=11 // pred_check_branch
          %1139 = sbr.rel (%p1137) target = $region60
        $region59: #{tpu_custom_call.1} parent=11 // pred_region
          %s1141 = ssub.s32 16, 16
          %1142 = vsyncadd [#allocation14], %s1141
          %s1144 = sshll.u32 [#allocation15], 4
          %s1145 = int_to_ptr.vmem [resolvable:$true] %s1144
          %1147 = dma.hbm_to_vmem [thread:$0]  %s27, 16, %s1145, [#allocation14]
        $region60: #{tpu_custom_call.1} parent=11 // pred_fallthru
          _
        // Predicated region
        $region61: #{tpu_custom_call.1} parent=11 // pred_check
          %p1148 = pneg %p406
        $region62: #{tpu_custom_call.1} parent=11 // pred_check_branch
          %1150 = sbr.rel (%p1148) target = $region64
        $region63: #{tpu_custom_call.1} parent=11 // pred_region
          %s1152 = ssub.s32 16, 16
          %1153 = vsyncadd [#allocation17], %s1152
          %s1155 = sshll.u32 [#allocation16], 4
          %s1156 = int_to_ptr.vmem [resolvable:$true] %s1155
          %1158 = dma.hbm_to_vmem [thread:$0]  %s29, 16, %s1156, [#allocation17]
        $region64: #{tpu_custom_call.1} parent=11 // pred_fallthru
          _
        // Predicated region
        $region65: #{tpu_custom_call.1} parent=11 // pred_check
          %p1159 = pneg %p427
        $region66: #{tpu_custom_call.1} parent=11 // pred_check_branch
          %1161 = sbr.rel (%p1159) target = $region68
        $region67: #{tpu_custom_call.1} parent=11 // pred_region
          %s1163 = ssub.s32 16, 16
          %1164 = vsyncadd [#allocation17], %s1163
          %s1166 = sshll.u32 [#allocation18], 4
          %s1167 = int_to_ptr.vmem [resolvable:$true] %s1166
          %1169 = dma.hbm_to_vmem [thread:$0]  %s31, 16, %s1167, [#allocation17]
        $region68: #{tpu_custom_call.1} parent=11 // pred_fallthru
          _
        // Predicated region
        $region69: #{tpu_custom_call.1} parent=11 // pred_check
          %p1170 = pneg %p448
        $region70: #{tpu_custom_call.1} parent=11 // pred_check_branch
          %1172 = sbr.rel (%p1170) target = $region72
        $region71: #{tpu_custom_call.1} parent=11 // pred_region
          %s1174 = ssub.s32 128, 128
          %1175 = vsyncadd [#allocation20], %s1174
          %s1177 = sshll.u32 [#allocation19], 4
          %s1178 = int_to_ptr.vmem [resolvable:$true] %s1177
          %1180 = dma.hbm_to_vmem [thread:$0]  %s33, 128, %s1178, [#allocation20]
        $region72: #{tpu_custom_call.1} parent=11 // pred_fallthru
          _
        // Predicated region
        $region73: #{tpu_custom_call.1} parent=11 // pred_check
          %p1181 = pneg %p469
        $region74: #{tpu_custom_call.1} parent=11 // pred_check_branch
          %1183 = sbr.rel (%p1181) target = $region76
        $region75: #{tpu_custom_call.1} parent=11 // pred_region
          %s1185 = ssub.s32 16, 16
          %1186 = vsyncadd [#allocation20], %s1185
          %s1188 = sshll.u32 [#allocation21], 4
          %s1189 = int_to_ptr.vmem [resolvable:$true] %s1188
          %1191 = dma.hbm_to_vmem [thread:$0]  %s35, 16, %s1189, [#allocation20]
        $region76: #{tpu_custom_call.1} parent=11 // pred_fallthru
          _
        // Predicated region
        $region77: #{tpu_custom_call.1} parent=11 // pred_check
          %p1192 = pneg %p490
        $region78: #{tpu_custom_call.1} parent=11 // pred_check_branch
          %1194 = sbr.rel (%p1192) target = $region80
        $region79: #{tpu_custom_call.1} parent=11 // pred_region
          _
        $region80: #{tpu_custom_call.1} parent=11 // pred_fallthru
          _
        // Predicated region
        $region81: #{tpu_custom_call.1} parent=11 // pred_check
          %p1195 = pneg %p511
        $region82: #{tpu_custom_call.1} parent=11 // pred_check_branch
          %1197 = sbr.rel (%p1195) target = $region84
        $region83: #{tpu_custom_call.1} parent=11 // pred_region
          %s1199 = ssub.s32 16, 16
          %1200 = vsyncadd [#allocation23], %s1199
          %s1202 = sshll.u32 [#allocation22], 4
          %s1203 = int_to_ptr.vmem [resolvable:$true] %s1202
          %1205 = dma.hbm_to_vmem [thread:$0]  %s39, 16, %s1203, [#allocation23]
        $region84: #{tpu_custom_call.1} parent=11 // pred_fallthru
          _
        // Predicated region
        $region85: #{tpu_custom_call.1} parent=11 // pred_check
          %p1206 = pneg %p532
        $region86: #{tpu_custom_call.1} parent=11 // pred_check_branch
          %1208 = sbr.rel (%p1206) target = $region88
        $region87: #{tpu_custom_call.1} parent=11 // pred_region
          _
        $region88: #{tpu_custom_call.1} parent=11 // pred_fallthru
          _
        // Predicated region
        $region89: #{tpu_custom_call.1} parent=11 // pred_check
          %p1209 = pneg %p553
        $region90: #{tpu_custom_call.1} parent=11 // pred_check_branch
          %1211 = sbr.rel (%p1209) target = $region92
        $region91: #{tpu_custom_call.1} parent=11 // pred_region
          %s1213 = ssub.s32 16, 16
          %1214 = vsyncadd [#allocation23], %s1213
          %s1216 = sshll.u32 [#allocation24], 4
          %s1217 = int_to_ptr.vmem [resolvable:$true] %s1216
          %1219 = dma.hbm_to_vmem [thread:$0]  %s43, 16, %s1217, [#allocation23]
        $region92: #{tpu_custom_call.1} parent=11 // pred_fallthru
          _
        // Predicated region
        $region93: #{tpu_custom_call.1} parent=11 // pred_check
          %p1220 = pneg %p574
        $region94: #{tpu_custom_call.1} parent=11 // pred_check_branch
          %1222 = sbr.rel (%p1220) target = $region96
        $region95: #{tpu_custom_call.1} parent=11 // pred_region
          _
        $region96: #{tpu_custom_call.1} parent=11 // pred_fallthru
          _
        // Predicated region
        $region97: #{tpu_custom_call.1} parent=11 // pred_check
          %p1223 = pneg %p595
        $region98: #{tpu_custom_call.1} parent=11 // pred_check_branch
          %1225 = sbr.rel (%p1223) target = $region100
        $region99: #{tpu_custom_call.1} parent=11 // pred_region
          %s1227 = ssub.s32 16, 16
          %1228 = vsyncadd [#allocation26], %s1227
          %s1230 = sshll.u32 [#allocation25], 4
          %s1231 = int_to_ptr.vmem [resolvable:$true] %s1230
          %1233 = dma.hbm_to_vmem [thread:$0]  %s47, 16, %s1231, [#allocation26]
        $region100: #{tpu_custom_call.1} parent=11 // pred_fallthru
          _
        // Predicated region
        $region101: #{tpu_custom_call.1} parent=11 // pred_check
          %p1234 = pneg %p616
        $region102: #{tpu_custom_call.1} parent=11 // pred_check_branch
          %1236 = sbr.rel (%p1234) target = $region104
        $region103: #{tpu_custom_call.1} parent=11 // pred_region
          _
        $region104: #{tpu_custom_call.1} parent=11 // pred_fallthru
          _
        // Predicated region
        $region105: #{tpu_custom_call.1} parent=11 // pred_check
          %p1237 = pneg %p637
        $region106: #{tpu_custom_call.1} parent=11 // pred_check_branch
          %1239 = sbr.rel (%p1237) target = $region108
        $region107: #{tpu_custom_call.1} parent=11 // pred_region
          _
        $region108: #{tpu_custom_call.1} parent=11 // pred_fallthru
          _
        // Predicated region
        $region109: #{tpu_custom_call.1} parent=11 // pred_check
          %p1240 = pneg %p658
        $region110: #{tpu_custom_call.1} parent=11 // pred_check_branch
          %1242 = sbr.rel (%p1240) target = $region112
        $region111: #{tpu_custom_call.1} parent=11 // pred_region
          _
        $region112: #{tpu_custom_call.1} parent=11 // pred_fallthru
          _
        // Predicated region
        $region113: #{tpu_custom_call.1} parent=11 // pred_check
          %p1243 = pneg %p679
        $region114: #{tpu_custom_call.1} parent=11 // pred_check_branch
          %1245 = sbr.rel (%p1243) target = $region116
        $region115: #{tpu_custom_call.1} parent=11 // pred_region
          _
        $region116: #{tpu_custom_call.1} parent=11 // pred_fallthru
          _
        // Predicated region
        $region117: #{tpu_custom_call.1} parent=11 // pred_check
          %p1246 = pneg %p700
        $region118: #{tpu_custom_call.1} parent=11 // pred_check_branch
          %1248 = sbr.rel (%p1246) target = $region120
        $region119: #{tpu_custom_call.1} parent=11 // pred_region
          _
        $region120: #{tpu_custom_call.1} parent=11 // pred_fallthru
          _
        // Predicated region
        $region121: #{tpu_custom_call.1} parent=11 // pred_check
          %p1249 = pneg %p721
        $region122: #{tpu_custom_call.1} parent=11 // pred_check_branch
          %1251 = sbr.rel (%p1249) target = $region124
        $region123: #{tpu_custom_call.1} parent=11 // pred_region
          _
        $region124: #{tpu_custom_call.1} parent=11 // pred_fallthru
          _
        // Predicated region
        $region125: #{tpu_custom_call.1} parent=11 // pred_check
          %p1252 = pneg %p742
        $region126: #{tpu_custom_call.1} parent=11 // pred_check_branch
          %1254 = sbr.rel (%p1252) target = $region128
        $region127: #{tpu_custom_call.1} parent=11 // pred_region
          _
        $region128: #{tpu_custom_call.1} parent=11 // pred_fallthru
          _
        // Predicated region
        $region129: #{tpu_custom_call.1} parent=11 // pred_check
          %p1255 = pneg %p763
        $region130: #{tpu_custom_call.1} parent=11 // pred_check_branch
          %1257 = sbr.rel (%p1255) target = $region132
        $region131: #{tpu_custom_call.1} parent=11 // pred_region
          _
        $region132: #{tpu_custom_call.1} parent=11 // pred_fallthru
          _
        // Predicated region
        $region133: #{tpu_custom_call.1} parent=11 // pred_check
          %p1258 = pneg %p784
        $region134: #{tpu_custom_call.1} parent=11 // pred_check_branch
          %1260 = sbr.rel (%p1258) target = $region136
        $region135: #{tpu_custom_call.1} parent=11 // pred_region
          _
        $region136: #{tpu_custom_call.1} parent=11 // pred_fallthru
          _
        // Predicated region
        $region137: #{tpu_custom_call.1} parent=11 // pred_check
          %p1261 = pneg %p805
        $region138: #{tpu_custom_call.1} parent=11 // pred_check_branch
          %1263 = sbr.rel (%p1261) target = $region140
        $region139: #{tpu_custom_call.1} parent=11 // pred_region
          _
        $region140: #{tpu_custom_call.1} parent=11 // pred_fallthru
          _
        // Predicated region
        $region141: #{tpu_custom_call.1} parent=11 // pred_check
          %p1264 = pneg %p826
        $region142: #{tpu_custom_call.1} parent=11 // pred_check_branch
          %1266 = sbr.rel (%p1264) target = $region144
        $region143: #{tpu_custom_call.1} parent=11 // pred_region
          _
        $region144: #{tpu_custom_call.1} parent=11 // pred_fallthru
          _
        // Predicated region
        $region145: #{tpu_custom_call.1} parent=11 // pred_check
          %p1267 = pneg %p847
        $region146: #{tpu_custom_call.1} parent=11 // pred_check_branch
          %1269 = sbr.rel (%p1267) target = $region148
        $region147: #{tpu_custom_call.1} parent=11 // pred_region
          _
        $region148: #{tpu_custom_call.1} parent=11 // pred_fallthru
          _
        // Predicated region
        $region149: #{tpu_custom_call.1} parent=11 // pred_check
          %p1270 = pneg %p868
        $region150: #{tpu_custom_call.1} parent=11 // pred_check_branch
          %1272 = sbr.rel (%p1270) target = $region152
        $region151: #{tpu_custom_call.1} parent=11 // pred_region
          _
        $region152: #{tpu_custom_call.1} parent=11 // pred_fallthru
          _
        // Predicated region
        $region153: #{tpu_custom_call.1} parent=11 // pred_check
          %p1273 = pneg %p889
        $region154: #{tpu_custom_call.1} parent=11 // pred_check_branch
          %1275 = sbr.rel (%p1273) target = $region156
        $region155: #{tpu_custom_call.1} parent=11 // pred_region
          _
        $region156: #{tpu_custom_call.1} parent=11 // pred_fallthru
          _
        // Predicated region
        $region157: #{tpu_custom_call.1} parent=11 // pred_check
          %p1276 = pneg %p910
        $region158: #{tpu_custom_call.1} parent=11 // pred_check_branch
          %1278 = sbr.rel (%p1276) target = $region160
        $region159: #{tpu_custom_call.1} parent=11 // pred_region
          _
        $region160: #{tpu_custom_call.1} parent=11 // pred_fallthru
          _
        // Predicated region
        $region161: #{tpu_custom_call.1} parent=11 // pred_check
          %p1279 = pneg %p931
        $region162: #{tpu_custom_call.1} parent=11 // pred_check_branch
          %1281 = sbr.rel (%p1279) target = $region164
        $region163: #{tpu_custom_call.1} parent=11 // pred_region
          _
        $region164: #{tpu_custom_call.1} parent=11 // pred_fallthru
          _
        // Predicated region
        $region165: #{tpu_custom_call.1} parent=11 // pred_check
          %p1282 = pneg %p952
        $region166: #{tpu_custom_call.1} parent=11 // pred_check_branch
          %1284 = sbr.rel (%p1282) target = $region168
        $region167: #{tpu_custom_call.1} parent=11 // pred_region
          _
        $region168: #{tpu_custom_call.1} parent=11 // pred_fallthru
          _
        // Predicated region
        $region169: #{tpu_custom_call.1} parent=11 // pred_check
          %p1285 = pneg %p973
        $region170: #{tpu_custom_call.1} parent=11 // pred_check_branch
          %1287 = sbr.rel (%p1285) target = $region172
        $region171: #{tpu_custom_call.1} parent=11 // pred_region
          _
        $region172: #{tpu_custom_call.1} parent=11 // pred_fallthru
          _
        // Predicated region
        $region173: #{tpu_custom_call.1} parent=11 // pred_check
          %p1288 = pneg %p994
        $region174: #{tpu_custom_call.1} parent=11 // pred_check_branch
          %1290 = sbr.rel (%p1288) target = $region176
        $region175: #{tpu_custom_call.1} parent=11 // pred_region
          _
        $region176: #{tpu_custom_call.1} parent=11 // pred_fallthru
          _
        // Predicated region
        $region177: #{tpu_custom_call.1} parent=11 // pred_check
          %p1291 = pneg %p1015
        $region178: #{tpu_custom_call.1} parent=11 // pred_check_branch
          %1293 = sbr.rel (%p1291) target = $region180
        $region179: #{tpu_custom_call.1} parent=11 // pred_region
          _
        $region180: #{tpu_custom_call.1} parent=11 // pred_fallthru
          _
      $region12: #{tpu_custom_call.1} parent=5 // pred_fallthru
        _
      %p1294 = scmp.lt.s32.totalorder %s107, 2
      // Predicated region
      $region181: #{tpu_custom_call.1} parent=5 // pred_check
        %p1295 = pneg %p1294
      $region182: #{tpu_custom_call.1} parent=5 // pred_check_branch
        %1297 = sbr.rel (%p1295) target = $region184
      $region183: #{tpu_custom_call.1} parent=5 // pred_region
        // Predicated region
        $region185: #{tpu_custom_call.1} parent=183 // pred_check
          %p1298 = pneg %p127
        $region186: #{tpu_custom_call.1} parent=183 // pred_check_branch
          %1300 = sbr.rel (%p1298) target = $region188
        $region187: #{tpu_custom_call.1} parent=183 // pred_region
          %p1301 = scmp.lt.s32.totalorder %s107, 1
          %s1302 = scalar_select %p1301, %s107, 1
          %s1303 = smul.addr %s1302, 2
          %s1304 = smul.addr %s1303, 8
          %s1305 = scalar_lea.vmem %s3, %s1304
        $region188: #{tpu_custom_call.1} parent=183 // pred_fallthru
          _
      $region184: #{tpu_custom_call.1} parent=5 // pred_fallthru
        _
      %p1306 = scmp.le.s32.totalorder 1, %s107
      %p1307 = scmp.lt.s32.totalorder %s107, 3
      %p1308 = pnand %p1306, %p1307
      %p1309 = pneg %p1308
      // Predicated region
      $region189: #{tpu_custom_call.1} parent=5 // pred_check
        _
      $region190: #{tpu_custom_call.1} parent=5 // pred_check_branch
        %1311 = sbr.rel (%p1308) target = $region192
      $region191: #{tpu_custom_call.1} parent=5 // pred_region
        %s1312 = ssub.s32 %s107, 1
        // Predicated region
        $region193: #{tpu_custom_call.1} parent=191 // pred_check
          %p1313 = pneg %p154
        $region194: #{tpu_custom_call.1} parent=191 // pred_check_branch
          %1315 = sbr.rel (%p1313) target = $region196
        $region195: #{tpu_custom_call.1} parent=191 // pred_region
          %1316 = dma.done [#allocation6], 128
        $region196: #{tpu_custom_call.1} parent=191 // pred_fallthru
          _
        // Predicated region
        $region197: #{tpu_custom_call.1} parent=191 // pred_check
          %p1317 = pneg %p175
        $region198: #{tpu_custom_call.1} parent=191 // pred_check_branch
          %1319 = sbr.rel (%p1317) target = $region200
        $region199: #{tpu_custom_call.1} parent=191 // pred_region
          %1320 = dma.done [#allocation8], 16
        $region200: #{tpu_custom_call.1} parent=191 // pred_fallthru
          _
        // Predicated region
        $region201: #{tpu_custom_call.1} parent=191 // pred_check
          %p1321 = pneg %p217
        $region202: #{tpu_custom_call.1} parent=191 // pred_check_branch
          %1323 = sbr.rel (%p1321) target = $region204
        $region203: #{tpu_custom_call.1} parent=191 // pred_region
          %1324 = dma.done [#allocation8], 16
        $region204: #{tpu_custom_call.1} parent=191 // pred_fallthru
          _
        // Predicated region
        $region205: #{tpu_custom_call.1} parent=191 // pred_check
          %p1325 = pneg %p259
        $region206: #{tpu_custom_call.1} parent=191 // pred_check_branch
          %1327 = sbr.rel (%p1325) target = $region208
        $region207: #{tpu_custom_call.1} parent=191 // pred_region
          %1328 = dma.done [#allocation11], 16
        $region208: #{tpu_custom_call.1} parent=191 // pred_fallthru
          _
        // Predicated region
        $region209: #{tpu_custom_call.1} parent=191 // pred_check
          %p1329 = pneg %p301
        $region210: #{tpu_custom_call.1} parent=191 // pred_check_branch
          %1331 = sbr.rel (%p1329) target = $region212
        $region211: #{tpu_custom_call.1} parent=191 // pred_region
          %1332 = dma.done [#allocation11], 16
        $region212: #{tpu_custom_call.1} parent=191 // pred_fallthru
          _
        // Predicated region
        $region213: #{tpu_custom_call.1} parent=191 // pred_check
          %p1333 = pneg %p343
        $region214: #{tpu_custom_call.1} parent=191 // pred_check_branch
          %1335 = sbr.rel (%p1333) target = $region216
        $region215: #{tpu_custom_call.1} parent=191 // pred_region
          %1336 = dma.done [#allocation14], 16
        $region216: #{tpu_custom_call.1} parent=191 // pred_fallthru
          _
        // Predicated region
        $region217: #{tpu_custom_call.1} parent=191 // pred_check
          %p1337 = pneg %p385
        $region218: #{tpu_custom_call.1} parent=191 // pred_check_branch
          %1339 = sbr.rel (%p1337) target = $region220
        $region219: #{tpu_custom_call.1} parent=191 // pred_region
          %1340 = dma.done [#allocation14], 16
        $region220: #{tpu_custom_call.1} parent=191 // pred_fallthru
          _
        // Predicated region
        $region221: #{tpu_custom_call.1} parent=191 // pred_check
          %p1341 = pneg %p406
        $region222: #{tpu_custom_call.1} parent=191 // pred_check_branch
          %1343 = sbr.rel (%p1341) target = $region224
        $region223: #{tpu_custom_call.1} parent=191 // pred_region
          %1344 = dma.done [#allocation17], 16
        $region224: #{tpu_custom_call.1} parent=191 // pred_fallthru
          _
        // Predicated region
        $region225: #{tpu_custom_call.1} parent=191 // pred_check
          %p1345 = pneg %p427
        $region226: #{tpu_custom_call.1} parent=191 // pred_check_branch
          %1347 = sbr.rel (%p1345) target = $region228
        $region227: #{tpu_custom_call.1} parent=191 // pred_region
          %1348 = dma.done [#allocation17], 16
        $region228: #{tpu_custom_call.1} parent=191 // pred_fallthru
          _
        // Predicated region
        $region229: #{tpu_custom_call.1} parent=191 // pred_check
          %p1349 = pneg %p448
        $region230: #{tpu_custom_call.1} parent=191 // pred_check_branch
          %1351 = sbr.rel (%p1349) target = $region232
        $region231: #{tpu_custom_call.1} parent=191 // pred_region
          %1352 = dma.done [#allocation20], 128
        $region232: #{tpu_custom_call.1} parent=191 // pred_fallthru
          _
        // Predicated region
        $region233: #{tpu_custom_call.1} parent=191 // pred_check
          %p1353 = pneg %p469
        $region234: #{tpu_custom_call.1} parent=191 // pred_check_branch
          %1355 = sbr.rel (%p1353) target = $region236
        $region235: #{tpu_custom_call.1} parent=191 // pred_region
          %1356 = dma.done [#allocation20], 16
        $region236: #{tpu_custom_call.1} parent=191 // pred_fallthru
          _
        // Predicated region
        $region237: #{tpu_custom_call.1} parent=191 // pred_check
          %p1357 = pneg %p511
        $region238: #{tpu_custom_call.1} parent=191 // pred_check_branch
          %1359 = sbr.rel (%p1357) target = $region240
        $region239: #{tpu_custom_call.1} parent=191 // pred_region
          %1360 = dma.done [#allocation23], 16
        $region240: #{tpu_custom_call.1} parent=191 // pred_fallthru
          _
        // Predicated region
        $region241: #{tpu_custom_call.1} parent=191 // pred_check
          %p1361 = pneg %p553
        $region242: #{tpu_custom_call.1} parent=191 // pred_check_branch
          %1363 = sbr.rel (%p1361) target = $region244
        $region243: #{tpu_custom_call.1} parent=191 // pred_region
          %1364 = dma.done [#allocation23], 16
        $region244: #{tpu_custom_call.1} parent=191 // pred_fallthru
          _
        // Predicated region
        $region245: #{tpu_custom_call.1} parent=191 // pred_check
          %p1365 = pneg %p595
        $region246: #{tpu_custom_call.1} parent=191 // pred_check_branch
          %1367 = sbr.rel (%p1365) target = $region248
        $region247: #{tpu_custom_call.1} parent=191 // pred_region
          %1368 = dma.done [#allocation26], 16
        $region248: #{tpu_custom_call.1} parent=191 // pred_fallthru
          _
        %p1369 = scmp.lt.s32.totalorder %s112, 1
        %s1370 = scalar_select %p1369, %s112, 1
        %s1371 = smul.addr %s1370, 2
        %s1372 = smul.addr %s1371, 8
        %s1373 = scalar_lea.vmem %s3, %s1372
        %p1374 = pneg %p133
        %p1375 = pneg %p130
        %p1376 = pneg %p154
        %p1377 = pneg %p151
        %p1378 = pneg %p175
        %p1379 = pneg %p172
        %p1380 = pneg %p196
        %p1381 = pneg %p193
        %p1382 = pneg %p217
        %p1383 = pneg %p214
        %p1384 = pneg %p238
        %p1385 = pneg %p235
        %p1386 = pneg %p259
        %p1387 = pneg %p256
        %p1388 = pneg %p280
        %p1389 = pneg %p277
        %p1390 = pneg %p301
        %p1391 = pneg %p298
        %p1392 = pneg %p322
        %p1393 = pneg %p319
        %p1394 = pneg %p343
        %p1395 = pneg %p340
        %p1396 = pneg %p364
        %p1397 = pneg %p361
        %p1398 = pneg %p385
        %p1399 = pneg %p382
        %p1400 = pneg %p406
        %p1401 = pneg %p403
        %p1402 = pneg %p427
        %p1403 = pneg %p424
        %p1404 = pneg %p448
        %p1405 = pneg %p445
        %p1406 = pneg %p469
        %p1407 = pneg %p466
        %p1408 = pneg %p490
        %p1409 = pneg %p487
        %p1410 = pneg %p511
        %p1411 = pneg %p508
        %p1412 = pneg %p532
        %p1413 = pneg %p529
        %p1414 = pneg %p553
        %p1415 = pneg %p550
        %p1416 = pneg %p574
        %p1417 = pneg %p571
        %p1418 = pneg %p595
        %p1419 = pneg %p592
        %p1420 = pneg %p616
        %p1421 = pneg %p613
        %p1422 = pneg %p637
        %p1423 = pneg %p634
        %p1424 = pneg %p658
        %p1425 = pneg %p655
        %p1426 = pneg %p679
        %p1427 = pneg %p676
        %p1428 = pneg %p700
        %p1429 = pneg %p697
        %p1430 = pneg %p721
        %p1431 = pneg %p718
        %p1432 = pneg %p742
        %p1433 = pneg %p739
        %p1434 = pneg %p763
        %p1435 = pneg %p760
        %p1436 = pneg %p784
        %p1437 = pneg %p781
        %p1438 = pneg %p805
        %p1439 = pneg %p802
        %p1440 = pneg %p826
        %p1441 = pneg %p823
        %p1442 = pneg %p847
        %p1443 = pneg %p844
        %p1444 = pneg %p868
        %p1445 = pneg %p865
        %p1446 = pneg %p889
        %p1447 = pneg %p886
        %p1448 = pneg %p910
        %p1449 = pneg %p907
        %p1450 = pneg %p931
        %p1451 = pneg %p928
        %p1452 = pneg %p952
        %p1453 = pneg %p949
        %p1454 = pneg %p973
        %p1455 = pneg %p970
        %p1456 = pneg %p994
        %p1457 = pneg %p991
        %p1458 = pneg %p1015
        %p1459 = pneg %p1012
        %p1460 = pneg %p1041
        %p1461 = pneg %p1038
        %p1462 = scmp.lt.s32.totalorder %s112, 1
        %s1463 = scalar_select %p1462, %s112, 1
        %s1464 = smul.addr %s1463, 2
        %s1465 = smul.addr %s1464, 8
        %s1466 = scalar_lea.vmem %s89, %s1465
        %p1467 = scmp.lt.s32.totalorder %s112, 1
        %s1468 = scalar_select %p1467, %s112, 1
        %s1469 = smul.addr %s1468, 2
        %s1470 = smul.addr %s1469, 8
        %s1471 = scalar_lea.vmem %s3, %s1470
        %p1472 = scmp.lt.s32.totalorder %s112, 1
        %s1473 = scalar_select %p1472, %s112, 1
        %s1474 = smul.addr %s1473, 2
        %s1475 = smul.addr %s1474, 8
        %s1476 = scalar_lea.vmem %s89, %s1475
        %vm1477 = vcmask 130048
        %1478 = vst.msk [vmem:[#allocation2] sm:$0xff] %vm1477, 0.0
        %1479 = vst.msk [vmem:[#allocation2 + $0x8] sm:$0xff] %vm1477, 0.0
        %1480 = vst.msk [vmem:[#allocation2 + $0x10] sm:$0xff] %vm1477, 0.0
        %v1481 = vld [vmem:[%s1471] sm:$0xff]
        %v1482 = vld [vmem:[%s1471 + $0x8] sm:$0xff]
        %vm1483 = vcmask 64512
        %1484 = vst.msk [vmem:[#allocation2 + $0x8] sm:$0xff] %vm1483, %v1481
        %1485 = vst.msk [vmem:[#allocation2 + $0x10] sm:$0xff] %vm1483, %v1482
        %v1486 = vld [vmem:[#allocation9] sm:$0x1]
        %v1488 = vlaneseq
        %v1489 = vshrl.u32 %v1488, 7
        %v1490 = vsub.s32 0, %v1489
        %v1491 = vrot.slane %v1486, %v1490
        %v1493 = vadd.f32 %v1491, 0.0
        %v1494 = vld [vmem:[#allocation2 + $0x6] sm:$0xff]
        %v1495 = vld [vmem:[#allocation2 + $0xe] sm:$0xff]
        %v1496 = vld [vmem:[%s9] sm:$0xff]
        %v1498 = vsel %vm1483, %v1494, 0
        %v1501 = vsel %vm1483, %v1495, 0
        %1503 = vmatprep.subr.mxu0 0.0
        %1504 = vmatpush1.msra.mxu0 0.0
        %1505 = vmatprep.subr.mxu0 0.0
        %1506 = vmatpush1.msra.mxu0 0.0
        %1507 = vmatprep.subr.mxu0 0.0
        %1508 = vmatpush1.msra.mxu0 0.0
        %1509 = vmatprep.subr.mxu0 0.0
        %1510 = vmatpush1.msra.mxu0 0.0
        %1511 = vmatprep.subr.mxu0 0.0
        %1512 = vmatpush1.msra.mxu0 0.0
        %1513 = vmatprep.subr.mxu0 0.0
        %1514 = vmatpush1.msra.mxu0 0.0
        %1515 = vmatprep.subr.mxu0 0.0
        %1516 = vmatpush1.msra.mxu0 0.0
        %1517 = vmatprep.subr.mxu0 0.0
        %1518 = vmatpush1.msra.mxu0 0.0
        %1519 = vmatprep.subr.mxu0 0.0
        %1520 = vmatpush1.msra.mxu0 0.0
        %1521 = vmatprep.subr.mxu0 0.0
        %1522 = vmatpush1.msra.mxu0 0.0
        %1523 = vmatprep.subr.mxu0 0.0
        %1524 = vmatpush1.msra.mxu0 0.0
        %1525 = vmatprep.subr.mxu0 0.0
        %1526 = vmatpush1.msra.mxu0 0.0
        %1527 = vmatprep.subr.mxu0 0.0
        %1528 = vmatpush1.msra.mxu0 0.0
        %1529 = vmatprep.subr.mxu0 0.0
        %1530 = vmatpush1.msra.mxu0 0.0
        %1531 = vmatprep.subr.mxu0 0.0
        %1532 = vmatpush1.msra.mxu0 0.0
        %1533 = vmatprep.subr.mxu0 0.0
        %1534 = vmatpush1.msra.mxu0 %v1496
        %1535 = vmatprep.subr.mxu0 0.0
        %1536 = vmatpush2.msra.mxu0 0.0
        %1537 = vmatprep.subr.mxu0 0.0
        %1538 = vmatpush2.msra.mxu0 0.0
        %1539 = vmatprep.subr.mxu0 0.0
        %1540 = vmatpush2.msra.mxu0 0.0
        %1541 = vmatprep.subr.mxu0 0.0
        %1542 = vmatpush2.msra.mxu0 0.0
        %1543 = vmatprep.subr.mxu0 0.0
        %1544 = vmatpush2.msra.mxu0 0.0
        %1545 = vmatprep.subr.mxu0 0.0
        %1546 = vmatpush2.msra.mxu0 0.0
        %1547 = vmatprep.subr.mxu0 0.0
        %1548 = vmatpush2.msra.mxu0 0.0
        %1549 = vmatprep.subr.mxu0 0.0
        %1550 = vmatpush2.msra.mxu0 0.0
        %1551 = vmatprep.subr.mxu0 0.0
        %1552 = vmatpush2.msra.mxu0 0.0
        %1553 = vmatprep.subr.mxu0 0.0
        %1554 = vmatpush2.msra.mxu0 0.0
        %1555 = vmatprep.subr.mxu0 0.0
        %1556 = vmatpush2.msra.mxu0 0.0
        %1557 = vmatprep.subr.mxu0 0.0
        %1558 = vmatpush2.msra.mxu0 0.0
        %1559 = vmatprep.subr.mxu0 0.0
        %1560 = vmatpush2.msra.mxu0 0.0
        %1561 = vmatprep.subr.mxu0 0.0
        %1562 = vmatpush2.msra.mxu0 0.0
        %1563 = vmatprep.subr.mxu0 0.0
        %1564 = vmatpush2.msra.mxu0 0.0
        %1565 = vmatprep.subr.mxu0 0.0
        %1566 = vmatpush2.msra.mxu0 0.0
        %1567 = vmatprep.mubr.f32.mxu0 0.0
        %1568 = vmatmul.mubr.f32.gmra.mxu0 %v1498
        %v1569 = vpop.f32.mrf.mxu0
        %v1570 = vadd.f32 0.0, %v1569
        %v1571 = vpop.f32.mrf.mxu0
        %1572 = vmatprep.mubr.f32.mxu0 0.0
        %1573 = vmatmul.mubr.f32.gmra.mxu0 %v1501
        %v1574 = vpop.f32.mrf.mxu0
        %v1575 = vadd.f32 0.0, %v1574
        %v1576 = vpop.f32.mrf.mxu0
        %1577 = vdwg.mxu0
        %v1578 = vadd.f32 %v1493, %v1570
        %v1579 = vadd.f32 %v1493, %v1575
        %v1580 = vld [vmem:[#allocation2 + $0x7] sm:$0xff]
        %v1581 = vld [vmem:[#allocation2 + $0xf] sm:$0xff]
        %s1582 = scalar_lea.vmem %s9, 8
        %v1583 = vld [vmem:[%s1582] sm:$0xff]
        %v1585 = vsel %vm1483, %v1580, 0
        %v1588 = vsel %vm1483, %v1581, 0
        %1590 = vmatprep.subr.mxu0 0.0
        %1591 = vmatpush1.msra.mxu0 0.0
        %1592 = vmatprep.subr.mxu0 0.0
        %1593 = vmatpush1.msra.mxu0 0.0
        %1594 = vmatprep.subr.mxu0 0.0
        %1595 = vmatpush1.msra.mxu0 0.0
        %1596 = vmatprep.subr.mxu0 0.0
        %1597 = vmatpush1.msra.mxu0 0.0
        %1598 = vmatprep.subr.mxu0 0.0
        %1599 = vmatpush1.msra.mxu0 0.0
        %1600 = vmatprep.subr.mxu0 0.0
        %1601 = vmatpush1.msra.mxu0 0.0
        %1602 = vmatprep.subr.mxu0 0.0
        %1603 = vmatpush1.msra.mxu0 0.0
        %1604 = vmatprep.subr.mxu0 0.0
        %1605 = vmatpush1.msra.mxu0 0.0
        %1606 = vmatprep.subr.mxu0 0.0
        %1607 = vmatpush1.msra.mxu0 0.0
        %1608 = vmatprep.subr.mxu0 0.0
        %1609 = vmatpush1.msra.mxu0 0.0
        %1610 = vmatprep.subr.mxu0 0.0
        %1611 = vmatpush1.msra.mxu0 0.0
        %1612 = vmatprep.subr.mxu0 0.0
        %1613 = vmatpush1.msra.mxu0 0.0
        %1614 = vmatprep.subr.mxu0 0.0
        %1615 = vmatpush1.msra.mxu0 0.0
        %1616 = vmatprep.subr.mxu0 0.0
        %1617 = vmatpush1.msra.mxu0 0.0
        %1618 = vmatprep.subr.mxu0 0.0
        %1619 = vmatpush1.msra.mxu0 0.0
        %1620 = vmatprep.subr.mxu0 0.0
        %1621 = vmatpush1.msra.mxu0 %v1583
        %1622 = vmatprep.subr.mxu0 0.0
        %1623 = vmatpush2.msra.mxu0 0.0
        %1624 = vmatprep.subr.mxu0 0.0
        %1625 = vmatpush2.msra.mxu0 0.0
        %1626 = vmatprep.subr.mxu0 0.0
        %1627 = vmatpush2.msra.mxu0 0.0
        %1628 = vmatprep.subr.mxu0 0.0
        %1629 = vmatpush2.msra.mxu0 0.0
        %1630 = vmatprep.subr.mxu0 0.0
        %1631 = vmatpush2.msra.mxu0 0.0
        %1632 = vmatprep.subr.mxu0 0.0
        %1633 = vmatpush2.msra.mxu0 0.0
        %1634 = vmatprep.subr.mxu0 0.0
        %1635 = vmatpush2.msra.mxu0 0.0
        %1636 = vmatprep.subr.mxu0 0.0
        %1637 = vmatpush2.msra.mxu0 0.0
        %1638 = vmatprep.subr.mxu0 0.0
        %1639 = vmatpush2.msra.mxu0 0.0
        %1640 = vmatprep.subr.mxu0 0.0
        %1641 = vmatpush2.msra.mxu0 0.0
        %1642 = vmatprep.subr.mxu0 0.0
        %1643 = vmatpush2.msra.mxu0 0.0
        %1644 = vmatprep.subr.mxu0 0.0
        %1645 = vmatpush2.msra.mxu0 0.0
        %1646 = vmatprep.subr.mxu0 0.0
        %1647 = vmatpush2.msra.mxu0 0.0
        %1648 = vmatprep.subr.mxu0 0.0
        %1649 = vmatpush2.msra.mxu0 0.0
        %1650 = vmatprep.subr.mxu0 0.0
        %1651 = vmatpush2.msra.mxu0 0.0
        %1652 = vmatprep.subr.mxu0 0.0
        %1653 = vmatpush2.msra.mxu0 0.0
        %1654 = vmatprep.mubr.f32.mxu0 0.0
        %1655 = vmatmul.mubr.f32.gmra.mxu0 %v1585
        %v1656 = vpop.f32.mrf.mxu0
        %v1657 = vadd.f32 0.0, %v1656
        %v1658 = vpop.f32.mrf.mxu0
        %1659 = vmatprep.mubr.f32.mxu0 0.0
        %1660 = vmatmul.mubr.f32.gmra.mxu0 %v1588
        %v1661 = vpop.f32.mrf.mxu0
        %v1662 = vadd.f32 0.0, %v1661
        %v1663 = vpop.f32.mrf.mxu0
        %1664 = vdwg.mxu0
        %v1665 = vadd.f32 %v1578, %v1657
        %v1666 = vadd.f32 %v1579, %v1662
        %v1667 = vld [vmem:[#allocation2 + $0x8] sm:$0xff]
        %v1668 = vld [vmem:[#allocation2 + $0x10] sm:$0xff]
        %s1669 = scalar_lea.vmem %s9, 16
        %v1670 = vld [vmem:[%s1669] sm:$0xff]
        %v1672 = vsel %vm1483, %v1667, 0
        %v1675 = vsel %vm1483, %v1668, 0
        %1677 = vmatprep.subr.mxu0 0.0
        %1678 = vmatpush1.msra.mxu0 0.0
        %1679 = vmatprep.subr.mxu0 0.0
        %1680 = vmatpush1.msra.mxu0 0.0
        %1681 = vmatprep.subr.mxu0 0.0
        %1682 = vmatpush1.msra.mxu0 0.0
        %1683 = vmatprep.subr.mxu0 0.0
        %1684 = vmatpush1.msra.mxu0 0.0
        %1685 = vmatprep.subr.mxu0 0.0
        %1686 = vmatpush1.msra.mxu0 0.0
        %1687 = vmatprep.subr.mxu0 0.0
        %1688 = vmatpush1.msra.mxu0 0.0
        %1689 = vmatprep.subr.mxu0 0.0
        %1690 = vmatpush1.msra.mxu0 0.0
        %1691 = vmatprep.subr.mxu0 0.0
        %1692 = vmatpush1.msra.mxu0 0.0
        %1693 = vmatprep.subr.mxu0 0.0
        %1694 = vmatpush1.msra.mxu0 0.0
        %1695 = vmatprep.subr.mxu0 0.0
        %1696 = vmatpush1.msra.mxu0 0.0
        %1697 = vmatprep.subr.mxu0 0.0
        %1698 = vmatpush1.msra.mxu0 0.0
        %1699 = vmatprep.subr.mxu0 0.0
        %1700 = vmatpush1.msra.mxu0 0.0
        %1701 = vmatprep.subr.mxu0 0.0
        %1702 = vmatpush1.msra.mxu0 0.0
        %1703 = vmatprep.subr.mxu0 0.0
        %1704 = vmatpush1.msra.mxu0 0.0
        %1705 = vmatprep.subr.mxu0 0.0
        %1706 = vmatpush1.msra.mxu0 0.0
        %1707 = vmatprep.subr.mxu0 0.0
        %1708 = vmatpush1.msra.mxu0 %v1670
        %1709 = vmatprep.subr.mxu0 0.0
        %1710 = vmatpush2.msra.mxu0 0.0
        %1711 = vmatprep.subr.mxu0 0.0
        %1712 = vmatpush2.msra.mxu0 0.0
        %1713 = vmatprep.subr.mxu0 0.0
        %1714 = vmatpush2.msra.mxu0 0.0
        %1715 = vmatprep.subr.mxu0 0.0
        %1716 = vmatpush2.msra.mxu0 0.0
        %1717 = vmatprep.subr.mxu0 0.0
        %1718 = vmatpush2.msra.mxu0 0.0
        %1719 = vmatprep.subr.mxu0 0.0
        %1720 = vmatpush2.msra.mxu0 0.0
        %1721 = vmatprep.subr.mxu0 0.0
        %1722 = vmatpush2.msra.mxu0 0.0
        %1723 = vmatprep.subr.mxu0 0.0
        %1724 = vmatpush2.msra.mxu0 0.0
        %1725 = vmatprep.subr.mxu0 0.0
        %1726 = vmatpush2.msra.mxu0 0.0
        %1727 = vmatprep.subr.mxu0 0.0
        %1728 = vmatpush2.msra.mxu0 0.0
        %1729 = vmatprep.subr.mxu0 0.0
        %1730 = vmatpush2.msra.mxu0 0.0
        %1731 = vmatprep.subr.mxu0 0.0
        %1732 = vmatpush2.msra.mxu0 0.0
        %1733 = vmatprep.subr.mxu0 0.0
        %1734 = vmatpush2.msra.mxu0 0.0
        %1735 = vmatprep.subr.mxu0 0.0
        %1736 = vmatpush2.msra.mxu0 0.0
        %1737 = vmatprep.subr.mxu0 0.0
        %1738 = vmatpush2.msra.mxu0 0.0
        %1739 = vmatprep.subr.mxu0 0.0
        %1740 = vmatpush2.msra.mxu0 0.0
        %1741 = vmatprep.mubr.f32.mxu0 0.0
        %1742 = vmatmul.mubr.f32.gmra.mxu0 %v1672
        %v1743 = vpop.f32.mrf.mxu0
        %v1744 = vadd.f32 0.0, %v1743
        %v1745 = vpop.f32.mrf.mxu0
        %1746 = vmatprep.mubr.f32.mxu0 0.0
        %1747 = vmatmul.mubr.f32.gmra.mxu0 %v1675
        %v1748 = vpop.f32.mrf.mxu0
        %v1749 = vadd.f32 0.0, %v1748
        %v1750 = vpop.f32.mrf.mxu0
        %1751 = vdwg.mxu0
        %v1752 = vadd.f32 %v1665, %v1744
        %v1753 = vadd.f32 %v1666, %v1749
        %s1754 = sld [smem:[#allocation4]]
        %vm1755 = vcmp.ge.f32.partialorder %v1752, 0.0
        %vm1756 = vcmp.ge.f32.partialorder %v1753, 0.0
        %v1757 = vstv %s1754
        %v1758 = vmul.f32 %v1752, %v1757
        %v1759 = vmul.f32 %v1753, %v1757
        %v1760 = vsel %vm1755, %v1752, %v1758
        %v1761 = vsel %vm1756, %v1753, %v1759
        %1762 = vst.msk [vmem:[#allocation2 + $0x8] sm:$0xff] %vm1477, %v1760
        %1763 = vst.msk [vmem:[#allocation2 + $0x10] sm:$0xff] %vm1477, %v1761
        %v1764 = vld [vmem:[#allocation10] sm:$0x1]
        %v1766 = vlaneseq
        %v1767 = vshrl.u32 %v1766, 7
        %v1768 = vsub.s32 0, %v1767
        %v1769 = vrot.slane %v1764, %v1768
        %v1771 = vadd.f32 %v1769, 0.0
        %v1772 = vld [vmem:[#allocation2 + $0x6] sm:$0xff]
        %v1773 = vld [vmem:[#allocation2 + $0xe] sm:$0xff]
        %v1774 = vld [vmem:[%s13] sm:$0xff]
        %v1775 = vld [vmem:[%s13 + $0x8] sm:$0xff]
        %v1777 = vsel %vm1477, %v1772, 0
        %v1780 = vsel %vm1477, %v1773, 0
        %1782 = vmatprep.subr.mxu0 0.0
        %1783 = vmatpush1.msra.mxu0 0.0
        %1784 = vmatprep.subr.mxu0 0.0
        %1785 = vmatpush1.msra.mxu0 0.0
        %1786 = vmatprep.subr.mxu0 0.0
        %1787 = vmatpush1.msra.mxu0 0.0
        %1788 = vmatprep.subr.mxu0 0.0
        %1789 = vmatpush1.msra.mxu0 0.0
        %1790 = vmatprep.subr.mxu0 0.0
        %1791 = vmatpush1.msra.mxu0 0.0
        %1792 = vmatprep.subr.mxu0 0.0
        %1793 = vmatpush1.msra.mxu0 0.0
        %1794 = vmatprep.subr.mxu0 0.0
        %1795 = vmatpush1.msra.mxu0 0.0
        %1796 = vmatprep.subr.mxu0 0.0
        %1797 = vmatpush1.msra.mxu0 0.0
        %1798 = vmatprep.subr.mxu0 0.0
        %1799 = vmatpush1.msra.mxu0 0.0
        %1800 = vmatprep.subr.mxu0 0.0
        %1801 = vmatpush1.msra.mxu0 0.0
        %1802 = vmatprep.subr.mxu0 0.0
        %1803 = vmatpush1.msra.mxu0 0.0
        %1804 = vmatprep.subr.mxu0 0.0
        %1805 = vmatpush1.msra.mxu0 0.0
        %1806 = vmatprep.subr.mxu0 0.0
        %1807 = vmatpush1.msra.mxu0 0.0
        %1808 = vmatprep.subr.mxu0 0.0
        %1809 = vmatpush1.msra.mxu0 0.0
        %1810 = vmatprep.subr.mxu0 0.0
        %1811 = vmatpush1.msra.mxu0 %v1775
        %1812 = vmatprep.subr.mxu0 0.0
        %1813 = vmatpush1.msra.mxu0 %v1774
        %1814 = vmatprep.subr.mxu0 0.0
        %1815 = vmatpush2.msra.mxu0 0.0
        %1816 = vmatprep.subr.mxu0 0.0
        %1817 = vmatpush2.msra.mxu0 0.0
        %1818 = vmatprep.subr.mxu0 0.0
        %1819 = vmatpush2.msra.mxu0 0.0
        %1820 = vmatprep.subr.mxu0 0.0
        %1821 = vmatpush2.msra.mxu0 0.0
        %1822 = vmatprep.subr.mxu0 0.0
        %1823 = vmatpush2.msra.mxu0 0.0
        %1824 = vmatprep.subr.mxu0 0.0
        %1825 = vmatpush2.msra.mxu0 0.0
        %1826 = vmatprep.subr.mxu0 0.0
        %1827 = vmatpush2.msra.mxu0 0.0
        %1828 = vmatprep.subr.mxu0 0.0
        %1829 = vmatpush2.msra.mxu0 0.0
        %1830 = vmatprep.subr.mxu0 0.0
        %1831 = vmatpush2.msra.mxu0 0.0
        %1832 = vmatprep.subr.mxu0 0.0
        %1833 = vmatpush2.msra.mxu0 0.0
        %1834 = vmatprep.subr.mxu0 0.0
        %1835 = vmatpush2.msra.mxu0 0.0
        %1836 = vmatprep.subr.mxu0 0.0
        %1837 = vmatpush2.msra.mxu0 0.0
        %1838 = vmatprep.subr.mxu0 0.0
        %1839 = vmatpush2.msra.mxu0 0.0
        %1840 = vmatprep.subr.mxu0 0.0
        %1841 = vmatpush2.msra.mxu0 0.0
        %1842 = vmatprep.subr.mxu0 0.0
        %1843 = vmatpush2.msra.mxu0 0.0
        %1844 = vmatprep.subr.mxu0 0.0
        %1845 = vmatpush2.msra.mxu0 0.0
        %1846 = vmatprep.mubr.f32.mxu0 0.0
        %1847 = vmatmul.mubr.f32.gmra.mxu0 %v1777
        %v1848 = vpop.f32.mrf.mxu0
        %v1849 = vadd.f32 0.0, %v1848
        %v1850 = vpop.f32.mrf.mxu0
        %1851 = vmatprep.mubr.f32.mxu0 0.0
        %1852 = vmatmul.mubr.f32.gmra.mxu0 %v1780
        %v1853 = vpop.f32.mrf.mxu0
        %v1854 = vadd.f32 0.0, %v1853
        %v1855 = vpop.f32.mrf.mxu0
        %1856 = vdwg.mxu0
        %v1857 = vadd.f32 %v1771, %v1849
        %v1858 = vadd.f32 %v1771, %v1854
        %v1859 = vld [vmem:[#allocation2 + $0x7] sm:$0xff]
        %v1860 = vld [vmem:[#allocation2 + $0xf] sm:$0xff]
        %s1861 = scalar_lea.vmem %s13, 16
        %v1862 = vld [vmem:[%s1861] sm:$0xff]
        %v1863 = vld [vmem:[%s1861 + $0x8] sm:$0xff]
        %v1865 = vsel %vm1477, %v1859, 0
        %v1868 = vsel %vm1477, %v1860, 0
        %1870 = vmatprep.subr.mxu0 0.0
        %1871 = vmatpush1.msra.mxu0 0.0
        %1872 = vmatprep.subr.mxu0 0.0
        %1873 = vmatpush1.msra.mxu0 0.0
        %1874 = vmatprep.subr.mxu0 0.0
        %1875 = vmatpush1.msra.mxu0 0.0
        %1876 = vmatprep.subr.mxu0 0.0
        %1877 = vmatpush1.msra.mxu0 0.0
        %1878 = vmatprep.subr.mxu0 0.0
        %1879 = vmatpush1.msra.mxu0 0.0
        %1880 = vmatprep.subr.mxu0 0.0
        %1881 = vmatpush1.msra.mxu0 0.0
        %1882 = vmatprep.subr.mxu0 0.0
        %1883 = vmatpush1.msra.mxu0 0.0
        %1884 = vmatprep.subr.mxu0 0.0
        %1885 = vmatpush1.msra.mxu0 0.0
        %1886 = vmatprep.subr.mxu0 0.0
        %1887 = vmatpush1.msra.mxu0 0.0
        %1888 = vmatprep.subr.mxu0 0.0
        %1889 = vmatpush1.msra.mxu0 0.0
        %1890 = vmatprep.subr.mxu0 0.0
        %1891 = vmatpush1.msra.mxu0 0.0
        %1892 = vmatprep.subr.mxu0 0.0
        %1893 = vmatpush1.msra.mxu0 0.0
        %1894 = vmatprep.subr.mxu0 0.0
        %1895 = vmatpush1.msra.mxu0 0.0
        %1896 = vmatprep.subr.mxu0 0.0
        %1897 = vmatpush1.msra.mxu0 0.0
        %1898 = vmatprep.subr.mxu0 0.0
        %1899 = vmatpush1.msra.mxu0 %v1863
        %1900 = vmatprep.subr.mxu0 0.0
        %1901 = vmatpush1.msra.mxu0 %v1862
        %1902 = vmatprep.subr.mxu0 0.0
        %1903 = vmatpush2.msra.mxu0 0.0
        %1904 = vmatprep.subr.mxu0 0.0
        %1905 = vmatpush2.msra.mxu0 0.0
        %1906 = vmatprep.subr.mxu0 0.0
        %1907 = vmatpush2.msra.mxu0 0.0
        %1908 = vmatprep.subr.mxu0 0.0
        %1909 = vmatpush2.msra.mxu0 0.0
        %1910 = vmatprep.subr.mxu0 0.0
        %1911 = vmatpush2.msra.mxu0 0.0
        %1912 = vmatprep.subr.mxu0 0.0
        %1913 = vmatpush2.msra.mxu0 0.0
        %1914 = vmatprep.subr.mxu0 0.0
        %1915 = vmatpush2.msra.mxu0 0.0
        %1916 = vmatprep.subr.mxu0 0.0
        %1917 = vmatpush2.msra.mxu0 0.0
        %1918 = vmatprep.subr.mxu0 0.0
        %1919 = vmatpush2.msra.mxu0 0.0
        %1920 = vmatprep.subr.mxu0 0.0
        %1921 = vmatpush2.msra.mxu0 0.0
        %1922 = vmatprep.subr.mxu0 0.0
        %1923 = vmatpush2.msra.mxu0 0.0
        %1924 = vmatprep.subr.mxu0 0.0
        %1925 = vmatpush2.msra.mxu0 0.0
        %1926 = vmatprep.subr.mxu0 0.0
        %1927 = vmatpush2.msra.mxu0 0.0
        %1928 = vmatprep.subr.mxu0 0.0
        %1929 = vmatpush2.msra.mxu0 0.0
        %1930 = vmatprep.subr.mxu0 0.0
        %1931 = vmatpush2.msra.mxu0 0.0
        %1932 = vmatprep.subr.mxu0 0.0
        %1933 = vmatpush2.msra.mxu0 0.0
        %1934 = vmatprep.mubr.f32.mxu0 0.0
        %1935 = vmatmul.mubr.f32.gmra.mxu0 %v1865
        %v1936 = vpop.f32.mrf.mxu0
        %v1937 = vadd.f32 0.0, %v1936
        %v1938 = vpop.f32.mrf.mxu0
        %1939 = vmatprep.mubr.f32.mxu0 0.0
        %1940 = vmatmul.mubr.f32.gmra.mxu0 %v1868
        %v1941 = vpop.f32.mrf.mxu0
        %v1942 = vadd.f32 0.0, %v1941
        %v1943 = vpop.f32.mrf.mxu0
        %1944 = vdwg.mxu0
        %v1945 = vadd.f32 %v1857, %v1937
        %v1946 = vadd.f32 %v1858, %v1942
        %v1947 = vld [vmem:[#allocation2 + $0x8] sm:$0xff]
        %v1948 = vld [vmem:[#allocation2 + $0x10] sm:$0xff]
        %s1949 = scalar_lea.vmem %s13, 32
        %v1950 = vld [vmem:[%s1949] sm:$0xff]
        %v1951 = vld [vmem:[%s1949 + $0x8] sm:$0xff]
        %v1953 = vsel %vm1477, %v1947, 0
        %v1956 = vsel %vm1477, %v1948, 0
        %1958 = vmatprep.subr.mxu0 0.0
        %1959 = vmatpush1.msra.mxu0 0.0
        %1960 = vmatprep.subr.mxu0 0.0
        %1961 = vmatpush1.msra.mxu0 0.0
        %1962 = vmatprep.subr.mxu0 0.0
        %1963 = vmatpush1.msra.mxu0 0.0
        %1964 = vmatprep.subr.mxu0 0.0
        %1965 = vmatpush1.msra.mxu0 0.0
        %1966 = vmatprep.subr.mxu0 0.0
        %1967 = vmatpush1.msra.mxu0 0.0
        %1968 = vmatprep.subr.mxu0 0.0
        %1969 = vmatpush1.msra.mxu0 0.0
        %1970 = vmatprep.subr.mxu0 0.0
        %1971 = vmatpush1.msra.mxu0 0.0
        %1972 = vmatprep.subr.mxu0 0.0
        %1973 = vmatpush1.msra.mxu0 0.0
        %1974 = vmatprep.subr.mxu0 0.0
        %1975 = vmatpush1.msra.mxu0 0.0
        %1976 = vmatprep.subr.mxu0 0.0
        %1977 = vmatpush1.msra.mxu0 0.0
        %1978 = vmatprep.subr.mxu0 0.0
        %1979 = vmatpush1.msra.mxu0 0.0
        %1980 = vmatprep.subr.mxu0 0.0
        %1981 = vmatpush1.msra.mxu0 0.0
        %1982 = vmatprep.subr.mxu0 0.0
        %1983 = vmatpush1.msra.mxu0 0.0
        %1984 = vmatprep.subr.mxu0 0.0
        %1985 = vmatpush1.msra.mxu0 0.0
        %1986 = vmatprep.subr.mxu0 0.0
        %1987 = vmatpush1.msra.mxu0 %v1951
        %1988 = vmatprep.subr.mxu0 0.0
        %1989 = vmatpush1.msra.mxu0 %v1950
        %1990 = vmatprep.subr.mxu0 0.0
        %1991 = vmatpush2.msra.mxu0 0.0
        %1992 = vmatprep.subr.mxu0 0.0
        %1993 = vmatpush2.msra.mxu0 0.0
        %1994 = vmatprep.subr.mxu0 0.0
        %1995 = vmatpush2.msra.mxu0 0.0
        %1996 = vmatprep.subr.mxu0 0.0
        %1997 = vmatpush2.msra.mxu0 0.0
        %1998 = vmatprep.subr.mxu0 0.0
        %1999 = vmatpush2.msra.mxu0 0.0
        %2000 = vmatprep.subr.mxu0 0.0
        %2001 = vmatpush2.msra.mxu0 0.0
        %2002 = vmatprep.subr.mxu0 0.0
        %2003 = vmatpush2.msra.mxu0 0.0
        %2004 = vmatprep.subr.mxu0 0.0
        %2005 = vmatpush2.msra.mxu0 0.0
        %2006 = vmatprep.subr.mxu0 0.0
        %2007 = vmatpush2.msra.mxu0 0.0
        %2008 = vmatprep.subr.mxu0 0.0
        %2009 = vmatpush2.msra.mxu0 0.0
        %2010 = vmatprep.subr.mxu0 0.0
        %2011 = vmatpush2.msra.mxu0 0.0
        %2012 = vmatprep.subr.mxu0 0.0
        %2013 = vmatpush2.msra.mxu0 0.0
        %2014 = vmatprep.subr.mxu0 0.0
        %2015 = vmatpush2.msra.mxu0 0.0
        %2016 = vmatprep.subr.mxu0 0.0
        %2017 = vmatpush2.msra.mxu0 0.0
        %2018 = vmatprep.subr.mxu0 0.0
        %2019 = vmatpush2.msra.mxu0 0.0
        %2020 = vmatprep.subr.mxu0 0.0
        %2021 = vmatpush2.msra.mxu0 0.0
        %2022 = vmatprep.mubr.f32.mxu0 0.0
        %2023 = vmatmul.mubr.f32.gmra.mxu0 %v1953
        %v2024 = vpop.f32.mrf.mxu0
        %v2025 = vadd.f32 0.0, %v2024
        %v2026 = vpop.f32.mrf.mxu0
        %2027 = vmatprep.mubr.f32.mxu0 0.0
        %2028 = vmatmul.mubr.f32.gmra.mxu0 %v1956
        %v2029 = vpop.f32.mrf.mxu0
        %v2030 = vadd.f32 0.0, %v2029
        %v2031 = vpop.f32.mrf.mxu0
        %2032 = vdwg.mxu0
        %v2033 = vadd.f32 %v1945, %v2025
        %v2034 = vadd.f32 %v1946, %v2030
        %s2035 = sld [smem:[#allocation4 + $0x1]]
        %vm2036 = vcmp.ge.f32.partialorder %v2033, 0.0
        %vm2037 = vcmp.ge.f32.partialorder %v2034, 0.0
        %v2038 = vstv %s2035
        %v2039 = vmul.f32 %v2033, %v2038
        %v2040 = vmul.f32 %v2034, %v2038
        %v2041 = vsel %vm2036, %v2033, %v2039
        %v2042 = vsel %vm2037, %v2034, %v2040
        %v2043 = vld [vmem:[#allocation5] sm:$0xff]
        %v2044 = vld [vmem:[#allocation7] sm:$0x1]
        %v2046 = vlaneseq
        %v2047 = vshrl.u32 %v2046, 7
        %v2048 = vsub.s32 0, %v2047
        %v2049 = vrot.slane %v2044, %v2048
        %v2052 = vsel %vm1483, %v1481, 0
        %v2055 = vsel %vm1483, %v1482, 0
        %2057 = vmatprep.subr.mxu0 0.0
        %2058 = vmatpush1.msra.mxu0 0.0
        %2059 = vmatprep.subr.mxu0 0.0
        %2060 = vmatpush1.msra.mxu0 0.0
        %2061 = vmatprep.subr.mxu0 0.0
        %2062 = vmatpush1.msra.mxu0 0.0
        %2063 = vmatprep.subr.mxu0 0.0
        %2064 = vmatpush1.msra.mxu0 0.0
        %2065 = vmatprep.subr.mxu0 0.0
        %2066 = vmatpush1.msra.mxu0 0.0
        %2067 = vmatprep.subr.mxu0 0.0
        %2068 = vmatpush1.msra.mxu0 0.0
        %2069 = vmatprep.subr.mxu0 0.0
        %2070 = vmatpush1.msra.mxu0 0.0
        %2071 = vmatprep.subr.mxu0 0.0
        %2072 = vmatpush1.msra.mxu0 0.0
        %2073 = vmatprep.subr.mxu0 0.0
        %2074 = vmatpush1.msra.mxu0 0.0
        %2075 = vmatprep.subr.mxu0 0.0
        %2076 = vmatpush1.msra.mxu0 0.0
        %2077 = vmatprep.subr.mxu0 0.0
        %2078 = vmatpush1.msra.mxu0 0.0
        %2079 = vmatprep.subr.mxu0 0.0
        %2080 = vmatpush1.msra.mxu0 0.0
        %2081 = vmatprep.subr.mxu0 0.0
        %2082 = vmatpush1.msra.mxu0 0.0
        %2083 = vmatprep.subr.mxu0 0.0
        %2084 = vmatpush1.msra.mxu0 0.0
        %2085 = vmatprep.subr.mxu0 0.0
        %2086 = vmatpush1.msra.mxu0 0.0
        %2087 = vmatprep.subr.mxu0 0.0
        %2088 = vmatpush1.msra.mxu0 %v2043
        %2089 = vmatprep.subr.mxu0 0.0
        %2090 = vmatpush2.msra.mxu0 0.0
        %2091 = vmatprep.subr.mxu0 0.0
        %2092 = vmatpush2.msra.mxu0 0.0
        %2093 = vmatprep.subr.mxu0 0.0
        %2094 = vmatpush2.msra.mxu0 0.0
        %2095 = vmatprep.subr.mxu0 0.0
        %2096 = vmatpush2.msra.mxu0 0.0
        %2097 = vmatprep.subr.mxu0 0.0
        %2098 = vmatpush2.msra.mxu0 0.0
        %2099 = vmatprep.subr.mxu0 0.0
        %2100 = vmatpush2.msra.mxu0 0.0
        %2101 = vmatprep.subr.mxu0 0.0
        %2102 = vmatpush2.msra.mxu0 0.0
        %2103 = vmatprep.subr.mxu0 0.0
        %2104 = vmatpush2.msra.mxu0 0.0
        %2105 = vmatprep.subr.mxu0 0.0
        %2106 = vmatpush2.msra.mxu0 0.0
        %2107 = vmatprep.subr.mxu0 0.0
        %2108 = vmatpush2.msra.mxu0 0.0
        %2109 = vmatprep.subr.mxu0 0.0
        %2110 = vmatpush2.msra.mxu0 0.0
        %2111 = vmatprep.subr.mxu0 0.0
        %2112 = vmatpush2.msra.mxu0 0.0
        %2113 = vmatprep.subr.mxu0 0.0
        %2114 = vmatpush2.msra.mxu0 0.0
        %2115 = vmatprep.subr.mxu0 0.0
        %2116 = vmatpush2.msra.mxu0 0.0
        %2117 = vmatprep.subr.mxu0 0.0
        %2118 = vmatpush2.msra.mxu0 0.0
        %2119 = vmatprep.subr.mxu0 0.0
        %2120 = vmatpush2.msra.mxu0 0.0
        %2121 = vmatprep.mubr.f32.mxu0 0.0
        %2122 = vmatmul.mubr.f32.gmra.mxu0 %v2052
        %v2123 = vpop.f32.mrf.mxu0
        %v2124 = vadd.f32 %v2049, %v2123
        %v2125 = vpop.f32.mrf.mxu0
        %2126 = vmatprep.mubr.f32.mxu0 0.0
        %2127 = vmatmul.mubr.f32.gmra.mxu0 %v2055
        %v2128 = vpop.f32.mrf.mxu0
        %v2129 = vadd.f32 %v2049, %v2128
        %v2130 = vpop.f32.mrf.mxu0
        %2131 = vdwg.mxu0
        %v2132 = vadd.f32 %v2041, %v2124
        %v2133 = vadd.f32 %v2042, %v2129
        %s2134 = sld [smem:[#allocation4 + $0x2]]
        %vm2135 = vcmp.ge.f32.partialorder %v2132, 0.0
        %vm2136 = vcmp.ge.f32.partialorder %v2133, 0.0
        %v2137 = vstv %s2134
        %v2138 = vmul.f32 %v2132, %v2137
        %v2139 = vmul.f32 %v2133, %v2137
        %v2140 = vsel %vm2135, %v2132, %v2138
        %v2141 = vsel %vm2136, %v2133, %v2139
        %2142 = vst.msk [vmem:[#allocation2 + $0x8] sm:$0xff] %vm1477, %v2140
        %2143 = vst.msk [vmem:[#allocation2 + $0x10] sm:$0xff] %vm1477, %v2141
        %v2144 = vld [vmem:[#allocation13] sm:$0x1]
        %v2146 = vlaneseq
        %v2147 = vshrl.u32 %v2146, 7
        %v2148 = vsub.s32 0, %v2147
        %v2149 = vrot.slane %v2144, %v2148
        %v2151 = vadd.f32 %v2149, 0.0
        %v2152 = vld [vmem:[#allocation2 + $0x4] sm:$0xff]
        %v2153 = vld [vmem:[#allocation2 + $0xc] sm:$0xff]
        %v2154 = vld [vmem:[%s21] sm:$0xff]
        %v2155 = vld [vmem:[%s21 + $0x8] sm:$0xff]
        %v2157 = vsel %vm1477, %v2152, 0
        %v2160 = vsel %vm1477, %v2153, 0
        %2162 = vmatprep.subr.mxu0 0.0
        %2163 = vmatpush1.msra.mxu0 0.0
        %2164 = vmatprep.subr.mxu0 0.0
        %2165 = vmatpush1.msra.mxu0 0.0
        %2166 = vmatprep.subr.mxu0 0.0
        %2167 = vmatpush1.msra.mxu0 0.0
        %2168 = vmatprep.subr.mxu0 0.0
        %2169 = vmatpush1.msra.mxu0 0.0
        %2170 = vmatprep.subr.mxu0 0.0
        %2171 = vmatpush1.msra.mxu0 0.0
        %2172 = vmatprep.subr.mxu0 0.0
        %2173 = vmatpush1.msra.mxu0 0.0
        %2174 = vmatprep.subr.mxu0 0.0
        %2175 = vmatpush1.msra.mxu0 0.0
        %2176 = vmatprep.subr.mxu0 0.0
        %2177 = vmatpush1.msra.mxu0 0.0
        %2178 = vmatprep.subr.mxu0 0.0
        %2179 = vmatpush1.msra.mxu0 0.0
        %2180 = vmatprep.subr.mxu0 0.0
        %2181 = vmatpush1.msra.mxu0 0.0
        %2182 = vmatprep.subr.mxu0 0.0
        %2183 = vmatpush1.msra.mxu0 0.0
        %2184 = vmatprep.subr.mxu0 0.0
        %2185 = vmatpush1.msra.mxu0 0.0
        %2186 = vmatprep.subr.mxu0 0.0
        %2187 = vmatpush1.msra.mxu0 0.0
        %2188 = vmatprep.subr.mxu0 0.0
        %2189 = vmatpush1.msra.mxu0 0.0
        %2190 = vmatprep.subr.mxu0 0.0
        %2191 = vmatpush1.msra.mxu0 %v2155
        %2192 = vmatprep.subr.mxu0 0.0
        %2193 = vmatpush1.msra.mxu0 %v2154
        %2194 = vmatprep.subr.mxu0 0.0
        %2195 = vmatpush2.msra.mxu0 0.0
        %2196 = vmatprep.subr.mxu0 0.0
        %2197 = vmatpush2.msra.mxu0 0.0
        %2198 = vmatprep.subr.mxu0 0.0
        %2199 = vmatpush2.msra.mxu0 0.0
        %2200 = vmatprep.subr.mxu0 0.0
        %2201 = vmatpush2.msra.mxu0 0.0
        %2202 = vmatprep.subr.mxu0 0.0
        %2203 = vmatpush2.msra.mxu0 0.0
        %2204 = vmatprep.subr.mxu0 0.0
        %2205 = vmatpush2.msra.mxu0 0.0
        %2206 = vmatprep.subr.mxu0 0.0
        %2207 = vmatpush2.msra.mxu0 0.0
        %2208 = vmatprep.subr.mxu0 0.0
        %2209 = vmatpush2.msra.mxu0 0.0
        %2210 = vmatprep.subr.mxu0 0.0
        %2211 = vmatpush2.msra.mxu0 0.0
        %2212 = vmatprep.subr.mxu0 0.0
        %2213 = vmatpush2.msra.mxu0 0.0
        %2214 = vmatprep.subr.mxu0 0.0
        %2215 = vmatpush2.msra.mxu0 0.0
        %2216 = vmatprep.subr.mxu0 0.0
        %2217 = vmatpush2.msra.mxu0 0.0
        %2218 = vmatprep.subr.mxu0 0.0
        %2219 = vmatpush2.msra.mxu0 0.0
        %2220 = vmatprep.subr.mxu0 0.0
        %2221 = vmatpush2.msra.mxu0 0.0
        %2222 = vmatprep.subr.mxu0 0.0
        %2223 = vmatpush2.msra.mxu0 0.0
        %2224 = vmatprep.subr.mxu0 0.0
        %2225 = vmatpush2.msra.mxu0 0.0
        %2226 = vmatprep.mubr.f32.mxu0 0.0
        %2227 = vmatmul.mubr.f32.gmra.mxu0 %v2157
        %v2228 = vpop.f32.mrf.mxu0
        %v2229 = vadd.f32 0.0, %v2228
        %v2230 = vpop.f32.mrf.mxu0
        %2231 = vmatprep.mubr.f32.mxu0 0.0
        %2232 = vmatmul.mubr.f32.gmra.mxu0 %v2160
        %v2233 = vpop.f32.mrf.mxu0
        %v2234 = vadd.f32 0.0, %v2233
        %v2235 = vpop.f32.mrf.mxu0
        %2236 = vdwg.mxu0
        %v2237 = vadd.f32 %v2151, %v2229
        %v2238 = vadd.f32 %v2151, %v2234
        %v2239 = vld [vmem:[#allocation2 + $0x6] sm:$0xff]
        %v2240 = vld [vmem:[#allocation2 + $0xe] sm:$0xff]
        %s2241 = scalar_lea.vmem %s21, 16
        %v2242 = vld [vmem:[%s2241] sm:$0xff]
        %v2243 = vld [vmem:[%s2241 + $0x8] sm:$0xff]
        %v2245 = vsel %vm1477, %v2239, 0
        %v2248 = vsel %vm1477, %v2240, 0
        %2250 = vmatprep.subr.mxu0 0.0
        %2251 = vmatpush1.msra.mxu0 0.0
        %2252 = vmatprep.subr.mxu0 0.0
        %2253 = vmatpush1.msra.mxu0 0.0
        %2254 = vmatprep.subr.mxu0 0.0
        %2255 = vmatpush1.msra.mxu0 0.0
        %2256 = vmatprep.subr.mxu0 0.0
        %2257 = vmatpush1.msra.mxu0 0.0
        %2258 = vmatprep.subr.mxu0 0.0
        %2259 = vmatpush1.msra.mxu0 0.0
        %2260 = vmatprep.subr.mxu0 0.0
        %2261 = vmatpush1.msra.mxu0 0.0
        %2262 = vmatprep.subr.mxu0 0.0
        %2263 = vmatpush1.msra.mxu0 0.0
        %2264 = vmatprep.subr.mxu0 0.0
        %2265 = vmatpush1.msra.mxu0 0.0
        %2266 = vmatprep.subr.mxu0 0.0
        %2267 = vmatpush1.msra.mxu0 0.0
        %2268 = vmatprep.subr.mxu0 0.0
        %2269 = vmatpush1.msra.mxu0 0.0
        %2270 = vmatprep.subr.mxu0 0.0
        %2271 = vmatpush1.msra.mxu0 0.0
        %2272 = vmatprep.subr.mxu0 0.0
        %2273 = vmatpush1.msra.mxu0 0.0
        %2274 = vmatprep.subr.mxu0 0.0
        %2275 = vmatpush1.msra.mxu0 0.0
        %2276 = vmatprep.subr.mxu0 0.0
        %2277 = vmatpush1.msra.mxu0 0.0
        %2278 = vmatprep.subr.mxu0 0.0
        %2279 = vmatpush1.msra.mxu0 %v2243
        %2280 = vmatprep.subr.mxu0 0.0
        %2281 = vmatpush1.msra.mxu0 %v2242
        %2282 = vmatprep.subr.mxu0 0.0
        %2283 = vmatpush2.msra.mxu0 0.0
        %2284 = vmatprep.subr.mxu0 0.0
        %2285 = vmatpush2.msra.mxu0 0.0
        %2286 = vmatprep.subr.mxu0 0.0
        %2287 = vmatpush2.msra.mxu0 0.0
        %2288 = vmatprep.subr.mxu0 0.0
        %2289 = vmatpush2.msra.mxu0 0.0
        %2290 = vmatprep.subr.mxu0 0.0
        %2291 = vmatpush2.msra.mxu0 0.0
        %2292 = vmatprep.subr.mxu0 0.0
        %2293 = vmatpush2.msra.mxu0 0.0
        %2294 = vmatprep.subr.mxu0 0.0
        %2295 = vmatpush2.msra.mxu0 0.0
        %2296 = vmatprep.subr.mxu0 0.0
        %2297 = vmatpush2.msra.mxu0 0.0
        %2298 = vmatprep.subr.mxu0 0.0
        %2299 = vmatpush2.msra.mxu0 0.0
        %2300 = vmatprep.subr.mxu0 0.0
        %2301 = vmatpush2.msra.mxu0 0.0
        %2302 = vmatprep.subr.mxu0 0.0
        %2303 = vmatpush2.msra.mxu0 0.0
        %2304 = vmatprep.subr.mxu0 0.0
        %2305 = vmatpush2.msra.mxu0 0.0
        %2306 = vmatprep.subr.mxu0 0.0
        %2307 = vmatpush2.msra.mxu0 0.0
        %2308 = vmatprep.subr.mxu0 0.0
        %2309 = vmatpush2.msra.mxu0 0.0
        %2310 = vmatprep.subr.mxu0 0.0
        %2311 = vmatpush2.msra.mxu0 0.0
        %2312 = vmatprep.subr.mxu0 0.0
        %2313 = vmatpush2.msra.mxu0 0.0
        %2314 = vmatprep.mubr.f32.mxu0 0.0
        %2315 = vmatmul.mubr.f32.gmra.mxu0 %v2245
        %v2316 = vpop.f32.mrf.mxu0
        %v2317 = vadd.f32 0.0, %v2316
        %v2318 = vpop.f32.mrf.mxu0
        %2319 = vmatprep.mubr.f32.mxu0 0.0
        %2320 = vmatmul.mubr.f32.gmra.mxu0 %v2248
        %v2321 = vpop.f32.mrf.mxu0
        %v2322 = vadd.f32 0.0, %v2321
        %v2323 = vpop.f32.mrf.mxu0
        %2324 = vdwg.mxu0
        %v2325 = vadd.f32 %v2237, %v2317
        %v2326 = vadd.f32 %v2238, %v2322
        %v2327 = vld [vmem:[#allocation2 + $0x8] sm:$0xff]
        %v2328 = vld [vmem:[#allocation2 + $0x10] sm:$0xff]
        %s2329 = scalar_lea.vmem %s21, 32
        %v2330 = vld [vmem:[%s2329] sm:$0xff]
        %v2331 = vld [vmem:[%s2329 + $0x8] sm:$0xff]
        %v2333 = vsel %vm1477, %v2327, 0
        %v2336 = vsel %vm1477, %v2328, 0
        %2338 = vmatprep.subr.mxu0 0.0
        %2339 = vmatpush1.msra.mxu0 0.0
        %2340 = vmatprep.subr.mxu0 0.0
        %2341 = vmatpush1.msra.mxu0 0.0
        %2342 = vmatprep.subr.mxu0 0.0
        %2343 = vmatpush1.msra.mxu0 0.0
        %2344 = vmatprep.subr.mxu0 0.0
        %2345 = vmatpush1.msra.mxu0 0.0
        %2346 = vmatprep.subr.mxu0 0.0
        %2347 = vmatpush1.msra.mxu0 0.0
        %2348 = vmatprep.subr.mxu0 0.0
        %2349 = vmatpush1.msra.mxu0 0.0
        %2350 = vmatprep.subr.mxu0 0.0
        %2351 = vmatpush1.msra.mxu0 0.0
        %2352 = vmatprep.subr.mxu0 0.0
        %2353 = vmatpush1.msra.mxu0 0.0
        %2354 = vmatprep.subr.mxu0 0.0
        %2355 = vmatpush1.msra.mxu0 0.0
        %2356 = vmatprep.subr.mxu0 0.0
        %2357 = vmatpush1.msra.mxu0 0.0
        %2358 = vmatprep.subr.mxu0 0.0
        %2359 = vmatpush1.msra.mxu0 0.0
        %2360 = vmatprep.subr.mxu0 0.0
        %2361 = vmatpush1.msra.mxu0 0.0
        %2362 = vmatprep.subr.mxu0 0.0
        %2363 = vmatpush1.msra.mxu0 0.0
        %2364 = vmatprep.subr.mxu0 0.0
        %2365 = vmatpush1.msra.mxu0 0.0
        %2366 = vmatprep.subr.mxu0 0.0
        %2367 = vmatpush1.msra.mxu0 %v2331
        %2368 = vmatprep.subr.mxu0 0.0
        %2369 = vmatpush1.msra.mxu0 %v2330
        %2370 = vmatprep.subr.mxu0 0.0
        %2371 = vmatpush2.msra.mxu0 0.0
        %2372 = vmatprep.subr.mxu0 0.0
        %2373 = vmatpush2.msra.mxu0 0.0
        %2374 = vmatprep.subr.mxu0 0.0
        %2375 = vmatpush2.msra.mxu0 0.0
        %2376 = vmatprep.subr.mxu0 0.0
        %2377 = vmatpush2.msra.mxu0 0.0
        %2378 = vmatprep.subr.mxu0 0.0
        %2379 = vmatpush2.msra.mxu0 0.0
        %2380 = vmatprep.subr.mxu0 0.0
        %2381 = vmatpush2.msra.mxu0 0.0
        %2382 = vmatprep.subr.mxu0 0.0
        %2383 = vmatpush2.msra.mxu0 0.0
        %2384 = vmatprep.subr.mxu0 0.0
        %2385 = vmatpush2.msra.mxu0 0.0
        %2386 = vmatprep.subr.mxu0 0.0
        %2387 = vmatpush2.msra.mxu0 0.0
        %2388 = vmatprep.subr.mxu0 0.0
        %2389 = vmatpush2.msra.mxu0 0.0
        %2390 = vmatprep.subr.mxu0 0.0
        %2391 = vmatpush2.msra.mxu0 0.0
        %2392 = vmatprep.subr.mxu0 0.0
        %2393 = vmatpush2.msra.mxu0 0.0
        %2394 = vmatprep.subr.mxu0 0.0
        %2395 = vmatpush2.msra.mxu0 0.0
        %2396 = vmatprep.subr.mxu0 0.0
        %2397 = vmatpush2.msra.mxu0 0.0
        %2398 = vmatprep.subr.mxu0 0.0
        %2399 = vmatpush2.msra.mxu0 0.0
        %2400 = vmatprep.subr.mxu0 0.0
        %2401 = vmatpush2.msra.mxu0 0.0
        %2402 = vmatprep.mubr.f32.mxu0 0.0
        %2403 = vmatmul.mubr.f32.gmra.mxu0 %v2333
        %v2404 = vpop.f32.mrf.mxu0
        %v2405 = vadd.f32 0.0, %v2404
        %v2406 = vpop.f32.mrf.mxu0
        %2407 = vmatprep.mubr.f32.mxu0 0.0
        %2408 = vmatmul.mubr.f32.gmra.mxu0 %v2336
        %v2409 = vpop.f32.mrf.mxu0
        %v2410 = vadd.f32 0.0, %v2409
        %v2411 = vpop.f32.mrf.mxu0
        %2412 = vdwg.mxu0
        %v2413 = vadd.f32 %v2325, %v2405
        %v2414 = vadd.f32 %v2326, %v2410
        %s2415 = sld [smem:[#allocation4 + $0x3]]
        %vm2416 = vcmp.ge.f32.partialorder %v2413, 0.0
        %vm2417 = vcmp.ge.f32.partialorder %v2414, 0.0
        %v2418 = vstv %s2415
        %v2419 = vmul.f32 %v2413, %v2418
        %v2420 = vmul.f32 %v2414, %v2418
        %v2421 = vsel %vm2416, %v2413, %v2419
        %v2422 = vsel %vm2417, %v2414, %v2420
        %2423 = vst.msk [vmem:[#allocation2 + $0x8] sm:$0xff] %vm1483, %v2421
        %2424 = vst.msk [vmem:[#allocation2 + $0x10] sm:$0xff] %vm1483, %v2422
        %v2425 = vld [vmem:[#allocation15] sm:$0x1]
        %v2427 = vlaneseq
        %v2428 = vshrl.u32 %v2427, 7
        %v2429 = vsub.s32 0, %v2428
        %v2430 = vrot.slane %v2425, %v2429
        %v2432 = vadd.f32 %v2430, 0.0
        %v2433 = vld [vmem:[#allocation2 + $0x4] sm:$0xff]
        %v2434 = vld [vmem:[#allocation2 + $0xc] sm:$0xff]
        %v2435 = vld [vmem:[%s25] sm:$0xff]
        %v2437 = vsel %vm1483, %v2433, 0
        %v2440 = vsel %vm1483, %v2434, 0
        %2442 = vmatprep.subr.mxu0 0.0
        %2443 = vmatpush1.msra.mxu0 0.0
        %2444 = vmatprep.subr.mxu0 0.0
        %2445 = vmatpush1.msra.mxu0 0.0
        %2446 = vmatprep.subr.mxu0 0.0
        %2447 = vmatpush1.msra.mxu0 0.0
        %2448 = vmatprep.subr.mxu0 0.0
        %2449 = vmatpush1.msra.mxu0 0.0
        %2450 = vmatprep.subr.mxu0 0.0
        %2451 = vmatpush1.msra.mxu0 0.0
        %2452 = vmatprep.subr.mxu0 0.0
        %2453 = vmatpush1.msra.mxu0 0.0
        %2454 = vmatprep.subr.mxu0 0.0
        %2455 = vmatpush1.msra.mxu0 0.0
        %2456 = vmatprep.subr.mxu0 0.0
        %2457 = vmatpush1.msra.mxu0 0.0
        %2458 = vmatprep.subr.mxu0 0.0
        %2459 = vmatpush1.msra.mxu0 0.0
        %2460 = vmatprep.subr.mxu0 0.0
        %2461 = vmatpush1.msra.mxu0 0.0
        %2462 = vmatprep.subr.mxu0 0.0
        %2463 = vmatpush1.msra.mxu0 0.0
        %2464 = vmatprep.subr.mxu0 0.0
        %2465 = vmatpush1.msra.mxu0 0.0
        %2466 = vmatprep.subr.mxu0 0.0
        %2467 = vmatpush1.msra.mxu0 0.0
        %2468 = vmatprep.subr.mxu0 0.0
        %2469 = vmatpush1.msra.mxu0 0.0
        %2470 = vmatprep.subr.mxu0 0.0
        %2471 = vmatpush1.msra.mxu0 0.0
        %2472 = vmatprep.subr.mxu0 0.0
        %2473 = vmatpush1.msra.mxu0 %v2435
        %2474 = vmatprep.subr.mxu0 0.0
        %2475 = vmatpush2.msra.mxu0 0.0
        %2476 = vmatprep.subr.mxu0 0.0
        %2477 = vmatpush2.msra.mxu0 0.0
        %2478 = vmatprep.subr.mxu0 0.0
        %2479 = vmatpush2.msra.mxu0 0.0
        %2480 = vmatprep.subr.mxu0 0.0
        %2481 = vmatpush2.msra.mxu0 0.0
        %2482 = vmatprep.subr.mxu0 0.0
        %2483 = vmatpush2.msra.mxu0 0.0
        %2484 = vmatprep.subr.mxu0 0.0
        %2485 = vmatpush2.msra.mxu0 0.0
        %2486 = vmatprep.subr.mxu0 0.0
        %2487 = vmatpush2.msra.mxu0 0.0
        %2488 = vmatprep.subr.mxu0 0.0
        %2489 = vmatpush2.msra.mxu0 0.0
        %2490 = vmatprep.subr.mxu0 0.0
        %2491 = vmatpush2.msra.mxu0 0.0
        %2492 = vmatprep.subr.mxu0 0.0
        %2493 = vmatpush2.msra.mxu0 0.0
        %2494 = vmatprep.subr.mxu0 0.0
        %2495 = vmatpush2.msra.mxu0 0.0
        %2496 = vmatprep.subr.mxu0 0.0
        %2497 = vmatpush2.msra.mxu0 0.0
        %2498 = vmatprep.subr.mxu0 0.0
        %2499 = vmatpush2.msra.mxu0 0.0
        %2500 = vmatprep.subr.mxu0 0.0
        %2501 = vmatpush2.msra.mxu0 0.0
        %2502 = vmatprep.subr.mxu0 0.0
        %2503 = vmatpush2.msra.mxu0 0.0
        %2504 = vmatprep.subr.mxu0 0.0
        %2505 = vmatpush2.msra.mxu0 0.0
        %2506 = vmatprep.mubr.f32.mxu0 0.0
        %2507 = vmatmul.mubr.f32.gmra.mxu0 %v2437
        %v2508 = vpop.f32.mrf.mxu0
        %v2509 = vadd.f32 0.0, %v2508
        %v2510 = vpop.f32.mrf.mxu0
        %2511 = vmatprep.mubr.f32.mxu0 0.0
        %2512 = vmatmul.mubr.f32.gmra.mxu0 %v2440
        %v2513 = vpop.f32.mrf.mxu0
        %v2514 = vadd.f32 0.0, %v2513
        %v2515 = vpop.f32.mrf.mxu0
        %2516 = vdwg.mxu0
        %v2517 = vadd.f32 %v2432, %v2509
        %v2518 = vadd.f32 %v2432, %v2514
        %v2519 = vld [vmem:[#allocation2 + $0x6] sm:$0xff]
        %v2520 = vld [vmem:[#allocation2 + $0xe] sm:$0xff]
        %s2521 = scalar_lea.vmem %s25, 8
        %v2522 = vld [vmem:[%s2521] sm:$0xff]
        %v2524 = vsel %vm1483, %v2519, 0
        %v2527 = vsel %vm1483, %v2520, 0
        %2529 = vmatprep.subr.mxu0 0.0
        %2530 = vmatpush1.msra.mxu0 0.0
        %2531 = vmatprep.subr.mxu0 0.0
        %2532 = vmatpush1.msra.mxu0 0.0
        %2533 = vmatprep.subr.mxu0 0.0
        %2534 = vmatpush1.msra.mxu0 0.0
        %2535 = vmatprep.subr.mxu0 0.0
        %2536 = vmatpush1.msra.mxu0 0.0
        %2537 = vmatprep.subr.mxu0 0.0
        %2538 = vmatpush1.msra.mxu0 0.0
        %2539 = vmatprep.subr.mxu0 0.0
        %2540 = vmatpush1.msra.mxu0 0.0
        %2541 = vmatprep.subr.mxu0 0.0
        %2542 = vmatpush1.msra.mxu0 0.0
        %2543 = vmatprep.subr.mxu0 0.0
        %2544 = vmatpush1.msra.mxu0 0.0
        %2545 = vmatprep.subr.mxu0 0.0
        %2546 = vmatpush1.msra.mxu0 0.0
        %2547 = vmatprep.subr.mxu0 0.0
        %2548 = vmatpush1.msra.mxu0 0.0
        %2549 = vmatprep.subr.mxu0 0.0
        %2550 = vmatpush1.msra.mxu0 0.0
        %2551 = vmatprep.subr.mxu0 0.0
        %2552 = vmatpush1.msra.mxu0 0.0
        %2553 = vmatprep.subr.mxu0 0.0
        %2554 = vmatpush1.msra.mxu0 0.0
        %2555 = vmatprep.subr.mxu0 0.0
        %2556 = vmatpush1.msra.mxu0 0.0
        %2557 = vmatprep.subr.mxu0 0.0
        %2558 = vmatpush1.msra.mxu0 0.0
        %2559 = vmatprep.subr.mxu0 0.0
        %2560 = vmatpush1.msra.mxu0 %v2522
        %2561 = vmatprep.subr.mxu0 0.0
        %2562 = vmatpush2.msra.mxu0 0.0
        %2563 = vmatprep.subr.mxu0 0.0
        %2564 = vmatpush2.msra.mxu0 0.0
        %2565 = vmatprep.subr.mxu0 0.0
        %2566 = vmatpush2.msra.mxu0 0.0
        %2567 = vmatprep.subr.mxu0 0.0
        %2568 = vmatpush2.msra.mxu0 0.0
        %2569 = vmatprep.subr.mxu0 0.0
        %2570 = vmatpush2.msra.mxu0 0.0
        %2571 = vmatprep.subr.mxu0 0.0
        %2572 = vmatpush2.msra.mxu0 0.0
        %2573 = vmatprep.subr.mxu0 0.0
        %2574 = vmatpush2.msra.mxu0 0.0
        %2575 = vmatprep.subr.mxu0 0.0
        %2576 = vmatpush2.msra.mxu0 0.0
        %2577 = vmatprep.subr.mxu0 0.0
        %2578 = vmatpush2.msra.mxu0 0.0
        %2579 = vmatprep.subr.mxu0 0.0
        %2580 = vmatpush2.msra.mxu0 0.0
        %2581 = vmatprep.subr.mxu0 0.0
        %2582 = vmatpush2.msra.mxu0 0.0
        %2583 = vmatprep.subr.mxu0 0.0
        %2584 = vmatpush2.msra.mxu0 0.0
        %2585 = vmatprep.subr.mxu0 0.0
        %2586 = vmatpush2.msra.mxu0 0.0
        %2587 = vmatprep.subr.mxu0 0.0
        %2588 = vmatpush2.msra.mxu0 0.0
        %2589 = vmatprep.subr.mxu0 0.0
        %2590 = vmatpush2.msra.mxu0 0.0
        %2591 = vmatprep.subr.mxu0 0.0
        %2592 = vmatpush2.msra.mxu0 0.0
        %2593 = vmatprep.mubr.f32.mxu0 0.0
        %2594 = vmatmul.mubr.f32.gmra.mxu0 %v2524
        %v2595 = vpop.f32.mrf.mxu0
        %v2596 = vadd.f32 0.0, %v2595
        %v2597 = vpop.f32.mrf.mxu0
        %2598 = vmatprep.mubr.f32.mxu0 0.0
        %2599 = vmatmul.mubr.f32.gmra.mxu0 %v2527
        %v2600 = vpop.f32.mrf.mxu0
        %v2601 = vadd.f32 0.0, %v2600
        %v2602 = vpop.f32.mrf.mxu0
        %2603 = vdwg.mxu0
        %v2604 = vadd.f32 %v2517, %v2596
        %v2605 = vadd.f32 %v2518, %v2601
        %v2606 = vld [vmem:[#allocation2 + $0x8] sm:$0xff]
        %v2607 = vld [vmem:[#allocation2 + $0x10] sm:$0xff]
        %s2608 = scalar_lea.vmem %s25, 16
        %v2609 = vld [vmem:[%s2608] sm:$0xff]
        %v2611 = vsel %vm1483, %v2606, 0
        %v2614 = vsel %vm1483, %v2607, 0
        %2616 = vmatprep.subr.mxu0 0.0
        %2617 = vmatpush1.msra.mxu0 0.0
        %2618 = vmatprep.subr.mxu0 0.0
        %2619 = vmatpush1.msra.mxu0 0.0
        %2620 = vmatprep.subr.mxu0 0.0
        %2621 = vmatpush1.msra.mxu0 0.0
        %2622 = vmatprep.subr.mxu0 0.0
        %2623 = vmatpush1.msra.mxu0 0.0
        %2624 = vmatprep.subr.mxu0 0.0
        %2625 = vmatpush1.msra.mxu0 0.0
        %2626 = vmatprep.subr.mxu0 0.0
        %2627 = vmatpush1.msra.mxu0 0.0
        %2628 = vmatprep.subr.mxu0 0.0
        %2629 = vmatpush1.msra.mxu0 0.0
        %2630 = vmatprep.subr.mxu0 0.0
        %2631 = vmatpush1.msra.mxu0 0.0
        %2632 = vmatprep.subr.mxu0 0.0
        %2633 = vmatpush1.msra.mxu0 0.0
        %2634 = vmatprep.subr.mxu0 0.0
        %2635 = vmatpush1.msra.mxu0 0.0
        %2636 = vmatprep.subr.mxu0 0.0
        %2637 = vmatpush1.msra.mxu0 0.0
        %2638 = vmatprep.subr.mxu0 0.0
        %2639 = vmatpush1.msra.mxu0 0.0
        %2640 = vmatprep.subr.mxu0 0.0
        %2641 = vmatpush1.msra.mxu0 0.0
        %2642 = vmatprep.subr.mxu0 0.0
        %2643 = vmatpush1.msra.mxu0 0.0
        %2644 = vmatprep.subr.mxu0 0.0
        %2645 = vmatpush1.msra.mxu0 0.0
        %2646 = vmatprep.subr.mxu0 0.0
        %2647 = vmatpush1.msra.mxu0 %v2609
        %2648 = vmatprep.subr.mxu0 0.0
        %2649 = vmatpush2.msra.mxu0 0.0
        %2650 = vmatprep.subr.mxu0 0.0
        %2651 = vmatpush2.msra.mxu0 0.0
        %2652 = vmatprep.subr.mxu0 0.0
        %2653 = vmatpush2.msra.mxu0 0.0
        %2654 = vmatprep.subr.mxu0 0.0
        %2655 = vmatpush2.msra.mxu0 0.0
        %2656 = vmatprep.subr.mxu0 0.0
        %2657 = vmatpush2.msra.mxu0 0.0
        %2658 = vmatprep.subr.mxu0 0.0
        %2659 = vmatpush2.msra.mxu0 0.0
        %2660 = vmatprep.subr.mxu0 0.0
        %2661 = vmatpush2.msra.mxu0 0.0
        %2662 = vmatprep.subr.mxu0 0.0
        %2663 = vmatpush2.msra.mxu0 0.0
        %2664 = vmatprep.subr.mxu0 0.0
        %2665 = vmatpush2.msra.mxu0 0.0
        %2666 = vmatprep.subr.mxu0 0.0
        %2667 = vmatpush2.msra.mxu0 0.0
        %2668 = vmatprep.subr.mxu0 0.0
        %2669 = vmatpush2.msra.mxu0 0.0
        %2670 = vmatprep.subr.mxu0 0.0
        %2671 = vmatpush2.msra.mxu0 0.0
        %2672 = vmatprep.subr.mxu0 0.0
        %2673 = vmatpush2.msra.mxu0 0.0
        %2674 = vmatprep.subr.mxu0 0.0
        %2675 = vmatpush2.msra.mxu0 0.0
        %2676 = vmatprep.subr.mxu0 0.0
        %2677 = vmatpush2.msra.mxu0 0.0
        %2678 = vmatprep.subr.mxu0 0.0
        %2679 = vmatpush2.msra.mxu0 0.0
        %2680 = vmatprep.mubr.f32.mxu0 0.0
        %2681 = vmatmul.mubr.f32.gmra.mxu0 %v2611
        %v2682 = vpop.f32.mrf.mxu0
        %v2683 = vadd.f32 0.0, %v2682
        %v2684 = vpop.f32.mrf.mxu0
        %2685 = vmatprep.mubr.f32.mxu0 0.0
        %2686 = vmatmul.mubr.f32.gmra.mxu0 %v2614
        %v2687 = vpop.f32.mrf.mxu0
        %v2688 = vadd.f32 0.0, %v2687
        %v2689 = vpop.f32.mrf.mxu0
        %2690 = vdwg.mxu0
        %v2691 = vadd.f32 %v2604, %v2683
        %v2692 = vadd.f32 %v2605, %v2688
        %s2693 = sld [smem:[#allocation4 + $0x4]]
        %vm2694 = vcmp.ge.f32.partialorder %v2691, 0.0
        %vm2695 = vcmp.ge.f32.partialorder %v2692, 0.0
        %v2696 = vstv %s2693
        %v2697 = vmul.f32 %v2691, %v2696
        %v2698 = vmul.f32 %v2692, %v2696
        %v2699 = vsel %vm2694, %v2691, %v2697
        %v2700 = vsel %vm2695, %v2692, %v2698
        %v2701 = vld [vmem:[%s17] sm:$0xff]
        %v2702 = vld [vmem:[%s17 + $0x8] sm:$0xff]
        %v2703 = vld [vmem:[#allocation12] sm:$0x1]
        %v2705 = vlaneseq
        %v2706 = vshrl.u32 %v2705, 7
        %v2707 = vsub.s32 0, %v2706
        %v2708 = vrot.slane %v2703, %v2707
        %v2711 = vsel %vm1477, %v2140, 0
        %v2714 = vsel %vm1477, %v2141, 0
        %2716 = vmatprep.subr.mxu0 0.0
        %2717 = vmatpush1.msra.mxu0 0.0
        %2718 = vmatprep.subr.mxu0 0.0
        %2719 = vmatpush1.msra.mxu0 0.0
        %2720 = vmatprep.subr.mxu0 0.0
        %2721 = vmatpush1.msra.mxu0 0.0
        %2722 = vmatprep.subr.mxu0 0.0
        %2723 = vmatpush1.msra.mxu0 0.0
        %2724 = vmatprep.subr.mxu0 0.0
        %2725 = vmatpush1.msra.mxu0 0.0
        %2726 = vmatprep.subr.mxu0 0.0
        %2727 = vmatpush1.msra.mxu0 0.0
        %2728 = vmatprep.subr.mxu0 0.0
        %2729 = vmatpush1.msra.mxu0 0.0
        %2730 = vmatprep.subr.mxu0 0.0
        %2731 = vmatpush1.msra.mxu0 0.0
        %2732 = vmatprep.subr.mxu0 0.0
        %2733 = vmatpush1.msra.mxu0 0.0
        %2734 = vmatprep.subr.mxu0 0.0
        %2735 = vmatpush1.msra.mxu0 0.0
        %2736 = vmatprep.subr.mxu0 0.0
        %2737 = vmatpush1.msra.mxu0 0.0
        %2738 = vmatprep.subr.mxu0 0.0
        %2739 = vmatpush1.msra.mxu0 0.0
        %2740 = vmatprep.subr.mxu0 0.0
        %2741 = vmatpush1.msra.mxu0 0.0
        %2742 = vmatprep.subr.mxu0 0.0
        %2743 = vmatpush1.msra.mxu0 0.0
        %2744 = vmatprep.subr.mxu0 0.0
        %2745 = vmatpush1.msra.mxu0 %v2702
        %2746 = vmatprep.subr.mxu0 0.0
        %2747 = vmatpush1.msra.mxu0 %v2701
        %2748 = vmatprep.subr.mxu0 0.0
        %2749 = vmatpush2.msra.mxu0 0.0
        %2750 = vmatprep.subr.mxu0 0.0
        %2751 = vmatpush2.msra.mxu0 0.0
        %2752 = vmatprep.subr.mxu0 0.0
        %2753 = vmatpush2.msra.mxu0 0.0
        %2754 = vmatprep.subr.mxu0 0.0
        %2755 = vmatpush2.msra.mxu0 0.0
        %2756 = vmatprep.subr.mxu0 0.0
        %2757 = vmatpush2.msra.mxu0 0.0
        %2758 = vmatprep.subr.mxu0 0.0
        %2759 = vmatpush2.msra.mxu0 0.0
        %2760 = vmatprep.subr.mxu0 0.0
        %2761 = vmatpush2.msra.mxu0 0.0
        %2762 = vmatprep.subr.mxu0 0.0
        %2763 = vmatpush2.msra.mxu0 0.0
        %2764 = vmatprep.subr.mxu0 0.0
        %2765 = vmatpush2.msra.mxu0 0.0
        %2766 = vmatprep.subr.mxu0 0.0
        %2767 = vmatpush2.msra.mxu0 0.0
        %2768 = vmatprep.subr.mxu0 0.0
        %2769 = vmatpush2.msra.mxu0 0.0
        %2770 = vmatprep.subr.mxu0 0.0
        %2771 = vmatpush2.msra.mxu0 0.0
        %2772 = vmatprep.subr.mxu0 0.0
        %2773 = vmatpush2.msra.mxu0 0.0
        %2774 = vmatprep.subr.mxu0 0.0
        %2775 = vmatpush2.msra.mxu0 0.0
        %2776 = vmatprep.subr.mxu0 0.0
        %2777 = vmatpush2.msra.mxu0 0.0
        %2778 = vmatprep.subr.mxu0 0.0
        %2779 = vmatpush2.msra.mxu0 0.0
        %2780 = vmatprep.mubr.f32.mxu0 0.0
        %2781 = vmatmul.mubr.f32.gmra.mxu0 %v2711
        %v2782 = vpop.f32.mrf.mxu0
        %v2783 = vadd.f32 %v2708, %v2782
        %v2784 = vpop.f32.mrf.mxu0
        %2785 = vmatprep.mubr.f32.mxu0 0.0
        %2786 = vmatmul.mubr.f32.gmra.mxu0 %v2714
        %v2787 = vpop.f32.mrf.mxu0
        %v2788 = vadd.f32 %v2708, %v2787
        %v2789 = vpop.f32.mrf.mxu0
        %2790 = vdwg.mxu0
        %v2791 = vadd.f32 %v2699, %v2783
        %v2792 = vadd.f32 %v2700, %v2788
        %s2793 = sld [smem:[#allocation4 + $0x5]]
        %vm2794 = vcmp.ge.f32.partialorder %v2791, 0.0
        %vm2795 = vcmp.ge.f32.partialorder %v2792, 0.0
        %v2796 = vstv %s2793
        %v2797 = vmul.f32 %v2791, %v2796
        %v2798 = vmul.f32 %v2792, %v2796
        %v2799 = vsel %vm2794, %v2791, %v2797
        %v2800 = vsel %vm2795, %v2792, %v2798
        %v2801 = vsel %vm1483, %v2799, 0.0
        %v2802 = vsel %vm1483, %v2800, 0.0
        %v2803 = vadd.f32 %v2801, %v2802
        %v2804 = vrot.slane %v2803, 4
        %v2805 = vadd.f32 %v2803, %v2804
        %v2806 = vrot.slane %v2805, 2
        %v2807 = vadd.f32 %v2805, %v2806
        %v2808 = vrot.slane %v2807, 1
        %v2809 = vadd.f32 %v2807, %v2808
        %v2810 = vrcp.pop 16.0
        %v2811 = vmul.f32 %v2809, %v2810
        %v2812 = vsub.f32 %v2799, %v2811
        %v2813 = vsub.f32 %v2800, %v2811
        %v2814 = vmul.f32 %v2812, %v2812
        %v2815 = vmul.f32 %v2813, %v2813
        %v2816 = vsel %vm1483, %v2814, 0.0
        %v2817 = vsel %vm1483, %v2815, 0.0
        %v2818 = vadd.f32 %v2816, %v2817
        %v2819 = vrot.slane %v2818, 4
        %v2820 = vadd.f32 %v2818, %v2819
        %v2821 = vrot.slane %v2820, 2
        %v2822 = vadd.f32 %v2820, %v2821
        %v2823 = vrot.slane %v2822, 1
        %v2824 = vadd.f32 %v2822, %v2823
        %v2825 = vmul.f32 %v2824, %v2810
        %v2826 = vadd.f32 %v2825, 1e-05
        %v2827 = vrsqrt.pop %v2826
        %v2828 = vmul.f32 %v2812, %v2827
        %v2829 = vmul.f32 %v2813, %v2827
        %v2830 = vld [vmem:[#allocation16] sm:$0x1]
        %v2832 = vlaneseq
        %v2833 = vshrl.u32 %v2832, 7
        %v2834 = vsub.s32 0, %v2833
        %v2835 = vrot.slane %v2830, %v2834
        %v2837 = vmul.f32 %v2828, %v2835
        %v2838 = vmul.f32 %v2829, %v2835
        %v2839 = vld [vmem:[#allocation18] sm:$0x1]
        %v2841 = vlaneseq
        %v2842 = vshrl.u32 %v2841, 7
        %v2843 = vsub.s32 0, %v2842
        %v2844 = vrot.slane %v2839, %v2843
        %v2846 = vadd.f32 %v2837, %v2844
        %v2847 = vadd.f32 %v2838, %v2844
        %2848 = vst.msk [vmem:[#allocation2 + $0x8] sm:$0xff] %vm1483, %v2846
        %2849 = vst.msk [vmem:[#allocation2 + $0x10] sm:$0xff] %vm1483, %v2847
        %v2850 = vld [vmem:[#allocation22] sm:$0x1]
        %v2852 = vlaneseq
        %v2853 = vshrl.u32 %v2852, 7
        %v2854 = vsub.s32 0, %v2853
        %v2855 = vrot.slane %v2850, %v2854
        %v2857 = vadd.f32 %v2855, 0.0
        %v2858 = vld [vmem:[#allocation2 + $0x6] sm:$0xff]
        %v2859 = vld [vmem:[#allocation2 + $0xe] sm:$0xff]
        %v2860 = vld [vmem:[%s37] sm:$0xff]
        %v2862 = vsel %vm1483, %v2858, 0
        %v2865 = vsel %vm1483, %v2859, 0
        %2867 = vmatprep.subr.mxu0 0.0
        %2868 = vmatpush1.msra.mxu0 0.0
        %2869 = vmatprep.subr.mxu0 0.0
        %2870 = vmatpush1.msra.mxu0 0.0
        %2871 = vmatprep.subr.mxu0 0.0
        %2872 = vmatpush1.msra.mxu0 0.0
        %2873 = vmatprep.subr.mxu0 0.0
        %2874 = vmatpush1.msra.mxu0 0.0
        %2875 = vmatprep.subr.mxu0 0.0
        %2876 = vmatpush1.msra.mxu0 0.0
        %2877 = vmatprep.subr.mxu0 0.0
        %2878 = vmatpush1.msra.mxu0 0.0
        %2879 = vmatprep.subr.mxu0 0.0
        %2880 = vmatpush1.msra.mxu0 0.0
        %2881 = vmatprep.subr.mxu0 0.0
        %2882 = vmatpush1.msra.mxu0 0.0
        %2883 = vmatprep.subr.mxu0 0.0
        %2884 = vmatpush1.msra.mxu0 0.0
        %2885 = vmatprep.subr.mxu0 0.0
        %2886 = vmatpush1.msra.mxu0 0.0
        %2887 = vmatprep.subr.mxu0 0.0
        %2888 = vmatpush1.msra.mxu0 0.0
        %2889 = vmatprep.subr.mxu0 0.0
        %2890 = vmatpush1.msra.mxu0 0.0
        %2891 = vmatprep.subr.mxu0 0.0
        %2892 = vmatpush1.msra.mxu0 0.0
        %2893 = vmatprep.subr.mxu0 0.0
        %2894 = vmatpush1.msra.mxu0 0.0
        %2895 = vmatprep.subr.mxu0 0.0
        %2896 = vmatpush1.msra.mxu0 0.0
        %2897 = vmatprep.subr.mxu0 0.0
        %2898 = vmatpush1.msra.mxu0 %v2860
        %2899 = vmatprep.subr.mxu0 0.0
        %2900 = vmatpush2.msra.mxu0 0.0
        %2901 = vmatprep.subr.mxu0 0.0
        %2902 = vmatpush2.msra.mxu0 0.0
        %2903 = vmatprep.subr.mxu0 0.0
        %2904 = vmatpush2.msra.mxu0 0.0
        %2905 = vmatprep.subr.mxu0 0.0
        %2906 = vmatpush2.msra.mxu0 0.0
        %2907 = vmatprep.subr.mxu0 0.0
        %2908 = vmatpush2.msra.mxu0 0.0
        %2909 = vmatprep.subr.mxu0 0.0
        %2910 = vmatpush2.msra.mxu0 0.0
        %2911 = vmatprep.subr.mxu0 0.0
        %2912 = vmatpush2.msra.mxu0 0.0
        %2913 = vmatprep.subr.mxu0 0.0
        %2914 = vmatpush2.msra.mxu0 0.0
        %2915 = vmatprep.subr.mxu0 0.0
        %2916 = vmatpush2.msra.mxu0 0.0
        %2917 = vmatprep.subr.mxu0 0.0
        %2918 = vmatpush2.msra.mxu0 0.0
        %2919 = vmatprep.subr.mxu0 0.0
        %2920 = vmatpush2.msra.mxu0 0.0
        %2921 = vmatprep.subr.mxu0 0.0
        %2922 = vmatpush2.msra.mxu0 0.0
        %2923 = vmatprep.subr.mxu0 0.0
        %2924 = vmatpush2.msra.mxu0 0.0
        %2925 = vmatprep.subr.mxu0 0.0
        %2926 = vmatpush2.msra.mxu0 0.0
        %2927 = vmatprep.subr.mxu0 0.0
        %2928 = vmatpush2.msra.mxu0 0.0
        %2929 = vmatprep.subr.mxu0 0.0
        %2930 = vmatpush2.msra.mxu0 0.0
        %2931 = vmatprep.mubr.f32.mxu0 0.0
        %2932 = vmatmul.mubr.f32.gmra.mxu0 %v2862
        %v2933 = vpop.f32.mrf.mxu0
        %v2934 = vadd.f32 0.0, %v2933
        %v2935 = vpop.f32.mrf.mxu0
        %2936 = vmatprep.mubr.f32.mxu0 0.0
        %2937 = vmatmul.mubr.f32.gmra.mxu0 %v2865
        %v2938 = vpop.f32.mrf.mxu0
        %v2939 = vadd.f32 0.0, %v2938
        %v2940 = vpop.f32.mrf.mxu0
        %2941 = vdwg.mxu0
        %v2942 = vadd.f32 %v2857, %v2934
        %v2943 = vadd.f32 %v2857, %v2939
        %v2944 = vld [vmem:[#allocation2 + $0x7] sm:$0xff]
        %v2945 = vld [vmem:[#allocation2 + $0xf] sm:$0xff]
        %s2946 = scalar_lea.vmem %s37, 8
        %v2947 = vld [vmem:[%s2946] sm:$0xff]
        %v2949 = vsel %vm1483, %v2944, 0
        %v2952 = vsel %vm1483, %v2945, 0
        %2954 = vmatprep.subr.mxu0 0.0
        %2955 = vmatpush1.msra.mxu0 0.0
        %2956 = vmatprep.subr.mxu0 0.0
        %2957 = vmatpush1.msra.mxu0 0.0
        %2958 = vmatprep.subr.mxu0 0.0
        %2959 = vmatpush1.msra.mxu0 0.0
        %2960 = vmatprep.subr.mxu0 0.0
        %2961 = vmatpush1.msra.mxu0 0.0
        %2962 = vmatprep.subr.mxu0 0.0
        %2963 = vmatpush1.msra.mxu0 0.0
        %2964 = vmatprep.subr.mxu0 0.0
        %2965 = vmatpush1.msra.mxu0 0.0
        %2966 = vmatprep.subr.mxu0 0.0
        %2967 = vmatpush1.msra.mxu0 0.0
        %2968 = vmatprep.subr.mxu0 0.0
        %2969 = vmatpush1.msra.mxu0 0.0
        %2970 = vmatprep.subr.mxu0 0.0
        %2971 = vmatpush1.msra.mxu0 0.0
        %2972 = vmatprep.subr.mxu0 0.0
        %2973 = vmatpush1.msra.mxu0 0.0
        %2974 = vmatprep.subr.mxu0 0.0
        %2975 = vmatpush1.msra.mxu0 0.0
        %2976 = vmatprep.subr.mxu0 0.0
        %2977 = vmatpush1.msra.mxu0 0.0
        %2978 = vmatprep.subr.mxu0 0.0
        %2979 = vmatpush1.msra.mxu0 0.0
        %2980 = vmatprep.subr.mxu0 0.0
        %2981 = vmatpush1.msra.mxu0 0.0
        %2982 = vmatprep.subr.mxu0 0.0
        %2983 = vmatpush1.msra.mxu0 0.0
        %2984 = vmatprep.subr.mxu0 0.0
        %2985 = vmatpush1.msra.mxu0 %v2947
        %2986 = vmatprep.subr.mxu0 0.0
        %2987 = vmatpush2.msra.mxu0 0.0
        %2988 = vmatprep.subr.mxu0 0.0
        %2989 = vmatpush2.msra.mxu0 0.0
        %2990 = vmatprep.subr.mxu0 0.0
        %2991 = vmatpush2.msra.mxu0 0.0
        %2992 = vmatprep.subr.mxu0 0.0
        %2993 = vmatpush2.msra.mxu0 0.0
        %2994 = vmatprep.subr.mxu0 0.0
        %2995 = vmatpush2.msra.mxu0 0.0
        %2996 = vmatprep.subr.mxu0 0.0
        %2997 = vmatpush2.msra.mxu0 0.0
        %2998 = vmatprep.subr.mxu0 0.0
        %2999 = vmatpush2.msra.mxu0 0.0
        %3000 = vmatprep.subr.mxu0 0.0
        %3001 = vmatpush2.msra.mxu0 0.0
        %3002 = vmatprep.subr.mxu0 0.0
        %3003 = vmatpush2.msra.mxu0 0.0
        %3004 = vmatprep.subr.mxu0 0.0
        %3005 = vmatpush2.msra.mxu0 0.0
        %3006 = vmatprep.subr.mxu0 0.0
        %3007 = vmatpush2.msra.mxu0 0.0
        %3008 = vmatprep.subr.mxu0 0.0
        %3009 = vmatpush2.msra.mxu0 0.0
        %3010 = vmatprep.subr.mxu0 0.0
        %3011 = vmatpush2.msra.mxu0 0.0
        %3012 = vmatprep.subr.mxu0 0.0
        %3013 = vmatpush2.msra.mxu0 0.0
        %3014 = vmatprep.subr.mxu0 0.0
        %3015 = vmatpush2.msra.mxu0 0.0
        %3016 = vmatprep.subr.mxu0 0.0
        %3017 = vmatpush2.msra.mxu0 0.0
        %3018 = vmatprep.mubr.f32.mxu0 0.0
        %3019 = vmatmul.mubr.f32.gmra.mxu0 %v2949
        %v3020 = vpop.f32.mrf.mxu0
        %v3021 = vadd.f32 0.0, %v3020
        %v3022 = vpop.f32.mrf.mxu0
        %3023 = vmatprep.mubr.f32.mxu0 0.0
        %3024 = vmatmul.mubr.f32.gmra.mxu0 %v2952
        %v3025 = vpop.f32.mrf.mxu0
        %v3026 = vadd.f32 0.0, %v3025
        %v3027 = vpop.f32.mrf.mxu0
        %3028 = vdwg.mxu0
        %v3029 = vadd.f32 %v2942, %v3021
        %v3030 = vadd.f32 %v2943, %v3026
        %v3031 = vld [vmem:[#allocation2 + $0x8] sm:$0xff]
        %v3032 = vld [vmem:[#allocation2 + $0x10] sm:$0xff]
        %s3033 = scalar_lea.vmem %s37, 16
        %v3034 = vld [vmem:[%s3033] sm:$0xff]
        %v3036 = vsel %vm1483, %v3031, 0
        %v3039 = vsel %vm1483, %v3032, 0
        %3041 = vmatprep.subr.mxu0 0.0
        %3042 = vmatpush1.msra.mxu0 0.0
        %3043 = vmatprep.subr.mxu0 0.0
        %3044 = vmatpush1.msra.mxu0 0.0
        %3045 = vmatprep.subr.mxu0 0.0
        %3046 = vmatpush1.msra.mxu0 0.0
        %3047 = vmatprep.subr.mxu0 0.0
        %3048 = vmatpush1.msra.mxu0 0.0
        %3049 = vmatprep.subr.mxu0 0.0
        %3050 = vmatpush1.msra.mxu0 0.0
        %3051 = vmatprep.subr.mxu0 0.0
        %3052 = vmatpush1.msra.mxu0 0.0
        %3053 = vmatprep.subr.mxu0 0.0
        %3054 = vmatpush1.msra.mxu0 0.0
        %3055 = vmatprep.subr.mxu0 0.0
        %3056 = vmatpush1.msra.mxu0 0.0
        %3057 = vmatprep.subr.mxu0 0.0
        %3058 = vmatpush1.msra.mxu0 0.0
        %3059 = vmatprep.subr.mxu0 0.0
        %3060 = vmatpush1.msra.mxu0 0.0
        %3061 = vmatprep.subr.mxu0 0.0
        %3062 = vmatpush1.msra.mxu0 0.0
        %3063 = vmatprep.subr.mxu0 0.0
        %3064 = vmatpush1.msra.mxu0 0.0
        %3065 = vmatprep.subr.mxu0 0.0
        %3066 = vmatpush1.msra.mxu0 0.0
        %3067 = vmatprep.subr.mxu0 0.0
        %3068 = vmatpush1.msra.mxu0 0.0
        %3069 = vmatprep.subr.mxu0 0.0
        %3070 = vmatpush1.msra.mxu0 0.0
        %3071 = vmatprep.subr.mxu0 0.0
        %3072 = vmatpush1.msra.mxu0 %v3034
        %3073 = vmatprep.subr.mxu0 0.0
        %3074 = vmatpush2.msra.mxu0 0.0
        %3075 = vmatprep.subr.mxu0 0.0
        %3076 = vmatpush2.msra.mxu0 0.0
        %3077 = vmatprep.subr.mxu0 0.0
        %3078 = vmatpush2.msra.mxu0 0.0
        %3079 = vmatprep.subr.mxu0 0.0
        %3080 = vmatpush2.msra.mxu0 0.0
        %3081 = vmatprep.subr.mxu0 0.0
        %3082 = vmatpush2.msra.mxu0 0.0
        %3083 = vmatprep.subr.mxu0 0.0
        %3084 = vmatpush2.msra.mxu0 0.0
        %3085 = vmatprep.subr.mxu0 0.0
        %3086 = vmatpush2.msra.mxu0 0.0
        %3087 = vmatprep.subr.mxu0 0.0
        %3088 = vmatpush2.msra.mxu0 0.0
        %3089 = vmatprep.subr.mxu0 0.0
        %3090 = vmatpush2.msra.mxu0 0.0
        %3091 = vmatprep.subr.mxu0 0.0
        %3092 = vmatpush2.msra.mxu0 0.0
        %3093 = vmatprep.subr.mxu0 0.0
        %3094 = vmatpush2.msra.mxu0 0.0
        %3095 = vmatprep.subr.mxu0 0.0
        %3096 = vmatpush2.msra.mxu0 0.0
        %3097 = vmatprep.subr.mxu0 0.0
        %3098 = vmatpush2.msra.mxu0 0.0
        %3099 = vmatprep.subr.mxu0 0.0
        %3100 = vmatpush2.msra.mxu0 0.0
        %3101 = vmatprep.subr.mxu0 0.0
        %3102 = vmatpush2.msra.mxu0 0.0
        %3103 = vmatprep.subr.mxu0 0.0
        %3104 = vmatpush2.msra.mxu0 0.0
        %3105 = vmatprep.mubr.f32.mxu0 0.0
        %3106 = vmatmul.mubr.f32.gmra.mxu0 %v3036
        %v3107 = vpop.f32.mrf.mxu0
        %v3108 = vadd.f32 0.0, %v3107
        %v3109 = vpop.f32.mrf.mxu0
        %3110 = vmatprep.mubr.f32.mxu0 0.0
        %3111 = vmatmul.mubr.f32.gmra.mxu0 %v3039
        %v3112 = vpop.f32.mrf.mxu0
        %v3113 = vadd.f32 0.0, %v3112
        %v3114 = vpop.f32.mrf.mxu0
        %3115 = vdwg.mxu0
        %v3116 = vadd.f32 %v3029, %v3108
        %v3117 = vadd.f32 %v3030, %v3113
        %s3118 = sld [smem:[#allocation4 + $0x6]]
        %vm3119 = vcmp.ge.f32.partialorder %v3116, 0.0
        %vm3120 = vcmp.ge.f32.partialorder %v3117, 0.0
        %v3121 = vstv %s3118
        %v3122 = vmul.f32 %v3116, %v3121
        %v3123 = vmul.f32 %v3117, %v3121
        %v3124 = vsel %vm3119, %v3116, %v3122
        %v3125 = vsel %vm3120, %v3117, %v3123
        %3126 = vst.msk [vmem:[#allocation2 + $0x8] sm:$0xff] %vm1477, %v3124
        %3127 = vst.msk [vmem:[#allocation2 + $0x10] sm:$0xff] %vm1477, %v3125
        %v3128 = vld [vmem:[#allocation24] sm:$0x1]
        %v3130 = vlaneseq
        %v3131 = vshrl.u32 %v3130, 7
        %v3132 = vsub.s32 0, %v3131
        %v3133 = vrot.slane %v3128, %v3132
        %v3135 = vadd.f32 %v3133, 0.0
        %v3136 = vld [vmem:[#allocation2 + $0x6] sm:$0xff]
        %v3137 = vld [vmem:[#allocation2 + $0xe] sm:$0xff]
        %v3138 = vld [vmem:[%s41] sm:$0xff]
        %v3139 = vld [vmem:[%s41 + $0x8] sm:$0xff]
        %v3141 = vsel %vm1477, %v3136, 0
        %v3144 = vsel %vm1477, %v3137, 0
        %3146 = vmatprep.subr.mxu0 0.0
        %3147 = vmatpush1.msra.mxu0 0.0
        %3148 = vmatprep.subr.mxu0 0.0
        %3149 = vmatpush1.msra.mxu0 0.0
        %3150 = vmatprep.subr.mxu0 0.0
        %3151 = vmatpush1.msra.mxu0 0.0
        %3152 = vmatprep.subr.mxu0 0.0
        %3153 = vmatpush1.msra.mxu0 0.0
        %3154 = vmatprep.subr.mxu0 0.0
        %3155 = vmatpush1.msra.mxu0 0.0
        %3156 = vmatprep.subr.mxu0 0.0
        %3157 = vmatpush1.msra.mxu0 0.0
        %3158 = vmatprep.subr.mxu0 0.0
        %3159 = vmatpush1.msra.mxu0 0.0
        %3160 = vmatprep.subr.mxu0 0.0
        %3161 = vmatpush1.msra.mxu0 0.0
        %3162 = vmatprep.subr.mxu0 0.0
        %3163 = vmatpush1.msra.mxu0 0.0
        %3164 = vmatprep.subr.mxu0 0.0
        %3165 = vmatpush1.msra.mxu0 0.0
        %3166 = vmatprep.subr.mxu0 0.0
        %3167 = vmatpush1.msra.mxu0 0.0
        %3168 = vmatprep.subr.mxu0 0.0
        %3169 = vmatpush1.msra.mxu0 0.0
        %3170 = vmatprep.subr.mxu0 0.0
        %3171 = vmatpush1.msra.mxu0 0.0
        %3172 = vmatprep.subr.mxu0 0.0
        %3173 = vmatpush1.msra.mxu0 0.0
        %3174 = vmatprep.subr.mxu0 0.0
        %3175 = vmatpush1.msra.mxu0 %v3139
        %3176 = vmatprep.subr.mxu0 0.0
        %3177 = vmatpush1.msra.mxu0 %v3138
        %3178 = vmatprep.subr.mxu0 0.0
        %3179 = vmatpush2.msra.mxu0 0.0
        %3180 = vmatprep.subr.mxu0 0.0
        %3181 = vmatpush2.msra.mxu0 0.0
        %3182 = vmatprep.subr.mxu0 0.0
        %3183 = vmatpush2.msra.mxu0 0.0
        %3184 = vmatprep.subr.mxu0 0.0
        %3185 = vmatpush2.msra.mxu0 0.0
        %3186 = vmatprep.subr.mxu0 0.0
        %3187 = vmatpush2.msra.mxu0 0.0
        %3188 = vmatprep.subr.mxu0 0.0
        %3189 = vmatpush2.msra.mxu0 0.0
        %3190 = vmatprep.subr.mxu0 0.0
        %3191 = vmatpush2.msra.mxu0 0.0
        %3192 = vmatprep.subr.mxu0 0.0
        %3193 = vmatpush2.msra.mxu0 0.0
        %3194 = vmatprep.subr.mxu0 0.0
        %3195 = vmatpush2.msra.mxu0 0.0
        %3196 = vmatprep.subr.mxu0 0.0
        %3197 = vmatpush2.msra.mxu0 0.0
        %3198 = vmatprep.subr.mxu0 0.0
        %3199 = vmatpush2.msra.mxu0 0.0
        %3200 = vmatprep.subr.mxu0 0.0
        %3201 = vmatpush2.msra.mxu0 0.0
        %3202 = vmatprep.subr.mxu0 0.0
        %3203 = vmatpush2.msra.mxu0 0.0
        %3204 = vmatprep.subr.mxu0 0.0
        %3205 = vmatpush2.msra.mxu0 0.0
        %3206 = vmatprep.subr.mxu0 0.0
        %3207 = vmatpush2.msra.mxu0 0.0
        %3208 = vmatprep.subr.mxu0 0.0
        %3209 = vmatpush2.msra.mxu0 0.0
        %3210 = vmatprep.mubr.f32.mxu0 0.0
        %3211 = vmatmul.mubr.f32.gmra.mxu0 %v3141
        %v3212 = vpop.f32.mrf.mxu0
        %v3213 = vadd.f32 0.0, %v3212
        %v3214 = vpop.f32.mrf.mxu0
        %3215 = vmatprep.mubr.f32.mxu0 0.0
        %3216 = vmatmul.mubr.f32.gmra.mxu0 %v3144
        %v3217 = vpop.f32.mrf.mxu0
        %v3218 = vadd.f32 0.0, %v3217
        %v3219 = vpop.f32.mrf.mxu0
        %3220 = vdwg.mxu0
        %v3221 = vadd.f32 %v3135, %v3213
        %v3222 = vadd.f32 %v3135, %v3218
        %v3223 = vld [vmem:[#allocation2 + $0x7] sm:$0xff]
        %v3224 = vld [vmem:[#allocation2 + $0xf] sm:$0xff]
        %s3225 = scalar_lea.vmem %s41, 16
        %v3226 = vld [vmem:[%s3225] sm:$0xff]
        %v3227 = vld [vmem:[%s3225 + $0x8] sm:$0xff]
        %v3229 = vsel %vm1477, %v3223, 0
        %v3232 = vsel %vm1477, %v3224, 0
        %3234 = vmatprep.subr.mxu0 0.0
        %3235 = vmatpush1.msra.mxu0 0.0
        %3236 = vmatprep.subr.mxu0 0.0
        %3237 = vmatpush1.msra.mxu0 0.0
        %3238 = vmatprep.subr.mxu0 0.0
        %3239 = vmatpush1.msra.mxu0 0.0
        %3240 = vmatprep.subr.mxu0 0.0
        %3241 = vmatpush1.msra.mxu0 0.0
        %3242 = vmatprep.subr.mxu0 0.0
        %3243 = vmatpush1.msra.mxu0 0.0
        %3244 = vmatprep.subr.mxu0 0.0
        %3245 = vmatpush1.msra.mxu0 0.0
        %3246 = vmatprep.subr.mxu0 0.0
        %3247 = vmatpush1.msra.mxu0 0.0
        %3248 = vmatprep.subr.mxu0 0.0
        %3249 = vmatpush1.msra.mxu0 0.0
        %3250 = vmatprep.subr.mxu0 0.0
        %3251 = vmatpush1.msra.mxu0 0.0
        %3252 = vmatprep.subr.mxu0 0.0
        %3253 = vmatpush1.msra.mxu0 0.0
        %3254 = vmatprep.subr.mxu0 0.0
        %3255 = vmatpush1.msra.mxu0 0.0
        %3256 = vmatprep.subr.mxu0 0.0
        %3257 = vmatpush1.msra.mxu0 0.0
        %3258 = vmatprep.subr.mxu0 0.0
        %3259 = vmatpush1.msra.mxu0 0.0
        %3260 = vmatprep.subr.mxu0 0.0
        %3261 = vmatpush1.msra.mxu0 0.0
        %3262 = vmatprep.subr.mxu0 0.0
        %3263 = vmatpush1.msra.mxu0 %v3227
        %3264 = vmatprep.subr.mxu0 0.0
        %3265 = vmatpush1.msra.mxu0 %v3226
        %3266 = vmatprep.subr.mxu0 0.0
        %3267 = vmatpush2.msra.mxu0 0.0
        %3268 = vmatprep.subr.mxu0 0.0
        %3269 = vmatpush2.msra.mxu0 0.0
        %3270 = vmatprep.subr.mxu0 0.0
        %3271 = vmatpush2.msra.mxu0 0.0
        %3272 = vmatprep.subr.mxu0 0.0
        %3273 = vmatpush2.msra.mxu0 0.0
        %3274 = vmatprep.subr.mxu0 0.0
        %3275 = vmatpush2.msra.mxu0 0.0
        %3276 = vmatprep.subr.mxu0 0.0
        %3277 = vmatpush2.msra.mxu0 0.0
        %3278 = vmatprep.subr.mxu0 0.0
        %3279 = vmatpush2.msra.mxu0 0.0
        %3280 = vmatprep.subr.mxu0 0.0
        %3281 = vmatpush2.msra.mxu0 0.0
        %3282 = vmatprep.subr.mxu0 0.0
        %3283 = vmatpush2.msra.mxu0 0.0
        %3284 = vmatprep.subr.mxu0 0.0
        %3285 = vmatpush2.msra.mxu0 0.0
        %3286 = vmatprep.subr.mxu0 0.0
        %3287 = vmatpush2.msra.mxu0 0.0
        %3288 = vmatprep.subr.mxu0 0.0
        %3289 = vmatpush2.msra.mxu0 0.0
        %3290 = vmatprep.subr.mxu0 0.0
        %3291 = vmatpush2.msra.mxu0 0.0
        %3292 = vmatprep.subr.mxu0 0.0
        %3293 = vmatpush2.msra.mxu0 0.0
        %3294 = vmatprep.subr.mxu0 0.0
        %3295 = vmatpush2.msra.mxu0 0.0
        %3296 = vmatprep.subr.mxu0 0.0
        %3297 = vmatpush2.msra.mxu0 0.0
        %3298 = vmatprep.mubr.f32.mxu0 0.0
        %3299 = vmatmul.mubr.f32.gmra.mxu0 %v3229
        %v3300 = vpop.f32.mrf.mxu0
        %v3301 = vadd.f32 0.0, %v3300
        %v3302 = vpop.f32.mrf.mxu0
        %3303 = vmatprep.mubr.f32.mxu0 0.0
        %3304 = vmatmul.mubr.f32.gmra.mxu0 %v3232
        %v3305 = vpop.f32.mrf.mxu0
        %v3306 = vadd.f32 0.0, %v3305
        %v3307 = vpop.f32.mrf.mxu0
        %3308 = vdwg.mxu0
        %v3309 = vadd.f32 %v3221, %v3301
        %v3310 = vadd.f32 %v3222, %v3306
        %v3311 = vld [vmem:[#allocation2 + $0x8] sm:$0xff]
        %v3312 = vld [vmem:[#allocation2 + $0x10] sm:$0xff]
        %s3313 = scalar_lea.vmem %s41, 32
        %v3314 = vld [vmem:[%s3313] sm:$0xff]
        %v3315 = vld [vmem:[%s3313 + $0x8] sm:$0xff]
        %v3317 = vsel %vm1477, %v3311, 0
        %v3320 = vsel %vm1477, %v3312, 0
        %3322 = vmatprep.subr.mxu0 0.0
        %3323 = vmatpush1.msra.mxu0 0.0
        %3324 = vmatprep.subr.mxu0 0.0
        %3325 = vmatpush1.msra.mxu0 0.0
        %3326 = vmatprep.subr.mxu0 0.0
        %3327 = vmatpush1.msra.mxu0 0.0
        %3328 = vmatprep.subr.mxu0 0.0
        %3329 = vmatpush1.msra.mxu0 0.0
        %3330 = vmatprep.subr.mxu0 0.0
        %3331 = vmatpush1.msra.mxu0 0.0
        %3332 = vmatprep.subr.mxu0 0.0
        %3333 = vmatpush1.msra.mxu0 0.0
        %3334 = vmatprep.subr.mxu0 0.0
        %3335 = vmatpush1.msra.mxu0 0.0
        %3336 = vmatprep.subr.mxu0 0.0
        %3337 = vmatpush1.msra.mxu0 0.0
        %3338 = vmatprep.subr.mxu0 0.0
        %3339 = vmatpush1.msra.mxu0 0.0
        %3340 = vmatprep.subr.mxu0 0.0
        %3341 = vmatpush1.msra.mxu0 0.0
        %3342 = vmatprep.subr.mxu0 0.0
        %3343 = vmatpush1.msra.mxu0 0.0
        %3344 = vmatprep.subr.mxu0 0.0
        %3345 = vmatpush1.msra.mxu0 0.0
        %3346 = vmatprep.subr.mxu0 0.0
        %3347 = vmatpush1.msra.mxu0 0.0
        %3348 = vmatprep.subr.mxu0 0.0
        %3349 = vmatpush1.msra.mxu0 0.0
        %3350 = vmatprep.subr.mxu0 0.0
        %3351 = vmatpush1.msra.mxu0 %v3315
        %3352 = vmatprep.subr.mxu0 0.0
        %3353 = vmatpush1.msra.mxu0 %v3314
        %3354 = vmatprep.subr.mxu0 0.0
        %3355 = vmatpush2.msra.mxu0 0.0
        %3356 = vmatprep.subr.mxu0 0.0
        %3357 = vmatpush2.msra.mxu0 0.0
        %3358 = vmatprep.subr.mxu0 0.0
        %3359 = vmatpush2.msra.mxu0 0.0
        %3360 = vmatprep.subr.mxu0 0.0
        %3361 = vmatpush2.msra.mxu0 0.0
        %3362 = vmatprep.subr.mxu0 0.0
        %3363 = vmatpush2.msra.mxu0 0.0
        %3364 = vmatprep.subr.mxu0 0.0
        %3365 = vmatpush2.msra.mxu0 0.0
        %3366 = vmatprep.subr.mxu0 0.0
        %3367 = vmatpush2.msra.mxu0 0.0
        %3368 = vmatprep.subr.mxu0 0.0
        %3369 = vmatpush2.msra.mxu0 0.0
        %3370 = vmatprep.subr.mxu0 0.0
        %3371 = vmatpush2.msra.mxu0 0.0
        %3372 = vmatprep.subr.mxu0 0.0
        %3373 = vmatpush2.msra.mxu0 0.0
        %3374 = vmatprep.subr.mxu0 0.0
        %3375 = vmatpush2.msra.mxu0 0.0
        %3376 = vmatprep.subr.mxu0 0.0
        %3377 = vmatpush2.msra.mxu0 0.0
        %3378 = vmatprep.subr.mxu0 0.0
        %3379 = vmatpush2.msra.mxu0 0.0
        %3380 = vmatprep.subr.mxu0 0.0
        %3381 = vmatpush2.msra.mxu0 0.0
        %3382 = vmatprep.subr.mxu0 0.0
        %3383 = vmatpush2.msra.mxu0 0.0
        %3384 = vmatprep.subr.mxu0 0.0
        %3385 = vmatpush2.msra.mxu0 0.0
        %3386 = vmatprep.mubr.f32.mxu0 0.0
        %3387 = vmatmul.mubr.f32.gmra.mxu0 %v3317
        %v3388 = vpop.f32.mrf.mxu0
        %v3389 = vadd.f32 0.0, %v3388
        %v3390 = vpop.f32.mrf.mxu0
        %3391 = vmatprep.mubr.f32.mxu0 0.0
        %3392 = vmatmul.mubr.f32.gmra.mxu0 %v3320
        %v3393 = vpop.f32.mrf.mxu0
        %v3394 = vadd.f32 0.0, %v3393
        %v3395 = vpop.f32.mrf.mxu0
        %3396 = vdwg.mxu0
        %v3397 = vadd.f32 %v3309, %v3389
        %v3398 = vadd.f32 %v3310, %v3394
        %s3399 = sld [smem:[#allocation4 + $0x7]]
        %vm3400 = vcmp.ge.f32.partialorder %v3397, 0.0
        %vm3401 = vcmp.ge.f32.partialorder %v3398, 0.0
        %v3402 = vstv %s3399
        %v3403 = vmul.f32 %v3397, %v3402
        %v3404 = vmul.f32 %v3398, %v3402
        %v3405 = vsel %vm3400, %v3397, %v3403
        %v3406 = vsel %vm3401, %v3398, %v3404
        %v3407 = vld [vmem:[#allocation19] sm:$0xff]
        %v3408 = vld [vmem:[#allocation21] sm:$0x1]
        %v3410 = vlaneseq
        %v3411 = vshrl.u32 %v3410, 7
        %v3412 = vsub.s32 0, %v3411
        %v3413 = vrot.slane %v3408, %v3412
        %v3416 = vsel %vm1483, %v2846, 0
        %v3419 = vsel %vm1483, %v2847, 0
        %3421 = vmatprep.subr.mxu0 0.0
        %3422 = vmatpush1.msra.mxu0 0.0
        %3423 = vmatprep.subr.mxu0 0.0
        %3424 = vmatpush1.msra.mxu0 0.0
        %3425 = vmatprep.subr.mxu0 0.0
        %3426 = vmatpush1.msra.mxu0 0.0
        %3427 = vmatprep.subr.mxu0 0.0
        %3428 = vmatpush1.msra.mxu0 0.0
        %3429 = vmatprep.subr.mxu0 0.0
        %3430 = vmatpush1.msra.mxu0 0.0
        %3431 = vmatprep.subr.mxu0 0.0
        %3432 = vmatpush1.msra.mxu0 0.0
        %3433 = vmatprep.subr.mxu0 0.0
        %3434 = vmatpush1.msra.mxu0 0.0
        %3435 = vmatprep.subr.mxu0 0.0
        %3436 = vmatpush1.msra.mxu0 0.0
        %3437 = vmatprep.subr.mxu0 0.0
        %3438 = vmatpush1.msra.mxu0 0.0
        %3439 = vmatprep.subr.mxu0 0.0
        %3440 = vmatpush1.msra.mxu0 0.0
        %3441 = vmatprep.subr.mxu0 0.0
        %3442 = vmatpush1.msra.mxu0 0.0
        %3443 = vmatprep.subr.mxu0 0.0
        %3444 = vmatpush1.msra.mxu0 0.0
        %3445 = vmatprep.subr.mxu0 0.0
        %3446 = vmatpush1.msra.mxu0 0.0
        %3447 = vmatprep.subr.mxu0 0.0
        %3448 = vmatpush1.msra.mxu0 0.0
        %3449 = vmatprep.subr.mxu0 0.0
        %3450 = vmatpush1.msra.mxu0 0.0
        %3451 = vmatprep.subr.mxu0 0.0
        %3452 = vmatpush1.msra.mxu0 %v3407
        %3453 = vmatprep.subr.mxu0 0.0
        %3454 = vmatpush2.msra.mxu0 0.0
        %3455 = vmatprep.subr.mxu0 0.0
        %3456 = vmatpush2.msra.mxu0 0.0
        %3457 = vmatprep.subr.mxu0 0.0
        %3458 = vmatpush2.msra.mxu0 0.0
        %3459 = vmatprep.subr.mxu0 0.0
        %3460 = vmatpush2.msra.mxu0 0.0
        %3461 = vmatprep.subr.mxu0 0.0
        %3462 = vmatpush2.msra.mxu0 0.0
        %3463 = vmatprep.subr.mxu0 0.0
        %3464 = vmatpush2.msra.mxu0 0.0
        %3465 = vmatprep.subr.mxu0 0.0
        %3466 = vmatpush2.msra.mxu0 0.0
        %3467 = vmatprep.subr.mxu0 0.0
        %3468 = vmatpush2.msra.mxu0 0.0
        %3469 = vmatprep.subr.mxu0 0.0
        %3470 = vmatpush2.msra.mxu0 0.0
        %3471 = vmatprep.subr.mxu0 0.0
        %3472 = vmatpush2.msra.mxu0 0.0
        %3473 = vmatprep.subr.mxu0 0.0
        %3474 = vmatpush2.msra.mxu0 0.0
        %3475 = vmatprep.subr.mxu0 0.0
        %3476 = vmatpush2.msra.mxu0 0.0
        %3477 = vmatprep.subr.mxu0 0.0
        %3478 = vmatpush2.msra.mxu0 0.0
        %3479 = vmatprep.subr.mxu0 0.0
        %3480 = vmatpush2.msra.mxu0 0.0
        %3481 = vmatprep.subr.mxu0 0.0
        %3482 = vmatpush2.msra.mxu0 0.0
        %3483 = vmatprep.subr.mxu0 0.0
        %3484 = vmatpush2.msra.mxu0 0.0
        %3485 = vmatprep.mubr.f32.mxu0 0.0
        %3486 = vmatmul.mubr.f32.gmra.mxu0 %v3416
        %v3487 = vpop.f32.mrf.mxu0
        %v3488 = vadd.f32 %v3413, %v3487
        %v3489 = vpop.f32.mrf.mxu0
        %3490 = vmatprep.mubr.f32.mxu0 0.0
        %3491 = vmatmul.mubr.f32.gmra.mxu0 %v3419
        %v3492 = vpop.f32.mrf.mxu0
        %v3493 = vadd.f32 %v3413, %v3492
        %v3494 = vpop.f32.mrf.mxu0
        %3495 = vdwg.mxu0
        %v3496 = vadd.f32 %v3405, %v3488
        %v3497 = vadd.f32 %v3406, %v3493
        %s3498 = sld [smem:[#allocation4 + $0x8]]
        %vm3499 = vcmp.ge.f32.partialorder %v3496, 0.0
        %vm3500 = vcmp.ge.f32.partialorder %v3497, 0.0
        %v3501 = vstv %s3498
        %v3502 = vmul.f32 %v3496, %v3501
        %v3503 = vmul.f32 %v3497, %v3501
        %v3504 = vsel %vm3499, %v3496, %v3502
        %v3505 = vsel %vm3500, %v3497, %v3503
        %3506 = vst.msk [vmem:[#allocation2 + $0x8] sm:$0xff] %vm1477, %v3504
        %3507 = vst.msk [vmem:[#allocation2 + $0x10] sm:$0xff] %vm1477, %v3505
        %v3508 = vld [vmem:[%s51] sm:$0x1]
        %v3510 = vlaneseq
        %v3511 = vshrl.u32 %v3510, 7
        %v3512 = vsub.s32 0, %v3511
        %v3513 = vrot.slane %v3508, %v3512
        %v3515 = vadd.f32 %v3513, 0.0
        %v3516 = vld [vmem:[#allocation2 + $0x4] sm:$0xff]
        %v3517 = vld [vmem:[#allocation2 + $0xc] sm:$0xff]
        %v3518 = vld [vmem:[%s49] sm:$0xff]
        %v3519 = vld [vmem:[%s49 + $0x8] sm:$0xff]
        %v3521 = vsel %vm1477, %v3516, 0
        %v3524 = vsel %vm1477, %v3517, 0
        %3526 = vmatprep.subr.mxu0 0.0
        %3527 = vmatpush1.msra.mxu0 0.0
        %3528 = vmatprep.subr.mxu0 0.0
        %3529 = vmatpush1.msra.mxu0 0.0
        %3530 = vmatprep.subr.mxu0 0.0
        %3531 = vmatpush1.msra.mxu0 0.0
        %3532 = vmatprep.subr.mxu0 0.0
        %3533 = vmatpush1.msra.mxu0 0.0
        %3534 = vmatprep.subr.mxu0 0.0
        %3535 = vmatpush1.msra.mxu0 0.0
        %3536 = vmatprep.subr.mxu0 0.0
        %3537 = vmatpush1.msra.mxu0 0.0
        %3538 = vmatprep.subr.mxu0 0.0
        %3539 = vmatpush1.msra.mxu0 0.0
        %3540 = vmatprep.subr.mxu0 0.0
        %3541 = vmatpush1.msra.mxu0 0.0
        %3542 = vmatprep.subr.mxu0 0.0
        %3543 = vmatpush1.msra.mxu0 0.0
        %3544 = vmatprep.subr.mxu0 0.0
        %3545 = vmatpush1.msra.mxu0 0.0
        %3546 = vmatprep.subr.mxu0 0.0
        %3547 = vmatpush1.msra.mxu0 0.0
        %3548 = vmatprep.subr.mxu0 0.0
        %3549 = vmatpush1.msra.mxu0 0.0
        %3550 = vmatprep.subr.mxu0 0.0
        %3551 = vmatpush1.msra.mxu0 0.0
        %3552 = vmatprep.subr.mxu0 0.0
        %3553 = vmatpush1.msra.mxu0 0.0
        %3554 = vmatprep.subr.mxu0 0.0
        %3555 = vmatpush1.msra.mxu0 %v3519
        %3556 = vmatprep.subr.mxu0 0.0
        %3557 = vmatpush1.msra.mxu0 %v3518
        %3558 = vmatprep.subr.mxu0 0.0
        %3559 = vmatpush2.msra.mxu0 0.0
        %3560 = vmatprep.subr.mxu0 0.0
        %3561 = vmatpush2.msra.mxu0 0.0
        %3562 = vmatprep.subr.mxu0 0.0
        %3563 = vmatpush2.msra.mxu0 0.0
        %3564 = vmatprep.subr.mxu0 0.0
        %3565 = vmatpush2.msra.mxu0 0.0
        %3566 = vmatprep.subr.mxu0 0.0
        %3567 = vmatpush2.msra.mxu0 0.0
        %3568 = vmatprep.subr.mxu0 0.0
        %3569 = vmatpush2.msra.mxu0 0.0
        %3570 = vmatprep.subr.mxu0 0.0
        %3571 = vmatpush2.msra.mxu0 0.0
        %3572 = vmatprep.subr.mxu0 0.0
        %3573 = vmatpush2.msra.mxu0 0.0
        %3574 = vmatprep.subr.mxu0 0.0
        %3575 = vmatpush2.msra.mxu0 0.0
        %3576 = vmatprep.subr.mxu0 0.0
        %3577 = vmatpush2.msra.mxu0 0.0
        %3578 = vmatprep.subr.mxu0 0.0
        %3579 = vmatpush2.msra.mxu0 0.0
        %3580 = vmatprep.subr.mxu0 0.0
        %3581 = vmatpush2.msra.mxu0 0.0
        %3582 = vmatprep.subr.mxu0 0.0
        %3583 = vmatpush2.msra.mxu0 0.0
        %3584 = vmatprep.subr.mxu0 0.0
        %3585 = vmatpush2.msra.mxu0 0.0
        %3586 = vmatprep.subr.mxu0 0.0
        %3587 = vmatpush2.msra.mxu0 0.0
        %3588 = vmatprep.subr.mxu0 0.0
        %3589 = vmatpush2.msra.mxu0 0.0
        %3590 = vmatprep.mubr.f32.mxu0 0.0
        %3591 = vmatmul.mubr.f32.gmra.mxu0 %v3521
        %v3592 = vpop.f32.mrf.mxu0
        %v3593 = vadd.f32 0.0, %v3592
        %v3594 = vpop.f32.mrf.mxu0
        %3595 = vmatprep.mubr.f32.mxu0 0.0
        %3596 = vmatmul.mubr.f32.gmra.mxu0 %v3524
        %v3597 = vpop.f32.mrf.mxu0
        %v3598 = vadd.f32 0.0, %v3597
        %v3599 = vpop.f32.mrf.mxu0
        %3600 = vdwg.mxu0
        %v3601 = vadd.f32 %v3515, %v3593
        %v3602 = vadd.f32 %v3515, %v3598
        %v3603 = vld [vmem:[#allocation2 + $0x6] sm:$0xff]
        %v3604 = vld [vmem:[#allocation2 + $0xe] sm:$0xff]
        %s3605 = scalar_lea.vmem %s49, 16
        %v3606 = vld [vmem:[%s3605] sm:$0xff]
        %v3607 = vld [vmem:[%s3605 + $0x8] sm:$0xff]
        %v3609 = vsel %vm1477, %v3603, 0
        %v3612 = vsel %vm1477, %v3604, 0
        %3614 = vmatprep.subr.mxu0 0.0
        %3615 = vmatpush1.msra.mxu0 0.0
        %3616 = vmatprep.subr.mxu0 0.0
        %3617 = vmatpush1.msra.mxu0 0.0
        %3618 = vmatprep.subr.mxu0 0.0
        %3619 = vmatpush1.msra.mxu0 0.0
        %3620 = vmatprep.subr.mxu0 0.0
        %3621 = vmatpush1.msra.mxu0 0.0
        %3622 = vmatprep.subr.mxu0 0.0
        %3623 = vmatpush1.msra.mxu0 0.0
        %3624 = vmatprep.subr.mxu0 0.0
        %3625 = vmatpush1.msra.mxu0 0.0
        %3626 = vmatprep.subr.mxu0 0.0
        %3627 = vmatpush1.msra.mxu0 0.0
        %3628 = vmatprep.subr.mxu0 0.0
        %3629 = vmatpush1.msra.mxu0 0.0
        %3630 = vmatprep.subr.mxu0 0.0
        %3631 = vmatpush1.msra.mxu0 0.0
        %3632 = vmatprep.subr.mxu0 0.0
        %3633 = vmatpush1.msra.mxu0 0.0
        %3634 = vmatprep.subr.mxu0 0.0
        %3635 = vmatpush1.msra.mxu0 0.0
        %3636 = vmatprep.subr.mxu0 0.0
        %3637 = vmatpush1.msra.mxu0 0.0
        %3638 = vmatprep.subr.mxu0 0.0
        %3639 = vmatpush1.msra.mxu0 0.0
        %3640 = vmatprep.subr.mxu0 0.0
        %3641 = vmatpush1.msra.mxu0 0.0
        %3642 = vmatprep.subr.mxu0 0.0
        %3643 = vmatpush1.msra.mxu0 %v3607
        %3644 = vmatprep.subr.mxu0 0.0
        %3645 = vmatpush1.msra.mxu0 %v3606
        %3646 = vmatprep.subr.mxu0 0.0
        %3647 = vmatpush2.msra.mxu0 0.0
        %3648 = vmatprep.subr.mxu0 0.0
        %3649 = vmatpush2.msra.mxu0 0.0
        %3650 = vmatprep.subr.mxu0 0.0
        %3651 = vmatpush2.msra.mxu0 0.0
        %3652 = vmatprep.subr.mxu0 0.0
        %3653 = vmatpush2.msra.mxu0 0.0
        %3654 = vmatprep.subr.mxu0 0.0
        %3655 = vmatpush2.msra.mxu0 0.0
        %3656 = vmatprep.subr.mxu0 0.0
        %3657 = vmatpush2.msra.mxu0 0.0
        %3658 = vmatprep.subr.mxu0 0.0
        %3659 = vmatpush2.msra.mxu0 0.0
        %3660 = vmatprep.subr.mxu0 0.0
        %3661 = vmatpush2.msra.mxu0 0.0
        %3662 = vmatprep.subr.mxu0 0.0
        %3663 = vmatpush2.msra.mxu0 0.0
        %3664 = vmatprep.subr.mxu0 0.0
        %3665 = vmatpush2.msra.mxu0 0.0
        %3666 = vmatprep.subr.mxu0 0.0
        %3667 = vmatpush2.msra.mxu0 0.0
        %3668 = vmatprep.subr.mxu0 0.0
        %3669 = vmatpush2.msra.mxu0 0.0
        %3670 = vmatprep.subr.mxu0 0.0
        %3671 = vmatpush2.msra.mxu0 0.0
        %3672 = vmatprep.subr.mxu0 0.0
        %3673 = vmatpush2.msra.mxu0 0.0
        %3674 = vmatprep.subr.mxu0 0.0
        %3675 = vmatpush2.msra.mxu0 0.0
        %3676 = vmatprep.subr.mxu0 0.0
        %3677 = vmatpush2.msra.mxu0 0.0
        %3678 = vmatprep.mubr.f32.mxu0 0.0
        %3679 = vmatmul.mubr.f32.gmra.mxu0 %v3609
        %v3680 = vpop.f32.mrf.mxu0
        %v3681 = vadd.f32 0.0, %v3680
        %v3682 = vpop.f32.mrf.mxu0
        %3683 = vmatprep.mubr.f32.mxu0 0.0
        %3684 = vmatmul.mubr.f32.gmra.mxu0 %v3612
        %v3685 = vpop.f32.mrf.mxu0
        %v3686 = vadd.f32 0.0, %v3685
        %v3687 = vpop.f32.mrf.mxu0
        %3688 = vdwg.mxu0
        %v3689 = vadd.f32 %v3601, %v3681
        %v3690 = vadd.f32 %v3602, %v3686
        %v3691 = vld [vmem:[#allocation2 + $0x8] sm:$0xff]
        %v3692 = vld [vmem:[#allocation2 + $0x10] sm:$0xff]
        %s3693 = scalar_lea.vmem %s49, 32
        %v3694 = vld [vmem:[%s3693] sm:$0xff]
        %v3695 = vld [vmem:[%s3693 + $0x8] sm:$0xff]
        %v3697 = vsel %vm1477, %v3691, 0
        %v3700 = vsel %vm1477, %v3692, 0
        %3702 = vmatprep.subr.mxu0 0.0
        %3703 = vmatpush1.msra.mxu0 0.0
        %3704 = vmatprep.subr.mxu0 0.0
        %3705 = vmatpush1.msra.mxu0 0.0
        %3706 = vmatprep.subr.mxu0 0.0
        %3707 = vmatpush1.msra.mxu0 0.0
        %3708 = vmatprep.subr.mxu0 0.0
        %3709 = vmatpush1.msra.mxu0 0.0
        %3710 = vmatprep.subr.mxu0 0.0
        %3711 = vmatpush1.msra.mxu0 0.0
        %3712 = vmatprep.subr.mxu0 0.0
        %3713 = vmatpush1.msra.mxu0 0.0
        %3714 = vmatprep.subr.mxu0 0.0
        %3715 = vmatpush1.msra.mxu0 0.0
        %3716 = vmatprep.subr.mxu0 0.0
        %3717 = vmatpush1.msra.mxu0 0.0
        %3718 = vmatprep.subr.mxu0 0.0
        %3719 = vmatpush1.msra.mxu0 0.0
        %3720 = vmatprep.subr.mxu0 0.0
        %3721 = vmatpush1.msra.mxu0 0.0
        %3722 = vmatprep.subr.mxu0 0.0
        %3723 = vmatpush1.msra.mxu0 0.0
        %3724 = vmatprep.subr.mxu0 0.0
        %3725 = vmatpush1.msra.mxu0 0.0
        %3726 = vmatprep.subr.mxu0 0.0
        %3727 = vmatpush1.msra.mxu0 0.0
        %3728 = vmatprep.subr.mxu0 0.0
        %3729 = vmatpush1.msra.mxu0 0.0
        %3730 = vmatprep.subr.mxu0 0.0
        %3731 = vmatpush1.msra.mxu0 %v3695
        %3732 = vmatprep.subr.mxu0 0.0
        %3733 = vmatpush1.msra.mxu0 %v3694
        %3734 = vmatprep.subr.mxu0 0.0
        %3735 = vmatpush2.msra.mxu0 0.0
        %3736 = vmatprep.subr.mxu0 0.0
        %3737 = vmatpush2.msra.mxu0 0.0
        %3738 = vmatprep.subr.mxu0 0.0
        %3739 = vmatpush2.msra.mxu0 0.0
        %3740 = vmatprep.subr.mxu0 0.0
        %3741 = vmatpush2.msra.mxu0 0.0
        %3742 = vmatprep.subr.mxu0 0.0
        %3743 = vmatpush2.msra.mxu0 0.0
        %3744 = vmatprep.subr.mxu0 0.0
        %3745 = vmatpush2.msra.mxu0 0.0
        %3746 = vmatprep.subr.mxu0 0.0
        %3747 = vmatpush2.msra.mxu0 0.0
        %3748 = vmatprep.subr.mxu0 0.0
        %3749 = vmatpush2.msra.mxu0 0.0
        %3750 = vmatprep.subr.mxu0 0.0
        %3751 = vmatpush2.msra.mxu0 0.0
        %3752 = vmatprep.subr.mxu0 0.0
        %3753 = vmatpush2.msra.mxu0 0.0
        %3754 = vmatprep.subr.mxu0 0.0
        %3755 = vmatpush2.msra.mxu0 0.0
        %3756 = vmatprep.subr.mxu0 0.0
        %3757 = vmatpush2.msra.mxu0 0.0
        %3758 = vmatprep.subr.mxu0 0.0
        %3759 = vmatpush2.msra.mxu0 0.0
        %3760 = vmatprep.subr.mxu0 0.0
        %3761 = vmatpush2.msra.mxu0 0.0
        %3762 = vmatprep.subr.mxu0 0.0
        %3763 = vmatpush2.msra.mxu0 0.0
        %3764 = vmatprep.subr.mxu0 0.0
        %3765 = vmatpush2.msra.mxu0 0.0
        %3766 = vmatprep.mubr.f32.mxu0 0.0
        %3767 = vmatmul.mubr.f32.gmra.mxu0 %v3697
        %v3768 = vpop.f32.mrf.mxu0
        %v3769 = vadd.f32 0.0, %v3768
        %v3770 = vpop.f32.mrf.mxu0
        %3771 = vmatprep.mubr.f32.mxu0 0.0
        %3772 = vmatmul.mubr.f32.gmra.mxu0 %v3700
        %v3773 = vpop.f32.mrf.mxu0
        %v3774 = vadd.f32 0.0, %v3773
        %v3775 = vpop.f32.mrf.mxu0
        %3776 = vdwg.mxu0
        %v3777 = vadd.f32 %v3689, %v3769
        %v3778 = vadd.f32 %v3690, %v3774
        %s3779 = sld [smem:[#allocation4 + $0x9]]
        %vm3780 = vcmp.ge.f32.partialorder %v3777, 0.0
        %vm3781 = vcmp.ge.f32.partialorder %v3778, 0.0
        %v3782 = vstv %s3779
        %v3783 = vmul.f32 %v3777, %v3782
        %v3784 = vmul.f32 %v3778, %v3782
        %v3785 = vsel %vm3780, %v3777, %v3783
        %v3786 = vsel %vm3781, %v3778, %v3784
        %3787 = vst.msk [vmem:[#allocation2 + $0x8] sm:$0xff] %vm1483, %v3785
        %3788 = vst.msk [vmem:[#allocation2 + $0x10] sm:$0xff] %vm1483, %v3786
        %v3789 = vld [vmem:[%s55] sm:$0x1]
        %v3791 = vlaneseq
        %v3792 = vshrl.u32 %v3791, 7
        %v3793 = vsub.s32 0, %v3792
        %v3794 = vrot.slane %v3789, %v3793
        %v3796 = vadd.f32 %v3794, 0.0
        %v3797 = vld [vmem:[#allocation2 + $0x4] sm:$0xff]
        %v3798 = vld [vmem:[#allocation2 + $0xc] sm:$0xff]
        %v3799 = vld [vmem:[%s53] sm:$0xff]
        %v3801 = vsel %vm1483, %v3797, 0
        %v3804 = vsel %vm1483, %v3798, 0
        %3806 = vmatprep.subr.mxu0 0.0
        %3807 = vmatpush1.msra.mxu0 0.0
        %3808 = vmatprep.subr.mxu0 0.0
        %3809 = vmatpush1.msra.mxu0 0.0
        %3810 = vmatprep.subr.mxu0 0.0
        %3811 = vmatpush1.msra.mxu0 0.0
        %3812 = vmatprep.subr.mxu0 0.0
        %3813 = vmatpush1.msra.mxu0 0.0
        %3814 = vmatprep.subr.mxu0 0.0
        %3815 = vmatpush1.msra.mxu0 0.0
        %3816 = vmatprep.subr.mxu0 0.0
        %3817 = vmatpush1.msra.mxu0 0.0
        %3818 = vmatprep.subr.mxu0 0.0
        %3819 = vmatpush1.msra.mxu0 0.0
        %3820 = vmatprep.subr.mxu0 0.0
        %3821 = vmatpush1.msra.mxu0 0.0
        %3822 = vmatprep.subr.mxu0 0.0
        %3823 = vmatpush1.msra.mxu0 0.0
        %3824 = vmatprep.subr.mxu0 0.0
        %3825 = vmatpush1.msra.mxu0 0.0
        %3826 = vmatprep.subr.mxu0 0.0
        %3827 = vmatpush1.msra.mxu0 0.0
        %3828 = vmatprep.subr.mxu0 0.0
        %3829 = vmatpush1.msra.mxu0 0.0
        %3830 = vmatprep.subr.mxu0 0.0
        %3831 = vmatpush1.msra.mxu0 0.0
        %3832 = vmatprep.subr.mxu0 0.0
        %3833 = vmatpush1.msra.mxu0 0.0
        %3834 = vmatprep.subr.mxu0 0.0
        %3835 = vmatpush1.msra.mxu0 0.0
        %3836 = vmatprep.subr.mxu0 0.0
        %3837 = vmatpush1.msra.mxu0 %v3799
        %3838 = vmatprep.subr.mxu0 0.0
        %3839 = vmatpush2.msra.mxu0 0.0
        %3840 = vmatprep.subr.mxu0 0.0
        %3841 = vmatpush2.msra.mxu0 0.0
        %3842 = vmatprep.subr.mxu0 0.0
        %3843 = vmatpush2.msra.mxu0 0.0
        %3844 = vmatprep.subr.mxu0 0.0
        %3845 = vmatpush2.msra.mxu0 0.0
        %3846 = vmatprep.subr.mxu0 0.0
        %3847 = vmatpush2.msra.mxu0 0.0
        %3848 = vmatprep.subr.mxu0 0.0
        %3849 = vmatpush2.msra.mxu0 0.0
        %3850 = vmatprep.subr.mxu0 0.0
        %3851 = vmatpush2.msra.mxu0 0.0
        %3852 = vmatprep.subr.mxu0 0.0
        %3853 = vmatpush2.msra.mxu0 0.0
        %3854 = vmatprep.subr.mxu0 0.0
        %3855 = vmatpush2.msra.mxu0 0.0
        %3856 = vmatprep.subr.mxu0 0.0
        %3857 = vmatpush2.msra.mxu0 0.0
        %3858 = vmatprep.subr.mxu0 0.0
        %3859 = vmatpush2.msra.mxu0 0.0
        %3860 = vmatprep.subr.mxu0 0.0
        %3861 = vmatpush2.msra.mxu0 0.0
        %3862 = vmatprep.subr.mxu0 0.0
        %3863 = vmatpush2.msra.mxu0 0.0
        %3864 = vmatprep.subr.mxu0 0.0
        %3865 = vmatpush2.msra.mxu0 0.0
        %3866 = vmatprep.subr.mxu0 0.0
        %3867 = vmatpush2.msra.mxu0 0.0
        %3868 = vmatprep.subr.mxu0 0.0
        %3869 = vmatpush2.msra.mxu0 0.0
        %3870 = vmatprep.mubr.f32.mxu0 0.0
        %3871 = vmatmul.mubr.f32.gmra.mxu0 %v3801
        %v3872 = vpop.f32.mrf.mxu0
        %v3873 = vadd.f32 0.0, %v3872
        %v3874 = vpop.f32.mrf.mxu0
        %3875 = vmatprep.mubr.f32.mxu0 0.0
        %3876 = vmatmul.mubr.f32.gmra.mxu0 %v3804
        %v3877 = vpop.f32.mrf.mxu0
        %v3878 = vadd.f32 0.0, %v3877
        %v3879 = vpop.f32.mrf.mxu0
        %3880 = vdwg.mxu0
        %v3881 = vadd.f32 %v3796, %v3873
        %v3882 = vadd.f32 %v3796, %v3878
        %v3883 = vld [vmem:[#allocation2 + $0x6] sm:$0xff]
        %v3884 = vld [vmem:[#allocation2 + $0xe] sm:$0xff]
        %s3885 = scalar_lea.vmem %s53, 8
        %v3886 = vld [vmem:[%s3885] sm:$0xff]
        %v3888 = vsel %vm1483, %v3883, 0
        %v3891 = vsel %vm1483, %v3884, 0
        %3893 = vmatprep.subr.mxu0 0.0
        %3894 = vmatpush1.msra.mxu0 0.0
        %3895 = vmatprep.subr.mxu0 0.0
        %3896 = vmatpush1.msra.mxu0 0.0
        %3897 = vmatprep.subr.mxu0 0.0
        %3898 = vmatpush1.msra.mxu0 0.0
        %3899 = vmatprep.subr.mxu0 0.0
        %3900 = vmatpush1.msra.mxu0 0.0
        %3901 = vmatprep.subr.mxu0 0.0
        %3902 = vmatpush1.msra.mxu0 0.0
        %3903 = vmatprep.subr.mxu0 0.0
        %3904 = vmatpush1.msra.mxu0 0.0
        %3905 = vmatprep.subr.mxu0 0.0
        %3906 = vmatpush1.msra.mxu0 0.0
        %3907 = vmatprep.subr.mxu0 0.0
        %3908 = vmatpush1.msra.mxu0 0.0
        %3909 = vmatprep.subr.mxu0 0.0
        %3910 = vmatpush1.msra.mxu0 0.0
        %3911 = vmatprep.subr.mxu0 0.0
        %3912 = vmatpush1.msra.mxu0 0.0
        %3913 = vmatprep.subr.mxu0 0.0
        %3914 = vmatpush1.msra.mxu0 0.0
        %3915 = vmatprep.subr.mxu0 0.0
        %3916 = vmatpush1.msra.mxu0 0.0
        %3917 = vmatprep.subr.mxu0 0.0
        %3918 = vmatpush1.msra.mxu0 0.0
        %3919 = vmatprep.subr.mxu0 0.0
        %3920 = vmatpush1.msra.mxu0 0.0
        %3921 = vmatprep.subr.mxu0 0.0
        %3922 = vmatpush1.msra.mxu0 0.0
        %3923 = vmatprep.subr.mxu0 0.0
        %3924 = vmatpush1.msra.mxu0 %v3886
        %3925 = vmatprep.subr.mxu0 0.0
        %3926 = vmatpush2.msra.mxu0 0.0
        %3927 = vmatprep.subr.mxu0 0.0
        %3928 = vmatpush2.msra.mxu0 0.0
        %3929 = vmatprep.subr.mxu0 0.0
        %3930 = vmatpush2.msra.mxu0 0.0
        %3931 = vmatprep.subr.mxu0 0.0
        %3932 = vmatpush2.msra.mxu0 0.0
        %3933 = vmatprep.subr.mxu0 0.0
        %3934 = vmatpush2.msra.mxu0 0.0
        %3935 = vmatprep.subr.mxu0 0.0
        %3936 = vmatpush2.msra.mxu0 0.0
        %3937 = vmatprep.subr.mxu0 0.0
        %3938 = vmatpush2.msra.mxu0 0.0
        %3939 = vmatprep.subr.mxu0 0.0
        %3940 = vmatpush2.msra.mxu0 0.0
        %3941 = vmatprep.subr.mxu0 0.0
        %3942 = vmatpush2.msra.mxu0 0.0
        %3943 = vmatprep.subr.mxu0 0.0
        %3944 = vmatpush2.msra.mxu0 0.0
        %3945 = vmatprep.subr.mxu0 0.0
        %3946 = vmatpush2.msra.mxu0 0.0
        %3947 = vmatprep.subr.mxu0 0.0
        %3948 = vmatpush2.msra.mxu0 0.0
        %3949 = vmatprep.subr.mxu0 0.0
        %3950 = vmatpush2.msra.mxu0 0.0
        %3951 = vmatprep.subr.mxu0 0.0
        %3952 = vmatpush2.msra.mxu0 0.0
        %3953 = vmatprep.subr.mxu0 0.0
        %3954 = vmatpush2.msra.mxu0 0.0
        %3955 = vmatprep.subr.mxu0 0.0
        %3956 = vmatpush2.msra.mxu0 0.0
        %3957 = vmatprep.mubr.f32.mxu0 0.0
        %3958 = vmatmul.mubr.f32.gmra.mxu0 %v3888
        %v3959 = vpop.f32.mrf.mxu0
        %v3960 = vadd.f32 0.0, %v3959
        %v3961 = vpop.f32.mrf.mxu0
        %3962 = vmatprep.mubr.f32.mxu0 0.0
        %3963 = vmatmul.mubr.f32.gmra.mxu0 %v3891
        %v3964 = vpop.f32.mrf.mxu0
        %v3965 = vadd.f32 0.0, %v3964
        %v3966 = vpop.f32.mrf.mxu0
        %3967 = vdwg.mxu0
        %v3968 = vadd.f32 %v3881, %v3960
        %v3969 = vadd.f32 %v3882, %v3965
        %v3970 = vld [vmem:[#allocation2 + $0x8] sm:$0xff]
        %v3971 = vld [vmem:[#allocation2 + $0x10] sm:$0xff]
        %s3972 = scalar_lea.vmem %s53, 16
        %v3973 = vld [vmem:[%s3972] sm:$0xff]
        %v3975 = vsel %vm1483, %v3970, 0
        %v3978 = vsel %vm1483, %v3971, 0
        %3980 = vmatprep.subr.mxu0 0.0
        %3981 = vmatpush1.msra.mxu0 0.0
        %3982 = vmatprep.subr.mxu0 0.0
        %3983 = vmatpush1.msra.mxu0 0.0
        %3984 = vmatprep.subr.mxu0 0.0
        %3985 = vmatpush1.msra.mxu0 0.0
        %3986 = vmatprep.subr.mxu0 0.0
        %3987 = vmatpush1.msra.mxu0 0.0
        %3988 = vmatprep.subr.mxu0 0.0
        %3989 = vmatpush1.msra.mxu0 0.0
        %3990 = vmatprep.subr.mxu0 0.0
        %3991 = vmatpush1.msra.mxu0 0.0
        %3992 = vmatprep.subr.mxu0 0.0
        %3993 = vmatpush1.msra.mxu0 0.0
        %3994 = vmatprep.subr.mxu0 0.0
        %3995 = vmatpush1.msra.mxu0 0.0
        %3996 = vmatprep.subr.mxu0 0.0
        %3997 = vmatpush1.msra.mxu0 0.0
        %3998 = vmatprep.subr.mxu0 0.0
        %3999 = vmatpush1.msra.mxu0 0.0
        %4000 = vmatprep.subr.mxu0 0.0
        %4001 = vmatpush1.msra.mxu0 0.0
        %4002 = vmatprep.subr.mxu0 0.0
        %4003 = vmatpush1.msra.mxu0 0.0
        %4004 = vmatprep.subr.mxu0 0.0
        %4005 = vmatpush1.msra.mxu0 0.0
        %4006 = vmatprep.subr.mxu0 0.0
        %4007 = vmatpush1.msra.mxu0 0.0
        %4008 = vmatprep.subr.mxu0 0.0
        %4009 = vmatpush1.msra.mxu0 0.0
        %4010 = vmatprep.subr.mxu0 0.0
        %4011 = vmatpush1.msra.mxu0 %v3973
        %4012 = vmatprep.subr.mxu0 0.0
        %4013 = vmatpush2.msra.mxu0 0.0
        %4014 = vmatprep.subr.mxu0 0.0
        %4015 = vmatpush2.msra.mxu0 0.0
        %4016 = vmatprep.subr.mxu0 0.0
        %4017 = vmatpush2.msra.mxu0 0.0
        %4018 = vmatprep.subr.mxu0 0.0
        %4019 = vmatpush2.msra.mxu0 0.0
        %4020 = vmatprep.subr.mxu0 0.0
        %4021 = vmatpush2.msra.mxu0 0.0
        %4022 = vmatprep.subr.mxu0 0.0
        %4023 = vmatpush2.msra.mxu0 0.0
        %4024 = vmatprep.subr.mxu0 0.0
        %4025 = vmatpush2.msra.mxu0 0.0
        %4026 = vmatprep.subr.mxu0 0.0
        %4027 = vmatpush2.msra.mxu0 0.0
        %4028 = vmatprep.subr.mxu0 0.0
        %4029 = vmatpush2.msra.mxu0 0.0
        %4030 = vmatprep.subr.mxu0 0.0
        %4031 = vmatpush2.msra.mxu0 0.0
        %4032 = vmatprep.subr.mxu0 0.0
        %4033 = vmatpush2.msra.mxu0 0.0
        %4034 = vmatprep.subr.mxu0 0.0
        %4035 = vmatpush2.msra.mxu0 0.0
        %4036 = vmatprep.subr.mxu0 0.0
        %4037 = vmatpush2.msra.mxu0 0.0
        %4038 = vmatprep.subr.mxu0 0.0
        %4039 = vmatpush2.msra.mxu0 0.0
        %4040 = vmatprep.subr.mxu0 0.0
        %4041 = vmatpush2.msra.mxu0 0.0
        %4042 = vmatprep.subr.mxu0 0.0
        %4043 = vmatpush2.msra.mxu0 0.0
        %4044 = vmatprep.mubr.f32.mxu0 0.0
        %4045 = vmatmul.mubr.f32.gmra.mxu0 %v3975
        %v4046 = vpop.f32.mrf.mxu0
        %v4047 = vadd.f32 0.0, %v4046
        %v4048 = vpop.f32.mrf.mxu0
        %4049 = vmatprep.mubr.f32.mxu0 0.0
        %4050 = vmatmul.mubr.f32.gmra.mxu0 %v3978
        %v4051 = vpop.f32.mrf.mxu0
        %v4052 = vadd.f32 0.0, %v4051
        %v4053 = vpop.f32.mrf.mxu0
        %4054 = vdwg.mxu0
        %v4055 = vadd.f32 %v3968, %v4047
        %v4056 = vadd.f32 %v3969, %v4052
        %s4057 = sld [smem:[#allocation4 + $0xa]]
        %vm4058 = vcmp.ge.f32.partialorder %v4055, 0.0
        %vm4059 = vcmp.ge.f32.partialorder %v4056, 0.0
        %v4060 = vstv %s4057
        %v4061 = vmul.f32 %v4055, %v4060
        %v4062 = vmul.f32 %v4056, %v4060
        %v4063 = vsel %vm4058, %v4055, %v4061
        %v4064 = vsel %vm4059, %v4056, %v4062
        %v4065 = vld [vmem:[%s45] sm:$0xff]
        %v4066 = vld [vmem:[%s45 + $0x8] sm:$0xff]
        %v4067 = vld [vmem:[#allocation25] sm:$0x1]
        %v4069 = vlaneseq
        %v4070 = vshrl.u32 %v4069, 7
        %v4071 = vsub.s32 0, %v4070
        %v4072 = vrot.slane %v4067, %v4071
        %v4075 = vsel %vm1477, %v3504, 0
        %v4078 = vsel %vm1477, %v3505, 0
        %4080 = vmatprep.subr.mxu0 0.0
        %4081 = vmatpush1.msra.mxu0 0.0
        %4082 = vmatprep.subr.mxu0 0.0
        %4083 = vmatpush1.msra.mxu0 0.0
        %4084 = vmatprep.subr.mxu0 0.0
        %4085 = vmatpush1.msra.mxu0 0.0
        %4086 = vmatprep.subr.mxu0 0.0
        %4087 = vmatpush1.msra.mxu0 0.0
        %4088 = vmatprep.subr.mxu0 0.0
        %4089 = vmatpush1.msra.mxu0 0.0
        %4090 = vmatprep.subr.mxu0 0.0
        %4091 = vmatpush1.msra.mxu0 0.0
        %4092 = vmatprep.subr.mxu0 0.0
        %4093 = vmatpush1.msra.mxu0 0.0
        %4094 = vmatprep.subr.mxu0 0.0
        %4095 = vmatpush1.msra.mxu0 0.0
        %4096 = vmatprep.subr.mxu0 0.0
        %4097 = vmatpush1.msra.mxu0 0.0
        %4098 = vmatprep.subr.mxu0 0.0
        %4099 = vmatpush1.msra.mxu0 0.0
        %4100 = vmatprep.subr.mxu0 0.0
        %4101 = vmatpush1.msra.mxu0 0.0
        %4102 = vmatprep.subr.mxu0 0.0
        %4103 = vmatpush1.msra.mxu0 0.0
        %4104 = vmatprep.subr.mxu0 0.0
        %4105 = vmatpush1.msra.mxu0 0.0
        %4106 = vmatprep.subr.mxu0 0.0
        %4107 = vmatpush1.msra.mxu0 0.0
        %4108 = vmatprep.subr.mxu0 0.0
        %4109 = vmatpush1.msra.mxu0 %v4066
        %4110 = vmatprep.subr.mxu0 0.0
        %4111 = vmatpush1.msra.mxu0 %v4065
        %4112 = vmatprep.subr.mxu0 0.0
        %4113 = vmatpush2.msra.mxu0 0.0
        %4114 = vmatprep.subr.mxu0 0.0
        %4115 = vmatpush2.msra.mxu0 0.0
        %4116 = vmatprep.subr.mxu0 0.0
        %4117 = vmatpush2.msra.mxu0 0.0
        %4118 = vmatprep.subr.mxu0 0.0
        %4119 = vmatpush2.msra.mxu0 0.0
        %4120 = vmatprep.subr.mxu0 0.0
        %4121 = vmatpush2.msra.mxu0 0.0
        %4122 = vmatprep.subr.mxu0 0.0
        %4123 = vmatpush2.msra.mxu0 0.0
        %4124 = vmatprep.subr.mxu0 0.0
        %4125 = vmatpush2.msra.mxu0 0.0
        %4126 = vmatprep.subr.mxu0 0.0
        %4127 = vmatpush2.msra.mxu0 0.0
        %4128 = vmatprep.subr.mxu0 0.0
        %4129 = vmatpush2.msra.mxu0 0.0
        %4130 = vmatprep.subr.mxu0 0.0
        %4131 = vmatpush2.msra.mxu0 0.0
        %4132 = vmatprep.subr.mxu0 0.0
        %4133 = vmatpush2.msra.mxu0 0.0
        %4134 = vmatprep.subr.mxu0 0.0
        %4135 = vmatpush2.msra.mxu0 0.0
        %4136 = vmatprep.subr.mxu0 0.0
        %4137 = vmatpush2.msra.mxu0 0.0
        %4138 = vmatprep.subr.mxu0 0.0
        %4139 = vmatpush2.msra.mxu0 0.0
        %4140 = vmatprep.subr.mxu0 0.0
        %4141 = vmatpush2.msra.mxu0 0.0
        %4142 = vmatprep.subr.mxu0 0.0
        %4143 = vmatpush2.msra.mxu0 0.0
        %4144 = vmatprep.mubr.f32.mxu0 0.0
        %4145 = vmatmul.mubr.f32.gmra.mxu0 %v4075
        %v4146 = vpop.f32.mrf.mxu0
        %v4147 = vadd.f32 %v4072, %v4146
        %v4148 = vpop.f32.mrf.mxu0
        %4149 = vmatprep.mubr.f32.mxu0 0.0
        %4150 = vmatmul.mubr.f32.gmra.mxu0 %v4078
        %v4151 = vpop.f32.mrf.mxu0
        %v4152 = vadd.f32 %v4072, %v4151
        %v4153 = vpop.f32.mrf.mxu0
        %4154 = vdwg.mxu0
        %v4155 = vadd.f32 %v4063, %v4147
        %v4156 = vadd.f32 %v4064, %v4152
        %s4157 = sld [smem:[#allocation4 + $0xb]]
        %vm4158 = vcmp.ge.f32.partialorder %v4155, 0.0
        %vm4159 = vcmp.ge.f32.partialorder %v4156, 0.0
        %v4160 = vstv %s4157
        %v4161 = vmul.f32 %v4155, %v4160
        %v4162 = vmul.f32 %v4156, %v4160
        %v4163 = vsel %vm4158, %v4155, %v4161
        %v4164 = vsel %vm4159, %v4156, %v4162
        %v4165 = vsel %vm1483, %v4163, 0.0
        %v4166 = vsel %vm1483, %v4164, 0.0
        %v4167 = vadd.f32 %v4165, %v4166
        %v4168 = vrot.slane %v4167, 4
        %v4169 = vadd.f32 %v4167, %v4168
        %v4170 = vrot.slane %v4169, 2
        %v4171 = vadd.f32 %v4169, %v4170
        %v4172 = vrot.slane %v4171, 1
        %v4173 = vadd.f32 %v4171, %v4172
        %v4174 = vmul.f32 %v4173, %v2810
        %v4175 = vsub.f32 %v4163, %v4174
        %v4176 = vsub.f32 %v4164, %v4174
        %v4177 = vmul.f32 %v4175, %v4175
        %v4178 = vmul.f32 %v4176, %v4176
        %v4179 = vsel %vm1483, %v4177, 0.0
        %v4180 = vsel %vm1483, %v4178, 0.0
        %v4181 = vadd.f32 %v4179, %v4180
        %v4182 = vrot.slane %v4181, 4
        %v4183 = vadd.f32 %v4181, %v4182
        %v4184 = vrot.slane %v4183, 2
        %v4185 = vadd.f32 %v4183, %v4184
        %v4186 = vrot.slane %v4185, 1
        %v4187 = vadd.f32 %v4185, %v4186
        %v4188 = vmul.f32 %v4187, %v2810
        %v4189 = vadd.f32 %v4188, 1e-05
        %v4190 = vrsqrt.pop %v4189
        %v4191 = vmul.f32 %v4175, %v4190
        %v4192 = vmul.f32 %v4176, %v4190
        %v4193 = vld [vmem:[%s57] sm:$0x1]
        %v4195 = vlaneseq
        %v4196 = vshrl.u32 %v4195, 7
        %v4197 = vsub.s32 0, %v4196
        %v4198 = vrot.slane %v4193, %v4197
        %v4200 = vmul.f32 %v4191, %v4198
        %v4201 = vmul.f32 %v4192, %v4198
        %v4202 = vld [vmem:[%s59] sm:$0x1]
        %v4204 = vlaneseq
        %v4205 = vshrl.u32 %v4204, 7
        %v4206 = vsub.s32 0, %v4205
        %v4207 = vrot.slane %v4202, %v4206
        %v4209 = vadd.f32 %v4200, %v4207
        %v4210 = vadd.f32 %v4201, %v4207
        %4211 = vst.msk [vmem:[#allocation2 + $0x8] sm:$0xff] %vm1483, %v4209
        %4212 = vst.msk [vmem:[#allocation2 + $0x10] sm:$0xff] %vm1483, %v4210
        %v4213 = vld [vmem:[%s67] sm:$0x1]
        %v4215 = vlaneseq
        %v4216 = vshrl.u32 %v4215, 7
        %v4217 = vsub.s32 0, %v4216
        %v4218 = vrot.slane %v4213, %v4217
        %v4220 = vadd.f32 %v4218, 0.0
        %v4221 = vld [vmem:[#allocation2 + $0x6] sm:$0xff]
        %v4222 = vld [vmem:[#allocation2 + $0xe] sm:$0xff]
        %v4223 = vld [vmem:[%s65] sm:$0xff]
        %v4225 = vsel %vm1483, %v4221, 0
        %v4228 = vsel %vm1483, %v4222, 0
        %4230 = vmatprep.subr.mxu0 0.0
        %4231 = vmatpush1.msra.mxu0 0.0
        %4232 = vmatprep.subr.mxu0 0.0
        %4233 = vmatpush1.msra.mxu0 0.0
        %4234 = vmatprep.subr.mxu0 0.0
        %4235 = vmatpush1.msra.mxu0 0.0
        %4236 = vmatprep.subr.mxu0 0.0
        %4237 = vmatpush1.msra.mxu0 0.0
        %4238 = vmatprep.subr.mxu0 0.0
        %4239 = vmatpush1.msra.mxu0 0.0
        %4240 = vmatprep.subr.mxu0 0.0
        %4241 = vmatpush1.msra.mxu0 0.0
        %4242 = vmatprep.subr.mxu0 0.0
        %4243 = vmatpush1.msra.mxu0 0.0
        %4244 = vmatprep.subr.mxu0 0.0
        %4245 = vmatpush1.msra.mxu0 0.0
        %4246 = vmatprep.subr.mxu0 0.0
        %4247 = vmatpush1.msra.mxu0 0.0
        %4248 = vmatprep.subr.mxu0 0.0
        %4249 = vmatpush1.msra.mxu0 0.0
        %4250 = vmatprep.subr.mxu0 0.0
        %4251 = vmatpush1.msra.mxu0 0.0
        %4252 = vmatprep.subr.mxu0 0.0
        %4253 = vmatpush1.msra.mxu0 0.0
        %4254 = vmatprep.subr.mxu0 0.0
        %4255 = vmatpush1.msra.mxu0 0.0
        %4256 = vmatprep.subr.mxu0 0.0
        %4257 = vmatpush1.msra.mxu0 0.0
        %4258 = vmatprep.subr.mxu0 0.0
        %4259 = vmatpush1.msra.mxu0 0.0
        %4260 = vmatprep.subr.mxu0 0.0
        %4261 = vmatpush1.msra.mxu0 %v4223
        %4262 = vmatprep.subr.mxu0 0.0
        %4263 = vmatpush2.msra.mxu0 0.0
        %4264 = vmatprep.subr.mxu0 0.0
        %4265 = vmatpush2.msra.mxu0 0.0
        %4266 = vmatprep.subr.mxu0 0.0
        %4267 = vmatpush2.msra.mxu0 0.0
        %4268 = vmatprep.subr.mxu0 0.0
        %4269 = vmatpush2.msra.mxu0 0.0
        %4270 = vmatprep.subr.mxu0 0.0
        %4271 = vmatpush2.msra.mxu0 0.0
        %4272 = vmatprep.subr.mxu0 0.0
        %4273 = vmatpush2.msra.mxu0 0.0
        %4274 = vmatprep.subr.mxu0 0.0
        %4275 = vmatpush2.msra.mxu0 0.0
        %4276 = vmatprep.subr.mxu0 0.0
        %4277 = vmatpush2.msra.mxu0 0.0
        %4278 = vmatprep.subr.mxu0 0.0
        %4279 = vmatpush2.msra.mxu0 0.0
        %4280 = vmatprep.subr.mxu0 0.0
        %4281 = vmatpush2.msra.mxu0 0.0
        %4282 = vmatprep.subr.mxu0 0.0
        %4283 = vmatpush2.msra.mxu0 0.0
        %4284 = vmatprep.subr.mxu0 0.0
        %4285 = vmatpush2.msra.mxu0 0.0
        %4286 = vmatprep.subr.mxu0 0.0
        %4287 = vmatpush2.msra.mxu0 0.0
        %4288 = vmatprep.subr.mxu0 0.0
        %4289 = vmatpush2.msra.mxu0 0.0
        %4290 = vmatprep.subr.mxu0 0.0
        %4291 = vmatpush2.msra.mxu0 0.0
        %4292 = vmatprep.subr.mxu0 0.0
        %4293 = vmatpush2.msra.mxu0 0.0
        %4294 = vmatprep.mubr.f32.mxu0 0.0
        %4295 = vmatmul.mubr.f32.gmra.mxu0 %v4225
        %v4296 = vpop.f32.mrf.mxu0
        %v4297 = vadd.f32 0.0, %v4296
        %v4298 = vpop.f32.mrf.mxu0
        %4299 = vmatprep.mubr.f32.mxu0 0.0
        %4300 = vmatmul.mubr.f32.gmra.mxu0 %v4228
        %v4301 = vpop.f32.mrf.mxu0
        %v4302 = vadd.f32 0.0, %v4301
        %v4303 = vpop.f32.mrf.mxu0
        %4304 = vdwg.mxu0
        %v4305 = vadd.f32 %v4220, %v4297
        %v4306 = vadd.f32 %v4220, %v4302
        %v4307 = vld [vmem:[#allocation2 + $0x7] sm:$0xff]
        %v4308 = vld [vmem:[#allocation2 + $0xf] sm:$0xff]
        %s4309 = scalar_lea.vmem %s65, 8
        %v4310 = vld [vmem:[%s4309] sm:$0xff]
        %v4312 = vsel %vm1483, %v4307, 0
        %v4315 = vsel %vm1483, %v4308, 0
        %4317 = vmatprep.subr.mxu0 0.0
        %4318 = vmatpush1.msra.mxu0 0.0
        %4319 = vmatprep.subr.mxu0 0.0
        %4320 = vmatpush1.msra.mxu0 0.0
        %4321 = vmatprep.subr.mxu0 0.0
        %4322 = vmatpush1.msra.mxu0 0.0
        %4323 = vmatprep.subr.mxu0 0.0
        %4324 = vmatpush1.msra.mxu0 0.0
        %4325 = vmatprep.subr.mxu0 0.0
        %4326 = vmatpush1.msra.mxu0 0.0
        %4327 = vmatprep.subr.mxu0 0.0
        %4328 = vmatpush1.msra.mxu0 0.0
        %4329 = vmatprep.subr.mxu0 0.0
        %4330 = vmatpush1.msra.mxu0 0.0
        %4331 = vmatprep.subr.mxu0 0.0
        %4332 = vmatpush1.msra.mxu0 0.0
        %4333 = vmatprep.subr.mxu0 0.0
        %4334 = vmatpush1.msra.mxu0 0.0
        %4335 = vmatprep.subr.mxu0 0.0
        %4336 = vmatpush1.msra.mxu0 0.0
        %4337 = vmatprep.subr.mxu0 0.0
        %4338 = vmatpush1.msra.mxu0 0.0
        %4339 = vmatprep.subr.mxu0 0.0
        %4340 = vmatpush1.msra.mxu0 0.0
        %4341 = vmatprep.subr.mxu0 0.0
        %4342 = vmatpush1.msra.mxu0 0.0
        %4343 = vmatprep.subr.mxu0 0.0
        %4344 = vmatpush1.msra.mxu0 0.0
        %4345 = vmatprep.subr.mxu0 0.0
        %4346 = vmatpush1.msra.mxu0 0.0
        %4347 = vmatprep.subr.mxu0 0.0
        %4348 = vmatpush1.msra.mxu0 %v4310
        %4349 = vmatprep.subr.mxu0 0.0
        %4350 = vmatpush2.msra.mxu0 0.0
        %4351 = vmatprep.subr.mxu0 0.0
        %4352 = vmatpush2.msra.mxu0 0.0
        %4353 = vmatprep.subr.mxu0 0.0
        %4354 = vmatpush2.msra.mxu0 0.0
        %4355 = vmatprep.subr.mxu0 0.0
        %4356 = vmatpush2.msra.mxu0 0.0
        %4357 = vmatprep.subr.mxu0 0.0
        %4358 = vmatpush2.msra.mxu0 0.0
        %4359 = vmatprep.subr.mxu0 0.0
        %4360 = vmatpush2.msra.mxu0 0.0
        %4361 = vmatprep.subr.mxu0 0.0
        %4362 = vmatpush2.msra.mxu0 0.0
        %4363 = vmatprep.subr.mxu0 0.0
        %4364 = vmatpush2.msra.mxu0 0.0
        %4365 = vmatprep.subr.mxu0 0.0
        %4366 = vmatpush2.msra.mxu0 0.0
        %4367 = vmatprep.subr.mxu0 0.0
        %4368 = vmatpush2.msra.mxu0 0.0
        %4369 = vmatprep.subr.mxu0 0.0
        %4370 = vmatpush2.msra.mxu0 0.0
        %4371 = vmatprep.subr.mxu0 0.0
        %4372 = vmatpush2.msra.mxu0 0.0
        %4373 = vmatprep.subr.mxu0 0.0
        %4374 = vmatpush2.msra.mxu0 0.0
        %4375 = vmatprep.subr.mxu0 0.0
        %4376 = vmatpush2.msra.mxu0 0.0
        %4377 = vmatprep.subr.mxu0 0.0
        %4378 = vmatpush2.msra.mxu0 0.0
        %4379 = vmatprep.subr.mxu0 0.0
        %4380 = vmatpush2.msra.mxu0 0.0
        %4381 = vmatprep.mubr.f32.mxu0 0.0
        %4382 = vmatmul.mubr.f32.gmra.mxu0 %v4312
        %v4383 = vpop.f32.mrf.mxu0
        %v4384 = vadd.f32 0.0, %v4383
        %v4385 = vpop.f32.mrf.mxu0
        %4386 = vmatprep.mubr.f32.mxu0 0.0
        %4387 = vmatmul.mubr.f32.gmra.mxu0 %v4315
        %v4388 = vpop.f32.mrf.mxu0
        %v4389 = vadd.f32 0.0, %v4388
        %v4390 = vpop.f32.mrf.mxu0
        %4391 = vdwg.mxu0
        %v4392 = vadd.f32 %v4305, %v4384
        %v4393 = vadd.f32 %v4306, %v4389
        %v4394 = vld [vmem:[#allocation2 + $0x8] sm:$0xff]
        %v4395 = vld [vmem:[#allocation2 + $0x10] sm:$0xff]
        %s4396 = scalar_lea.vmem %s65, 16
        %v4397 = vld [vmem:[%s4396] sm:$0xff]
        %v4399 = vsel %vm1483, %v4394, 0
        %v4402 = vsel %vm1483, %v4395, 0
        %4404 = vmatprep.subr.mxu0 0.0
        %4405 = vmatpush1.msra.mxu0 0.0
        %4406 = vmatprep.subr.mxu0 0.0
        %4407 = vmatpush1.msra.mxu0 0.0
        %4408 = vmatprep.subr.mxu0 0.0
        %4409 = vmatpush1.msra.mxu0 0.0
        %4410 = vmatprep.subr.mxu0 0.0
        %4411 = vmatpush1.msra.mxu0 0.0
        %4412 = vmatprep.subr.mxu0 0.0
        %4413 = vmatpush1.msra.mxu0 0.0
        %4414 = vmatprep.subr.mxu0 0.0
        %4415 = vmatpush1.msra.mxu0 0.0
        %4416 = vmatprep.subr.mxu0 0.0
        %4417 = vmatpush1.msra.mxu0 0.0
        %4418 = vmatprep.subr.mxu0 0.0
        %4419 = vmatpush1.msra.mxu0 0.0
        %4420 = vmatprep.subr.mxu0 0.0
        %4421 = vmatpush1.msra.mxu0 0.0
        %4422 = vmatprep.subr.mxu0 0.0
        %4423 = vmatpush1.msra.mxu0 0.0
        %4424 = vmatprep.subr.mxu0 0.0
        %4425 = vmatpush1.msra.mxu0 0.0
        %4426 = vmatprep.subr.mxu0 0.0
        %4427 = vmatpush1.msra.mxu0 0.0
        %4428 = vmatprep.subr.mxu0 0.0
        %4429 = vmatpush1.msra.mxu0 0.0
        %4430 = vmatprep.subr.mxu0 0.0
        %4431 = vmatpush1.msra.mxu0 0.0
        %4432 = vmatprep.subr.mxu0 0.0
        %4433 = vmatpush1.msra.mxu0 0.0
        %4434 = vmatprep.subr.mxu0 0.0
        %4435 = vmatpush1.msra.mxu0 %v4397
        %4436 = vmatprep.subr.mxu0 0.0
        %4437 = vmatpush2.msra.mxu0 0.0
        %4438 = vmatprep.subr.mxu0 0.0
        %4439 = vmatpush2.msra.mxu0 0.0
        %4440 = vmatprep.subr.mxu0 0.0
        %4441 = vmatpush2.msra.mxu0 0.0
        %4442 = vmatprep.subr.mxu0 0.0
        %4443 = vmatpush2.msra.mxu0 0.0
        %4444 = vmatprep.subr.mxu0 0.0
        %4445 = vmatpush2.msra.mxu0 0.0
        %4446 = vmatprep.subr.mxu0 0.0
        %4447 = vmatpush2.msra.mxu0 0.0
        %4448 = vmatprep.subr.mxu0 0.0
        %4449 = vmatpush2.msra.mxu0 0.0
        %4450 = vmatprep.subr.mxu0 0.0
        %4451 = vmatpush2.msra.mxu0 0.0
        %4452 = vmatprep.subr.mxu0 0.0
        %4453 = vmatpush2.msra.mxu0 0.0
        %4454 = vmatprep.subr.mxu0 0.0
        %4455 = vmatpush2.msra.mxu0 0.0
        %4456 = vmatprep.subr.mxu0 0.0
        %4457 = vmatpush2.msra.mxu0 0.0
        %4458 = vmatprep.subr.mxu0 0.0
        %4459 = vmatpush2.msra.mxu0 0.0
        %4460 = vmatprep.subr.mxu0 0.0
        %4461 = vmatpush2.msra.mxu0 0.0
        %4462 = vmatprep.subr.mxu0 0.0
        %4463 = vmatpush2.msra.mxu0 0.0
        %4464 = vmatprep.subr.mxu0 0.0
        %4465 = vmatpush2.msra.mxu0 0.0
        %4466 = vmatprep.subr.mxu0 0.0
        %4467 = vmatpush2.msra.mxu0 0.0
        %4468 = vmatprep.mubr.f32.mxu0 0.0
        %4469 = vmatmul.mubr.f32.gmra.mxu0 %v4399
        %v4470 = vpop.f32.mrf.mxu0
        %v4471 = vadd.f32 0.0, %v4470
        %v4472 = vpop.f32.mrf.mxu0
        %4473 = vmatprep.mubr.f32.mxu0 0.0
        %4474 = vmatmul.mubr.f32.gmra.mxu0 %v4402
        %v4475 = vpop.f32.mrf.mxu0
        %v4476 = vadd.f32 0.0, %v4475
        %v4477 = vpop.f32.mrf.mxu0
        %4478 = vdwg.mxu0
        %v4479 = vadd.f32 %v4392, %v4471
        %v4480 = vadd.f32 %v4393, %v4476
        %s4481 = sld [smem:[#allocation4 + $0xc]]
        %vm4482 = vcmp.ge.f32.partialorder %v4479, 0.0
        %vm4483 = vcmp.ge.f32.partialorder %v4480, 0.0
        %v4484 = vstv %s4481
        %v4485 = vmul.f32 %v4479, %v4484
        %v4486 = vmul.f32 %v4480, %v4484
        %v4487 = vsel %vm4482, %v4479, %v4485
        %v4488 = vsel %vm4483, %v4480, %v4486
        %4489 = vst.msk [vmem:[#allocation2 + $0x8] sm:$0xff] %vm1477, %v4487
        %4490 = vst.msk [vmem:[#allocation2 + $0x10] sm:$0xff] %vm1477, %v4488
        %v4491 = vld [vmem:[%s71] sm:$0x1]
        %v4493 = vlaneseq
        %v4494 = vshrl.u32 %v4493, 7
        %v4495 = vsub.s32 0, %v4494
        %v4496 = vrot.slane %v4491, %v4495
        %v4498 = vadd.f32 %v4496, 0.0
        %v4499 = vld [vmem:[#allocation2 + $0x6] sm:$0xff]
        %v4500 = vld [vmem:[#allocation2 + $0xe] sm:$0xff]
        %v4501 = vld [vmem:[%s69] sm:$0xff]
        %v4502 = vld [vmem:[%s69 + $0x8] sm:$0xff]
        %v4504 = vsel %vm1477, %v4499, 0
        %v4507 = vsel %vm1477, %v4500, 0
        %4509 = vmatprep.subr.mxu0 0.0
        %4510 = vmatpush1.msra.mxu0 0.0
        %4511 = vmatprep.subr.mxu0 0.0
        %4512 = vmatpush1.msra.mxu0 0.0
        %4513 = vmatprep.subr.mxu0 0.0
        %4514 = vmatpush1.msra.mxu0 0.0
        %4515 = vmatprep.subr.mxu0 0.0
        %4516 = vmatpush1.msra.mxu0 0.0
        %4517 = vmatprep.subr.mxu0 0.0
        %4518 = vmatpush1.msra.mxu0 0.0
        %4519 = vmatprep.subr.mxu0 0.0
        %4520 = vmatpush1.msra.mxu0 0.0
        %4521 = vmatprep.subr.mxu0 0.0
        %4522 = vmatpush1.msra.mxu0 0.0
        %4523 = vmatprep.subr.mxu0 0.0
        %4524 = vmatpush1.msra.mxu0 0.0
        %4525 = vmatprep.subr.mxu0 0.0
        %4526 = vmatpush1.msra.mxu0 0.0
        %4527 = vmatprep.subr.mxu0 0.0
        %4528 = vmatpush1.msra.mxu0 0.0
        %4529 = vmatprep.subr.mxu0 0.0
        %4530 = vmatpush1.msra.mxu0 0.0
        %4531 = vmatprep.subr.mxu0 0.0
        %4532 = vmatpush1.msra.mxu0 0.0
        %4533 = vmatprep.subr.mxu0 0.0
        %4534 = vmatpush1.msra.mxu0 0.0
        %4535 = vmatprep.subr.mxu0 0.0
        %4536 = vmatpush1.msra.mxu0 0.0
        %4537 = vmatprep.subr.mxu0 0.0
        %4538 = vmatpush1.msra.mxu0 %v4502
        %4539 = vmatprep.subr.mxu0 0.0
        %4540 = vmatpush1.msra.mxu0 %v4501
        %4541 = vmatprep.subr.mxu0 0.0
        %4542 = vmatpush2.msra.mxu0 0.0
        %4543 = vmatprep.subr.mxu0 0.0
        %4544 = vmatpush2.msra.mxu0 0.0
        %4545 = vmatprep.subr.mxu0 0.0
        %4546 = vmatpush2.msra.mxu0 0.0
        %4547 = vmatprep.subr.mxu0 0.0
        %4548 = vmatpush2.msra.mxu0 0.0
        %4549 = vmatprep.subr.mxu0 0.0
        %4550 = vmatpush2.msra.mxu0 0.0
        %4551 = vmatprep.subr.mxu0 0.0
        %4552 = vmatpush2.msra.mxu0 0.0
        %4553 = vmatprep.subr.mxu0 0.0
        %4554 = vmatpush2.msra.mxu0 0.0
        %4555 = vmatprep.subr.mxu0 0.0
        %4556 = vmatpush2.msra.mxu0 0.0
        %4557 = vmatprep.subr.mxu0 0.0
        %4558 = vmatpush2.msra.mxu0 0.0
        %4559 = vmatprep.subr.mxu0 0.0
        %4560 = vmatpush2.msra.mxu0 0.0
        %4561 = vmatprep.subr.mxu0 0.0
        %4562 = vmatpush2.msra.mxu0 0.0
        %4563 = vmatprep.subr.mxu0 0.0
        %4564 = vmatpush2.msra.mxu0 0.0
        %4565 = vmatprep.subr.mxu0 0.0
        %4566 = vmatpush2.msra.mxu0 0.0
        %4567 = vmatprep.subr.mxu0 0.0
        %4568 = vmatpush2.msra.mxu0 0.0
        %4569 = vmatprep.subr.mxu0 0.0
        %4570 = vmatpush2.msra.mxu0 0.0
        %4571 = vmatprep.subr.mxu0 0.0
        %4572 = vmatpush2.msra.mxu0 0.0
        %4573 = vmatprep.mubr.f32.mxu0 0.0
        %4574 = vmatmul.mubr.f32.gmra.mxu0 %v4504
        %v4575 = vpop.f32.mrf.mxu0
        %v4576 = vadd.f32 0.0, %v4575
        %v4577 = vpop.f32.mrf.mxu0
        %4578 = vmatprep.mubr.f32.mxu0 0.0
        %4579 = vmatmul.mubr.f32.gmra.mxu0 %v4507
        %v4580 = vpop.f32.mrf.mxu0
        %v4581 = vadd.f32 0.0, %v4580
        %v4582 = vpop.f32.mrf.mxu0
        %4583 = vdwg.mxu0
        %v4584 = vadd.f32 %v4498, %v4576
        %v4585 = vadd.f32 %v4498, %v4581
        %v4586 = vld [vmem:[#allocation2 + $0x7] sm:$0xff]
        %v4587 = vld [vmem:[#allocation2 + $0xf] sm:$0xff]
        %s4588 = scalar_lea.vmem %s69, 16
        %v4589 = vld [vmem:[%s4588] sm:$0xff]
        %v4590 = vld [vmem:[%s4588 + $0x8] sm:$0xff]
        %v4592 = vsel %vm1477, %v4586, 0
        %v4595 = vsel %vm1477, %v4587, 0
        %4597 = vmatprep.subr.mxu0 0.0
        %4598 = vmatpush1.msra.mxu0 0.0
        %4599 = vmatprep.subr.mxu0 0.0
        %4600 = vmatpush1.msra.mxu0 0.0
        %4601 = vmatprep.subr.mxu0 0.0
        %4602 = vmatpush1.msra.mxu0 0.0
        %4603 = vmatprep.subr.mxu0 0.0
        %4604 = vmatpush1.msra.mxu0 0.0
        %4605 = vmatprep.subr.mxu0 0.0
        %4606 = vmatpush1.msra.mxu0 0.0
        %4607 = vmatprep.subr.mxu0 0.0
        %4608 = vmatpush1.msra.mxu0 0.0
        %4609 = vmatprep.subr.mxu0 0.0
        %4610 = vmatpush1.msra.mxu0 0.0
        %4611 = vmatprep.subr.mxu0 0.0
        %4612 = vmatpush1.msra.mxu0 0.0
        %4613 = vmatprep.subr.mxu0 0.0
        %4614 = vmatpush1.msra.mxu0 0.0
        %4615 = vmatprep.subr.mxu0 0.0
        %4616 = vmatpush1.msra.mxu0 0.0
        %4617 = vmatprep.subr.mxu0 0.0
        %4618 = vmatpush1.msra.mxu0 0.0
        %4619 = vmatprep.subr.mxu0 0.0
        %4620 = vmatpush1.msra.mxu0 0.0
        %4621 = vmatprep.subr.mxu0 0.0
        %4622 = vmatpush1.msra.mxu0 0.0
        %4623 = vmatprep.subr.mxu0 0.0
        %4624 = vmatpush1.msra.mxu0 0.0
        %4625 = vmatprep.subr.mxu0 0.0
        %4626 = vmatpush1.msra.mxu0 %v4590
        %4627 = vmatprep.subr.mxu0 0.0
        %4628 = vmatpush1.msra.mxu0 %v4589
        %4629 = vmatprep.subr.mxu0 0.0
        %4630 = vmatpush2.msra.mxu0 0.0
        %4631 = vmatprep.subr.mxu0 0.0
        %4632 = vmatpush2.msra.mxu0 0.0
        %4633 = vmatprep.subr.mxu0 0.0
        %4634 = vmatpush2.msra.mxu0 0.0
        %4635 = vmatprep.subr.mxu0 0.0
        %4636 = vmatpush2.msra.mxu0 0.0
        %4637 = vmatprep.subr.mxu0 0.0
        %4638 = vmatpush2.msra.mxu0 0.0
        %4639 = vmatprep.subr.mxu0 0.0
        %4640 = vmatpush2.msra.mxu0 0.0
        %4641 = vmatprep.subr.mxu0 0.0
        %4642 = vmatpush2.msra.mxu0 0.0
        %4643 = vmatprep.subr.mxu0 0.0
        %4644 = vmatpush2.msra.mxu0 0.0
        %4645 = vmatprep.subr.mxu0 0.0
        %4646 = vmatpush2.msra.mxu0 0.0
        %4647 = vmatprep.subr.mxu0 0.0
        %4648 = vmatpush2.msra.mxu0 0.0
        %4649 = vmatprep.subr.mxu0 0.0
        %4650 = vmatpush2.msra.mxu0 0.0
        %4651 = vmatprep.subr.mxu0 0.0
        %4652 = vmatpush2.msra.mxu0 0.0
        %4653 = vmatprep.subr.mxu0 0.0
        %4654 = vmatpush2.msra.mxu0 0.0
        %4655 = vmatprep.subr.mxu0 0.0
        %4656 = vmatpush2.msra.mxu0 0.0
        %4657 = vmatprep.subr.mxu0 0.0
        %4658 = vmatpush2.msra.mxu0 0.0
        %4659 = vmatprep.subr.mxu0 0.0
        %4660 = vmatpush2.msra.mxu0 0.0
        %4661 = vmatprep.mubr.f32.mxu0 0.0
        %4662 = vmatmul.mubr.f32.gmra.mxu0 %v4592
        %v4663 = vpop.f32.mrf.mxu0
        %v4664 = vadd.f32 0.0, %v4663
        %v4665 = vpop.f32.mrf.mxu0
        %4666 = vmatprep.mubr.f32.mxu0 0.0
        %4667 = vmatmul.mubr.f32.gmra.mxu0 %v4595
        %v4668 = vpop.f32.mrf.mxu0
        %v4669 = vadd.f32 0.0, %v4668
        %v4670 = vpop.f32.mrf.mxu0
        %4671 = vdwg.mxu0
        %v4672 = vadd.f32 %v4584, %v4664
        %v4673 = vadd.f32 %v4585, %v4669
        %v4674 = vld [vmem:[#allocation2 + $0x8] sm:$0xff]
        %v4675 = vld [vmem:[#allocation2 + $0x10] sm:$0xff]
        %s4676 = scalar_lea.vmem %s69, 32
        %v4677 = vld [vmem:[%s4676] sm:$0xff]
        %v4678 = vld [vmem:[%s4676 + $0x8] sm:$0xff]
        %v4680 = vsel %vm1477, %v4674, 0
        %v4683 = vsel %vm1477, %v4675, 0
        %4685 = vmatprep.subr.mxu0 0.0
        %4686 = vmatpush1.msra.mxu0 0.0
        %4687 = vmatprep.subr.mxu0 0.0
        %4688 = vmatpush1.msra.mxu0 0.0
        %4689 = vmatprep.subr.mxu0 0.0
        %4690 = vmatpush1.msra.mxu0 0.0
        %4691 = vmatprep.subr.mxu0 0.0
        %4692 = vmatpush1.msra.mxu0 0.0
        %4693 = vmatprep.subr.mxu0 0.0
        %4694 = vmatpush1.msra.mxu0 0.0
        %4695 = vmatprep.subr.mxu0 0.0
        %4696 = vmatpush1.msra.mxu0 0.0
        %4697 = vmatprep.subr.mxu0 0.0
        %4698 = vmatpush1.msra.mxu0 0.0
        %4699 = vmatprep.subr.mxu0 0.0
        %4700 = vmatpush1.msra.mxu0 0.0
        %4701 = vmatprep.subr.mxu0 0.0
        %4702 = vmatpush1.msra.mxu0 0.0
        %4703 = vmatprep.subr.mxu0 0.0
        %4704 = vmatpush1.msra.mxu0 0.0
        %4705 = vmatprep.subr.mxu0 0.0
        %4706 = vmatpush1.msra.mxu0 0.0
        %4707 = vmatprep.subr.mxu0 0.0
        %4708 = vmatpush1.msra.mxu0 0.0
        %4709 = vmatprep.subr.mxu0 0.0
        %4710 = vmatpush1.msra.mxu0 0.0
        %4711 = vmatprep.subr.mxu0 0.0
        %4712 = vmatpush1.msra.mxu0 0.0
        %4713 = vmatprep.subr.mxu0 0.0
        %4714 = vmatpush1.msra.mxu0 %v4678
        %4715 = vmatprep.subr.mxu0 0.0
        %4716 = vmatpush1.msra.mxu0 %v4677
        %4717 = vmatprep.subr.mxu0 0.0
        %4718 = vmatpush2.msra.mxu0 0.0
        %4719 = vmatprep.subr.mxu0 0.0
        %4720 = vmatpush2.msra.mxu0 0.0
        %4721 = vmatprep.subr.mxu0 0.0
        %4722 = vmatpush2.msra.mxu0 0.0
        %4723 = vmatprep.subr.mxu0 0.0
        %4724 = vmatpush2.msra.mxu0 0.0
        %4725 = vmatprep.subr.mxu0 0.0
        %4726 = vmatpush2.msra.mxu0 0.0
        %4727 = vmatprep.subr.mxu0 0.0
        %4728 = vmatpush2.msra.mxu0 0.0
        %4729 = vmatprep.subr.mxu0 0.0
        %4730 = vmatpush2.msra.mxu0 0.0
        %4731 = vmatprep.subr.mxu0 0.0
        %4732 = vmatpush2.msra.mxu0 0.0
        %4733 = vmatprep.subr.mxu0 0.0
        %4734 = vmatpush2.msra.mxu0 0.0
        %4735 = vmatprep.subr.mxu0 0.0
        %4736 = vmatpush2.msra.mxu0 0.0
        %4737 = vmatprep.subr.mxu0 0.0
        %4738 = vmatpush2.msra.mxu0 0.0
        %4739 = vmatprep.subr.mxu0 0.0
        %4740 = vmatpush2.msra.mxu0 0.0
        %4741 = vmatprep.subr.mxu0 0.0
        %4742 = vmatpush2.msra.mxu0 0.0
        %4743 = vmatprep.subr.mxu0 0.0
        %4744 = vmatpush2.msra.mxu0 0.0
        %4745 = vmatprep.subr.mxu0 0.0
        %4746 = vmatpush2.msra.mxu0 0.0
        %4747 = vmatprep.subr.mxu0 0.0
        %4748 = vmatpush2.msra.mxu0 0.0
        %4749 = vmatprep.mubr.f32.mxu0 0.0
        %4750 = vmatmul.mubr.f32.gmra.mxu0 %v4680
        %v4751 = vpop.f32.mrf.mxu0
        %v4752 = vadd.f32 0.0, %v4751
        %v4753 = vpop.f32.mrf.mxu0
        %4754 = vmatprep.mubr.f32.mxu0 0.0
        %4755 = vmatmul.mubr.f32.gmra.mxu0 %v4683
        %v4756 = vpop.f32.mrf.mxu0
        %v4757 = vadd.f32 0.0, %v4756
        %v4758 = vpop.f32.mrf.mxu0
        %4759 = vdwg.mxu0
        %v4760 = vadd.f32 %v4672, %v4752
        %v4761 = vadd.f32 %v4673, %v4757
        %s4762 = sld [smem:[#allocation4 + $0xd]]
        %vm4763 = vcmp.ge.f32.partialorder %v4760, 0.0
        %vm4764 = vcmp.ge.f32.partialorder %v4761, 0.0
        %v4765 = vstv %s4762
        %v4766 = vmul.f32 %v4760, %v4765
        %v4767 = vmul.f32 %v4761, %v4765
        %v4768 = vsel %vm4763, %v4760, %v4766
        %v4769 = vsel %vm4764, %v4761, %v4767
        %v4770 = vld [vmem:[%s61] sm:$0xff]
        %v4771 = vld [vmem:[%s63] sm:$0x1]
        %v4773 = vlaneseq
        %v4774 = vshrl.u32 %v4773, 7
        %v4775 = vsub.s32 0, %v4774
        %v4776 = vrot.slane %v4771, %v4775
        %v4779 = vsel %vm1483, %v4209, 0
        %v4782 = vsel %vm1483, %v4210, 0
        %4784 = vmatprep.subr.mxu0 0.0
        %4785 = vmatpush1.msra.mxu0 0.0
        %4786 = vmatprep.subr.mxu0 0.0
        %4787 = vmatpush1.msra.mxu0 0.0
        %4788 = vmatprep.subr.mxu0 0.0
        %4789 = vmatpush1.msra.mxu0 0.0
        %4790 = vmatprep.subr.mxu0 0.0
        %4791 = vmatpush1.msra.mxu0 0.0
        %4792 = vmatprep.subr.mxu0 0.0
        %4793 = vmatpush1.msra.mxu0 0.0
        %4794 = vmatprep.subr.mxu0 0.0
        %4795 = vmatpush1.msra.mxu0 0.0
        %4796 = vmatprep.subr.mxu0 0.0
        %4797 = vmatpush1.msra.mxu0 0.0
        %4798 = vmatprep.subr.mxu0 0.0
        %4799 = vmatpush1.msra.mxu0 0.0
        %4800 = vmatprep.subr.mxu0 0.0
        %4801 = vmatpush1.msra.mxu0 0.0
        %4802 = vmatprep.subr.mxu0 0.0
        %4803 = vmatpush1.msra.mxu0 0.0
        %4804 = vmatprep.subr.mxu0 0.0
        %4805 = vmatpush1.msra.mxu0 0.0
        %4806 = vmatprep.subr.mxu0 0.0
        %4807 = vmatpush1.msra.mxu0 0.0
        %4808 = vmatprep.subr.mxu0 0.0
        %4809 = vmatpush1.msra.mxu0 0.0
        %4810 = vmatprep.subr.mxu0 0.0
        %4811 = vmatpush1.msra.mxu0 0.0
        %4812 = vmatprep.subr.mxu0 0.0
        %4813 = vmatpush1.msra.mxu0 0.0
        %4814 = vmatprep.subr.mxu0 0.0
        %4815 = vmatpush1.msra.mxu0 %v4770
        %4816 = vmatprep.subr.mxu0 0.0
        %4817 = vmatpush2.msra.mxu0 0.0
        %4818 = vmatprep.subr.mxu0 0.0
        %4819 = vmatpush2.msra.mxu0 0.0
        %4820 = vmatprep.subr.mxu0 0.0
        %4821 = vmatpush2.msra.mxu0 0.0
        %4822 = vmatprep.subr.mxu0 0.0
        %4823 = vmatpush2.msra.mxu0 0.0
        %4824 = vmatprep.subr.mxu0 0.0
        %4825 = vmatpush2.msra.mxu0 0.0
        %4826 = vmatprep.subr.mxu0 0.0
        %4827 = vmatpush2.msra.mxu0 0.0
        %4828 = vmatprep.subr.mxu0 0.0
        %4829 = vmatpush2.msra.mxu0 0.0
        %4830 = vmatprep.subr.mxu0 0.0
        %4831 = vmatpush2.msra.mxu0 0.0
        %4832 = vmatprep.subr.mxu0 0.0
        %4833 = vmatpush2.msra.mxu0 0.0
        %4834 = vmatprep.subr.mxu0 0.0
        %4835 = vmatpush2.msra.mxu0 0.0
        %4836 = vmatprep.subr.mxu0 0.0
        %4837 = vmatpush2.msra.mxu0 0.0
        %4838 = vmatprep.subr.mxu0 0.0
        %4839 = vmatpush2.msra.mxu0 0.0
        %4840 = vmatprep.subr.mxu0 0.0
        %4841 = vmatpush2.msra.mxu0 0.0
        %4842 = vmatprep.subr.mxu0 0.0
        %4843 = vmatpush2.msra.mxu0 0.0
        %4844 = vmatprep.subr.mxu0 0.0
        %4845 = vmatpush2.msra.mxu0 0.0
        %4846 = vmatprep.subr.mxu0 0.0
        %4847 = vmatpush2.msra.mxu0 0.0
        %4848 = vmatprep.mubr.f32.mxu0 0.0
        %4849 = vmatmul.mubr.f32.gmra.mxu0 %v4779
        %v4850 = vpop.f32.mrf.mxu0
        %v4851 = vadd.f32 %v4776, %v4850
        %v4852 = vpop.f32.mrf.mxu0
        %4853 = vmatprep.mubr.f32.mxu0 0.0
        %4854 = vmatmul.mubr.f32.gmra.mxu0 %v4782
        %v4855 = vpop.f32.mrf.mxu0
        %v4856 = vadd.f32 %v4776, %v4855
        %v4857 = vpop.f32.mrf.mxu0
        %4858 = vdwg.mxu0
        %v4859 = vadd.f32 %v4768, %v4851
        %v4860 = vadd.f32 %v4769, %v4856
        %s4861 = sld [smem:[#allocation4 + $0xe]]
        %vm4862 = vcmp.ge.f32.partialorder %v4859, 0.0
        %vm4863 = vcmp.ge.f32.partialorder %v4860, 0.0
        %v4864 = vstv %s4861
        %v4865 = vmul.f32 %v4859, %v4864
        %v4866 = vmul.f32 %v4860, %v4864
        %v4867 = vsel %vm4862, %v4859, %v4865
        %v4868 = vsel %vm4863, %v4860, %v4866
        %4869 = vst.msk [vmem:[#allocation2 + $0x8] sm:$0xff] %vm1477, %v4867
        %4870 = vst.msk [vmem:[#allocation2 + $0x10] sm:$0xff] %vm1477, %v4868
        %v4871 = vld [vmem:[%s79] sm:$0x1]
        %v4873 = vlaneseq
        %v4874 = vshrl.u32 %v4873, 7
        %v4875 = vsub.s32 0, %v4874
        %v4876 = vrot.slane %v4871, %v4875
        %v4878 = vadd.f32 %v4876, 0.0
        %v4879 = vld [vmem:[#allocation2 + $0x4] sm:$0xff]
        %v4880 = vld [vmem:[#allocation2 + $0xc] sm:$0xff]
        %v4881 = vld [vmem:[%s77] sm:$0xff]
        %v4882 = vld [vmem:[%s77 + $0x8] sm:$0xff]
        %v4884 = vsel %vm1477, %v4879, 0
        %v4887 = vsel %vm1477, %v4880, 0
        %4889 = vmatprep.subr.mxu0 0.0
        %4890 = vmatpush1.msra.mxu0 0.0
        %4891 = vmatprep.subr.mxu0 0.0
        %4892 = vmatpush1.msra.mxu0 0.0
        %4893 = vmatprep.subr.mxu0 0.0
        %4894 = vmatpush1.msra.mxu0 0.0
        %4895 = vmatprep.subr.mxu0 0.0
        %4896 = vmatpush1.msra.mxu0 0.0
        %4897 = vmatprep.subr.mxu0 0.0
        %4898 = vmatpush1.msra.mxu0 0.0
        %4899 = vmatprep.subr.mxu0 0.0
        %4900 = vmatpush1.msra.mxu0 0.0
        %4901 = vmatprep.subr.mxu0 0.0
        %4902 = vmatpush1.msra.mxu0 0.0
        %4903 = vmatprep.subr.mxu0 0.0
        %4904 = vmatpush1.msra.mxu0 0.0
        %4905 = vmatprep.subr.mxu0 0.0
        %4906 = vmatpush1.msra.mxu0 0.0
        %4907 = vmatprep.subr.mxu0 0.0
        %4908 = vmatpush1.msra.mxu0 0.0
        %4909 = vmatprep.subr.mxu0 0.0
        %4910 = vmatpush1.msra.mxu0 0.0
        %4911 = vmatprep.subr.mxu0 0.0
        %4912 = vmatpush1.msra.mxu0 0.0
        %4913 = vmatprep.subr.mxu0 0.0
        %4914 = vmatpush1.msra.mxu0 0.0
        %4915 = vmatprep.subr.mxu0 0.0
        %4916 = vmatpush1.msra.mxu0 0.0
        %4917 = vmatprep.subr.mxu0 0.0
        %4918 = vmatpush1.msra.mxu0 %v4882
        %4919 = vmatprep.subr.mxu0 0.0
        %4920 = vmatpush1.msra.mxu0 %v4881
        %4921 = vmatprep.subr.mxu0 0.0
        %4922 = vmatpush2.msra.mxu0 0.0
        %4923 = vmatprep.subr.mxu0 0.0
        %4924 = vmatpush2.msra.mxu0 0.0
        %4925 = vmatprep.subr.mxu0 0.0
        %4926 = vmatpush2.msra.mxu0 0.0
        %4927 = vmatprep.subr.mxu0 0.0
        %4928 = vmatpush2.msra.mxu0 0.0
        %4929 = vmatprep.subr.mxu0 0.0
        %4930 = vmatpush2.msra.mxu0 0.0
        %4931 = vmatprep.subr.mxu0 0.0
        %4932 = vmatpush2.msra.mxu0 0.0
        %4933 = vmatprep.subr.mxu0 0.0
        %4934 = vmatpush2.msra.mxu0 0.0
        %4935 = vmatprep.subr.mxu0 0.0
        %4936 = vmatpush2.msra.mxu0 0.0
        %4937 = vmatprep.subr.mxu0 0.0
        %4938 = vmatpush2.msra.mxu0 0.0
        %4939 = vmatprep.subr.mxu0 0.0
        %4940 = vmatpush2.msra.mxu0 0.0
        %4941 = vmatprep.subr.mxu0 0.0
        %4942 = vmatpush2.msra.mxu0 0.0
        %4943 = vmatprep.subr.mxu0 0.0
        %4944 = vmatpush2.msra.mxu0 0.0
        %4945 = vmatprep.subr.mxu0 0.0
        %4946 = vmatpush2.msra.mxu0 0.0
        %4947 = vmatprep.subr.mxu0 0.0
        %4948 = vmatpush2.msra.mxu0 0.0
        %4949 = vmatprep.subr.mxu0 0.0
        %4950 = vmatpush2.msra.mxu0 0.0
        %4951 = vmatprep.subr.mxu0 0.0
        %4952 = vmatpush2.msra.mxu0 0.0
        %4953 = vmatprep.mubr.f32.mxu0 0.0
        %4954 = vmatmul.mubr.f32.gmra.mxu0 %v4884
        %v4955 = vpop.f32.mrf.mxu0
        %v4956 = vadd.f32 0.0, %v4955
        %v4957 = vpop.f32.mrf.mxu0
        %4958 = vmatprep.mubr.f32.mxu0 0.0
        %4959 = vmatmul.mubr.f32.gmra.mxu0 %v4887
        %v4960 = vpop.f32.mrf.mxu0
        %v4961 = vadd.f32 0.0, %v4960
        %v4962 = vpop.f32.mrf.mxu0
        %4963 = vdwg.mxu0
        %v4964 = vadd.f32 %v4878, %v4956
        %v4965 = vadd.f32 %v4878, %v4961
        %v4966 = vld [vmem:[#allocation2 + $0x6] sm:$0xff]
        %v4967 = vld [vmem:[#allocation2 + $0xe] sm:$0xff]
        %s4968 = scalar_lea.vmem %s77, 16
        %v4969 = vld [vmem:[%s4968] sm:$0xff]
        %v4970 = vld [vmem:[%s4968 + $0x8] sm:$0xff]
        %v4972 = vsel %vm1477, %v4966, 0
        %v4975 = vsel %vm1477, %v4967, 0
        %4977 = vmatprep.subr.mxu0 0.0
        %4978 = vmatpush1.msra.mxu0 0.0
        %4979 = vmatprep.subr.mxu0 0.0
        %4980 = vmatpush1.msra.mxu0 0.0
        %4981 = vmatprep.subr.mxu0 0.0
        %4982 = vmatpush1.msra.mxu0 0.0
        %4983 = vmatprep.subr.mxu0 0.0
        %4984 = vmatpush1.msra.mxu0 0.0
        %4985 = vmatprep.subr.mxu0 0.0
        %4986 = vmatpush1.msra.mxu0 0.0
        %4987 = vmatprep.subr.mxu0 0.0
        %4988 = vmatpush1.msra.mxu0 0.0
        %4989 = vmatprep.subr.mxu0 0.0
        %4990 = vmatpush1.msra.mxu0 0.0
        %4991 = vmatprep.subr.mxu0 0.0
        %4992 = vmatpush1.msra.mxu0 0.0
        %4993 = vmatprep.subr.mxu0 0.0
        %4994 = vmatpush1.msra.mxu0 0.0
        %4995 = vmatprep.subr.mxu0 0.0
        %4996 = vmatpush1.msra.mxu0 0.0
        %4997 = vmatprep.subr.mxu0 0.0
        %4998 = vmatpush1.msra.mxu0 0.0
        %4999 = vmatprep.subr.mxu0 0.0
        %5000 = vmatpush1.msra.mxu0 0.0
        %5001 = vmatprep.subr.mxu0 0.0
        %5002 = vmatpush1.msra.mxu0 0.0
        %5003 = vmatprep.subr.mxu0 0.0
        %5004 = vmatpush1.msra.mxu0 0.0
        %5005 = vmatprep.subr.mxu0 0.0
        %5006 = vmatpush1.msra.mxu0 %v4970
        %5007 = vmatprep.subr.mxu0 0.0
        %5008 = vmatpush1.msra.mxu0 %v4969
        %5009 = vmatprep.subr.mxu0 0.0
        %5010 = vmatpush2.msra.mxu0 0.0
        %5011 = vmatprep.subr.mxu0 0.0
        %5012 = vmatpush2.msra.mxu0 0.0
        %5013 = vmatprep.subr.mxu0 0.0
        %5014 = vmatpush2.msra.mxu0 0.0
        %5015 = vmatprep.subr.mxu0 0.0
        %5016 = vmatpush2.msra.mxu0 0.0
        %5017 = vmatprep.subr.mxu0 0.0
        %5018 = vmatpush2.msra.mxu0 0.0
        %5019 = vmatprep.subr.mxu0 0.0
        %5020 = vmatpush2.msra.mxu0 0.0
        %5021 = vmatprep.subr.mxu0 0.0
        %5022 = vmatpush2.msra.mxu0 0.0
        %5023 = vmatprep.subr.mxu0 0.0
        %5024 = vmatpush2.msra.mxu0 0.0
        %5025 = vmatprep.subr.mxu0 0.0
        %5026 = vmatpush2.msra.mxu0 0.0
        %5027 = vmatprep.subr.mxu0 0.0
        %5028 = vmatpush2.msra.mxu0 0.0
        %5029 = vmatprep.subr.mxu0 0.0
        %5030 = vmatpush2.msra.mxu0 0.0
        %5031 = vmatprep.subr.mxu0 0.0
        %5032 = vmatpush2.msra.mxu0 0.0
        %5033 = vmatprep.subr.mxu0 0.0
        %5034 = vmatpush2.msra.mxu0 0.0
        %5035 = vmatprep.subr.mxu0 0.0
        %5036 = vmatpush2.msra.mxu0 0.0
        %5037 = vmatprep.subr.mxu0 0.0
        %5038 = vmatpush2.msra.mxu0 0.0
        %5039 = vmatprep.subr.mxu0 0.0
        %5040 = vmatpush2.msra.mxu0 0.0
        %5041 = vmatprep.mubr.f32.mxu0 0.0
        %5042 = vmatmul.mubr.f32.gmra.mxu0 %v4972
        %v5043 = vpop.f32.mrf.mxu0
        %v5044 = vadd.f32 0.0, %v5043
        %v5045 = vpop.f32.mrf.mxu0
        %5046 = vmatprep.mubr.f32.mxu0 0.0
        %5047 = vmatmul.mubr.f32.gmra.mxu0 %v4975
        %v5048 = vpop.f32.mrf.mxu0
        %v5049 = vadd.f32 0.0, %v5048
        %v5050 = vpop.f32.mrf.mxu0
        %5051 = vdwg.mxu0
        %v5052 = vadd.f32 %v4964, %v5044
        %v5053 = vadd.f32 %v4965, %v5049
        %v5054 = vld [vmem:[#allocation2 + $0x8] sm:$0xff]
        %v5055 = vld [vmem:[#allocation2 + $0x10] sm:$0xff]
        %s5056 = scalar_lea.vmem %s77, 32
        %v5057 = vld [vmem:[%s5056] sm:$0xff]
        %v5058 = vld [vmem:[%s5056 + $0x8] sm:$0xff]
        %v5060 = vsel %vm1477, %v5054, 0
        %v5063 = vsel %vm1477, %v5055, 0
        %5065 = vmatprep.subr.mxu0 0.0
        %5066 = vmatpush1.msra.mxu0 0.0
        %5067 = vmatprep.subr.mxu0 0.0
        %5068 = vmatpush1.msra.mxu0 0.0
        %5069 = vmatprep.subr.mxu0 0.0
        %5070 = vmatpush1.msra.mxu0 0.0
        %5071 = vmatprep.subr.mxu0 0.0
        %5072 = vmatpush1.msra.mxu0 0.0
        %5073 = vmatprep.subr.mxu0 0.0
        %5074 = vmatpush1.msra.mxu0 0.0
        %5075 = vmatprep.subr.mxu0 0.0
        %5076 = vmatpush1.msra.mxu0 0.0
        %5077 = vmatprep.subr.mxu0 0.0
        %5078 = vmatpush1.msra.mxu0 0.0
        %5079 = vmatprep.subr.mxu0 0.0
        %5080 = vmatpush1.msra.mxu0 0.0
        %5081 = vmatprep.subr.mxu0 0.0
        %5082 = vmatpush1.msra.mxu0 0.0
        %5083 = vmatprep.subr.mxu0 0.0
        %5084 = vmatpush1.msra.mxu0 0.0
        %5085 = vmatprep.subr.mxu0 0.0
        %5086 = vmatpush1.msra.mxu0 0.0
        %5087 = vmatprep.subr.mxu0 0.0
        %5088 = vmatpush1.msra.mxu0 0.0
        %5089 = vmatprep.subr.mxu0 0.0
        %5090 = vmatpush1.msra.mxu0 0.0
        %5091 = vmatprep.subr.mxu0 0.0
        %5092 = vmatpush1.msra.mxu0 0.0
        %5093 = vmatprep.subr.mxu0 0.0
        %5094 = vmatpush1.msra.mxu0 %v5058
        %5095 = vmatprep.subr.mxu0 0.0
        %5096 = vmatpush1.msra.mxu0 %v5057
        %5097 = vmatprep.subr.mxu0 0.0
        %5098 = vmatpush2.msra.mxu0 0.0
        %5099 = vmatprep.subr.mxu0 0.0
        %5100 = vmatpush2.msra.mxu0 0.0
        %5101 = vmatprep.subr.mxu0 0.0
        %5102 = vmatpush2.msra.mxu0 0.0
        %5103 = vmatprep.subr.mxu0 0.0
        %5104 = vmatpush2.msra.mxu0 0.0
        %5105 = vmatprep.subr.mxu0 0.0
        %5106 = vmatpush2.msra.mxu0 0.0
        %5107 = vmatprep.subr.mxu0 0.0
        %5108 = vmatpush2.msra.mxu0 0.0
        %5109 = vmatprep.subr.mxu0 0.0
        %5110 = vmatpush2.msra.mxu0 0.0
        %5111 = vmatprep.subr.mxu0 0.0
        %5112 = vmatpush2.msra.mxu0 0.0
        %5113 = vmatprep.subr.mxu0 0.0
        %5114 = vmatpush2.msra.mxu0 0.0
        %5115 = vmatprep.subr.mxu0 0.0
        %5116 = vmatpush2.msra.mxu0 0.0
        %5117 = vmatprep.subr.mxu0 0.0
        %5118 = vmatpush2.msra.mxu0 0.0
        %5119 = vmatprep.subr.mxu0 0.0
        %5120 = vmatpush2.msra.mxu0 0.0
        %5121 = vmatprep.subr.mxu0 0.0
        %5122 = vmatpush2.msra.mxu0 0.0
        %5123 = vmatprep.subr.mxu0 0.0
        %5124 = vmatpush2.msra.mxu0 0.0
        %5125 = vmatprep.subr.mxu0 0.0
        %5126 = vmatpush2.msra.mxu0 0.0
        %5127 = vmatprep.subr.mxu0 0.0
        %5128 = vmatpush2.msra.mxu0 0.0
        %5129 = vmatprep.mubr.f32.mxu0 0.0
        %5130 = vmatmul.mubr.f32.gmra.mxu0 %v5060
        %v5131 = vpop.f32.mrf.mxu0
        %v5132 = vadd.f32 0.0, %v5131
        %v5133 = vpop.f32.mrf.mxu0
        %5134 = vmatprep.mubr.f32.mxu0 0.0
        %5135 = vmatmul.mubr.f32.gmra.mxu0 %v5063
        %v5136 = vpop.f32.mrf.mxu0
        %v5137 = vadd.f32 0.0, %v5136
        %v5138 = vpop.f32.mrf.mxu0
        %5139 = vdwg.mxu0
        %v5140 = vadd.f32 %v5052, %v5132
        %v5141 = vadd.f32 %v5053, %v5137
        %s5142 = sld [smem:[#allocation4 + $0xf]]
        %vm5143 = vcmp.ge.f32.partialorder %v5140, 0.0
        %vm5144 = vcmp.ge.f32.partialorder %v5141, 0.0
        %v5145 = vstv %s5142
        %v5146 = vmul.f32 %v5140, %v5145
        %v5147 = vmul.f32 %v5141, %v5145
        %v5148 = vsel %vm5143, %v5140, %v5146
        %v5149 = vsel %vm5144, %v5141, %v5147
        %5150 = vst.msk [vmem:[#allocation2 + $0x8] sm:$0xff] %vm1483, %v5148
        %5151 = vst.msk [vmem:[#allocation2 + $0x10] sm:$0xff] %vm1483, %v5149
        %v5152 = vld [vmem:[%s83] sm:$0x1]
        %v5154 = vlaneseq
        %v5155 = vshrl.u32 %v5154, 7
        %v5156 = vsub.s32 0, %v5155
        %v5157 = vrot.slane %v5152, %v5156
        %v5159 = vadd.f32 %v5157, 0.0
        %v5160 = vld [vmem:[#allocation2 + $0x4] sm:$0xff]
        %v5161 = vld [vmem:[#allocation2 + $0xc] sm:$0xff]
        %v5162 = vld [vmem:[%s81] sm:$0xff]
        %v5164 = vsel %vm1483, %v5160, 0
        %v5167 = vsel %vm1483, %v5161, 0
        %5169 = vmatprep.subr.mxu0 0.0
        %5170 = vmatpush1.msra.mxu0 0.0
        %5171 = vmatprep.subr.mxu0 0.0
        %5172 = vmatpush1.msra.mxu0 0.0
        %5173 = vmatprep.subr.mxu0 0.0
        %5174 = vmatpush1.msra.mxu0 0.0
        %5175 = vmatprep.subr.mxu0 0.0
        %5176 = vmatpush1.msra.mxu0 0.0
        %5177 = vmatprep.subr.mxu0 0.0
        %5178 = vmatpush1.msra.mxu0 0.0
        %5179 = vmatprep.subr.mxu0 0.0
        %5180 = vmatpush1.msra.mxu0 0.0
        %5181 = vmatprep.subr.mxu0 0.0
        %5182 = vmatpush1.msra.mxu0 0.0
        %5183 = vmatprep.subr.mxu0 0.0
        %5184 = vmatpush1.msra.mxu0 0.0
        %5185 = vmatprep.subr.mxu0 0.0
        %5186 = vmatpush1.msra.mxu0 0.0
        %5187 = vmatprep.subr.mxu0 0.0
        %5188 = vmatpush1.msra.mxu0 0.0
        %5189 = vmatprep.subr.mxu0 0.0
        %5190 = vmatpush1.msra.mxu0 0.0
        %5191 = vmatprep.subr.mxu0 0.0
        %5192 = vmatpush1.msra.mxu0 0.0
        %5193 = vmatprep.subr.mxu0 0.0
        %5194 = vmatpush1.msra.mxu0 0.0
        %5195 = vmatprep.subr.mxu0 0.0
        %5196 = vmatpush1.msra.mxu0 0.0
        %5197 = vmatprep.subr.mxu0 0.0
        %5198 = vmatpush1.msra.mxu0 0.0
        %5199 = vmatprep.subr.mxu0 0.0
        %5200 = vmatpush1.msra.mxu0 %v5162
        %5201 = vmatprep.subr.mxu0 0.0
        %5202 = vmatpush2.msra.mxu0 0.0
        %5203 = vmatprep.subr.mxu0 0.0
        %5204 = vmatpush2.msra.mxu0 0.0
        %5205 = vmatprep.subr.mxu0 0.0
        %5206 = vmatpush2.msra.mxu0 0.0
        %5207 = vmatprep.subr.mxu0 0.0
        %5208 = vmatpush2.msra.mxu0 0.0
        %5209 = vmatprep.subr.mxu0 0.0
        %5210 = vmatpush2.msra.mxu0 0.0
        %5211 = vmatprep.subr.mxu0 0.0
        %5212 = vmatpush2.msra.mxu0 0.0
        %5213 = vmatprep.subr.mxu0 0.0
        %5214 = vmatpush2.msra.mxu0 0.0
        %5215 = vmatprep.subr.mxu0 0.0
        %5216 = vmatpush2.msra.mxu0 0.0
        %5217 = vmatprep.subr.mxu0 0.0
        %5218 = vmatpush2.msra.mxu0 0.0
        %5219 = vmatprep.subr.mxu0 0.0
        %5220 = vmatpush2.msra.mxu0 0.0
        %5221 = vmatprep.subr.mxu0 0.0
        %5222 = vmatpush2.msra.mxu0 0.0
        %5223 = vmatprep.subr.mxu0 0.0
        %5224 = vmatpush2.msra.mxu0 0.0
        %5225 = vmatprep.subr.mxu0 0.0
        %5226 = vmatpush2.msra.mxu0 0.0
        %5227 = vmatprep.subr.mxu0 0.0
        %5228 = vmatpush2.msra.mxu0 0.0
        %5229 = vmatprep.subr.mxu0 0.0
        %5230 = vmatpush2.msra.mxu0 0.0
        %5231 = vmatprep.subr.mxu0 0.0
        %5232 = vmatpush2.msra.mxu0 0.0
        %5233 = vmatprep.mubr.f32.mxu0 0.0
        %5234 = vmatmul.mubr.f32.gmra.mxu0 %v5164
        %v5235 = vpop.f32.mrf.mxu0
        %v5236 = vadd.f32 0.0, %v5235
        %v5237 = vpop.f32.mrf.mxu0
        %5238 = vmatprep.mubr.f32.mxu0 0.0
        %5239 = vmatmul.mubr.f32.gmra.mxu0 %v5167
        %v5240 = vpop.f32.mrf.mxu0
        %v5241 = vadd.f32 0.0, %v5240
        %v5242 = vpop.f32.mrf.mxu0
        %5243 = vdwg.mxu0
        %v5244 = vadd.f32 %v5159, %v5236
        %v5245 = vadd.f32 %v5159, %v5241
        %v5246 = vld [vmem:[#allocation2 + $0x6] sm:$0xff]
        %v5247 = vld [vmem:[#allocation2 + $0xe] sm:$0xff]
        %s5248 = scalar_lea.vmem %s81, 8
        %v5249 = vld [vmem:[%s5248] sm:$0xff]
        %v5251 = vsel %vm1483, %v5246, 0
        %v5254 = vsel %vm1483, %v5247, 0
        %5256 = vmatprep.subr.mxu0 0.0
        %5257 = vmatpush1.msra.mxu0 0.0
        %5258 = vmatprep.subr.mxu0 0.0
        %5259 = vmatpush1.msra.mxu0 0.0
        %5260 = vmatprep.subr.mxu0 0.0
        %5261 = vmatpush1.msra.mxu0 0.0
        %5262 = vmatprep.subr.mxu0 0.0
        %5263 = vmatpush1.msra.mxu0 0.0
        %5264 = vmatprep.subr.mxu0 0.0
        %5265 = vmatpush1.msra.mxu0 0.0
        %5266 = vmatprep.subr.mxu0 0.0
        %5267 = vmatpush1.msra.mxu0 0.0
        %5268 = vmatprep.subr.mxu0 0.0
        %5269 = vmatpush1.msra.mxu0 0.0
        %5270 = vmatprep.subr.mxu0 0.0
        %5271 = vmatpush1.msra.mxu0 0.0
        %5272 = vmatprep.subr.mxu0 0.0
        %5273 = vmatpush1.msra.mxu0 0.0
        %5274 = vmatprep.subr.mxu0 0.0
        %5275 = vmatpush1.msra.mxu0 0.0
        %5276 = vmatprep.subr.mxu0 0.0
        %5277 = vmatpush1.msra.mxu0 0.0
        %5278 = vmatprep.subr.mxu0 0.0
        %5279 = vmatpush1.msra.mxu0 0.0
        %5280 = vmatprep.subr.mxu0 0.0
        %5281 = vmatpush1.msra.mxu0 0.0
        %5282 = vmatprep.subr.mxu0 0.0
        %5283 = vmatpush1.msra.mxu0 0.0
        %5284 = vmatprep.subr.mxu0 0.0
        %5285 = vmatpush1.msra.mxu0 0.0
        %5286 = vmatprep.subr.mxu0 0.0
        %5287 = vmatpush1.msra.mxu0 %v5249
        %5288 = vmatprep.subr.mxu0 0.0
        %5289 = vmatpush2.msra.mxu0 0.0
        %5290 = vmatprep.subr.mxu0 0.0
        %5291 = vmatpush2.msra.mxu0 0.0
        %5292 = vmatprep.subr.mxu0 0.0
        %5293 = vmatpush2.msra.mxu0 0.0
        %5294 = vmatprep.subr.mxu0 0.0
        %5295 = vmatpush2.msra.mxu0 0.0
        %5296 = vmatprep.subr.mxu0 0.0
        %5297 = vmatpush2.msra.mxu0 0.0
        %5298 = vmatprep.subr.mxu0 0.0
        %5299 = vmatpush2.msra.mxu0 0.0
        %5300 = vmatprep.subr.mxu0 0.0
        %5301 = vmatpush2.msra.mxu0 0.0
        %5302 = vmatprep.subr.mxu0 0.0
        %5303 = vmatpush2.msra.mxu0 0.0
        %5304 = vmatprep.subr.mxu0 0.0
        %5305 = vmatpush2.msra.mxu0 0.0
        %5306 = vmatprep.subr.mxu0 0.0
        %5307 = vmatpush2.msra.mxu0 0.0
        %5308 = vmatprep.subr.mxu0 0.0
        %5309 = vmatpush2.msra.mxu0 0.0
        %5310 = vmatprep.subr.mxu0 0.0
        %5311 = vmatpush2.msra.mxu0 0.0
        %5312 = vmatprep.subr.mxu0 0.0
        %5313 = vmatpush2.msra.mxu0 0.0
        %5314 = vmatprep.subr.mxu0 0.0
        %5315 = vmatpush2.msra.mxu0 0.0
        %5316 = vmatprep.subr.mxu0 0.0
        %5317 = vmatpush2.msra.mxu0 0.0
        %5318 = vmatprep.subr.mxu0 0.0
        %5319 = vmatpush2.msra.mxu0 0.0
        %5320 = vmatprep.mubr.f32.mxu0 0.0
        %5321 = vmatmul.mubr.f32.gmra.mxu0 %v5251
        %v5322 = vpop.f32.mrf.mxu0
        %v5323 = vadd.f32 0.0, %v5322
        %v5324 = vpop.f32.mrf.mxu0
        %5325 = vmatprep.mubr.f32.mxu0 0.0
        %5326 = vmatmul.mubr.f32.gmra.mxu0 %v5254
        %v5327 = vpop.f32.mrf.mxu0
        %v5328 = vadd.f32 0.0, %v5327
        %v5329 = vpop.f32.mrf.mxu0
        %5330 = vdwg.mxu0
        %v5331 = vadd.f32 %v5244, %v5323
        %v5332 = vadd.f32 %v5245, %v5328
        %v5333 = vld [vmem:[#allocation2 + $0x8] sm:$0xff]
        %v5334 = vld [vmem:[#allocation2 + $0x10] sm:$0xff]
        %s5335 = scalar_lea.vmem %s81, 16
        %v5336 = vld [vmem:[%s5335] sm:$0xff]
        %v5338 = vsel %vm1483, %v5333, 0
        %v5341 = vsel %vm1483, %v5334, 0
        %5343 = vmatprep.subr.mxu0 0.0
        %5344 = vmatpush1.msra.mxu0 0.0
        %5345 = vmatprep.subr.mxu0 0.0
        %5346 = vmatpush1.msra.mxu0 0.0
        %5347 = vmatprep.subr.mxu0 0.0
        %5348 = vmatpush1.msra.mxu0 0.0
        %5349 = vmatprep.subr.mxu0 0.0
        %5350 = vmatpush1.msra.mxu0 0.0
        %5351 = vmatprep.subr.mxu0 0.0
        %5352 = vmatpush1.msra.mxu0 0.0
        %5353 = vmatprep.subr.mxu0 0.0
        %5354 = vmatpush1.msra.mxu0 0.0
        %5355 = vmatprep.subr.mxu0 0.0
        %5356 = vmatpush1.msra.mxu0 0.0
        %5357 = vmatprep.subr.mxu0 0.0
        %5358 = vmatpush1.msra.mxu0 0.0
        %5359 = vmatprep.subr.mxu0 0.0
        %5360 = vmatpush1.msra.mxu0 0.0
        %5361 = vmatprep.subr.mxu0 0.0
        %5362 = vmatpush1.msra.mxu0 0.0
        %5363 = vmatprep.subr.mxu0 0.0
        %5364 = vmatpush1.msra.mxu0 0.0
        %5365 = vmatprep.subr.mxu0 0.0
        %5366 = vmatpush1.msra.mxu0 0.0
        %5367 = vmatprep.subr.mxu0 0.0
        %5368 = vmatpush1.msra.mxu0 0.0
        %5369 = vmatprep.subr.mxu0 0.0
        %5370 = vmatpush1.msra.mxu0 0.0
        %5371 = vmatprep.subr.mxu0 0.0
        %5372 = vmatpush1.msra.mxu0 0.0
        %5373 = vmatprep.subr.mxu0 0.0
        %5374 = vmatpush1.msra.mxu0 %v5336
        %5375 = vmatprep.subr.mxu0 0.0
        %5376 = vmatpush2.msra.mxu0 0.0
        %5377 = vmatprep.subr.mxu0 0.0
        %5378 = vmatpush2.msra.mxu0 0.0
        %5379 = vmatprep.subr.mxu0 0.0
        %5380 = vmatpush2.msra.mxu0 0.0
        %5381 = vmatprep.subr.mxu0 0.0
        %5382 = vmatpush2.msra.mxu0 0.0
        %5383 = vmatprep.subr.mxu0 0.0
        %5384 = vmatpush2.msra.mxu0 0.0
        %5385 = vmatprep.subr.mxu0 0.0
        %5386 = vmatpush2.msra.mxu0 0.0
        %5387 = vmatprep.subr.mxu0 0.0
        %5388 = vmatpush2.msra.mxu0 0.0
        %5389 = vmatprep.subr.mxu0 0.0
        %5390 = vmatpush2.msra.mxu0 0.0
        %5391 = vmatprep.subr.mxu0 0.0
        %5392 = vmatpush2.msra.mxu0 0.0
        %5393 = vmatprep.subr.mxu0 0.0
        %5394 = vmatpush2.msra.mxu0 0.0
        %5395 = vmatprep.subr.mxu0 0.0
        %5396 = vmatpush2.msra.mxu0 0.0
        %5397 = vmatprep.subr.mxu0 0.0
        %5398 = vmatpush2.msra.mxu0 0.0
        %5399 = vmatprep.subr.mxu0 0.0
        %5400 = vmatpush2.msra.mxu0 0.0
        %5401 = vmatprep.subr.mxu0 0.0
        %5402 = vmatpush2.msra.mxu0 0.0
        %5403 = vmatprep.subr.mxu0 0.0
        %5404 = vmatpush2.msra.mxu0 0.0
        %5405 = vmatprep.subr.mxu0 0.0
        %5406 = vmatpush2.msra.mxu0 0.0
        %5407 = vmatprep.mubr.f32.mxu0 0.0
        %5408 = vmatmul.mubr.f32.gmra.mxu0 %v5338
        %v5409 = vpop.f32.mrf.mxu0
        %v5410 = vadd.f32 0.0, %v5409
        %v5411 = vpop.f32.mrf.mxu0
        %5412 = vmatprep.mubr.f32.mxu0 0.0
        %5413 = vmatmul.mubr.f32.gmra.mxu0 %v5341
        %v5414 = vpop.f32.mrf.mxu0
        %v5415 = vadd.f32 0.0, %v5414
        %v5416 = vpop.f32.mrf.mxu0
        %5417 = vdwg.mxu0
        %v5418 = vadd.f32 %v5331, %v5410
        %v5419 = vadd.f32 %v5332, %v5415
        %s5420 = sld [smem:[#allocation4 + $0x10]]
        %vm5421 = vcmp.ge.f32.partialorder %v5418, 0.0
        %vm5422 = vcmp.ge.f32.partialorder %v5419, 0.0
        %v5423 = vstv %s5420
        %v5424 = vmul.f32 %v5418, %v5423
        %v5425 = vmul.f32 %v5419, %v5423
        %v5426 = vsel %vm5421, %v5418, %v5424
        %v5427 = vsel %vm5422, %v5419, %v5425
        %v5428 = vld [vmem:[%s73] sm:$0xff]
        %v5429 = vld [vmem:[%s73 + $0x8] sm:$0xff]
        %v5430 = vld [vmem:[%s75] sm:$0x1]
        %v5432 = vlaneseq
        %v5433 = vshrl.u32 %v5432, 7
        %v5434 = vsub.s32 0, %v5433
        %v5435 = vrot.slane %v5430, %v5434
        %v5438 = vsel %vm1477, %v4867, 0
        %v5441 = vsel %vm1477, %v4868, 0
        %5443 = vmatprep.subr.mxu0 0.0
        %5444 = vmatpush1.msra.mxu0 0.0
        %5445 = vmatprep.subr.mxu0 0.0
        %5446 = vmatpush1.msra.mxu0 0.0
        %5447 = vmatprep.subr.mxu0 0.0
        %5448 = vmatpush1.msra.mxu0 0.0
        %5449 = vmatprep.subr.mxu0 0.0
        %5450 = vmatpush1.msra.mxu0 0.0
        %5451 = vmatprep.subr.mxu0 0.0
        %5452 = vmatpush1.msra.mxu0 0.0
        %5453 = vmatprep.subr.mxu0 0.0
        %5454 = vmatpush1.msra.mxu0 0.0
        %5455 = vmatprep.subr.mxu0 0.0
        %5456 = vmatpush1.msra.mxu0 0.0
        %5457 = vmatprep.subr.mxu0 0.0
        %5458 = vmatpush1.msra.mxu0 0.0
        %5459 = vmatprep.subr.mxu0 0.0
        %5460 = vmatpush1.msra.mxu0 0.0
        %5461 = vmatprep.subr.mxu0 0.0
        %5462 = vmatpush1.msra.mxu0 0.0
        %5463 = vmatprep.subr.mxu0 0.0
        %5464 = vmatpush1.msra.mxu0 0.0
        %5465 = vmatprep.subr.mxu0 0.0
        %5466 = vmatpush1.msra.mxu0 0.0
        %5467 = vmatprep.subr.mxu0 0.0
        %5468 = vmatpush1.msra.mxu0 0.0
        %5469 = vmatprep.subr.mxu0 0.0
        %5470 = vmatpush1.msra.mxu0 0.0
        %5471 = vmatprep.subr.mxu0 0.0
        %5472 = vmatpush1.msra.mxu0 %v5429
        %5473 = vmatprep.subr.mxu0 0.0
        %5474 = vmatpush1.msra.mxu0 %v5428
        %5475 = vmatprep.subr.mxu0 0.0
        %5476 = vmatpush2.msra.mxu0 0.0
        %5477 = vmatprep.subr.mxu0 0.0
        %5478 = vmatpush2.msra.mxu0 0.0
        %5479 = vmatprep.subr.mxu0 0.0
        %5480 = vmatpush2.msra.mxu0 0.0
        %5481 = vmatprep.subr.mxu0 0.0
        %5482 = vmatpush2.msra.mxu0 0.0
        %5483 = vmatprep.subr.mxu0 0.0
        %5484 = vmatpush2.msra.mxu0 0.0
        %5485 = vmatprep.subr.mxu0 0.0
        %5486 = vmatpush2.msra.mxu0 0.0
        %5487 = vmatprep.subr.mxu0 0.0
        %5488 = vmatpush2.msra.mxu0 0.0
        %5489 = vmatprep.subr.mxu0 0.0
        %5490 = vmatpush2.msra.mxu0 0.0
        %5491 = vmatprep.subr.mxu0 0.0
        %5492 = vmatpush2.msra.mxu0 0.0
        %5493 = vmatprep.subr.mxu0 0.0
        %5494 = vmatpush2.msra.mxu0 0.0
        %5495 = vmatprep.subr.mxu0 0.0
        %5496 = vmatpush2.msra.mxu0 0.0
        %5497 = vmatprep.subr.mxu0 0.0
        %5498 = vmatpush2.msra.mxu0 0.0
        %5499 = vmatprep.subr.mxu0 0.0
        %5500 = vmatpush2.msra.mxu0 0.0
        %5501 = vmatprep.subr.mxu0 0.0
        %5502 = vmatpush2.msra.mxu0 0.0
        %5503 = vmatprep.subr.mxu0 0.0
        %5504 = vmatpush2.msra.mxu0 0.0
        %5505 = vmatprep.subr.mxu0 0.0
        %5506 = vmatpush2.msra.mxu0 0.0
        %5507 = vmatprep.mubr.f32.mxu0 0.0
        %5508 = vmatmul.mubr.f32.gmra.mxu0 %v5438
        %v5509 = vpop.f32.mrf.mxu0
        %v5510 = vadd.f32 %v5435, %v5509
        %v5511 = vpop.f32.mrf.mxu0
        %5512 = vmatprep.mubr.f32.mxu0 0.0
        %5513 = vmatmul.mubr.f32.gmra.mxu0 %v5441
        %v5514 = vpop.f32.mrf.mxu0
        %v5515 = vadd.f32 %v5435, %v5514
        %v5516 = vpop.f32.mrf.mxu0
        %5517 = vdwg.mxu0
        %v5518 = vadd.f32 %v5426, %v5510
        %v5519 = vadd.f32 %v5427, %v5515
        %s5520 = sld [smem:[#allocation4 + $0x11]]
        %vm5521 = vcmp.ge.f32.partialorder %v5518, 0.0
        %vm5522 = vcmp.ge.f32.partialorder %v5519, 0.0
        %v5523 = vstv %s5520
        %v5524 = vmul.f32 %v5518, %v5523
        %v5525 = vmul.f32 %v5519, %v5523
        %v5526 = vsel %vm5521, %v5518, %v5524
        %v5527 = vsel %vm5522, %v5519, %v5525
        %v5528 = vld [vmem:[%s85] sm:$0xff]
        %v5529 = vld [vmem:[%s87] sm:$0x1]
        %v5531 = vlaneseq
        %v5532 = vshrl.u32 %v5531, 7
        %v5533 = vsub.s32 0, %v5532
        %v5534 = vrot.slane %v5529, %v5533
        %v5537 = vsel %vm1483, %v5526, 0
        %v5540 = vsel %vm1483, %v5527, 0
        %5542 = vmatprep.subr.mxu0 0.0
        %5543 = vmatpush1.msra.mxu0 0.0
        %5544 = vmatprep.subr.mxu0 0.0
        %5545 = vmatpush1.msra.mxu0 0.0
        %5546 = vmatprep.subr.mxu0 0.0
        %5547 = vmatpush1.msra.mxu0 0.0
        %5548 = vmatprep.subr.mxu0 0.0
        %5549 = vmatpush1.msra.mxu0 0.0
        %5550 = vmatprep.subr.mxu0 0.0
        %5551 = vmatpush1.msra.mxu0 0.0
        %5552 = vmatprep.subr.mxu0 0.0
        %5553 = vmatpush1.msra.mxu0 0.0
        %5554 = vmatprep.subr.mxu0 0.0
        %5555 = vmatpush1.msra.mxu0 0.0
        %5556 = vmatprep.subr.mxu0 0.0
        %5557 = vmatpush1.msra.mxu0 0.0
        %5558 = vmatprep.subr.mxu0 0.0
        %5559 = vmatpush1.msra.mxu0 0.0
        %5560 = vmatprep.subr.mxu0 0.0
        %5561 = vmatpush1.msra.mxu0 0.0
        %5562 = vmatprep.subr.mxu0 0.0
        %5563 = vmatpush1.msra.mxu0 0.0
        %5564 = vmatprep.subr.mxu0 0.0
        %5565 = vmatpush1.msra.mxu0 0.0
        %5566 = vmatprep.subr.mxu0 0.0
        %5567 = vmatpush1.msra.mxu0 0.0
        %5568 = vmatprep.subr.mxu0 0.0
        %5569 = vmatpush1.msra.mxu0 0.0
        %5570 = vmatprep.subr.mxu0 0.0
        %5571 = vmatpush1.msra.mxu0 0.0
        %5572 = vmatprep.subr.mxu0 0.0
        %5573 = vmatpush1.msra.mxu0 %v5528
        %5574 = vmatprep.subr.mxu0 0.0
        %5575 = vmatpush2.msra.mxu0 0.0
        %5576 = vmatprep.subr.mxu0 0.0
        %5577 = vmatpush2.msra.mxu0 0.0
        %5578 = vmatprep.subr.mxu0 0.0
        %5579 = vmatpush2.msra.mxu0 0.0
        %5580 = vmatprep.subr.mxu0 0.0
        %5581 = vmatpush2.msra.mxu0 0.0
        %5582 = vmatprep.subr.mxu0 0.0
        %5583 = vmatpush2.msra.mxu0 0.0
        %5584 = vmatprep.subr.mxu0 0.0
        %5585 = vmatpush2.msra.mxu0 0.0
        %5586 = vmatprep.subr.mxu0 0.0
        %5587 = vmatpush2.msra.mxu0 0.0
        %5588 = vmatprep.subr.mxu0 0.0
        %5589 = vmatpush2.msra.mxu0 0.0
        %5590 = vmatprep.subr.mxu0 0.0
        %5591 = vmatpush2.msra.mxu0 0.0
        %5592 = vmatprep.subr.mxu0 0.0
        %5593 = vmatpush2.msra.mxu0 0.0
        %5594 = vmatprep.subr.mxu0 0.0
        %5595 = vmatpush2.msra.mxu0 0.0
        %5596 = vmatprep.subr.mxu0 0.0
        %5597 = vmatpush2.msra.mxu0 0.0
        %5598 = vmatprep.subr.mxu0 0.0
        %5599 = vmatpush2.msra.mxu0 0.0
        %5600 = vmatprep.subr.mxu0 0.0
        %5601 = vmatpush2.msra.mxu0 0.0
        %5602 = vmatprep.subr.mxu0 0.0
        %5603 = vmatpush2.msra.mxu0 0.0
        %5604 = vmatprep.subr.mxu0 0.0
        %5605 = vmatpush2.msra.mxu0 0.0
        %5606 = vmatprep.mubr.f32.mxu0 0.0
        %5607 = vmatmul.mubr.f32.gmra.mxu0 %v5537
        %v5608 = vpop.f32.mrf.mxu0
        %v5609 = vadd.f32 %v5534, %v5608
        %v5610 = vpop.f32.mrf.mxu0
        %5611 = vmatprep.mubr.f32.mxu0 0.0
        %5612 = vmatmul.mubr.f32.gmra.mxu0 %v5540
        %v5613 = vpop.f32.mrf.mxu0
        %v5614 = vadd.f32 %v5534, %v5613
        %v5615 = vpop.f32.mrf.mxu0
        %5616 = vdwg.mxu0
        %v5617 = vsub.f32 0.0, %v5609
        %v5618 = vsub.f32 0.0, %v5614
        %v5619 = vmul.f32 %v5617, 1.442695
        %v5620 = vpow.pop %v5619
        %v5621 = vmul.f32 %v5618, 1.442695
        %v5622 = vpow.pop %v5621
        %v5623 = vadd.f32 %v5620, 1.0
        %v5624 = vadd.f32 %v5622, 1.0
        %v5625 = vrcp.pop %v5623
        %v5626 = vmul.f32 1.0, %v5625
        %v5627 = vrcp.pop %v5624
        %v5628 = vmul.f32 1.0, %v5627
        %vm5629 = vcmask 31744
        %5630 = vst.msk [vmem:[%s1476] sm:$0xff] %vm5629, %v5626
        %5631 = vst.msk [vmem:[%s1476 + $0x8] sm:$0xff] %vm5629, %v5628
        %p5632 = scmp.lt.s32.totalorder %s112, 1
        %s5633 = scalar_select %p5632, %s112, 1
        %s5634 = smul.addr %s5633, 2
        %s5635 = smul.addr %s5634, 8
        %s5636 = scalar_lea.vmem %s89, %s5635
        // Predicated region
        $region249: #{tpu_custom_call.1} parent=191 // pred_check
          %p5637 = pneg %p1038
        $region250: #{tpu_custom_call.1} parent=191 // pred_check_branch
          %5639 = sbr.rel (%p5637) target = $region252
        $region251: #{tpu_custom_call.1} parent=191 // pred_region
          _
        $region252: #{tpu_custom_call.1} parent=191 // pred_fallthru
          _
      $region192: #{tpu_custom_call.1} parent=5 // pred_fallthru
        _
      %p5640 = scmp.le.s32.totalorder 2, %s107
      // Predicated region
      $region253: #{tpu_custom_call.1} parent=5 // pred_check
        %p5641 = pneg %p5640
      $region254: #{tpu_custom_call.1} parent=5 // pred_check_branch
        %5643 = sbr.rel (%p5641) target = $region256
      $region255: #{tpu_custom_call.1} parent=5 // pred_region
        %s5644 = ssub.s32 %s107, 2
        // Predicated region
        $region257: #{tpu_custom_call.1} parent=255 // pred_check
          %p5645 = pneg %p1044
        $region258: #{tpu_custom_call.1} parent=255 // pred_check_branch
          %5647 = sbr.rel (%p5645) target = $region260
        $region259: #{tpu_custom_call.1} parent=255 // pred_region
          %p5648 = scmp.lt.s32.totalorder %s113, 1
          %s5649 = scalar_select %p5648, %s113, 1
          %s5650 = smul.addr %s5649, 2
          %s5651 = smul.addr %s5650, 8
          %s5652 = scalar_lea.vmem %s89, %s5651
        $region260: #{tpu_custom_call.1} parent=255 // pred_fallthru
          _
      $region256: #{tpu_custom_call.1} parent=5 // pred_fallthru
        _
    $region6: #{tpu_custom_call.1} parent=1 // loop_footer
      %s111 = sadd.s32 1, %s107
    $region7: #{tpu_custom_call.1} parent=1 // loop_footer_branch
      %106 = sbr.rel target = $region3
    $region8: #{tpu_custom_call.1} parent=1 // loop_exit
      _
    %5653 = vsyncpa [#allocation6], 1
    %s5654 = scalar_lea.sflag [#allocation6], 1
    %5655 = vsyncpa %s5654, 1
    %5656 = vsyncpa [#allocation8], 1
    %5657 = vsyncpa [#allocation11], 1
    %5658 = vsyncpa [#allocation14], 1
    %5659 = vsyncpa [#allocation17], 1
    %5660 = vsyncpa [#allocation20], 1
    %5661 = vsyncpa [#allocation23], 1
    %5662 = vsyncpa [#allocation26], 1

</llo_original>
